<compile_context>
chip_gen: v5e
topology: v5e:2x2
jax: 0.10.0
libtpu: 0.0.40
codegen_flags: <defaults>
</compile_context>

<pallas_src>
import math
from functools import partial

import jax
import jax.numpy as jnp
from jax import lax
from jax.experimental import pallas as pl
from jax.experimental.pallas import tpu as pltpu

EPS = 1e-5
STAGE_DTYPE = jnp.bfloat16         # inter-stage activations / MXU operand dtype


# --------------------------------------------------------------------------- #
# helpers (match torchvision / timm semantics)
# --------------------------------------------------------------------------- #
def _make_divisible(v, divisor=8, min_value=None):
    if min_value is None:
        min_value = divisor
    new_v = max(min_value, int(v + divisor / 2) // divisor * divisor)
    if new_v < 0.9 * v:
        new_v += divisor
    return new_v


_VMEM_LIMIT = None


def _vmem_limit():
    """Half of physical VMEM: 64 MiB on v5e/v6e (128 MiB), 32 MiB on v7x (64 MiB)."""
    global _VMEM_LIMIT
    if _VMEM_LIMIT is None:
        try:
            cap = pltpu.get_tpu_info().vmem_capacity_bytes
        except Exception:
            cap = 64 * 1024 * 1024
        _VMEM_LIMIT = int(min(96 << 20, max(32 << 20, cap // 2)))
    return _VMEM_LIMIT


def _cparams(sem):
    return pltpu.CompilerParams(dimension_semantics=sem,
                                vmem_limit_bytes=_vmem_limit())


def _gelu(x):
    # tanh-approx GELU (perf review): lands on the EUP instead of ~20 f32 VALU
    # ops/elem for the erf polynomial; |err| ~1e-3 << bf16 activation resolution.
    c = math.sqrt(2.0 / math.pi)
    return 0.5 * x * (1.0 + jnp.tanh(c * (x + 0.044715 * x * x * x)))


def _hardswish(x):   # nn.Hardswish
    return x * jnp.clip(x + 3.0, 0.0, 6.0) * (1.0 / 6.0)


def _hardsigmoid(x):  # nn.Hardsigmoid
    return jnp.clip(x * (1.0 / 6.0) + 0.5, 0.0, 1.0)


def _row_tile(n, cap=512, min_steps=4):
    """Row tile near `cap` while keeping >= min_steps grid steps (megacore/pipeline)."""
    t = min(cap, -(-n // min_steps))
    t = max(8, (t // 8) * 8)
    return min(t, n) if n >= 8 else n


def _col_tile(n, cap=512):
    """Output-column tile for the MLP second matmul (multiple of 128, or full)."""
    if n <= cap:
        return n
    return max(128, (cap // 128) * 128)


def _divisor_tile(n, cap=512):
    """Largest divisor of n that is <= cap and (multiple of 8 or == n)."""
    for t in range(min(cap, n), 0, -1):
        if n % t == 0 and (t % 8 == 0 or t == n):
            return t
    return n


def _strip_rows(Ho, Wo, C, budget_bytes=2 << 20):
    """Strip height for the depthwise stage: bounds per-strip f32 intermediates."""
    per_row = Wo * C * 4
    cap = max(1, budget_bytes // per_row)
    if Ho >= 2:
        cap = min(cap, Ho // 2)     # at least 2 strips -> exercises the loop path
    for sh in range(min(Ho, cap), 0, -1):
        if Ho % sh == 0:
            return sh
    return 1


# --------------------------------------------------------------------------- #
# Kernel 1: token MLP  (Linear -> GELU -> Linear), column-tiled second matmul
# --------------------------------------------------------------------------- #
def _mlp_kernel(x_ref, w1_ref, b1_ref, w2_ref, b2_ref, o_ref, h_ref):
    # grid = (row tiles, output-column tiles).  The GELU'd hidden activation for
    # the current row tile is computed once (j == 0) and reused for every column
    # slice of w2, so only an (ouc, tn) weight slice is VMEM-resident per step.
    @pl.when(pl.program_id(1) == 0)
    def _():
        x = x_ref[...].astype(jnp.bfloat16)
        h = jnp.dot(x, w1_ref[...], preferred_element_type=jnp.float32) + b1_ref[...]
        h_ref[...] = _gelu(h).astype(jnp.bfloat16)

    o = jnp.dot(h_ref[...], w2_ref[...], preferred_element_type=jnp.float32) + b2_ref[...]
    o_ref[...] = o.astype(o_ref.dtype)


def mlp_pallas(x2d, w1, b1, w2, b2, out_dtype):
    n, inc = x2d.shape
    ouc = w1.shape[1]
    tm = _row_tile(n)
    tn = _col_tile(ouc)
    grid = (pl.cdiv(n, tm), pl.cdiv(ouc, tn))
    # TODO(synk): mark grid-invariant operands (w1/b1/x per-j) pipeline_mode=pl.Buffered(1)
    # once single-buffered constant blocks are supported in this pallas_call path.
    return pl.pallas_call(
        _mlp_kernel,
        out_shape=jax.ShapeDtypeStruct((n, ouc), out_dtype),
        grid=grid,
        in_specs=[
            pl.BlockSpec((tm, inc), lambda i, j: (i, 0)),
            pl.BlockSpec((inc, ouc), lambda i, j: (0, 0)),
            pl.BlockSpec((1, ouc), lambda i, j: (0, 0)),
            pl.BlockSpec((ouc, tn), lambda i, j: (0, j)),
            pl.BlockSpec((1, tn), lambda i, j: (0, j)),
        ],
        out_specs=pl.BlockSpec((tm, tn), lambda i, j: (i, j)),
        scratch_shapes=[pltpu.VMEM((tm, ouc), jnp.bfloat16)],
        compiler_params=_cparams(("parallel", "arbitrary")),
    )(x2d, w1, b1, w2, b2)


# --------------------------------------------------------------------------- #
# Kernel 2a: depthwise 3x3 conv -> LayerNormAct2d -> Hardswish + SE global pool
#   One image per grid step; output rows processed in H-strips so per-strip f32
#   intermediates stay bounded.  Taps are static/dynamic slices of the padded
#   (or parity-split) bf16 slab, cast to f32 lazily.
# --------------------------------------------------------------------------- #
def _dw_ln_hs_pool_kernel(*args, view_plan, out_hw, strip_h):
    Ho, Wo = out_hw
    n_src = len(args) - 5
    src_refs = args[:n_src]
    dw_ref, g1_ref, b1_ref, h_out_ref, pool_ref = args[n_src:]

    C = dw_ref.shape[1]
    dw = dw_ref[...]                                     # (9, C) f32
    g1 = g1_ref[...].reshape(1, 1, C)
    b1 = b1_ref[...].reshape(1, 1, C)
    inv_px = 1.0 / float(Ho * Wo)
    n_strips = Ho // strip_h

    pool_ref[...] = jnp.zeros(pool_ref.shape, pool_ref.dtype)

    def strip_body(s, carry):
        r0 = pl.multiple_of(s * strip_h, strip_h)
        # depthwise 3x3: nine weighted shifted views, lazy f32 cast, pairwise tree
        terms = []
        for k, (si, ro, co) in enumerate(view_plan):
            v = src_refs[si][pl.ds(r0 + ro, strip_h), co:co + Wo, :]
            terms.append(v.astype(jnp.float32) * dw[k:k + 1, :].reshape(1, 1, C))
        while len(terms) > 1:
            nxt = [terms[i] + terms[i + 1] for i in range(0, len(terms) - 1, 2)]
            if len(terms) % 2:
                nxt.append(terms[-1])
            terms = nxt
        acc = terms[0]                                   # (strip_h, Wo, C) f32

        # LayerNormAct2d (channel LN per pixel, f32 stats) + Hardswish
        mu = jnp.mean(acc, axis=-1, keepdims=True)
        var = jnp.mean(jnp.square(acc - mu), axis=-1, keepdims=True)
        h = (acc - mu) * lax.rsqrt(var + EPS) * g1 + b1
        h = _hardswish(h)

        h_out_ref[pl.ds(r0, strip_h), :, :] = h.astype(h_out_ref.dtype)
        # exact SE global-average-pool accumulator (strips tile Ho exactly)
        pool_ref[...] += jnp.sum(jnp.sum(h, axis=0), axis=0, keepdims=True) * inv_px
        return carry

    lax.fori_loop(0, n_strips, strip_body, 0, unroll=(n_strips <= 4))


def dw_ln_hs_pool_pallas(x_nhwc, p, stride):
    B, H, W, C = x_nhwc.shape
    # TODO(synk): fuse the zero-pad / stride-2 parity split into the kernel (zero-init
    # VMEM scratch + strided ref loads) to drop this extra HBM round trip.
    xpad = jnp.pad(x_nhwc, ((0, 0), (1, 1), (1, 1), (0, 0)))
    if stride == 1:
        Ho, Wo = H, W
        srcs = [xpad]
        view_plan = tuple((0, kh, kw) for kh in range(3) for kw in range(3))
    else:
        assert stride == 2 and H % 2 == 0 and W % 2 == 0
        Ho, Wo = (H - 1) // 2 + 1, (W - 1) // 2 + 1
        # 2x2 parity split so every stride-2 tap is a contiguous slice
        srcs = [xpad[:, 0::2, 0::2, :], xpad[:, 0::2, 1::2, :],
                xpad[:, 1::2, 0::2, :], xpad[:, 1::2, 1::2, :]]
        view_plan = tuple(((kh % 2) * 2 + (kw % 2), kh // 2, kw // 2)
                          for kh in range(3) for kw in range(3))
    strip_h = _strip_rows(Ho, Wo, C)

    in_specs = [pl.BlockSpec((None,) + s.shape[1:], lambda b: (b, 0, 0, 0)) for s in srcs]
    in_specs += [
        pl.BlockSpec((9, C), lambda b: (0, 0)),     # depthwise weights (f32)
        pl.BlockSpec((1, C), lambda b: (0, 0)),     # ln1 gamma
        pl.BlockSpec((1, C), lambda b: (0, 0)),     # ln1 beta
    ]
    h_pre, pooled = pl.pallas_call(
        partial(_dw_ln_hs_pool_kernel, view_plan=view_plan, out_hw=(Ho, Wo),
                strip_h=strip_h),
        out_shape=(jax.ShapeDtypeStruct((B, Ho, Wo, C), STAGE_DTYPE),
                   jax.ShapeDtypeStruct((B, 1, C), jnp.float32)),
        grid=(B,),
        in_specs=in_specs,
        out_specs=(pl.BlockSpec((None, Ho, Wo, C), lambda b: (b, 0, 0, 0)),
                   pl.BlockSpec((None, 1, C), lambda b: (b, 0, 0))),
        compiler_params=_cparams(("parallel",)),
    )(*srcs, p["dw_w"], p["ln1_g"], p["ln1_b"])
    return h_pre, pooled


# --------------------------------------------------------------------------- #
# Kernel 2b: batched Squeeze-Excitation FCs (all images in one matmul pair)
# --------------------------------------------------------------------------- #
def _se_kernel(pool_ref, w1_ref, b1_ref, w2_ref, b2_ref, o_ref):
    pooled = pool_ref[:, 0, :].astype(jnp.bfloat16)                 # (B, C)
    s = jnp.dot(pooled, w1_ref[...], preferred_element_type=jnp.float32) + b1_ref[...]
    s = jnp.maximum(s, 0.0)                                         # ReLU
    s = jnp.dot(s.astype(jnp.bfloat16), w2_ref[...],
                preferred_element_type=jnp.float32) + b2_ref[...]
    o_ref[:, 0, :] = _hardsigmoid(s)


def se_pallas(pooled, p):
    B, _, C = pooled.shape
    cs = p["se_w1"].shape[1]
    return pl.pallas_call(
        _se_kernel,
        out_shape=jax.ShapeDtypeStruct((B, 1, C), jnp.float32),
        grid=(1,),
        in_specs=[
            pl.BlockSpec((B, 1, C), lambda i: (0, 0, 0)),
            pl.BlockSpec((C, cs), lambda i: (0, 0)),
            pl.BlockSpec((1, cs), lambda i: (0, 0)),
            pl.BlockSpec((cs, C), lambda i: (0, 0)),
            pl.BlockSpec((1, C), lambda i: (0, 0)),
        ],
        out_specs=pl.BlockSpec((B, 1, C), lambda i: (0, 0, 0)),
        compiler_params=_cparams(("arbitrary",)),
    )(pooled, p["se_w1"], p["se_b1"], p["se_w2"], p["se_b2"])


# --------------------------------------------------------------------------- #
# Kernel 2c: (SE scale) * h -> 1x1 projection (bf16 MXU) -> LN [-> + residual]
#   grid = (B, row-tiles-per-image): pipelined, megacore-parallel.
# --------------------------------------------------------------------------- #
def _pw_ln_kernel(*args, residual):
    if residual:
        h_ref, sc_ref, res_ref, pw_ref, g2_ref, b2_ref, o_ref = args
    else:
        h_ref, sc_ref, pw_ref, g2_ref, b2_ref, o_ref = args
    hs = (h_ref[...].astype(jnp.float32) * sc_ref[...]).astype(jnp.bfloat16)
    p = jnp.dot(hs, pw_ref[...], preferred_element_type=jnp.float32)
    mu = jnp.mean(p, axis=-1, keepdims=True)
    var = jnp.mean(jnp.square(p - mu), axis=-1, keepdims=True)
    p = (p - mu) * lax.rsqrt(var + EPS) * g2_ref[...] + b2_ref[...]
    if residual:
        p = p + res_ref[...].astype(jnp.float32)
    o_ref[...] = p.astype(o_ref.dtype)


def pw_ln_pallas(h_pre, scale, x_res, p, out_dtype):
    B, Ho, Wo, C = h_pre.shape
    HW = Ho * Wo
    t = _divisor_tile(HW, cap=512)
    residual = x_res is not None
    # TODO(synk): for very large C (>~4096) N-tile pw_w with an accumulator scratch
    # (LN needs the full output row) to keep the weight slice small.
    operands = [h_pre.reshape(B, HW, C), scale]
    in_specs = [pl.BlockSpec((None, t, C), lambda b, i: (b, i, 0)),
                pl.BlockSpec((None, 1, C), lambda b, i: (b, 0, 0))]
    if residual:
        operands.append(x_res.reshape(B, HW, C))
        in_specs.append(pl.BlockSpec((None, t, C), lambda b, i: (b, i, 0)))
    operands += [p["pw_w"], p["ln2_g"], p["ln2_b"]]
    in_specs += [pl.BlockSpec((C, C), lambda b, i: (0, 0)),
                 pl.BlockSpec((1, C), lambda b, i: (0, 0)),
                 pl.BlockSpec((1, C), lambda b, i: (0, 0))]
    out = pl.pallas_call(
        partial(_pw_ln_kernel, residual=residual),
        out_shape=jax.ShapeDtypeStruct((B, HW, C), out_dtype),
        grid=(B, HW // t),
        in_specs=in_specs,
        out_specs=pl.BlockSpec((None, t, C), lambda b, i: (b, i, 0)),
        compiler_params=_cparams(("parallel", "parallel")),
    )(*operands)
    return out.reshape(B, Ho, Wo, C)


def inverted_residual(x_nhwc, p, stride, residual, out_dtype):
    """One MobileNetV3 InvertedResidual (expand ratio 1, SE, HS), NHWC."""
    assert (not residual) or stride == 1
    h_pre, pooled = dw_ln_hs_pool_pallas(x_nhwc, p, stride)
    scale = se_pallas(pooled, p)                          # (B, 1, C) f32
    return pw_ln_pallas(h_pre, scale, x_nhwc if residual else None, p, out_dtype)


# --------------------------------------------------------------------------- #
# Parameter init (deterministic; matmul weights stored once in bf16)
# --------------------------------------------------------------------------- #
def init_params(key, inc, ouc):
    assert ouc % 8 == 0, "hidden_size must be divisible by 8"
    cs = _make_divisible(ouc // 4, 8)      # SE squeeze channels
    ks = jax.random.split(key, 6)

    def nrm(k, shape, scale=0.05, dtype=jnp.float32):
        return (scale * jax.random.normal(k, shape)).astype(dtype)

    params = {
        "w1": nrm(ks[0], (inc, ouc), dtype=jnp.bfloat16),
        "b1": nrm(ks[1], (1, ouc)),
        "w2": nrm(ks[2], (ouc, ouc), dtype=jnp.bfloat16),
        "b2": nrm(ks[3], (1, ouc)),
        "blocks": [],
    }
    for i in range(2):
        kb = jax.random.split(ks[4 + i], 6)
        params["blocks"].append({
            "dw_w": nrm(kb[0], (9, ouc), 0.1),                    # (kh*3+kw, C) f32
            "ln1_g": jnp.ones((1, ouc), jnp.float32),
            "ln1_b": jnp.zeros((1, ouc), jnp.float32),
            "se_w1": nrm(kb[1], (ouc, cs), 0.1, jnp.bfloat16),
            "se_b1": nrm(kb[2], (1, cs), 0.1),
            "se_w2": nrm(kb[3], (cs, ouc), 0.1, jnp.bfloat16),
            "se_b2": nrm(kb[4], (1, ouc), 0.1),
            "pw_w": nrm(kb[5], (ouc, ouc), 0.1, jnp.bfloat16),
            "ln2_g": jnp.ones((1, ouc), jnp.float32),
            "ln2_b": jnp.zeros((1, ouc), jnp.float32),
        })
    return params


# --------------------------------------------------------------------------- #
# LDPBlock forward
# --------------------------------------------------------------------------- #
def ldp_block_forward(x, params, ouc):
    B, T, inc = x.shape
    h = int(math.sqrt(T))
    # mlp: Identity -> Linear -> GELU -> Linear (token-major 2-D tiles)
    y = mlp_pallas(x.reshape(B * T, inc), params["w1"], params["b1"],
                   params["w2"], params["b2"], out_dtype=STAGE_DTYPE)
    # torch: permute(0,2,1).reshape(B,C,h,h) (NCHW)  ==  NHWC (B,h,h,C) here
    feat = y.reshape(B, h, h, ouc)
    # mb_block: InvertedResidual stride 1 (+residual), then stride 2
    feat = inverted_residual(feat, params["blocks"][0], stride=1, residual=True,
                             out_dtype=STAGE_DTYPE)
    feat = inverted_residual(feat, params["blocks"][1], stride=2, residual=False,
                             out_dtype=x.dtype)
    # torch: flatten(2).permute(0,2,1) -> (B, Ho*Wo, C); NHWC already matches
    Bo, Ho, Wo, C = feat.shape
    return feat.reshape(Bo, Ho * Wo, C)


if __name__ == "__main__":
    B, T, INC, OUC = 2, 256, 24, 32   # mm_hidden_size=24, hidden_size=32, 16x16 tokens
    key = jax.random.PRNGKey(0)
    kx, kp = jax.random.split(key)
    x = jax.random.normal(kx, (B, T, INC), dtype=jnp.float32)
    params = init_params(kp, INC, OUC)

    fwd = jax.jit(partial(ldp_block_forward, ouc=OUC))
    out = jax.block_until_ready(fwd(x, params))

    h = int(math.sqrt(T))
    h2 = (h + 2 - 3) // 2 + 1          # conv3x3, pad=1, stride=2
    assert out.shape == (B, h2 * h2, OUC), out.shape
    assert out.dtype == jnp.float32
    assert bool(jnp.all(jnp.isfinite(out)))
    print("KERNEL_OK")
</pallas_src>

<mosaic_0001>
module attributes {stable_mosaic.version = 11 : i64} {
  func.func @_mlp_kernel(%arg0: i32, %arg1: i32, %arg2: memref<128x24xf32, #tpu.memory_space<vmem>>, %arg3: memref<24x32xbf16, #tpu.memory_space<vmem>>, %arg4: memref<1x32xf32, #tpu.memory_space<vmem>>, %arg5: memref<32x32xbf16, #tpu.memory_space<vmem>>, %arg6: memref<1x32xf32, #tpu.memory_space<vmem>>, %arg7: memref<128x32xbf16, #tpu.memory_space<vmem>>, %arg8: memref<128x32xbf16, #tpu.memory_space<vmem>>) attributes {dimension_semantics = [#tpu.dimension_semantics<parallel>, #tpu.dimension_semantics<arbitrary>], iteration_bounds = array<i64: 4, 1>, scalar_prefetch = 0 : i64, scratch_operands = 1 : i64, tpu.core_type = #tpu.core_type<tc>, window_params = [{transform_indices = @transform_0, window_bounds = array<i64: 128, 24>}, {pipeline_mode = #tpu.pipeline_mode<synchronous>, transform_indices = @transform_1, window_bounds = array<i64: 24, 32>}, {pipeline_mode = #tpu.pipeline_mode<synchronous>, transform_indices = @transform_2, window_bounds = array<i64: 1, 32>}, {transform_indices = @transform_3, window_bounds = array<i64: 32, 32>}, {transform_indices = @transform_4, window_bounds = array<i64: 1, 32>}, {transform_indices = @transform_5, window_bounds = array<i64: 128, 32>}]} {
    %c0_i32 = arith.constant 0 : i32
    %0 = arith.cmpi eq, %arg1, %c0_i32 : i32
    %1 = arith.extui %0 : i1 to i32
    %c0_i32_0 = arith.constant 0 : i32
    %2 = arith.cmpi ne, %1, %c0_i32_0 : i32
    scf.if %2 {
      %c0_8 = arith.constant 0 : index
      %c0_9 = arith.constant 0 : index
      %11 = vector.load %arg2[%c0_8, %c0_9] : memref<128x24xf32, #tpu.memory_space<vmem>>, vector<128x24xf32>
      %12 = arith.truncf %11 : vector<128x24xf32> to vector<128x24xbf16>
      %c0_10 = arith.constant 0 : index
      %c0_11 = arith.constant 0 : index
      %13 = vector.load %arg3[%c0_10, %c0_11] : memref<24x32xbf16, #tpu.memory_space<vmem>>, vector<24x32xbf16>
      %cst_12 = arith.constant dense<0.000000e+00> : vector<128x32xf32>
      %14 = tpu.matmul %12, %13, %cst_12 {dimension_numbers = #tpu.dot_dimension_numbers<[1], [0], [0], [1], [0, 0, 1, 1], [], []>} : vector<128x24xbf16>, vector<24x32xbf16>, vector<128x32xf32> -> vector<128x32xf32>
      %c0_13 = arith.constant 0 : index
      %c0_14 = arith.constant 0 : index
      %15 = vector.load %arg4[%c0_13, %c0_14] : memref<1x32xf32, #tpu.memory_space<vmem>>, vector<1x32xf32>
      %16 = vector.broadcast %15 : vector<1x32xf32> to vector<128x32xf32>
      %17 = arith.addf %14, %16 : vector<128x32xf32>
      %cst_15 = arith.constant 5.000000e-01 : f32
      %18 = vector.broadcast %cst_15 : f32 to vector<128x32xf32>
      %19 = arith.mulf %18, %17 : vector<128x32xf32>
      %cst_16 = arith.constant 4.471500e-02 : f32
      %20 = vector.broadcast %cst_16 : f32 to vector<128x32xf32>
      %21 = arith.mulf %20, %17 : vector<128x32xf32>
      %22 = arith.mulf %21, %17 : vector<128x32xf32>
      %23 = arith.mulf %22, %17 : vector<128x32xf32>
      %24 = arith.addf %17, %23 : vector<128x32xf32>
      %cst_17 = arith.constant 0.797884583 : f32
      %25 = vector.broadcast %cst_17 : f32 to vector<128x32xf32>
      %26 = arith.mulf %25, %24 : vector<128x32xf32>
      %27 = math.tanh %26 : vector<128x32xf32>
      %cst_18 = arith.constant 1.000000e+00 : f32
      %28 = vector.broadcast %cst_18 : f32 to vector<128x32xf32>
      %29 = arith.addf %28, %27 : vector<128x32xf32>
      %30 = arith.mulf %19, %29 : vector<128x32xf32>
      %31 = arith.truncf %30 : vector<128x32xf32> to vector<128x32xbf16>
      %c0_19 = arith.constant 0 : index
      %c0_20 = arith.constant 0 : index
      %32 = vector.load %arg8[%c0_19, %c0_20] : memref<128x32xbf16, #tpu.memory_space<vmem>>, vector<128x32xbf16>
      tpu.vector_store %arg8[%c0_19, %c0_20], %31 {strides = array<i32>} : memref<128x32xbf16, #tpu.memory_space<vmem>>, vector<128x32xbf16>,
    } else {
    }
    %c0 = arith.constant 0 : index
    %c0_1 = arith.constant 0 : index
    %3 = vector.load %arg8[%c0, %c0_1] : memref<128x32xbf16, #tpu.memory_space<vmem>>, vector<128x32xbf16>
    %c0_2 = arith.constant 0 : index
    %c0_3 = arith.constant 0 : index
    %4 = vector.load %arg5[%c0_2, %c0_3] : memref<32x32xbf16, #tpu.memory_space<vmem>>, vector<32x32xbf16>
    %cst = arith.constant dense<0.000000e+00> : vector<128x32xf32>
    %5 = tpu.matmul %3, %4, %cst {dimension_numbers = #tpu.dot_dimension_numbers<[1], [0], [0], [1], [0, 0, 1, 1], [], []>} : vector<128x32xbf16>, vector<32x32xbf16>, vector<128x32xf32> -> vector<128x32xf32>
    %c0_4 = arith.constant 0 : index
    %c0_5 = arith.constant 0 : index
    %6 = vector.load %arg6[%c0_4, %c0_5] : memref<1x32xf32, #tpu.memory_space<vmem>>, vector<1x32xf32>
    %7 = vector.broadcast %6 : vector<1x32xf32> to vector<128x32xf32>
    %8 = arith.addf %5, %7 : vector<128x32xf32>
    %9 = arith.truncf %8 : vector<128x32xf32> to vector<128x32xbf16>
    %c0_6 = arith.constant 0 : index
    %c0_7 = arith.constant 0 : index
    %10 = vector.load %arg7[%c0_6, %c0_7] : memref<128x32xbf16, #tpu.memory_space<vmem>>, vector<128x32xbf16>
    tpu.vector_store %arg7[%c0_6, %c0_7], %9 {strides = array<i32>} : memref<128x32xbf16, #tpu.memory_space<vmem>>, vector<128x32xbf16>,
    return
  }
  func.func @transform_0(%arg0: i32, %arg1: i32) -> (i32, i32) {
    %c0_i32 = arith.constant 0 : i32
    %c0_i32_0 = arith.constant 0 : i32
    return %arg0, %c0_i32 : i32, i32
  }
  func.func @transform_1(%arg0: i32, %arg1: i32) -> (i32, i32) {
    %c0_i32 = arith.constant 0 : i32
    %c0_i32_0 = arith.constant 0 : i32
    %c0_i32_1 = arith.constant 0 : i32
    return %c0_i32, %c0_i32_0 : i32, i32
  }
  func.func @transform_2(%arg0: i32, %arg1: i32) -> (i32, i32) {
    %c0_i32 = arith.constant 0 : i32
    %c0_i32_0 = arith.constant 0 : i32
    %c0_i32_1 = arith.constant 0 : i32
    return %c0_i32, %c0_i32_0 : i32, i32
  }
  func.func @transform_3(%arg0: i32, %arg1: i32) -> (i32, i32) {
    %c0_i32 = arith.constant 0 : i32
    %c0_i32_0 = arith.constant 0 : i32
    return %c0_i32, %arg1 : i32, i32
  }
  func.func @transform_4(%arg0: i32, %arg1: i32) -> (i32, i32) {
    %c0_i32 = arith.constant 0 : i32
    %c0_i32_0 = arith.constant 0 : i32
    return %c0_i32, %arg1 : i32, i32
  }
  func.func @transform_5(%arg0: i32, %arg1: i32) -> (i32, i32) {
    %c0_i32 = arith.constant 0 : i32
    return %arg0, %arg1 : i32, i32
  }
}

module attributes {stable_mosaic.version = 11 : i64} {
  func.func @_dw_ln_hs_pool_kernel(%arg0: i32, %arg1: memref<1x18x18x32xbf16, #tpu.memory_space<vmem>>, %arg2: memref<9x32xf32, #tpu.memory_space<vmem>>, %arg3: memref<1x32xf32, #tpu.memory_space<vmem>>, %arg4: memref<1x32xf32, #tpu.memory_space<vmem>>, %arg5: memref<1x16x16x32xbf16, #tpu.memory_space<vmem>>, %arg6: memref<1x1x32xf32, #tpu.memory_space<vmem>>) attributes {dimension_semantics = [#tpu.dimension_semantics<parallel>], iteration_bounds = array<i64: 2>, scalar_prefetch = 0 : i64, scratch_operands = 0 : i64, tpu.core_type = #tpu.core_type<tc>, window_params = [{transform_indices = @transform_0, window_bounds = array<i64: 1, 18, 18, 32>}, {pipeline_mode = #tpu.pipeline_mode<synchronous>, transform_indices = @transform_1, window_bounds = array<i64: 9, 32>}, {pipeline_mode = #tpu.pipeline_mode<synchronous>, transform_indices = @transform_2, window_bounds = array<i64: 1, 32>}, {pipeline_mode = #tpu.pipeline_mode<synchronous>, transform_indices = @transform_3, window_bounds = array<i64: 1, 32>}, {transform_indices = @transform_4, window_bounds = array<i64: 1, 16, 16, 32>}, {transform_indices = @transform_5, window_bounds = array<i64: 1, 1, 32>}]} {
    %c0 = arith.constant 0 : index
    %c0_0 = arith.constant 0 : index
    %0 = vector.load %arg2[%c0, %c0_0] : memref<9x32xf32, #tpu.memory_space<vmem>>, vector<9x32xf32>
    %c0_1 = arith.constant 0 : index
    %c0_2 = arith.constant 0 : index
    %1 = vector.load %arg3[%c0_1, %c0_2] : memref<1x32xf32, #tpu.memory_space<vmem>>, vector<1x32xf32>
    %2 = vector.shape_cast %1 : vector<1x32xf32> to vector<1x1x32xf32>
    %c0_3 = arith.constant 0 : index
    %c0_4 = arith.constant 0 : index
    %3 = vector.load %arg4[%c0_3, %c0_4] : memref<1x32xf32, #tpu.memory_space<vmem>>, vector<1x32xf32>
    %4 = vector.shape_cast %3 : vector<1x32xf32> to vector<1x1x32xf32>
    %cst = arith.constant 0.000000e+00 : f32
    %5 = vector.broadcast %cst : f32 to vector<1x32xf32>
    %c0_5 = arith.constant 0 : index
    %c0_6 = arith.constant 0 : index
    %c0_7 = arith.constant 0 : index
    %6 = vector.load %arg6[%c0_5, %c0_6, %c0_7] : memref<1x1x32xf32, #tpu.memory_space<vmem>>, vector<1x1x32xf32>
    %7 = vector.shape_cast %6 : vector<1x1x32xf32> to vector<1x32xf32>
    %8 = vector.shape_cast %5 : vector<1x32xf32> to vector<1x1x32xf32>
    tpu.vector_store %arg6[%c0_5, %c0_6, %c0_7], %8 {strides = array<i32>} : memref<1x1x32xf32, #tpu.memory_space<vmem>>, vector<1x1x32xf32>,
    %c0_i32 = arith.constant 0 : i32
    %c8_i32 = arith.constant 8 : i32
    %9 = arith.muli %c0_i32, %c8_i32 : i32
    %10 = tpu.assume_multiple %9, 8 : i32
    %c0_i32_8 = arith.constant 0 : i32
    %11 = arith.addi %10, %c0_i32_8 : i32
    %c0_9 = arith.constant 0 : index
    %12 = arith.index_cast %11 : i32 to index
    %c0_10 = arith.constant 0 : index
    %c0_11 = arith.constant 0 : index
    %13 = vector.load %arg1[%c0_9, %12, %c0_10, %c0_11] : memref<1x18x18x32xbf16, #tpu.memory_space<vmem>>, vector<1x8x16x32xbf16>
    %14 = vector.shape_cast %13 : vector<1x8x16x32xbf16> to vector<8x16x32xbf16>
    %15 = arith.extf %14 : vector<8x16x32xbf16> to vector<8x16x32xf32>
    %16 = vector.extract_strided_slice %0 {offsets = [0, 0], sizes = [1, 32], strides = [1, 1]} : vector<9x32xf32> to vector<1x32xf32>
    %17 = vector.shape_cast %16 : vector<1x32xf32> to vector<1x1x32xf32>
    %18 = vector.broadcast %17 : vector<1x1x32xf32> to vector<8x16x32xf32>
    %19 = arith.mulf %15, %18 : vector<8x16x32xf32>
    %c0_i32_12 = arith.constant 0 : i32
    %20 = arith.addi %10, %c0_i32_12 : i32
    %c0_13 = arith.constant 0 : index
    %21 = arith.index_cast %20 : i32 to index
    %c1 = arith.constant 1 : index
    %c0_14 = arith.constant 0 : index
    %22 = vector.load %arg1[%c0_13, %21, %c1, %c0_14] : memref<1x18x18x32xbf16, #tpu.memory_space<vmem>>, vector<1x8x16x32xbf16>
    %23 = vector.shape_cast %22 : vector<1x8x16x32xbf16> to vector<8x16x32xbf16>
    %24 = arith.extf %23 : vector<8x16x32xbf16> to vector<8x16x32xf32>
    %25 = vector.extract_strided_slice %0 {offsets = [1, 0], sizes = [1, 32], strides = [1, 1]} : vector<9x32xf32> to vector<1x32xf32>
    %26 = vector.shape_cast %25 : vector<1x32xf32> to vector<1x1x32xf32>
    %27 = vector.broadcast %26 : vector<1x1x32xf32> to vector<8x16x32xf32>
    %28 = arith.mulf %24, %27 : vector<8x16x32xf32>
    %c0_i32_15 = arith.constant 0 : i32
    %29 = arith.addi %10, %c0_i32_15 : i32
    %c0_16 = arith.constant 0 : index
    %30 = arith.index_cast %29 : i32 to index
    %c2 = arith.constant 2 : index
    %c0_17 = arith.constant 0 : index
    %31 = vector.load %arg1[%c0_16, %30, %c2, %c0_17] : memref<1x18x18x32xbf16, #tpu.memory_space<vmem>>, vector<1x8x16x32xbf16>
    %32 = vector.shape_cast %31 : vector<1x8x16x32xbf16> to vector<8x16x32xbf16>
    %33 = arith.extf %32 : vector<8x16x32xbf16> to vector<8x16x32xf32>
    %34 = vector.extract_strided_slice %0 {offsets = [2, 0], sizes = [1, 32], strides = [1, 1]} : vector<9x32xf32> to vector<1x32xf32>
    %35 = vector.shape_cast %34 : vector<1x32xf32> to vector<1x1x32xf32>
    %36 = vector.broadcast %35 : vector<1x1x32xf32> to vector<8x16x32xf32>
    %37 = arith.mulf %33, %36 : vector<8x16x32xf32>
    %c1_i32 = arith.constant 1 : i32
    %38 = arith.addi %10, %c1_i32 : i32
    %c0_18 = arith.constant 0 : index
    %39 = arith.index_cast %38 : i32 to index
    %c0_19 = arith.constant 0 : index
    %c0_20 = arith.constant 0 : index
    %40 = vector.load %arg1[%c0_18, %39, %c0_19, %c0_20] : memref<1x18x18x32xbf16, #tpu.memory_space<vmem>>, vector<1x8x16x32xbf16>
    %41 = vector.shape_cast %40 : vector<1x8x16x32xbf16> to vector<8x16x32xbf16>
    %42 = arith.extf %41 : vector<8x16x32xbf16> to vector<8x16x32xf32>
    %43 = vector.extract_strided_slice %0 {offsets = [3, 0], sizes = [1, 32], strides = [1, 1]} : vector<9x32xf32> to vector<1x32xf32>
    %44 = vector.shape_cast %43 : vector<1x32xf32> to vector<1x1x32xf32>
    %45 = vector.broadcast %44 : vector<1x1x32xf32> to vector<8x16x32xf32>
    %46 = arith.mulf %42, %45 : vector<8x16x32xf32>
    %c1_i32_21 = arith.constant 1 : i32
    %47 = arith.addi %10, %c1_i32_21 : i32
    %c0_22 = arith.constant 0 : index
    %48 = arith.index_cast %47 : i32 to index
    %c1_23 = arith.constant 1 : index
    %c0_24 = arith.constant 0 : index
    %49 = vector.load %arg1[%c0_22, %48, %c1_23, %c0_24] : memref<1x18x18x32xbf16, #tpu.memory_space<vmem>>, vector<1x8x16x32xbf16>
    %50 = vector.shape_cast %49 : vector<1x8x16x32xbf16> to vector<8x16x32xbf16>
    %51 = arith.extf %50 : vector<8x16x32xbf16> to vector<8x16x32xf32>
    %52 = vector.extract_strided_slice %0 {offsets = [4, 0], sizes = [1, 32], strides = [1, 1]} : vector<9x32xf32> to vector<1x32xf32>
    %53 = vector.shape_cast %52 : vector<1x32xf32> to vector<1x1x32xf32>
    %54 = vector.broadcast %53 : vector<1x1x32xf32> to vector<8x16x32xf32>
    %55 = arith.mulf %51, %54 : vector<8x16x32xf32>
    %c1_i32_25 = arith.constant 1 : i32
    %56 = arith.addi %10, %c1_i32_25 : i32
    %c0_26 = arith.constant 0 : index
    %57 = arith.index_cast %56 : i32 to index
    %c2_27 = arith.constant 2 : index
    %c0_28 = arith.constant 0 : index
    %58 = vector.load %arg1[%c0_26, %57, %c2_27, %c0_28] : memref<1x18x18x32xbf16, #tpu.memory_space<vmem>>, vector<1x8x16x32xbf16>
    %59 = vector.shape_cast %58 : vector<1x8x16x32xbf16> to vector<8x16x32xbf16>
    %60 = arith.extf %59 : vector<8x16x32xbf16> to vector<8x16x32xf32>
    %61 = vector.extract_strided_slice %0 {offsets = [5, 0], sizes = [1, 32], strides = [1, 1]} : vector<9x32xf32> to vector<1x32xf32>
    %62 = vector.shape_cast %61 : vector<1x32xf32> to vector<1x1x32xf32>
    %63 = vector.broadcast %62 : vector<1x1x32xf32> to vector<8x16x32xf32>
    %64 = arith.mulf %60, %63 : vector<8x16x32xf32>
    %c2_i32 = arith.constant 2 : i32
    %65 = arith.addi %10, %c2_i32 : i32
    %c0_29 = arith.constant 0 : index
    %66 = arith.index_cast %65 : i32 to index
    %c0_30 = arith.constant 0 : index
    %c0_31 = arith.constant 0 : index
    %67 = vector.load %arg1[%c0_29, %66, %c0_30, %c0_31] : memref<1x18x18x32xbf16, #tpu.memory_space<vmem>>, vector<1x8x16x32xbf16>
    %68 = vector.shape_cast %67 : vector<1x8x16x32xbf16> to vector<8x16x32xbf16>
    %69 = arith.extf %68 : vector<8x16x32xbf16> to vector<8x16x32xf32>
    %70 = vector.extract_strided_slice %0 {offsets = [6, 0], sizes = [1, 32], strides = [1, 1]} : vector<9x32xf32> to vector<1x32xf32>
    %71 = vector.shape_cast %70 : vector<1x32xf32> to vector<1x1x32xf32>
    %72 = vector.broadcast %71 : vector<1x1x32xf32> to vector<8x16x32xf32>
    %73 = arith.mulf %69, %72 : vector<8x16x32xf32>
    %c2_i32_32 = arith.constant 2 : i32
    %74 = arith.addi %10, %c2_i32_32 : i32
    %c0_33 = arith.constant 0 : index
    %75 = arith.index_cast %74 : i32 to index
    %c1_34 = arith.constant 1 : index
    %c0_35 = arith.constant 0 : index
    %76 = vector.load %arg1[%c0_33, %75, %c1_34, %c0_35] : memref<1x18x18x32xbf16, #tpu.memory_space<vmem>>, vector<1x8x16x32xbf16>
    %77 = vector.shape_cast %76 : vector<1x8x16x32xbf16> to vector<8x16x32xbf16>
    %78 = arith.extf %77 : vector<8x16x32xbf16> to vector<8x16x32xf32>
    %79 = vector.extract_strided_slice %0 {offsets = [7, 0], sizes = [1, 32], strides = [1, 1]} : vector<9x32xf32> to vector<1x32xf32>
    %80 = vector.shape_cast %79 : vector<1x32xf32> to vector<1x1x32xf32>
    %81 = vector.broadcast %80 : vector<1x1x32xf32> to vector<8x16x32xf32>
    %82 = arith.mulf %78, %81 : vector<8x16x32xf32>
    %c2_i32_36 = arith.constant 2 : i32
    %83 = arith.addi %10, %c2_i32_36 : i32
    %c0_37 = arith.constant 0 : index
    %84 = arith.index_cast %83 : i32 to index
    %c2_38 = arith.constant 2 : index
    %c0_39 = arith.constant 0 : index
    %85 = vector.load %arg1[%c0_37, %84, %c2_38, %c0_39] : memref<1x18x18x32xbf16, #tpu.memory_space<vmem>>, vector<1x8x16x32xbf16>
    %86 = vector.shape_cast %85 : vector<1x8x16x32xbf16> to vector<8x16x32xbf16>
    %87 = arith.extf %86 : vector<8x16x32xbf16> to vector<8x16x32xf32>
    %88 = vector.extract_strided_slice %0 {offsets = [8, 0], sizes = [1, 32], strides = [1, 1]} : vector<9x32xf32> to vector<1x32xf32>
    %89 = vector.shape_cast %88 : vector<1x32xf32> to vector<1x1x32xf32>
    %90 = vector.broadcast %89 : vector<1x1x32xf32> to vector<8x16x32xf32>
    %91 = arith.mulf %87, %90 : vector<8x16x32xf32>
    %92 = arith.addf %19, %28 : vector<8x16x32xf32>
    %93 = arith.addf %37, %46 : vector<8x16x32xf32>
    %94 = arith.addf %55, %64 : vector<8x16x32xf32>
    %95 = arith.addf %73, %82 : vector<8x16x32xf32>
    %96 = arith.addf %92, %93 : vector<8x16x32xf32>
    %97 = arith.addf %94, %95 : vector<8x16x32xf32>
    %98 = arith.addf %96, %97 : vector<8x16x32xf32>
    %99 = arith.addf %98, %91 : vector<8x16x32xf32>
    %cst_40 = arith.constant dense<0.000000e+00> : vector<8x16xf32>
    %100 = vector.multi_reduction <add>, %99, %cst_40 [2] : vector<8x16x32xf32> to vector<8x16xf32>
    %101 = vector.shape_cast %100 : vector<8x16xf32> to vector<8x16x1xf32>
    %cst_41 = arith.constant 3.200000e+01 : f32
    %102 = vector.broadcast %cst_41 : f32 to vector<8x16x1xf32>
    %103 = arith.divf %101, %102 : vector<8x16x1xf32>
    %104 = vector.broadcast %103 : vector<8x16x1xf32> to vector<8x16x32xf32>
    %105 = arith.subf %99, %104 : vector<8x16x32xf32>
    %106 = arith.mulf %105, %105 : vector<8x16x32xf32>
    %cst_42 = arith.constant dense<0.000000e+00> : vector<8x16xf32>
    %107 = vector.multi_reduction <add>, %106, %cst_42 [2] : vector<8x16x32xf32> to vector<8x16xf32>
    %108 = vector.shape_cast %107 : vector<8x16xf32> to vector<8x16x1xf32>
    %cst_43 = arith.constant 3.200000e+01 : f32
    %109 = vector.broadcast %cst_43 : f32 to vector<8x16x1xf32>
    %110 = arith.divf %108, %109 : vector<8x16x1xf32>
    %111 = vector.broadcast %103 : vector<8x16x1xf32> to vector<8x16x32xf32>
    %112 = arith.subf %99, %111 : vector<8x16x32xf32>
    %cst_44 = arith.constant 9.99999974E-6 : f32
    %113 = vector.broadcast %cst_44 : f32 to vector<8x16x1xf32>
    %114 = arith.addf %110, %113 : vector<8x16x1xf32>
    %115 = math.rsqrt %114 : vector<8x16x1xf32>
    %116 = vector.broadcast %115 : vector<8x16x1xf32> to vector<8x16x32xf32>
    %117 = arith.mulf %112, %116 : vector<8x16x32xf32>
    %118 = vector.broadcast %2 : vector<1x1x32xf32> to vector<8x16x32xf32>
    %119 = arith.mulf %117, %118 : vector<8x16x32xf32>
    %120 = vector.broadcast %4 : vector<1x1x32xf32> to vector<8x16x32xf32>
    %121 = arith.addf %119, %120 : vector<8x16x32xf32>
    %cst_45 = arith.constant 3.000000e+00 : f32
    %122 = vector.broadcast %cst_45 : f32 to vector<8x16x32xf32>
    %123 = arith.addf %121, %122 : vector<8x16x32xf32>
    %cst_46 = arith.constant 0.000000e+00 : f32
    %cst_47 = arith.constant 6.000000e+00 : f32
    %124 = vector.broadcast %cst_46 : f32 to vector<8x16x32xf32>
    %125 = arith.maximumf %124, %123 : vector<8x16x32xf32>
    %126 = vector.broadcast %cst_47 : f32 to vector<8x16x32xf32>
    %127 = arith.minimumf %126, %125 : vector<8x16x32xf32>
    %128 = arith.mulf %121, %127 : vector<8x16x32xf32>
    %cst_48 = arith.constant 0.166666672 : f32
    %129 = vector.broadcast %cst_48 : f32 to vector<8x16x32xf32>
    %130 = arith.mulf %128, %129 : vector<8x16x32xf32>
    %131 = arith.truncf %130 : vector<8x16x32xf32> to vector<8x16x32xbf16>
    %c0_49 = arith.constant 0 : index
    %132 = arith.index_cast %10 : i32 to index
    %c0_50 = arith.constant 0 : index
    %c0_51 = arith.constant 0 : index
    %133 = vector.load %arg5[%c0_49, %132, %c0_50, %c0_51] : memref<1x16x16x32xbf16, #tpu.memory_space<vmem>>, vector<1x8x16x32xbf16>
    %134 = vector.shape_cast %133 : vector<1x8x16x32xbf16> to vector<8x16x32xbf16>
    %135 = vector.shape_cast %131 : vector<8x16x32xbf16> to vector<1x8x16x32xbf16>
    tpu.vector_store %arg5[%c0_49, %132, %c0_50, %c0_51], %135 {strides = array<i32>} : memref<1x16x16x32xbf16, #tpu.memory_space<vmem>>, vector<1x8x16x32xbf16>,
    %c0_52 = arith.constant 0 : index
    %c0_53 = arith.constant 0 : index
    %c0_54 = arith.constant 0 : index
    %136 = vector.load %arg6[%c0_52, %c0_53, %c0_54] : memref<1x1x32xf32, #tpu.memory_space<vmem>>, vector<1x1x32xf32>
    %137 = vector.shape_cast %136 : vector<1x1x32xf32> to vector<1x32xf32>
    %cst_55 = arith.constant dense<0.000000e+00> : vector<16x32xf32>
    %138 = vector.multi_reduction <add>, %130, %cst_55 [0] : vector<8x16x32xf32> to vector<16x32xf32>
    %cst_56 = arith.constant dense<0.000000e+00> : vector<32xf32>
    %139 = vector.multi_reduction <add>, %138, %cst_56 [0] : vector<16x32xf32> to vector<32xf32>
    %140 = vector.shape_cast %139 : vector<32xf32> to vector<1x32xf32>
    %cst_57 = arith.constant 3.906250e-03 : f32
    %141 = vector.broadcast %cst_57 : f32 to vector<1x32xf32>
    %142 = arith.mulf %140, %141 : vector<1x32xf32>
    %143 = arith.addf %137, %142 : vector<1x32xf32>
    %c0_58 = arith.constant 0 : index
    %c0_59 = arith.constant 0 : index
    %c0_60 = arith.constant 0 : index
    %144 = vector.load %arg6[%c0_58, %c0_59, %c0_60] : memref<1x1x32xf32, #tpu.memory_space<vmem>>, vector<1x1x32xf32>
    %145 = vector.shape_cast %144 : vector<1x1x32xf32> to vector<1x32xf32>
    %146 = vector.shape_cast %143 : vector<1x32xf32> to vector<1x1x32xf32>
    tpu.vector_store %arg6[%c0_58, %c0_59, %c0_60], %146 {strides = array<i32>} : memref<1x1x32xf32, #tpu.memory_space<vmem>>, vector<1x1x32xf32>,
    %c1_i32_61 = arith.constant 1 : i32
    %c8_i32_62 = arith.constant 8 : i32
    %147 = arith.muli %c1_i32_61, %c8_i32_62 : i32
    %148 = tpu.assume_multiple %147, 8 : i32
    %c0_i32_63 = arith.constant 0 : i32
    %149 = arith.addi %148, %c0_i32_63 : i32
    %c0_64 = arith.constant 0 : index
    %150 = arith.index_cast %149 : i32 to index
    %c0_65 = arith.constant 0 : index
    %c0_66 = arith.constant 0 : index
    %151 = vector.load %arg1[%c0_64, %150, %c0_65, %c0_66] : memref<1x18x18x32xbf16, #tpu.memory_space<vmem>>, vector<1x8x16x32xbf16>
    %152 = vector.shape_cast %151 : vector<1x8x16x32xbf16> to vector<8x16x32xbf16>
    %153 = arith.extf %152 : vector<8x16x32xbf16> to vector<8x16x32xf32>
    %154 = vector.extract_strided_slice %0 {offsets = [0, 0], sizes = [1, 32], strides = [1, 1]} : vector<9x32xf32> to vector<1x32xf32>
    %155 = vector.shape_cast %154 : vector<1x32xf32> to vector<1x1x32xf32>
    %156 = vector.broadcast %155 : vector<1x1x32xf32> to vector<8x16x32xf32>
    %157 = arith.mulf %153, %156 : vector<8x16x32xf32>
    %c0_i32_67 = arith.constant 0 : i32
    %158 = arith.addi %148, %c0_i32_67 : i32
    %c0_68 = arith.constant 0 : index
    %159 = arith.index_cast %158 : i32 to index
    %c1_69 = arith.constant 1 : index
    %c0_70 = arith.constant 0 : index
    %160 = vector.load %arg1[%c0_68, %159, %c1_69, %c0_70] : memref<1x18x18x32xbf16, #tpu.memory_space<vmem>>, vector<1x8x16x32xbf16>
    %161 = vector.shape_cast %160 : vector<1x8x16x32xbf16> to vector<8x16x32xbf16>
    %162 = arith.extf %161 : vector<8x16x32xbf16> to vector<8x16x32xf32>
    %163 = vector.extract_strided_slice %0 {offsets = [1, 0], sizes = [1, 32], strides = [1, 1]} : vector<9x32xf32> to vector<1x32xf32>
    %164 = vector.shape_cast %163 : vector<1x32xf32> to vector<1x1x32xf32>
    %165 = vector.broadcast %164 : vector<1x1x32xf32> to vector<8x16x32xf32>
    %166 = arith.mulf %162, %165 : vector<8x16x32xf32>
    %c0_i32_71 = arith.constant 0 : i32
    %167 = arith.addi %148, %c0_i32_71 : i32
    %c0_72 = arith.constant 0 : index
    %168 = arith.index_cast %167 : i32 to index
    %c2_73 = arith.constant 2 : index
    %c0_74 = arith.constant 0 : index
    %169 = vector.load %arg1[%c0_72, %168, %c2_73, %c0_74] : memref<1x18x18x32xbf16, #tpu.memory_space<vmem>>, vector<1x8x16x32xbf16>
    %170 = vector.shape_cast %169 : vector<1x8x16x32xbf16> to vector<8x16x32xbf16>
    %171 = arith.extf %170 : vector<8x16x32xbf16> to vector<8x16x32xf32>
    %172 = vector.extract_strided_slice %0 {offsets = [2, 0], sizes = [1, 32], strides = [1, 1]} : vector<9x32xf32> to vector<1x32xf32>
    %173 = vector.shape_cast %172 : vector<1x32xf32> to vector<1x1x32xf32>
    %174 = vector.broadcast %173 : vector<1x1x32xf32> to vector<8x16x32xf32>
    %175 = arith.mulf %171, %174 : vector<8x16x32xf32>
    %c1_i32_75 = arith.constant 1 : i32
    %176 = arith.addi %148, %c1_i32_75 : i32
    %c0_76 = arith.constant 0 : index
    %177 = arith.index_cast %176 : i32 to index
    %c0_77 = arith.constant 0 : index
    %c0_78 = arith.constant 0 : index
    %178 = vector.load %arg1[%c0_76, %177, %c0_77, %c0_78] : memref<1x18x18x32xbf16, #tpu.memory_space<vmem>>, vector<1x8x16x32xbf16>
    %179 = vector.shape_cast %178 : vector<1x8x16x32xbf16> to vector<8x16x32xbf16>
    %180 = arith.extf %179 : vector<8x16x32xbf16> to vector<8x16x32xf32>
    %181 = vector.extract_strided_slice %0 {offsets = [3, 0], sizes = [1, 32], strides = [1, 1]} : vector<9x32xf32> to vector<1x32xf32>
    %182 = vector.shape_cast %181 : vector<1x32xf32> to vector<1x1x32xf32>
    %183 = vector.broadcast %182 : vector<1x1x32xf32> to vector<8x16x32xf32>
    %184 = arith.mulf %180, %183 : vector<8x16x32xf32>
    %c1_i32_79 = arith.constant 1 : i32
    %185 = arith.addi %148, %c1_i32_79 : i32
    %c0_80 = arith.constant 0 : index
    %186 = arith.index_cast %185 : i32 to index
    %c1_81 = arith.constant 1 : index
    %c0_82 = arith.constant 0 : index
    %187 = vector.load %arg1[%c0_80, %186, %c1_81, %c0_82] : memref<1x18x18x32xbf16, #tpu.memory_space<vmem>>, vector<1x8x16x32xbf16>
    %188 = vector.shape_cast %187 : vector<1x8x16x32xbf16> to vector<8x16x32xbf16>
    %189 = arith.extf %188 : vector<8x16x32xbf16> to vector<8x16x32xf32>
    %190 = vector.extract_strided_slice %0 {offsets = [4, 0], sizes = [1, 32], strides = [1, 1]} : vector<9x32xf32> to vector<1x32xf32>
    %191 = vector.shape_cast %190 : vector<1x32xf32> to vector<1x1x32xf32>
    %192 = vector.broadcast %191 : vector<1x1x32xf32> to vector<8x16x32xf32>
    %193 = arith.mulf %189, %192 : vector<8x16x32xf32>
    %c1_i32_83 = arith.constant 1 : i32
    %194 = arith.addi %148, %c1_i32_83 : i32
    %c0_84 = arith.constant 0 : index
    %195 = arith.index_cast %194 : i32 to index
    %c2_85 = arith.constant 2 : index
    %c0_86 = arith.constant 0 : index
    %196 = vector.load %arg1[%c0_84, %195, %c2_85, %c0_86] : memref<1x18x18x32xbf16, #tpu.memory_space<vmem>>, vector<1x8x16x32xbf16>
    %197 = vector.shape_cast %196 : vector<1x8x16x32xbf16> to vector<8x16x32xbf16>
    %198 = arith.extf %197 : vector<8x16x32xbf16> to vector<8x16x32xf32>
    %199 = vector.extract_strided_slice %0 {offsets = [5, 0], sizes = [1, 32], strides = [1, 1]} : vector<9x32xf32> to vector<1x32xf32>
    %200 = vector.shape_cast %199 : vector<1x32xf32> to vector<1x1x32xf32>
    %201 = vector.broadcast %200 : vector<1x1x32xf32> to vector<8x16x32xf32>
    %202 = arith.mulf %198, %201 : vector<8x16x32xf32>
    %c2_i32_87 = arith.constant 2 : i32
    %203 = arith.addi %148, %c2_i32_87 : i32
    %c0_88 = arith.constant 0 : index
    %204 = arith.index_cast %203 : i32 to index
    %c0_89 = arith.constant 0 : index
    %c0_90 = arith.constant 0 : index
    %205 = vector.load %arg1[%c0_88, %204, %c0_89, %c0_90] : memref<1x18x18x32xbf16, #tpu.memory_space<vmem>>, vector<1x8x16x32xbf16>
    %206 = vector.shape_cast %205 : vector<1x8x16x32xbf16> to vector<8x16x32xbf16>
    %207 = arith.extf %206 : vector<8x16x32xbf16> to vector<8x16x32xf32>
    %208 = vector.extract_strided_slice %0 {offsets = [6, 0], sizes = [1, 32], strides = [1, 1]} : vector<9x32xf32> to vector<1x32xf32>
    %209 = vector.shape_cast %208 : vector<1x32xf32> to vector<1x1x32xf32>
    %210 = vector.broadcast %209 : vector<1x1x32xf32> to vector<8x16x32xf32>
    %211 = arith.mulf %207, %210 : vector<8x16x32xf32>
    %c2_i32_91 = arith.constant 2 : i32
    %212 = arith.addi %148, %c2_i32_91 : i32
    %c0_92 = arith.constant 0 : index
    %213 = arith.index_cast %212 : i32 to index
    %c1_93 = arith.constant 1 : index
    %c0_94 = arith.constant 0 : index
    %214 = vector.load %arg1[%c0_92, %213, %c1_93, %c0_94] : memref<1x18x18x32xbf16, #tpu.memory_space<vmem>>, vector<1x8x16x32xbf16>
    %215 = vector.shape_cast %214 : vector<1x8x16x32xbf16> to vector<8x16x32xbf16>
    %216 = arith.extf %215 : vector<8x16x32xbf16> to vector<8x16x32xf32>
    %217 = vector.extract_strided_slice %0 {offsets = [7, 0], sizes = [1, 32], strides = [1, 1]} : vector<9x32xf32> to vector<1x32xf32>
    %218 = vector.shape_cast %217 : vector<1x32xf32> to vector<1x1x32xf32>
    %219 = vector.broadcast %218 : vector<1x1x32xf32> to vector<8x16x32xf32>
    %220 = arith.mulf %216, %219 : vector<8x16x32xf32>
    %c2_i32_95 = arith.constant 2 : i32
    %221 = arith.addi %148, %c2_i32_95 : i32
    %c0_96 = arith.constant 0 : index
    %222 = arith.index_cast %221 : i32 to index
    %c2_97 = arith.constant 2 : index
    %c0_98 = arith.constant 0 : index
    %223 = vector.load %arg1[%c0_96, %222, %c2_97, %c0_98] : memref<1x18x18x32xbf16, #tpu.memory_space<vmem>>, vector<1x8x16x32xbf16>
    %224 = vector.shape_cast %223 : vector<1x8x16x32xbf16> to vector<8x16x32xbf16>
    %225 = arith.extf %224 : vector<8x16x32xbf16> to vector<8x16x32xf32>
    %226 = vector.extract_strided_slice %0 {offsets = [8, 0], sizes = [1, 32], strides = [1, 1]} : vector<9x32xf32> to vector<1x32xf32>
    %227 = vector.shape_cast %226 : vector<1x32xf32> to vector<1x1x32xf32>
    %228 = vector.broadcast %227 : vector<1x1x32xf32> to vector<8x16x32xf32>
    %229 = arith.mulf %225, %228 : vector<8x16x32xf32>
    %230 = arith.addf %157, %166 : vector<8x16x32xf32>
    %231 = arith.addf %175, %184 : vector<8x16x32xf32>
    %232 = arith.addf %193, %202 : vector<8x16x32xf32>
    %233 = arith.addf %211, %220 : vector<8x16x32xf32>
    %234 = arith.addf %230, %231 : vector<8x16x32xf32>
    %235 = arith.addf %232, %233 : vector<8x16x32xf32>
    %236 = arith.addf %234, %235 : vector<8x16x32xf32>
    %237 = arith.addf %236, %229 : vector<8x16x32xf32>
    %cst_99 = arith.constant dense<0.000000e+00> : vector<8x16xf32>
    %238 = vector.multi_reduction <add>, %237, %cst_99 [2] : vector<8x16x32xf32> to vector<8x16xf32>
    %239 = vector.shape_cast %238 : vector<8x16xf32> to vector<8x16x1xf32>
    %cst_100 = arith.constant 3.200000e+01 : f32
    %240 = vector.broadcast %cst_100 : f32 to vector<8x16x1xf32>
    %241 = arith.divf %239, %240 : vector<8x16x1xf32>
    %242 = vector.broadcast %241 : vector<8x16x1xf32> to vector<8x16x32xf32>
    %243 = arith.subf %237, %242 : vector<8x16x32xf32>
    %244 = arith.mulf %243, %243 : vector<8x16x32xf32>
    %cst_101 = arith.constant dense<0.000000e+00> : vector<8x16xf32>
    %245 = vector.multi_reduction <add>, %244, %cst_101 [2] : vector<8x16x32xf32> to vector<8x16xf32>
    %246 = vector.shape_cast %245 : vector<8x16xf32> to vector<8x16x1xf32>
    %cst_102 = arith.constant 3.200000e+01 : f32
    %247 = vector.broadcast %cst_102 : f32 to vector<8x16x1xf32>
    %248 = arith.divf %246, %247 : vector<8x16x1xf32>
    %249 = vector.broadcast %241 : vector<8x16x1xf32> to vector<8x16x32xf32>
    %250 = arith.subf %237, %249 : vector<8x16x32xf32>
    %cst_103 = arith.constant 9.99999974E-6 : f32
    %251 = vector.broadcast %cst_103 : f32 to vector<8x16x1xf32>
    %252 = arith.addf %248, %251 : vector<8x16x1xf32>
    %253 = math.rsqrt %252 : vector<8x16x1xf32>
    %254 = vector.broadcast %253 : vector<8x16x1xf32> to vector<8x16x32xf32>
    %255 = arith.mulf %250, %254 : vector<8x16x32xf32>
    %256 = vector.broadcast %2 : vector<1x1x32xf32> to vector<8x16x32xf32>
    %257 = arith.mulf %255, %256 : vector<8x16x32xf32>
    %258 = vector.broadcast %4 : vector<1x1x32xf32> to vector<8x16x32xf32>
    %259 = arith.addf %257, %258 : vector<8x16x32xf32>
    %cst_104 = arith.constant 3.000000e+00 : f32
    %260 = vector.broadcast %cst_104 : f32 to vector<8x16x32xf32>
    %261 = arith.addf %259, %260 : vector<8x16x32xf32>
    %cst_105 = arith.constant 0.000000e+00 : f32
    %cst_106 = arith.constant 6.000000e+00 : f32
    %262 = vector.broadcast %cst_105 : f32 to vector<8x16x32xf32>
    %263 = arith.maximumf %262, %261 : vector<8x16x32xf32>
    %264 = vector.broadcast %cst_106 : f32 to vector<8x16x32xf32>
    %265 = arith.minimumf %264, %263 : vector<8x16x32xf32>
    %266 = arith.mulf %259, %265 : vector<8x16x32xf32>
    %cst_107 = arith.constant 0.166666672 : f32
    %267 = vector.broadcast %cst_107 : f32 to vector<8x16x32xf32>
    %268 = arith.mulf %266, %267 : vector<8x16x32xf32>
    %269 = arith.truncf %268 : vector<8x16x32xf32> to vector<8x16x32xbf16>
    %c0_108 = arith.constant 0 : index
    %270 = arith.index_cast %148 : i32 to index
    %c0_109 = arith.constant 0 : index
    %c0_110 = arith.constant 0 : index
    %271 = vector.load %arg5[%c0_108, %270, %c0_109, %c0_110] : memref<1x16x16x32xbf16, #tpu.memory_space<vmem>>, vector<1x8x16x32xbf16>
    %272 = vector.shape_cast %271 : vector<1x8x16x32xbf16> to vector<8x16x32xbf16>
    %273 = vector.shape_cast %269 : vector<8x16x32xbf16> to vector<1x8x16x32xbf16>
    tpu.vector_store %arg5[%c0_108, %270, %c0_109, %c0_110], %273 {strides = array<i32>} : memref<1x16x16x32xbf16, #tpu.memory_space<vmem>>, vector<1x8x16x32xbf16>,
    %c0_111 = arith.constant 0 : index
    %c0_112 = arith.constant 0 : index
    %c0_113 = arith.constant 0 : index
    %274 = vector.load %arg6[%c0_111, %c0_112, %c0_113] : memref<1x1x32xf32, #tpu.memory_space<vmem>>, vector<1x1x32xf32>
    %275 = vector.shape_cast %274 : vector<1x1x32xf32> to vector<1x32xf32>
    %cst_114 = arith.constant dense<0.000000e+00> : vector<16x32xf32>
    %276 = vector.multi_reduction <add>, %268, %cst_114 [0] : vector<8x16x32xf32> to vector<16x32xf32>
    %cst_115 = arith.constant dense<0.000000e+00> : vector<32xf32>
    %277 = vector.multi_reduction <add>, %276, %cst_115 [0] : vector<16x32xf32> to vector<32xf32>
    %278 = vector.shape_cast %277 : vector<32xf32> to vector<1x32xf32>
    %cst_116 = arith.constant 3.906250e-03 : f32
    %279 = vector.broadcast %cst_116 : f32 to vector<1x32xf32>
    %280 = arith.mulf %278, %279 : vector<1x32xf32>
    %281 = arith.addf %275, %280 : vector<1x32xf32>
    %c0_117 = arith.constant 0 : index
    %c0_118 = arith.constant 0 : index
    %c0_119 = arith.constant 0 : index
    %282 = vector.load %arg6[%c0_117, %c0_118, %c0_119] : memref<1x1x32xf32, #tpu.memory_space<vmem>>, vector<1x1x32xf32>
    %283 = vector.shape_cast %282 : vector<1x1x32xf32> to vector<1x32xf32>
    %284 = vector.shape_cast %281 : vector<1x32xf32> to vector<1x1x32xf32>
    tpu.vector_store %arg6[%c0_117, %c0_118, %c0_119], %284 {strides = array<i32>} : memref<1x1x32xf32, #tpu.memory_space<vmem>>, vector<1x1x32xf32>,
    %c2_i32_120 = arith.constant 2 : i32
    return
  }
  func.func @transform_0(%arg0: i32) -> (i32, i32, i32, i32) {
    %c0_i32 = arith.constant 0 : i32
    %c0_i32_0 = arith.constant 0 : i32
    %c0_i32_1 = arith.constant 0 : i32
    %c0_i32_2 = arith.constant 0 : i32
    return %arg0, %c0_i32, %c0_i32_0, %c0_i32_1 : i32, i32, i32, i32
  }
  func.func @transform_1(%arg0: i32) -> (i32, i32) {
    %c0_i32 = arith.constant 0 : i32
    %c0_i32_0 = arith.constant 0 : i32
    %c0_i32_1 = arith.constant 0 : i32
    return %c0_i32, %c0_i32_0 : i32, i32
  }
  func.func @transform_2(%arg0: i32) -> (i32, i32) {
    %c0_i32 = arith.constant 0 : i32
    %c0_i32_0 = arith.constant 0 : i32
    %c0_i32_1 = arith.constant 0 : i32
    return %c0_i32, %c0_i32_0 : i32, i32
  }
  func.func @transform_3(%arg0: i32) -> (i32, i32) {
    %c0_i32 = arith.constant 0 : i32
    %c0_i32_0 = arith.constant 0 : i32
    %c0_i32_1 = arith.constant 0 : i32
    return %c0_i32, %c0_i32_0 : i32, i32
  }
  func.func @transform_4(%arg0: i32) -> (i32, i32, i32, i32) {
    %c0_i32 = arith.constant 0 : i32
    %c0_i32_0 = arith.constant 0 : i32
    %c0_i32_1 = arith.constant 0 : i32
    %c0_i32_2 = arith.constant 0 : i32
    return %arg0, %c0_i32, %c0_i32_0, %c0_i32_1 : i32, i32, i32, i32
  }
  func.func @transform_5(%arg0: i32) -> (i32, i32, i32) {
    %c0_i32 = arith.constant 0 : i32
    %c0_i32_0 = arith.constant 0 : i32
    %c0_i32_1 = arith.constant 0 : i32
    return %arg0, %c0_i32, %c0_i32_0 : i32, i32, i32
  }
}

module attributes {stable_mosaic.version = 11 : i64} {
  func.func @_pw_ln_kernel(%arg0: i32, %arg1: i32, %arg2: memref<1x256x32xbf16, #tpu.memory_space<vmem>>, %arg3: memref<1x1x32xf32, #tpu.memory_space<vmem>>, %arg4: memref<1x256x32xbf16, #tpu.memory_space<vmem>>, %arg5: memref<32x32xbf16, #tpu.memory_space<vmem>>, %arg6: memref<1x32xf32, #tpu.memory_space<vmem>>, %arg7: memref<1x32xf32, #tpu.memory_space<vmem>>, %arg8: memref<1x256x32xbf16, #tpu.memory_space<vmem>>) attributes {dimension_semantics = [#tpu.dimension_semantics<parallel>, #tpu.dimension_semantics<parallel>], iteration_bounds = array<i64: 2, 1>, scalar_prefetch = 0 : i64, scratch_operands = 0 : i64, tpu.core_type = #tpu.core_type<tc>, window_params = [{transform_indices = @transform_0, window_bounds = array<i64: 1, 256, 32>}, {transform_indices = @transform_1, window_bounds = array<i64: 1, 1, 32>}, {transform_indices = @transform_2, window_bounds = array<i64: 1, 256, 32>}, {pipeline_mode = #tpu.pipeline_mode<synchronous>, transform_indices = @transform_3, window_bounds = array<i64: 32, 32>}, {pipeline_mode = #tpu.pipeline_mode<synchronous>, transform_indices = @transform_4, window_bounds = array<i64: 1, 32>}, {pipeline_mode = #tpu.pipeline_mode<synchronous>, transform_indices = @transform_5, window_bounds = array<i64: 1, 32>}, {transform_indices = @transform_6, window_bounds = array<i64: 1, 256, 32>}]} {
    %c0 = arith.constant 0 : index
    %c0_0 = arith.constant 0 : index
    %c0_1 = arith.constant 0 : index
    %0 = vector.load %arg2[%c0, %c0_0, %c0_1] : memref<1x256x32xbf16, #tpu.memory_space<vmem>>, vector<1x256x32xbf16>
    %1 = vector.shape_cast %0 : vector<1x256x32xbf16> to vector<256x32xbf16>
    %2 = arith.extf %1 : vector<256x32xbf16> to vector<256x32xf32>
    %c0_2 = arith.constant 0 : index
    %c0_3 = arith.constant 0 : index
    %c0_4 = arith.constant 0 : index
    %3 = vector.load %arg3[%c0_2, %c0_3, %c0_4] : memref<1x1x32xf32, #tpu.memory_space<vmem>>, vector<1x1x32xf32>
    %4 = vector.shape_cast %3 : vector<1x1x32xf32> to vector<1x32xf32>
    %5 = vector.broadcast %4 : vector<1x32xf32> to vector<256x32xf32>
    %6 = arith.mulf %2, %5 : vector<256x32xf32>
    %7 = arith.truncf %6 : vector<256x32xf32> to vector<256x32xbf16>
    %c0_5 = arith.constant 0 : index
    %c0_6 = arith.constant 0 : index
    %8 = vector.load %arg5[%c0_5, %c0_6] : memref<32x32xbf16, #tpu.memory_space<vmem>>, vector<32x32xbf16>
    %cst = arith.constant dense<0.000000e+00> : vector<256x32xf32>
    %9 = tpu.matmul %7, %8, %cst {dimension_numbers = #tpu.dot_dimension_numbers<[1], [0], [0], [1], [0, 0, 1, 1], [], []>} : vector<256x32xbf16>, vector<32x32xbf16>, vector<256x32xf32> -> vector<256x32xf32>
    %cst_7 = arith.constant dense<0.000000e+00> : vector<256xf32>
    %10 = vector.multi_reduction <add>, %9, %cst_7 [1] : vector<256x32xf32> to vector<256xf32>
    %11 = vector.shape_cast %10 : vector<256xf32> to vector<256x1xf32>
    %cst_8 = arith.constant 3.200000e+01 : f32
    %12 = vector.broadcast %cst_8 : f32 to vector<256x1xf32>
    %13 = arith.divf %11, %12 : vector<256x1xf32>
    %14 = vector.broadcast %13 : vector<256x1xf32> to vector<256x32xf32>
    %15 = arith.subf %9, %14 : vector<256x32xf32>
    %16 = arith.mulf %15, %15 : vector<256x32xf32>
    %cst_9 = arith.constant dense<0.000000e+00> : vector<256xf32>
    %17 = vector.multi_reduction <add>, %16, %cst_9 [1] : vector<256x32xf32> to vector<256xf32>
    %18 = vector.shape_cast %17 : vector<256xf32> to vector<256x1xf32>
    %cst_10 = arith.constant 3.200000e+01 : f32
    %19 = vector.broadcast %cst_10 : f32 to vector<256x1xf32>
    %20 = arith.divf %18, %19 : vector<256x1xf32>
    %21 = vector.broadcast %13 : vector<256x1xf32> to vector<256x32xf32>
    %22 = arith.subf %9, %21 : vector<256x32xf32>
    %cst_11 = arith.constant 9.99999974E-6 : f32
    %23 = vector.broadcast %cst_11 : f32 to vector<256x1xf32>
    %24 = arith.addf %20, %23 : vector<256x1xf32>
    %25 = math.rsqrt %24 : vector<256x1xf32>
    %26 = vector.broadcast %25 : vector<256x1xf32> to vector<256x32xf32>
    %27 = arith.mulf %22, %26 : vector<256x32xf32>
    %c0_12 = arith.constant 0 : index
    %c0_13 = arith.constant 0 : index
    %28 = vector.load %arg6[%c0_12, %c0_13] : memref<1x32xf32, #tpu.memory_space<vmem>>, vector<1x32xf32>
    %29 = vector.broadcast %28 : vector<1x32xf32> to vector<256x32xf32>
    %30 = arith.mulf %27, %29 : vector<256x32xf32>
    %c0_14 = arith.constant 0 : index
    %c0_15 = arith.constant 0 : index
    %31 = vector.load %arg7[%c0_14, %c0_15] : memref<1x32xf32, #tpu.memory_space<vmem>>, vector<1x32xf32>
    %32 = vector.broadcast %31 : vector<1x32xf32> to vector<256x32xf32>
    %33 = arith.addf %30, %32 : vector<256x32xf32>
    %c0_16 = arith.constant 0 : index
    %c0_17 = arith.constant 0 : index
    %c0_18 = arith.constant 0 : index
    %34 = vector.load %arg4[%c0_16, %c0_17, %c0_18] : memref<1x256x32xbf16, #tpu.memory_space<vmem>>, vector<1x256x32xbf16>
    %35 = vector.shape_cast %34 : vector<1x256x32xbf16> to vector<256x32xbf16>
    %36 = arith.extf %35 : vector<256x32xbf16> to vector<256x32xf32>
    %37 = arith.addf %33, %36 : vector<256x32xf32>
    %38 = arith.truncf %37 : vector<256x32xf32> to vector<256x32xbf16>
    %c0_19 = arith.constant 0 : index
    %c0_20 = arith.constant 0 : index
    %c0_21 = arith.constant 0 : index
    %39 = vector.load %arg8[%c0_19, %c0_20, %c0_21] : memref<1x256x32xbf16, #tpu.memory_space<vmem>>, vector<1x256x32xbf16>
    %40 = vector.shape_cast %39 : vector<1x256x32xbf16> to vector<256x32xbf16>
    %41 = vector.shape_cast %38 : vector<256x32xbf16> to vector<1x256x32xbf16>
    tpu.vector_store %arg8[%c0_19, %c0_20, %c0_21], %41 {strides = array<i32>} : memref<1x256x32xbf16, #tpu.memory_space<vmem>>, vector<1x256x32xbf16>,
    return
  }
  func.func @transform_0(%arg0: i32, %arg1: i32) -> (i32, i32, i32) {
    %c0_i32 = arith.constant 0 : i32
    %c0_i32_0 = arith.constant 0 : i32
    return %arg0, %arg1, %c0_i32 : i32, i32, i32
  }
  func.func @transform_1(%arg0: i32, %arg1: i32) -> (i32, i32, i32) {
    %c0_i32 = arith.constant 0 : i32
    %c0_i32_0 = arith.constant 0 : i32
    %c0_i32_1 = arith.constant 0 : i32
    return %arg0, %c0_i32, %c0_i32_0 : i32, i32, i32
  }
  func.func @transform_2(%arg0: i32, %arg1: i32) -> (i32, i32, i32) {
    %c0_i32 = arith.constant 0 : i32
    %c0_i32_0 = arith.constant 0 : i32
    return %arg0, %arg1, %c0_i32 : i32, i32, i32
  }
  func.func @transform_3(%arg0: i32, %arg1: i32) -> (i32, i32) {
    %c0_i32 = arith.constant 0 : i32
    %c0_i32_0 = arith.constant 0 : i32
    %c0_i32_1 = arith.constant 0 : i32
    return %c0_i32, %c0_i32_0 : i32, i32
  }
  func.func @transform_4(%arg0: i32, %arg1: i32) -> (i32, i32) {
    %c0_i32 = arith.constant 0 : i32
    %c0_i32_0 = arith.constant 0 : i32
    %c0_i32_1 = arith.constant 0 : i32
    return %c0_i32, %c0_i32_0 : i32, i32
  }
  func.func @transform_5(%arg0: i32, %arg1: i32) -> (i32, i32) {
    %c0_i32 = arith.constant 0 : i32
    %c0_i32_0 = arith.constant 0 : i32
    %c0_i32_1 = arith.constant 0 : i32
    return %c0_i32, %c0_i32_0 : i32, i32
  }
  func.func @transform_6(%arg0: i32, %arg1: i32) -> (i32, i32, i32) {
    %c0_i32 = arith.constant 0 : i32
    %c0_i32_0 = arith.constant 0 : i32
    return %arg0, %arg1, %c0_i32 : i32, i32, i32
  }
}

module attributes {stable_mosaic.version = 11 : i64} {
  func.func @_se_kernel(%arg0: i32, %arg1: memref<2x1x32xf32, #tpu.memory_space<vmem>>, %arg2: memref<32x8xbf16, #tpu.memory_space<vmem>>, %arg3: memref<1x8xf32, #tpu.memory_space<vmem>>, %arg4: memref<8x32xbf16, #tpu.memory_space<vmem>>, %arg5: memref<1x32xf32, #tpu.memory_space<vmem>>, %arg6: memref<2x1x32xf32, #tpu.memory_space<vmem>>) attributes {dimension_semantics = [#tpu.dimension_semantics<arbitrary>], iteration_bounds = array<i64: 1>, scalar_prefetch = 0 : i64, scratch_operands = 0 : i64, tpu.core_type = #tpu.core_type<tc>, window_params = [{pipeline_mode = #tpu.pipeline_mode<synchronous>, transform_indices = @transform_0, window_bounds = array<i64: 2, 1, 32>}, {pipeline_mode = #tpu.pipeline_mode<synchronous>, transform_indices = @transform_1, window_bounds = array<i64: 32, 8>}, {pipeline_mode = #tpu.pipeline_mode<synchronous>, transform_indices = @transform_2, window_bounds = array<i64: 1, 8>}, {pipeline_mode = #tpu.pipeline_mode<synchronous>, transform_indices = @transform_3, window_bounds = array<i64: 8, 32>}, {pipeline_mode = #tpu.pipeline_mode<synchronous>, transform_indices = @transform_4, window_bounds = array<i64: 1, 32>}, {pipeline_mode = #tpu.pipeline_mode<synchronous>, transform_indices = @transform_5, window_bounds = array<i64: 2, 1, 32>}]} {
    %c0 = arith.constant 0 : index
    %c0_0 = arith.constant 0 : index
    %c0_1 = arith.constant 0 : index
    %0 = vector.load %arg1[%c0, %c0_0, %c0_1] : memref<2x1x32xf32, #tpu.memory_space<vmem>>, vector<2x1x32xf32>
    %1 = vector.shape_cast %0 : vector<2x1x32xf32> to vector<2x32xf32>
    %2 = arith.truncf %1 : vector<2x32xf32> to vector<2x32xbf16>
    %c0_2 = arith.constant 0 : index
    %c0_3 = arith.constant 0 : index
    %3 = vector.load %arg2[%c0_2, %c0_3] : memref<32x8xbf16, #tpu.memory_space<vmem>>, vector<32x8xbf16>
    %cst = arith.constant dense<0.000000e+00> : vector<2x8xf32>
    %4 = tpu.matmul %2, %3, %cst {dimension_numbers = #tpu.dot_dimension_numbers<[1], [0], [0], [1], [0, 0, 1, 1], [], []>} : vector<2x32xbf16>, vector<32x8xbf16>, vector<2x8xf32> -> vector<2x8xf32>
    %c0_4 = arith.constant 0 : index
    %c0_5 = arith.constant 0 : index
    %5 = vector.load %arg3[%c0_4, %c0_5] : memref<1x8xf32, #tpu.memory_space<vmem>>, vector<1x8xf32>
    %6 = vector.broadcast %5 : vector<1x8xf32> to vector<2x8xf32>
    %7 = arith.addf %4, %6 : vector<2x8xf32>
    %cst_6 = arith.constant 0.000000e+00 : f32
    %8 = vector.broadcast %cst_6 : f32 to vector<2x8xf32>
    %9 = arith.maximumf %7, %8 : vector<2x8xf32>
    %10 = arith.truncf %9 : vector<2x8xf32> to vector<2x8xbf16>
    %c0_7 = arith.constant 0 : index
    %c0_8 = arith.constant 0 : index
    %11 = vector.load %arg4[%c0_7, %c0_8] : memref<8x32xbf16, #tpu.memory_space<vmem>>, vector<8x32xbf16>
    %cst_9 = arith.constant dense<0.000000e+00> : vector<2x32xf32>
    %12 = tpu.matmul %10, %11, %cst_9 {dimension_numbers = #tpu.dot_dimension_numbers<[1], [0], [0], [1], [0, 0, 1, 1], [], []>} : vector<2x8xbf16>, vector<8x32xbf16>, vector<2x32xf32> -> vector<2x32xf32>
    %c0_10 = arith.constant 0 : index
    %c0_11 = arith.constant 0 : index
    %13 = vector.load %arg5[%c0_10, %c0_11] : memref<1x32xf32, #tpu.memory_space<vmem>>, vector<1x32xf32>
    %14 = vector.broadcast %13 : vector<1x32xf32> to vector<2x32xf32>
    %15 = arith.addf %12, %14 : vector<2x32xf32>
    %cst_12 = arith.constant 0.166666672 : f32
    %16 = vector.broadcast %cst_12 : f32 to vector<2x32xf32>
    %17 = arith.mulf %15, %16 : vector<2x32xf32>
    %cst_13 = arith.constant 5.000000e-01 : f32
    %18 = vector.broadcast %cst_13 : f32 to vector<2x32xf32>
    %19 = arith.addf %17, %18 : vector<2x32xf32>
    %cst_14 = arith.constant 0.000000e+00 : f32
    %cst_15 = arith.constant 1.000000e+00 : f32
    %20 = vector.broadcast %cst_14 : f32 to vector<2x32xf32>
    %21 = arith.maximumf %20, %19 : vector<2x32xf32>
    %22 = vector.broadcast %cst_15 : f32 to vector<2x32xf32>
    %23 = arith.minimumf %22, %21 : vector<2x32xf32>
    %c0_16 = arith.constant 0 : index
    %c0_17 = arith.constant 0 : index
    %c0_18 = arith.constant 0 : index
    %24 = vector.load %arg6[%c0_16, %c0_17, %c0_18] : memref<2x1x32xf32, #tpu.memory_space<vmem>>, vector<2x1x32xf32>
    %25 = vector.shape_cast %24 : vector<2x1x32xf32> to vector<2x32xf32>
    %26 = vector.shape_cast %23 : vector<2x32xf32> to vector<2x1x32xf32>
    tpu.vector_store %arg6[%c0_16, %c0_17, %c0_18], %26 {strides = array<i32>} : memref<2x1x32xf32, #tpu.memory_space<vmem>>, vector<2x1x32xf32>,
    return
  }
  func.func @transform_0(%arg0: i32) -> (i32, i32, i32) {
    %c0_i32 = arith.constant 0 : i32
    %c0_i32_0 = arith.constant 0 : i32
    %c0_i32_1 = arith.constant 0 : i32
    %c0_i32_2 = arith.constant 0 : i32
    return %c0_i32, %c0_i32_0, %c0_i32_1 : i32, i32, i32
  }
  func.func @transform_1(%arg0: i32) -> (i32, i32) {
    %c0_i32 = arith.constant 0 : i32
    %c0_i32_0 = arith.constant 0 : i32
    %c0_i32_1 = arith.constant 0 : i32
    return %c0_i32, %c0_i32_0 : i32, i32
  }
  func.func @transform_2(%arg0: i32) -> (i32, i32) {
    %c0_i32 = arith.constant 0 : i32
    %c0_i32_0 = arith.constant 0 : i32
    %c0_i32_1 = arith.constant 0 : i32
    return %c0_i32, %c0_i32_0 : i32, i32
  }
  func.func @transform_3(%arg0: i32) -> (i32, i32) {
    %c0_i32 = arith.constant 0 : i32
    %c0_i32_0 = arith.constant 0 : i32
    %c0_i32_1 = arith.constant 0 : i32
    return %c0_i32, %c0_i32_0 : i32, i32
  }
  func.func @transform_4(%arg0: i32) -> (i32, i32) {
    %c0_i32 = arith.constant 0 : i32
    %c0_i32_0 = arith.constant 0 : i32
    %c0_i32_1 = arith.constant 0 : i32
    return %c0_i32, %c0_i32_0 : i32, i32
  }
  func.func @transform_5(%arg0: i32) -> (i32, i32, i32) {
    %c0_i32 = arith.constant 0 : i32
    %c0_i32_0 = arith.constant 0 : i32
    %c0_i32_1 = arith.constant 0 : i32
    %c0_i32_2 = arith.constant 0 : i32
    return %c0_i32, %c0_i32_0, %c0_i32_1 : i32, i32, i32
  }
}

module attributes {stable_mosaic.version = 11 : i64} {
  func.func @_pw_ln_kernel(%arg0: i32, %arg1: i32, %arg2: memref<1x64x32xbf16, #tpu.memory_space<vmem>>, %arg3: memref<1x1x32xf32, #tpu.memory_space<vmem>>, %arg4: memref<32x32xbf16, #tpu.memory_space<vmem>>, %arg5: memref<1x32xf32, #tpu.memory_space<vmem>>, %arg6: memref<1x32xf32, #tpu.memory_space<vmem>>, %arg7: memref<1x64x32xf32, #tpu.memory_space<vmem>>) attributes {dimension_semantics = [#tpu.dimension_semantics<parallel>, #tpu.dimension_semantics<parallel>], iteration_bounds = array<i64: 2, 1>, scalar_prefetch = 0 : i64, scratch_operands = 0 : i64, tpu.core_type = #tpu.core_type<tc>, window_params = [{transform_indices = @transform_0, window_bounds = array<i64: 1, 64, 32>}, {transform_indices = @transform_1, window_bounds = array<i64: 1, 1, 32>}, {pipeline_mode = #tpu.pipeline_mode<synchronous>, transform_indices = @transform_2, window_bounds = array<i64: 32, 32>}, {pipeline_mode = #tpu.pipeline_mode<synchronous>, transform_indices = @transform_3, window_bounds = array<i64: 1, 32>}, {pipeline_mode = #tpu.pipeline_mode<synchronous>, transform_indices = @transform_4, window_bounds = array<i64: 1, 32>}, {transform_indices = @transform_5, window_bounds = array<i64: 1, 64, 32>}]} {
    %c0 = arith.constant 0 : index
    %c0_0 = arith.constant 0 : index
    %c0_1 = arith.constant 0 : index
    %0 = vector.load %arg2[%c0, %c0_0, %c0_1] : memref<1x64x32xbf16, #tpu.memory_space<vmem>>, vector<1x64x32xbf16>
    %1 = vector.shape_cast %0 : vector<1x64x32xbf16> to vector<64x32xbf16>
    %2 = arith.extf %1 : vector<64x32xbf16> to vector<64x32xf32>
    %c0_2 = arith.constant 0 : index
    %c0_3 = arith.constant 0 : index
    %c0_4 = arith.constant 0 : index
    %3 = vector.load %arg3[%c0_2, %c0_3, %c0_4] : memref<1x1x32xf32, #tpu.memory_space<vmem>>, vector<1x1x32xf32>
    %4 = vector.shape_cast %3 : vector<1x1x32xf32> to vector<1x32xf32>
    %5 = vector.broadcast %4 : vector<1x32xf32> to vector<64x32xf32>
    %6 = arith.mulf %2, %5 : vector<64x32xf32>
    %7 = arith.truncf %6 : vector<64x32xf32> to vector<64x32xbf16>
    %c0_5 = arith.constant 0 : index
    %c0_6 = arith.constant 0 : index
    %8 = vector.load %arg4[%c0_5, %c0_6] : memref<32x32xbf16, #tpu.memory_space<vmem>>, vector<32x32xbf16>
    %cst = arith.constant dense<0.000000e+00> : vector<64x32xf32>
    %9 = tpu.matmul %7, %8, %cst {dimension_numbers = #tpu.dot_dimension_numbers<[1], [0], [0], [1], [0, 0, 1, 1], [], []>} : vector<64x32xbf16>, vector<32x32xbf16>, vector<64x32xf32> -> vector<64x32xf32>
    %cst_7 = arith.constant dense<0.000000e+00> : vector<64xf32>
    %10 = vector.multi_reduction <add>, %9, %cst_7 [1] : vector<64x32xf32> to vector<64xf32>
    %11 = vector.shape_cast %10 : vector<64xf32> to vector<64x1xf32>
    %cst_8 = arith.constant 3.200000e+01 : f32
    %12 = vector.broadcast %cst_8 : f32 to vector<64x1xf32>
    %13 = arith.divf %11, %12 : vector<64x1xf32>
    %14 = vector.broadcast %13 : vector<64x1xf32> to vector<64x32xf32>
    %15 = arith.subf %9, %14 : vector<64x32xf32>
    %16 = arith.mulf %15, %15 : vector<64x32xf32>
    %cst_9 = arith.constant dense<0.000000e+00> : vector<64xf32>
    %17 = vector.multi_reduction <add>, %16, %cst_9 [1] : vector<64x32xf32> to vector<64xf32>
    %18 = vector.shape_cast %17 : vector<64xf32> to vector<64x1xf32>
    %cst_10 = arith.constant 3.200000e+01 : f32
    %19 = vector.broadcast %cst_10 : f32 to vector<64x1xf32>
    %20 = arith.divf %18, %19 : vector<64x1xf32>
    %21 = vector.broadcast %13 : vector<64x1xf32> to vector<64x32xf32>
    %22 = arith.subf %9, %21 : vector<64x32xf32>
    %cst_11 = arith.constant 9.99999974E-6 : f32
    %23 = vector.broadcast %cst_11 : f32 to vector<64x1xf32>
    %24 = arith.addf %20, %23 : vector<64x1xf32>
    %25 = math.rsqrt %24 : vector<64x1xf32>
    %26 = vector.broadcast %25 : vector<64x1xf32> to vector<64x32xf32>
    %27 = arith.mulf %22, %26 : vector<64x32xf32>
    %c0_12 = arith.constant 0 : index
    %c0_13 = arith.constant 0 : index
    %28 = vector.load %arg5[%c0_12, %c0_13] : memref<1x32xf32, #tpu.memory_space<vmem>>, vector<1x32xf32>
    %29 = vector.broadcast %28 : vector<1x32xf32> to vector<64x32xf32>
    %30 = arith.mulf %27, %29 : vector<64x32xf32>
    %c0_14 = arith.constant 0 : index
    %c0_15 = arith.constant 0 : index
    %31 = vector.load %arg6[%c0_14, %c0_15] : memref<1x32xf32, #tpu.memory_space<vmem>>, vector<1x32xf32>
    %32 = vector.broadcast %31 : vector<1x32xf32> to vector<64x32xf32>
    %33 = arith.addf %30, %32 : vector<64x32xf32>
    %c0_16 = arith.constant 0 : index
    %c0_17 = arith.constant 0 : index
    %c0_18 = arith.constant 0 : index
    %34 = vector.load %arg7[%c0_16, %c0_17, %c0_18] : memref<1x64x32xf32, #tpu.memory_space<vmem>>, vector<1x64x32xf32>
    %35 = vector.shape_cast %34 : vector<1x64x32xf32> to vector<64x32xf32>
    %36 = vector.shape_cast %33 : vector<64x32xf32> to vector<1x64x32xf32>
    tpu.vector_store %arg7[%c0_16, %c0_17, %c0_18], %36 {strides = array<i32>} : memref<1x64x32xf32, #tpu.memory_space<vmem>>, vector<1x64x32xf32>,
    return
  }
  func.func @transform_0(%arg0: i32, %arg1: i32) -> (i32, i32, i32) {
    %c0_i32 = arith.constant 0 : i32
    %c0_i32_0 = arith.constant 0 : i32
    return %arg0, %arg1, %c0_i32 : i32, i32, i32
  }
  func.func @transform_1(%arg0: i32, %arg1: i32) -> (i32, i32, i32) {
    %c0_i32 = arith.constant 0 : i32
    %c0_i32_0 = arith.constant 0 : i32
    %c0_i32_1 = arith.constant 0 : i32
    return %arg0, %c0_i32, %c0_i32_0 : i32, i32, i32
  }
  func.func @transform_2(%arg0: i32, %arg1: i32) -> (i32, i32) {
    %c0_i32 = arith.constant 0 : i32
    %c0_i32_0 = arith.constant 0 : i32
    %c0_i32_1 = arith.constant 0 : i32
    return %c0_i32, %c0_i32_0 : i32, i32
  }
  func.func @transform_3(%arg0: i32, %arg1: i32) -> (i32, i32) {
    %c0_i32 = arith.constant 0 : i32
    %c0_i32_0 = arith.constant 0 : i32
    %c0_i32_1 = arith.constant 0 : i32
    return %c0_i32, %c0_i32_0 : i32, i32
  }
  func.func @transform_4(%arg0: i32, %arg1: i32) -> (i32, i32) {
    %c0_i32 = arith.constant 0 : i32
    %c0_i32_0 = arith.constant 0 : i32
    %c0_i32_1 = arith.constant 0 : i32
    return %c0_i32, %c0_i32_0 : i32, i32
  }
  func.func @transform_5(%arg0: i32, %arg1: i32) -> (i32, i32, i32) {
    %c0_i32 = arith.constant 0 : i32
    %c0_i32_0 = arith.constant 0 : i32
    return %arg0, %arg1, %c0_i32 : i32, i32, i32
  }
}

module attributes {stable_mosaic.version = 11 : i64} {
  func.func @_dw_ln_hs_pool_kernel(%arg0: i32, %arg1: memref<1x9x9x32xbf16, #tpu.memory_space<vmem>>, %arg2: memref<1x9x9x32xbf16, #tpu.memory_space<vmem>>, %arg3: memref<1x9x9x32xbf16, #tpu.memory_space<vmem>>, %arg4: memref<1x9x9x32xbf16, #tpu.memory_space<vmem>>, %arg5: memref<9x32xf32, #tpu.memory_space<vmem>>, %arg6: memref<1x32xf32, #tpu.memory_space<vmem>>, %arg7: memref<1x32xf32, #tpu.memory_space<vmem>>, %arg8: memref<1x8x8x32xbf16, #tpu.memory_space<vmem>>, %arg9: memref<1x1x32xf32, #tpu.memory_space<vmem>>) attributes {dimension_semantics = [#tpu.dimension_semantics<parallel>], iteration_bounds = array<i64: 2>, scalar_prefetch = 0 : i64, scratch_operands = 0 : i64, tpu.core_type = #tpu.core_type<tc>, window_params = [{transform_indices = @transform_0, window_bounds = array<i64: 1, 9, 9, 32>}, {transform_indices = @transform_1, window_bounds = array<i64: 1, 9, 9, 32>}, {transform_indices = @transform_2, window_bounds = array<i64: 1, 9, 9, 32>}, {transform_indices = @transform_3, window_bounds = array<i64: 1, 9, 9, 32>}, {pipeline_mode = #tpu.pipeline_mode<synchronous>, transform_indices = @transform_4, window_bounds = array<i64: 9, 32>}, {pipeline_mode = #tpu.pipeline_mode<synchronous>, transform_indices = @transform_5, window_bounds = array<i64: 1, 32>}, {pipeline_mode = #tpu.pipeline_mode<synchronous>, transform_indices = @transform_6, window_bounds = array<i64: 1, 32>}, {transform_indices = @transform_7, window_bounds = array<i64: 1, 8, 8, 32>}, {transform_indices = @transform_8, window_bounds = array<i64: 1, 1, 32>}]} {
    %c0 = arith.constant 0 : index
    %c0_0 = arith.constant 0 : index
    %0 = vector.load %arg5[%c0, %c0_0] : memref<9x32xf32, #tpu.memory_space<vmem>>, vector<9x32xf32>
    %c0_1 = arith.constant 0 : index
    %c0_2 = arith.constant 0 : index
    %1 = vector.load %arg6[%c0_1, %c0_2] : memref<1x32xf32, #tpu.memory_space<vmem>>, vector<1x32xf32>
    %2 = vector.shape_cast %1 : vector<1x32xf32> to vector<1x1x32xf32>
    %c0_3 = arith.constant 0 : index
    %c0_4 = arith.constant 0 : index
    %3 = vector.load %arg7[%c0_3, %c0_4] : memref<1x32xf32, #tpu.memory_space<vmem>>, vector<1x32xf32>
    %4 = vector.shape_cast %3 : vector<1x32xf32> to vector<1x1x32xf32>
    %cst = arith.constant 0.000000e+00 : f32
    %5 = vector.broadcast %cst : f32 to vector<1x32xf32>
    %c0_5 = arith.constant 0 : index
    %c0_6 = arith.constant 0 : index
    %c0_7 = arith.constant 0 : index
    %6 = vector.load %arg9[%c0_5, %c0_6, %c0_7] : memref<1x1x32xf32, #tpu.memory_space<vmem>>, vector<1x1x32xf32>
    %7 = vector.shape_cast %6 : vector<1x1x32xf32> to vector<1x32xf32>
    %8 = vector.shape_cast %5 : vector<1x32xf32> to vector<1x1x32xf32>
    tpu.vector_store %arg9[%c0_5, %c0_6, %c0_7], %8 {strides = array<i32>} : memref<1x1x32xf32, #tpu.memory_space<vmem>>, vector<1x1x32xf32>,
    %c0_i32 = arith.constant 0 : i32
    %c4_i32 = arith.constant 4 : i32
    %9 = arith.muli %c0_i32, %c4_i32 : i32
    %10 = tpu.assume_multiple %9, 4 : i32
    %c0_i32_8 = arith.constant 0 : i32
    %11 = arith.addi %10, %c0_i32_8 : i32
    %c0_9 = arith.constant 0 : index
    %12 = arith.index_cast %11 : i32 to index
    %c0_10 = arith.constant 0 : index
    %c0_11 = arith.constant 0 : index
    %13 = vector.load %arg1[%c0_9, %12, %c0_10, %c0_11] : memref<1x9x9x32xbf16, #tpu.memory_space<vmem>>, vector<1x4x8x32xbf16>
    %14 = vector.shape_cast %13 : vector<1x4x8x32xbf16> to vector<4x8x32xbf16>
    %15 = arith.extf %14 : vector<4x8x32xbf16> to vector<4x8x32xf32>
    %16 = vector.extract_strided_slice %0 {offsets = [0, 0], sizes = [1, 32], strides = [1, 1]} : vector<9x32xf32> to vector<1x32xf32>
    %17 = vector.shape_cast %16 : vector<1x32xf32> to vector<1x1x32xf32>
    %18 = vector.broadcast %17 : vector<1x1x32xf32> to vector<4x8x32xf32>
    %19 = arith.mulf %15, %18 : vector<4x8x32xf32>
    %c0_i32_12 = arith.constant 0 : i32
    %20 = arith.addi %10, %c0_i32_12 : i32
    %c0_13 = arith.constant 0 : index
    %21 = arith.index_cast %20 : i32 to index
    %c0_14 = arith.constant 0 : index
    %c0_15 = arith.constant 0 : index
    %22 = vector.load %arg2[%c0_13, %21, %c0_14, %c0_15] : memref<1x9x9x32xbf16, #tpu.memory_space<vmem>>, vector<1x4x8x32xbf16>
    %23 = vector.shape_cast %22 : vector<1x4x8x32xbf16> to vector<4x8x32xbf16>
    %24 = arith.extf %23 : vector<4x8x32xbf16> to vector<4x8x32xf32>
    %25 = vector.extract_strided_slice %0 {offsets = [1, 0], sizes = [1, 32], strides = [1, 1]} : vector<9x32xf32> to vector<1x32xf32>
    %26 = vector.shape_cast %25 : vector<1x32xf32> to vector<1x1x32xf32>
    %27 = vector.broadcast %26 : vector<1x1x32xf32> to vector<4x8x32xf32>
    %28 = arith.mulf %24, %27 : vector<4x8x32xf32>
    %c0_i32_16 = arith.constant 0 : i32
    %29 = arith.addi %10, %c0_i32_16 : i32
    %c0_17 = arith.constant 0 : index
    %30 = arith.index_cast %29 : i32 to index
    %c1 = arith.constant 1 : index
    %c0_18 = arith.constant 0 : index
    %31 = vector.load %arg1[%c0_17, %30, %c1, %c0_18] : memref<1x9x9x32xbf16, #tpu.memory_space<vmem>>, vector<1x4x8x32xbf16>
    %32 = vector.shape_cast %31 : vector<1x4x8x32xbf16> to vector<4x8x32xbf16>
    %33 = arith.extf %32 : vector<4x8x32xbf16> to vector<4x8x32xf32>
    %34 = vector.extract_strided_slice %0 {offsets = [2, 0], sizes = [1, 32], strides = [1, 1]} : vector<9x32xf32> to vector<1x32xf32>
    %35 = vector.shape_cast %34 : vector<1x32xf32> to vector<1x1x32xf32>
    %36 = vector.broadcast %35 : vector<1x1x32xf32> to vector<4x8x32xf32>
    %37 = arith.mulf %33, %36 : vector<4x8x32xf32>
    %c0_i32_19 = arith.constant 0 : i32
    %38 = arith.addi %10, %c0_i32_19 : i32
    %c0_20 = arith.constant 0 : index
    %39 = arith.index_cast %38 : i32 to index
    %c0_21 = arith.constant 0 : index
    %c0_22 = arith.constant 0 : index
    %40 = vector.load %arg3[%c0_20, %39, %c0_21, %c0_22] : memref<1x9x9x32xbf16, #tpu.memory_space<vmem>>, vector<1x4x8x32xbf16>
    %41 = vector.shape_cast %40 : vector<1x4x8x32xbf16> to vector<4x8x32xbf16>
    %42 = arith.extf %41 : vector<4x8x32xbf16> to vector<4x8x32xf32>
    %43 = vector.extract_strided_slice %0 {offsets = [3, 0], sizes = [1, 32], strides = [1, 1]} : vector<9x32xf32> to vector<1x32xf32>
    %44 = vector.shape_cast %43 : vector<1x32xf32> to vector<1x1x32xf32>
    %45 = vector.broadcast %44 : vector<1x1x32xf32> to vector<4x8x32xf32>
    %46 = arith.mulf %42, %45 : vector<4x8x32xf32>
    %c0_i32_23 = arith.constant 0 : i32
    %47 = arith.addi %10, %c0_i32_23 : i32
    %c0_24 = arith.constant 0 : index
    %48 = arith.index_cast %47 : i32 to index
    %c0_25 = arith.constant 0 : index
    %c0_26 = arith.constant 0 : index
    %49 = vector.load %arg4[%c0_24, %48, %c0_25, %c0_26] : memref<1x9x9x32xbf16, #tpu.memory_space<vmem>>, vector<1x4x8x32xbf16>
    %50 = vector.shape_cast %49 : vector<1x4x8x32xbf16> to vector<4x8x32xbf16>
    %51 = arith.extf %50 : vector<4x8x32xbf16> to vector<4x8x32xf32>
    %52 = vector.extract_strided_slice %0 {offsets = [4, 0], sizes = [1, 32], strides = [1, 1]} : vector<9x32xf32> to vector<1x32xf32>
    %53 = vector.shape_cast %52 : vector<1x32xf32> to vector<1x1x32xf32>
    %54 = vector.broadcast %53 : vector<1x1x32xf32> to vector<4x8x32xf32>
    %55 = arith.mulf %51, %54 : vector<4x8x32xf32>
    %c0_i32_27 = arith.constant 0 : i32
    %56 = arith.addi %10, %c0_i32_27 : i32
    %c0_28 = arith.constant 0 : index
    %57 = arith.index_cast %56 : i32 to index
    %c1_29 = arith.constant 1 : index
    %c0_30 = arith.constant 0 : index
    %58 = vector.load %arg3[%c0_28, %57, %c1_29, %c0_30] : memref<1x9x9x32xbf16, #tpu.memory_space<vmem>>, vector<1x4x8x32xbf16>
    %59 = vector.shape_cast %58 : vector<1x4x8x32xbf16> to vector<4x8x32xbf16>
    %60 = arith.extf %59 : vector<4x8x32xbf16> to vector<4x8x32xf32>
    %61 = vector.extract_strided_slice %0 {offsets = [5, 0], sizes = [1, 32], strides = [1, 1]} : vector<9x32xf32> to vector<1x32xf32>
    %62 = vector.shape_cast %61 : vector<1x32xf32> to vector<1x1x32xf32>
    %63 = vector.broadcast %62 : vector<1x1x32xf32> to vector<4x8x32xf32>
    %64 = arith.mulf %60, %63 : vector<4x8x32xf32>
    %c1_i32 = arith.constant 1 : i32
    %65 = arith.addi %10, %c1_i32 : i32
    %c0_31 = arith.constant 0 : index
    %66 = arith.index_cast %65 : i32 to index
    %c0_32 = arith.constant 0 : index
    %c0_33 = arith.constant 0 : index
    %67 = vector.load %arg1[%c0_31, %66, %c0_32, %c0_33] : memref<1x9x9x32xbf16, #tpu.memory_space<vmem>>, vector<1x4x8x32xbf16>
    %68 = vector.shape_cast %67 : vector<1x4x8x32xbf16> to vector<4x8x32xbf16>
    %69 = arith.extf %68 : vector<4x8x32xbf16> to vector<4x8x32xf32>
    %70 = vector.extract_strided_slice %0 {offsets = [6, 0], sizes = [1, 32], strides = [1, 1]} : vector<9x32xf32> to vector<1x32xf32>
    %71 = vector.shape_cast %70 : vector<1x32xf32> to vector<1x1x32xf32>
    %72 = vector.broadcast %71 : vector<1x1x32xf32> to vector<4x8x32xf32>
    %73 = arith.mulf %69, %72 : vector<4x8x32xf32>
    %c1_i32_34 = arith.constant 1 : i32
    %74 = arith.addi %10, %c1_i32_34 : i32
    %c0_35 = arith.constant 0 : index
    %75 = arith.index_cast %74 : i32 to index
    %c0_36 = arith.constant 0 : index
    %c0_37 = arith.constant 0 : index
    %76 = vector.load %arg2[%c0_35, %75, %c0_36, %c0_37] : memref<1x9x9x32xbf16, #tpu.memory_space<vmem>>, vector<1x4x8x32xbf16>
    %77 = vector.shape_cast %76 : vector<1x4x8x32xbf16> to vector<4x8x32xbf16>
    %78 = arith.extf %77 : vector<4x8x32xbf16> to vector<4x8x32xf32>
    %79 = vector.extract_strided_slice %0 {offsets = [7, 0], sizes = [1, 32], strides = [1, 1]} : vector<9x32xf32> to vector<1x32xf32>
    %80 = vector.shape_cast %79 : vector<1x32xf32> to vector<1x1x32xf32>
    %81 = vector.broadcast %80 : vector<1x1x32xf32> to vector<4x8x32xf32>
    %82 = arith.mulf %78, %81 : vector<4x8x32xf32>
    %c1_i32_38 = arith.constant 1 : i32
    %83 = arith.addi %10, %c1_i32_38 : i32
    %c0_39 = arith.constant 0 : index
    %84 = arith.index_cast %83 : i32 to index
    %c1_40 = arith.constant 1 : index
    %c0_41 = arith.constant 0 : index
    %85 = vector.load %arg1[%c0_39, %84, %c1_40, %c0_41] : memref<1x9x9x32xbf16, #tpu.memory_space<vmem>>, vector<1x4x8x32xbf16>
    %86 = vector.shape_cast %85 : vector<1x4x8x32xbf16> to vector<4x8x32xbf16>
    %87 = arith.extf %86 : vector<4x8x32xbf16> to vector<4x8x32xf32>
    %88 = vector.extract_strided_slice %0 {offsets = [8, 0], sizes = [1, 32], strides = [1, 1]} : vector<9x32xf32> to vector<1x32xf32>
    %89 = vector.shape_cast %88 : vector<1x32xf32> to vector<1x1x32xf32>
    %90 = vector.broadcast %89 : vector<1x1x32xf32> to vector<4x8x32xf32>
    %91 = arith.mulf %87, %90 : vector<4x8x32xf32>
    %92 = arith.addf %19, %28 : vector<4x8x32xf32>
    %93 = arith.addf %37, %46 : vector<4x8x32xf32>
    %94 = arith.addf %55, %64 : vector<4x8x32xf32>
    %95 = arith.addf %73, %82 : vector<4x8x32xf32>
    %96 = arith.addf %92, %93 : vector<4x8x32xf32>
    %97 = arith.addf %94, %95 : vector<4x8x32xf32>
    %98 = arith.addf %96, %97 : vector<4x8x32xf32>
    %99 = arith.addf %98, %91 : vector<4x8x32xf32>
    %cst_42 = arith.constant dense<0.000000e+00> : vector<4x8xf32>
    %100 = vector.multi_reduction <add>, %99, %cst_42 [2] : vector<4x8x32xf32> to vector<4x8xf32>
    %101 = vector.shape_cast %100 : vector<4x8xf32> to vector<4x8x1xf32>
    %cst_43 = arith.constant 3.200000e+01 : f32
    %102 = vector.broadcast %cst_43 : f32 to vector<4x8x1xf32>
    %103 = arith.divf %101, %102 : vector<4x8x1xf32>
    %104 = vector.broadcast %103 : vector<4x8x1xf32> to vector<4x8x32xf32>
    %105 = arith.subf %99, %104 : vector<4x8x32xf32>
    %106 = arith.mulf %105, %105 : vector<4x8x32xf32>
    %cst_44 = arith.constant dense<0.000000e+00> : vector<4x8xf32>
    %107 = vector.multi_reduction <add>, %106, %cst_44 [2] : vector<4x8x32xf32> to vector<4x8xf32>
    %108 = vector.shape_cast %107 : vector<4x8xf32> to vector<4x8x1xf32>
    %cst_45 = arith.constant 3.200000e+01 : f32
    %109 = vector.broadcast %cst_45 : f32 to vector<4x8x1xf32>
    %110 = arith.divf %108, %109 : vector<4x8x1xf32>
    %111 = vector.broadcast %103 : vector<4x8x1xf32> to vector<4x8x32xf32>
    %112 = arith.subf %99, %111 : vector<4x8x32xf32>
    %cst_46 = arith.constant 9.99999974E-6 : f32
    %113 = vector.broadcast %cst_46 : f32 to vector<4x8x1xf32>
    %114 = arith.addf %110, %113 : vector<4x8x1xf32>
    %115 = math.rsqrt %114 : vector<4x8x1xf32>
    %116 = vector.broadcast %115 : vector<4x8x1xf32> to vector<4x8x32xf32>
    %117 = arith.mulf %112, %116 : vector<4x8x32xf32>
    %118 = vector.broadcast %2 : vector<1x1x32xf32> to vector<4x8x32xf32>
    %119 = arith.mulf %117, %118 : vector<4x8x32xf32>
    %120 = vector.broadcast %4 : vector<1x1x32xf32> to vector<4x8x32xf32>
    %121 = arith.addf %119, %120 : vector<4x8x32xf32>
    %cst_47 = arith.constant 3.000000e+00 : f32
    %122 = vector.broadcast %cst_47 : f32 to vector<4x8x32xf32>
    %123 = arith.addf %121, %122 : vector<4x8x32xf32>
    %cst_48 = arith.constant 0.000000e+00 : f32
    %cst_49 = arith.constant 6.000000e+00 : f32
    %124 = vector.broadcast %cst_48 : f32 to vector<4x8x32xf32>
    %125 = arith.maximumf %124, %123 : vector<4x8x32xf32>
    %126 = vector.broadcast %cst_49 : f32 to vector<4x8x32xf32>
    %127 = arith.minimumf %126, %125 : vector<4x8x32xf32>
    %128 = arith.mulf %121, %127 : vector<4x8x32xf32>
    %cst_50 = arith.constant 0.166666672 : f32
    %129 = vector.broadcast %cst_50 : f32 to vector<4x8x32xf32>
    %130 = arith.mulf %128, %129 : vector<4x8x32xf32>
    %131 = arith.truncf %130 : vector<4x8x32xf32> to vector<4x8x32xbf16>
    %c0_51 = arith.constant 0 : index
    %132 = arith.index_cast %10 : i32 to index
    %c0_52 = arith.constant 0 : index
    %c0_53 = arith.constant 0 : index
    %133 = vector.load %arg8[%c0_51, %132, %c0_52, %c0_53] : memref<1x8x8x32xbf16, #tpu.memory_space<vmem>>, vector<1x4x8x32xbf16>
    %134 = vector.shape_cast %133 : vector<1x4x8x32xbf16> to vector<4x8x32xbf16>
    %135 = vector.shape_cast %131 : vector<4x8x32xbf16> to vector<1x4x8x32xbf16>
    tpu.vector_store %arg8[%c0_51, %132, %c0_52, %c0_53], %135 {strides = array<i32>} : memref<1x8x8x32xbf16, #tpu.memory_space<vmem>>, vector<1x4x8x32xbf16>,
    %c0_54 = arith.constant 0 : index
    %c0_55 = arith.constant 0 : index
    %c0_56 = arith.constant 0 : index
    %136 = vector.load %arg9[%c0_54, %c0_55, %c0_56] : memref<1x1x32xf32, #tpu.memory_space<vmem>>, vector<1x1x32xf32>
    %137 = vector.shape_cast %136 : vector<1x1x32xf32> to vector<1x32xf32>
    %cst_57 = arith.constant dense<0.000000e+00> : vector<8x32xf32>
    %138 = vector.multi_reduction <add>, %130, %cst_57 [0] : vector<4x8x32xf32> to vector<8x32xf32>
    %cst_58 = arith.constant dense<0.000000e+00> : vector<32xf32>
    %139 = vector.multi_reduction <add>, %138, %cst_58 [0] : vector<8x32xf32> to vector<32xf32>
    %140 = vector.shape_cast %139 : vector<32xf32> to vector<1x32xf32>
    %cst_59 = arith.constant 1.562500e-02 : f32
    %141 = vector.broadcast %cst_59 : f32 to vector<1x32xf32>
    %142 = arith.mulf %140, %141 : vector<1x32xf32>
    %143 = arith.addf %137, %142 : vector<1x32xf32>
    %c0_60 = arith.constant 0 : index
    %c0_61 = arith.constant 0 : index
    %c0_62 = arith.constant 0 : index
    %144 = vector.load %arg9[%c0_60, %c0_61, %c0_62] : memref<1x1x32xf32, #tpu.memory_space<vmem>>, vector<1x1x32xf32>
    %145 = vector.shape_cast %144 : vector<1x1x32xf32> to vector<1x32xf32>
    %146 = vector.shape_cast %143 : vector<1x32xf32> to vector<1x1x32xf32>
    tpu.vector_store %arg9[%c0_60, %c0_61, %c0_62], %146 {strides = array<i32>} : memref<1x1x32xf32, #tpu.memory_space<vmem>>, vector<1x1x32xf32>,
    %c1_i32_63 = arith.constant 1 : i32
    %c4_i32_64 = arith.constant 4 : i32
    %147 = arith.muli %c1_i32_63, %c4_i32_64 : i32
    %148 = tpu.assume_multiple %147, 4 : i32
    %c0_i32_65 = arith.constant 0 : i32
    %149 = arith.addi %148, %c0_i32_65 : i32
    %c0_66 = arith.constant 0 : index
    %150 = arith.index_cast %149 : i32 to index
    %c0_67 = arith.constant 0 : index
    %c0_68 = arith.constant 0 : index
    %151 = vector.load %arg1[%c0_66, %150, %c0_67, %c0_68] : memref<1x9x9x32xbf16, #tpu.memory_space<vmem>>, vector<1x4x8x32xbf16>
    %152 = vector.shape_cast %151 : vector<1x4x8x32xbf16> to vector<4x8x32xbf16>
    %153 = arith.extf %152 : vector<4x8x32xbf16> to vector<4x8x32xf32>
    %154 = vector.extract_strided_slice %0 {offsets = [0, 0], sizes = [1, 32], strides = [1, 1]} : vector<9x32xf32> to vector<1x32xf32>
    %155 = vector.shape_cast %154 : vector<1x32xf32> to vector<1x1x32xf32>
    %156 = vector.broadcast %155 : vector<1x1x32xf32> to vector<4x8x32xf32>
    %157 = arith.mulf %153, %156 : vector<4x8x32xf32>
    %c0_i32_69 = arith.constant 0 : i32
    %158 = arith.addi %148, %c0_i32_69 : i32
    %c0_70 = arith.constant 0 : index
    %159 = arith.index_cast %158 : i32 to index
    %c0_71 = arith.constant 0 : index
    %c0_72 = arith.constant 0 : index
    %160 = vector.load %arg2[%c0_70, %159, %c0_71, %c0_72] : memref<1x9x9x32xbf16, #tpu.memory_space<vmem>>, vector<1x4x8x32xbf16>
    %161 = vector.shape_cast %160 : vector<1x4x8x32xbf16> to vector<4x8x32xbf16>
    %162 = arith.extf %161 : vector<4x8x32xbf16> to vector<4x8x32xf32>
    %163 = vector.extract_strided_slice %0 {offsets = [1, 0], sizes = [1, 32], strides = [1, 1]} : vector<9x32xf32> to vector<1x32xf32>
    %164 = vector.shape_cast %163 : vector<1x32xf32> to vector<1x1x32xf32>
    %165 = vector.broadcast %164 : vector<1x1x32xf32> to vector<4x8x32xf32>
    %166 = arith.mulf %162, %165 : vector<4x8x32xf32>
    %c0_i32_73 = arith.constant 0 : i32
    %167 = arith.addi %148, %c0_i32_73 : i32
    %c0_74 = arith.constant 0 : index
    %168 = arith.index_cast %167 : i32 to index
    %c1_75 = arith.constant 1 : index
    %c0_76 = arith.constant 0 : index
    %169 = vector.load %arg1[%c0_74, %168, %c1_75, %c0_76] : memref<1x9x9x32xbf16, #tpu.memory_space<vmem>>, vector<1x4x8x32xbf16>
    %170 = vector.shape_cast %169 : vector<1x4x8x32xbf16> to vector<4x8x32xbf16>
    %171 = arith.extf %170 : vector<4x8x32xbf16> to vector<4x8x32xf32>
    %172 = vector.extract_strided_slice %0 {offsets = [2, 0], sizes = [1, 32], strides = [1, 1]} : vector<9x32xf32> to vector<1x32xf32>
    %173 = vector.shape_cast %172 : vector<1x32xf32> to vector<1x1x32xf32>
    %174 = vector.broadcast %173 : vector<1x1x32xf32> to vector<4x8x32xf32>
    %175 = arith.mulf %171, %174 : vector<4x8x32xf32>
    %c0_i32_77 = arith.constant 0 : i32
    %176 = arith.addi %148, %c0_i32_77 : i32
    %c0_78 = arith.constant 0 : index
    %177 = arith.index_cast %176 : i32 to index
    %c0_79 = arith.constant 0 : index
    %c0_80 = arith.constant 0 : index
    %178 = vector.load %arg3[%c0_78, %177, %c0_79, %c0_80] : memref<1x9x9x32xbf16, #tpu.memory_space<vmem>>, vector<1x4x8x32xbf16>
    %179 = vector.shape_cast %178 : vector<1x4x8x32xbf16> to vector<4x8x32xbf16>
    %180 = arith.extf %179 : vector<4x8x32xbf16> to vector<4x8x32xf32>
    %181 = vector.extract_strided_slice %0 {offsets = [3, 0], sizes = [1, 32], strides = [1, 1]} : vector<9x32xf32> to vector<1x32xf32>
    %182 = vector.shape_cast %181 : vector<1x32xf32> to vector<1x1x32xf32>
    %183 = vector.broadcast %182 : vector<1x1x32xf32> to vector<4x8x32xf32>
    %184 = arith.mulf %180, %183 : vector<4x8x32xf32>
    %c0_i32_81 = arith.constant 0 : i32
    %185 = arith.addi %148, %c0_i32_81 : i32
    %c0_82 = arith.constant 0 : index
    %186 = arith.index_cast %185 : i32 to index
    %c0_83 = arith.constant 0 : index
    %c0_84 = arith.constant 0 : index
    %187 = vector.load %arg4[%c0_82, %186, %c0_83, %c0_84] : memref<1x9x9x32xbf16, #tpu.memory_space<vmem>>, vector<1x4x8x32xbf16>
    %188 = vector.shape_cast %187 : vector<1x4x8x32xbf16> to vector<4x8x32xbf16>
    %189 = arith.extf %188 : vector<4x8x32xbf16> to vector<4x8x32xf32>
    %190 = vector.extract_strided_slice %0 {offsets = [4, 0], sizes = [1, 32], strides = [1, 1]} : vector<9x32xf32> to vector<1x32xf32>
    %191 = vector.shape_cast %190 : vector<1x32xf32> to vector<1x1x32xf32>
    %192 = vector.broadcast %191 : vector<1x1x32xf32> to vector<4x8x32xf32>
    %193 = arith.mulf %189, %192 : vector<4x8x32xf32>
    %c0_i32_85 = arith.constant 0 : i32
    %194 = arith.addi %148, %c0_i32_85 : i32
    %c0_86 = arith.constant 0 : index
    %195 = arith.index_cast %194 : i32 to index
    %c1_87 = arith.constant 1 : index
    %c0_88 = arith.constant 0 : index
    %196 = vector.load %arg3[%c0_86, %195, %c1_87, %c0_88] : memref<1x9x9x32xbf16, #tpu.memory_space<vmem>>, vector<1x4x8x32xbf16>
    %197 = vector.shape_cast %196 : vector<1x4x8x32xbf16> to vector<4x8x32xbf16>
    %198 = arith.extf %197 : vector<4x8x32xbf16> to vector<4x8x32xf32>
    %199 = vector.extract_strided_slice %0 {offsets = [5, 0], sizes = [1, 32], strides = [1, 1]} : vector<9x32xf32> to vector<1x32xf32>
    %200 = vector.shape_cast %199 : vector<1x32xf32> to vector<1x1x32xf32>
    %201 = vector.broadcast %200 : vector<1x1x32xf32> to vector<4x8x32xf32>
    %202 = arith.mulf %198, %201 : vector<4x8x32xf32>
    %c1_i32_89 = arith.constant 1 : i32
    %203 = arith.addi %148, %c1_i32_89 : i32
    %c0_90 = arith.constant 0 : index
    %204 = arith.index_cast %203 : i32 to index
    %c0_91 = arith.constant 0 : index
    %c0_92 = arith.constant 0 : index
    %205 = vector.load %arg1[%c0_90, %204, %c0_91, %c0_92] : memref<1x9x9x32xbf16, #tpu.memory_space<vmem>>, vector<1x4x8x32xbf16>
    %206 = vector.shape_cast %205 : vector<1x4x8x32xbf16> to vector<4x8x32xbf16>
    %207 = arith.extf %206 : vector<4x8x32xbf16> to vector<4x8x32xf32>
    %208 = vector.extract_strided_slice %0 {offsets = [6, 0], sizes = [1, 32], strides = [1, 1]} : vector<9x32xf32> to vector<1x32xf32>
    %209 = vector.shape_cast %208 : vector<1x32xf32> to vector<1x1x32xf32>
    %210 = vector.broadcast %209 : vector<1x1x32xf32> to vector<4x8x32xf32>
    %211 = arith.mulf %207, %210 : vector<4x8x32xf32>
    %c1_i32_93 = arith.constant 1 : i32
    %212 = arith.addi %148, %c1_i32_93 : i32
    %c0_94 = arith.constant 0 : index
    %213 = arith.index_cast %212 : i32 to index
    %c0_95 = arith.constant 0 : index
    %c0_96 = arith.constant 0 : index
    %214 = vector.load %arg2[%c0_94, %213, %c0_95, %c0_96] : memref<1x9x9x32xbf16, #tpu.memory_space<vmem>>, vector<1x4x8x32xbf16>
    %215 = vector.shape_cast %214 : vector<1x4x8x32xbf16> to vector<4x8x32xbf16>
    %216 = arith.extf %215 : vector<4x8x32xbf16> to vector<4x8x32xf32>
    %217 = vector.extract_strided_slice %0 {offsets = [7, 0], sizes = [1, 32], strides = [1, 1]} : vector<9x32xf32> to vector<1x32xf32>
    %218 = vector.shape_cast %217 : vector<1x32xf32> to vector<1x1x32xf32>
    %219 = vector.broadcast %218 : vector<1x1x32xf32> to vector<4x8x32xf32>
    %220 = arith.mulf %216, %219 : vector<4x8x32xf32>
    %c1_i32_97 = arith.constant 1 : i32
    %221 = arith.addi %148, %c1_i32_97 : i32
    %c0_98 = arith.constant 0 : index
    %222 = arith.index_cast %221 : i32 to index
    %c1_99 = arith.constant 1 : index
    %c0_100 = arith.constant 0 : index
    %223 = vector.load %arg1[%c0_98, %222, %c1_99, %c0_100] : memref<1x9x9x32xbf16, #tpu.memory_space<vmem>>, vector<1x4x8x32xbf16>
    %224 = vector.shape_cast %223 : vector<1x4x8x32xbf16> to vector<4x8x32xbf16>
    %225 = arith.extf %224 : vector<4x8x32xbf16> to vector<4x8x32xf32>
    %226 = vector.extract_strided_slice %0 {offsets = [8, 0], sizes = [1, 32], strides = [1, 1]} : vector<9x32xf32> to vector<1x32xf32>
    %227 = vector.shape_cast %226 : vector<1x32xf32> to vector<1x1x32xf32>
    %228 = vector.broadcast %227 : vector<1x1x32xf32> to vector<4x8x32xf32>
    %229 = arith.mulf %225, %228 : vector<4x8x32xf32>
    %230 = arith.addf %157, %166 : vector<4x8x32xf32>
    %231 = arith.addf %175, %184 : vector<4x8x32xf32>
    %232 = arith.addf %193, %202 : vector<4x8x32xf32>
    %233 = arith.addf %211, %220 : vector<4x8x32xf32>
    %234 = arith.addf %230, %231 : vector<4x8x32xf32>
    %235 = arith.addf %232, %233 : vector<4x8x32xf32>
    %236 = arith.addf %234, %235 : vector<4x8x32xf32>
    %237 = arith.addf %236, %229 : vector<4x8x32xf32>
    %cst_101 = arith.constant dense<0.000000e+00> : vector<4x8xf32>
    %238 = vector.multi_reduction <add>, %237, %cst_101 [2] : vector<4x8x32xf32> to vector<4x8xf32>
    %239 = vector.shape_cast %238 : vector<4x8xf32> to vector<4x8x1xf32>
    %cst_102 = arith.constant 3.200000e+01 : f32
    %240 = vector.broadcast %cst_102 : f32 to vector<4x8x1xf32>
    %241 = arith.divf %239, %240 : vector<4x8x1xf32>
    %242 = vector.broadcast %241 : vector<4x8x1xf32> to vector<4x8x32xf32>
    %243 = arith.subf %237, %242 : vector<4x8x32xf32>
    %244 = arith.mulf %243, %243 : vector<4x8x32xf32>
    %cst_103 = arith.constant dense<0.000000e+00> : vector<4x8xf32>
    %245 = vector.multi_reduction <add>, %244, %cst_103 [2] : vector<4x8x32xf32> to vector<4x8xf32>
    %246 = vector.shape_cast %245 : vector<4x8xf32> to vector<4x8x1xf32>
    %cst_104 = arith.constant 3.200000e+01 : f32
    %247 = vector.broadcast %cst_104 : f32 to vector<4x8x1xf32>
    %248 = arith.divf %246, %247 : vector<4x8x1xf32>
    %249 = vector.broadcast %241 : vector<4x8x1xf32> to vector<4x8x32xf32>
    %250 = arith.subf %237, %249 : vector<4x8x32xf32>
    %cst_105 = arith.constant 9.99999974E-6 : f32
    %251 = vector.broadcast %cst_105 : f32 to vector<4x8x1xf32>
    %252 = arith.addf %248, %251 : vector<4x8x1xf32>
    %253 = math.rsqrt %252 : vector<4x8x1xf32>
    %254 = vector.broadcast %253 : vector<4x8x1xf32> to vector<4x8x32xf32>
    %255 = arith.mulf %250, %254 : vector<4x8x32xf32>
    %256 = vector.broadcast %2 : vector<1x1x32xf32> to vector<4x8x32xf32>
    %257 = arith.mulf %255, %256 : vector<4x8x32xf32>
    %258 = vector.broadcast %4 : vector<1x1x32xf32> to vector<4x8x32xf32>
    %259 = arith.addf %257, %258 : vector<4x8x32xf32>
    %cst_106 = arith.constant 3.000000e+00 : f32
    %260 = vector.broadcast %cst_106 : f32 to vector<4x8x32xf32>
    %261 = arith.addf %259, %260 : vector<4x8x32xf32>
    %cst_107 = arith.constant 0.000000e+00 : f32
    %cst_108 = arith.constant 6.000000e+00 : f32
    %262 = vector.broadcast %cst_107 : f32 to vector<4x8x32xf32>
    %263 = arith.maximumf %262, %261 : vector<4x8x32xf32>
    %264 = vector.broadcast %cst_108 : f32 to vector<4x8x32xf32>
    %265 = arith.minimumf %264, %263 : vector<4x8x32xf32>
    %266 = arith.mulf %259, %265 : vector<4x8x32xf32>
    %cst_109 = arith.constant 0.166666672 : f32
    %267 = vector.broadcast %cst_109 : f32 to vector<4x8x32xf32>
    %268 = arith.mulf %266, %267 : vector<4x8x32xf32>
    %269 = arith.truncf %268 : vector<4x8x32xf32> to vector<4x8x32xbf16>
    %c0_110 = arith.constant 0 : index
    %270 = arith.index_cast %148 : i32 to index
    %c0_111 = arith.constant 0 : index
    %c0_112 = arith.constant 0 : index
    %271 = vector.load %arg8[%c0_110, %270, %c0_111, %c0_112] : memref<1x8x8x32xbf16, #tpu.memory_space<vmem>>, vector<1x4x8x32xbf16>
    %272 = vector.shape_cast %271 : vector<1x4x8x32xbf16> to vector<4x8x32xbf16>
    %273 = vector.shape_cast %269 : vector<4x8x32xbf16> to vector<1x4x8x32xbf16>
    tpu.vector_store %arg8[%c0_110, %270, %c0_111, %c0_112], %273 {strides = array<i32>} : memref<1x8x8x32xbf16, #tpu.memory_space<vmem>>, vector<1x4x8x32xbf16>,
    %c0_113 = arith.constant 0 : index
    %c0_114 = arith.constant 0 : index
    %c0_115 = arith.constant 0 : index
    %274 = vector.load %arg9[%c0_113, %c0_114, %c0_115] : memref<1x1x32xf32, #tpu.memory_space<vmem>>, vector<1x1x32xf32>
    %275 = vector.shape_cast %274 : vector<1x1x32xf32> to vector<1x32xf32>
    %cst_116 = arith.constant dense<0.000000e+00> : vector<8x32xf32>
    %276 = vector.multi_reduction <add>, %268, %cst_116 [0] : vector<4x8x32xf32> to vector<8x32xf32>
    %cst_117 = arith.constant dense<0.000000e+00> : vector<32xf32>
    %277 = vector.multi_reduction <add>, %276, %cst_117 [0] : vector<8x32xf32> to vector<32xf32>
    %278 = vector.shape_cast %277 : vector<32xf32> to vector<1x32xf32>
    %cst_118 = arith.constant 1.562500e-02 : f32
    %279 = vector.broadcast %cst_118 : f32 to vector<1x32xf32>
    %280 = arith.mulf %278, %279 : vector<1x32xf32>
    %281 = arith.addf %275, %280 : vector<1x32xf32>
    %c0_119 = arith.constant 0 : index
    %c0_120 = arith.constant 0 : index
    %c0_121 = arith.constant 0 : index
    %282 = vector.load %arg9[%c0_119, %c0_120, %c0_121] : memref<1x1x32xf32, #tpu.memory_space<vmem>>, vector<1x1x32xf32>
    %283 = vector.shape_cast %282 : vector<1x1x32xf32> to vector<1x32xf32>
    %284 = vector.shape_cast %281 : vector<1x32xf32> to vector<1x1x32xf32>
    tpu.vector_store %arg9[%c0_119, %c0_120, %c0_121], %284 {strides = array<i32>} : memref<1x1x32xf32, #tpu.memory_space<vmem>>, vector<1x1x32xf32>,
    %c2_i32 = arith.constant 2 : i32
    return
  }
  func.func @transform_0(%arg0: i32) -> (i32, i32, i32, i32) {
    %c0_i32 = arith.constant 0 : i32
    %c0_i32_0 = arith.constant 0 : i32
    %c0_i32_1 = arith.constant 0 : i32
    %c0_i32_2 = arith.constant 0 : i32
    return %arg0, %c0_i32, %c0_i32_0, %c0_i32_1 : i32, i32, i32, i32
  }
  func.func @transform_1(%arg0: i32) -> (i32, i32, i32, i32) {
    %c0_i32 = arith.constant 0 : i32
    %c0_i32_0 = arith.constant 0 : i32
    %c0_i32_1 = arith.constant 0 : i32
    %c0_i32_2 = arith.constant 0 : i32
    return %arg0, %c0_i32, %c0_i32_0, %c0_i32_1 : i32, i32, i32, i32
  }
  func.func @transform_2(%arg0: i32) -> (i32, i32, i32, i32) {
    %c0_i32 = arith.constant 0 : i32
    %c0_i32_0 = arith.constant 0 : i32
    %c0_i32_1 = arith.constant 0 : i32
    %c0_i32_2 = arith.constant 0 : i32
    return %arg0, %c0_i32, %c0_i32_0, %c0_i32_1 : i32, i32, i32, i32
  }
  func.func @transform_3(%arg0: i32) -> (i32, i32, i32, i32) {
    %c0_i32 = arith.constant 0 : i32
    %c0_i32_0 = arith.constant 0 : i32
    %c0_i32_1 = arith.constant 0 : i32
    %c0_i32_2 = arith.constant 0 : i32
    return %arg0, %c0_i32, %c0_i32_0, %c0_i32_1 : i32, i32, i32, i32
  }
  func.func @transform_4(%arg0: i32) -> (i32, i32) {
    %c0_i32 = arith.constant 0 : i32
    %c0_i32_0 = arith.constant 0 : i32
    %c0_i32_1 = arith.constant 0 : i32
    return %c0_i32, %c0_i32_0 : i32, i32
  }
  func.func @transform_5(%arg0: i32) -> (i32, i32) {
    %c0_i32 = arith.constant 0 : i32
    %c0_i32_0 = arith.constant 0 : i32
    %c0_i32_1 = arith.constant 0 : i32
    return %c0_i32, %c0_i32_0 : i32, i32
  }
  func.func @transform_6(%arg0: i32) -> (i32, i32) {
    %c0_i32 = arith.constant 0 : i32
    %c0_i32_0 = arith.constant 0 : i32
    %c0_i32_1 = arith.constant 0 : i32
    return %c0_i32, %c0_i32_0 : i32, i32
  }
  func.func @transform_7(%arg0: i32) -> (i32, i32, i32, i32) {
    %c0_i32 = arith.constant 0 : i32
    %c0_i32_0 = arith.constant 0 : i32
    %c0_i32_1 = arith.constant 0 : i32
    %c0_i32_2 = arith.constant 0 : i32
    return %arg0, %c0_i32, %c0_i32_0, %c0_i32_1 : i32, i32, i32, i32
  }
  func.func @transform_8(%arg0: i32) -> (i32, i32, i32) {
    %c0_i32 = arith.constant 0 : i32
    %c0_i32_0 = arith.constant 0 : i32
    %c0_i32_1 = arith.constant 0 : i32
    return %arg0, %c0_i32, %c0_i32_0 : i32, i32, i32
  }
}

</mosaic_0001>

<llo_original>
// kernel: ldp_block_forward.7
$region0: #{ldp_block_forward.7}
  #allocation0 [shape = 'u32[]', space=smem, size = 0x4, offset = 0x4, fixed_abs, tag = 'smem constant byte address 0x4 - core index']
  #allocation1 [shape = 'u32[72,128]{1,0:T(1,128)}', space=vmem, size = 0x9000, scoped, tag = 'internal scratch']
  #allocation2 [shape = 'bf16[128,32]{1,0:T(8,128)(2,1)}', space=vmem, size = 0x8000, scoped, tag = 'scratch operand']
  %s0 = inlined_call_operand.vmem [shape: f32[512,24], index: 0, kind: input, shape index: {}]
  %s1 = inlined_call_operand.vmem [shape: bf16[24,32], index: 1, kind: input, shape index: {}]
  %s2 = inlined_call_operand.vmem [shape: f32[1,32], index: 2, kind: input, shape index: {}]
  %s3 = inlined_call_operand.vmem [shape: bf16[32,32], index: 3, kind: input, shape index: {}]
  %s4 = inlined_call_operand.vmem [shape: f32[1,32], index: 4, kind: input, shape index: {}]
  %s5 = inlined_call_operand.vmem [shape: bf16[512,32], index: 5, kind: output, shape index: {}]
  %s6 = sld [smem:[#allocation0]]
  $region57: #{ldp_block_forward.7} parent=0
    _
  %s8 = ssub.s32 1, %s6
  %s9 = scalar_select 0, %s8, %s6
  loop: start=0, step=1, limit=6
  $region2: #{ldp_block_forward.7} parent=0 // loop_pre_header
    _
  $region3: #{ldp_block_forward.7} parent=0 // loop_header
    %s11 = sphi 0, %s15
    %p12 = scmp.ge.s32.totalorder %s11, 6
    %s18 = sphi 0, %s30
    %s19 = sphi 0, %s26
    %s20 = sphi 0, %s18
    %s21 = sphi 0, %s19
    %s22 = sphi 0, %s20
    %s23 = sphi 0, %s21
    %s33 = sphi 0, %s35
    %s36 = sphi 0, %s33
    %s37 = sphi 0, %s36
    %s53 = sphi 0, %s37
    %s57 = sphi 0, %s57
    %s59 = sphi 0, %s57
    %s60 = sphi 0, %s59
    %s74 = sphi 0, %s60
    %s78 = sphi 0, %s78
    %s80 = sphi 0, %s78
    %s81 = sphi 0, %s80
    %s95 = sphi 0, %s81
    %s101 = sphi 0, %s103
    %s104 = sphi 0, %s101
    %s105 = sphi 0, %s104
    %s121 = sphi 0, %s105
    %s127 = sphi 0, %s129
    %s130 = sphi 0, %s127
    %s131 = sphi 0, %s130
    %s147 = sphi 0, %s131
    %s155 = sphi 0, %s157
    %s158 = sphi 0, %s155
    %s159 = sphi 0, %s158
    %s175 = sphi 0, %s159
  $region4: #{ldp_block_forward.7} parent=0 // loop_header_branch
    %14 = sbr.rel (%p12) target = $region8
  $region5: #{ldp_block_forward.7} parent=0 // loop_body
    %s16 = ssub.s32 %s11, 1
    %s17 = ssub.s32 %s11, 2
    %s24 = sadd.s32 1, %s19
    %p25 = scmp.ge.s32.totalorder %s24, 1
    %s26 = scalar_select %p25, 0, %s24
    %s27 = sadd.s32 1, %s18
    %s28 = scalar_select %p25, %s27, %s18
    %p29 = scmp.ge.s32.totalorder %s28, 4
    %s30 = scalar_select %p29, 0, %s28
    %s31 = ssub.s32 %s18, %s30
    %p32 = scmp.eq.s32.totalorder %s31, 0
    %s34 = sadd.s32 %s33, 1
    %s35 = scalar_select %p32, %s33, %s34
    %p38 = pneg %p32
    %p39 = scmp.eq.s32.totalorder %s11, 3
    %p40 = por %p38, %p39
    %p41 = scmp.ne.s32.totalorder %s33, %s36
    %p42 = scmp.eq.s32.totalorder %s11, 0
    %p43 = por %p41, %p42
    %p44 = scmp.ne.s32.totalorder %s33, %s36
    %p45 = scmp.eq.s32.totalorder %s16, 3
    %p46 = por %p44, %p45
    %p47 = scmp.ne.s32.totalorder %s36, %s37
    %p48 = scmp.eq.s32.totalorder %s16, 0
    %p49 = por %p47, %p48
    %p50 = scmp.ne.s32.totalorder %s36, %s37
    %p51 = scmp.eq.s32.totalorder %s17, 3
    %p52 = por %p50, %p51
    %p54 = scmp.ne.s32.totalorder %s37, %s53
    %p55 = scmp.eq.s32.totalorder %s17, 0
    %p56 = por %p54, %p55
    %s58 = sadd.s32 %s57, 1
    %p61 = scmp.eq.s32.totalorder %s11, 3
    %p62 = scmp.ne.s32.totalorder %s57, %s59
    %p63 = scmp.eq.s32.totalorder %s11, 0
    %p64 = por %p62, %p63
    %p65 = scmp.ne.s32.totalorder %s57, %s59
    %p66 = scmp.eq.s32.totalorder %s16, 3
    %p67 = por %p65, %p66
    %p68 = scmp.ne.s32.totalorder %s59, %s60
    %p69 = scmp.eq.s32.totalorder %s16, 0
    %p70 = por %p68, %p69
    %p71 = scmp.ne.s32.totalorder %s59, %s60
    %p72 = scmp.eq.s32.totalorder %s17, 3
    %p73 = por %p71, %p72
    %p75 = scmp.ne.s32.totalorder %s60, %s74
    %p76 = scmp.eq.s32.totalorder %s17, 0
    %p77 = por %p75, %p76
    %s79 = sadd.s32 %s78, 1
    %p82 = scmp.eq.s32.totalorder %s11, 3
    %p83 = scmp.ne.s32.totalorder %s78, %s80
    %p84 = scmp.eq.s32.totalorder %s11, 0
    %p85 = por %p83, %p84
    %p86 = scmp.ne.s32.totalorder %s78, %s80
    %p87 = scmp.eq.s32.totalorder %s16, 3
    %p88 = por %p86, %p87
    %p89 = scmp.ne.s32.totalorder %s80, %s81
    %p90 = scmp.eq.s32.totalorder %s16, 0
    %p91 = por %p89, %p90
    %p92 = scmp.ne.s32.totalorder %s80, %s81
    %p93 = scmp.eq.s32.totalorder %s17, 3
    %p94 = por %p92, %p93
    %p96 = scmp.ne.s32.totalorder %s81, %s95
    %p97 = scmp.eq.s32.totalorder %s17, 0
    %p98 = por %p96, %p97
    %s99 = ssub.s32 %s19, %s26
    %p100 = scmp.eq.s32.totalorder %s99, 0
    %s102 = sadd.s32 %s101, 1
    %s103 = scalar_select %p100, %s101, %s102
    %p106 = pneg %p100
    %p107 = scmp.eq.s32.totalorder %s11, 3
    %p108 = por %p106, %p107
    %p109 = scmp.ne.s32.totalorder %s101, %s104
    %p110 = scmp.eq.s32.totalorder %s11, 0
    %p111 = por %p109, %p110
    %p112 = scmp.ne.s32.totalorder %s101, %s104
    %p113 = scmp.eq.s32.totalorder %s16, 3
    %p114 = por %p112, %p113
    %p115 = scmp.ne.s32.totalorder %s104, %s105
    %p116 = scmp.eq.s32.totalorder %s16, 0
    %p117 = por %p115, %p116
    %p118 = scmp.ne.s32.totalorder %s104, %s105
    %p119 = scmp.eq.s32.totalorder %s17, 3
    %p120 = por %p118, %p119
    %p122 = scmp.ne.s32.totalorder %s105, %s121
    %p123 = scmp.eq.s32.totalorder %s17, 0
    %p124 = por %p122, %p123
    %s125 = ssub.s32 %s19, %s26
    %p126 = scmp.eq.s32.totalorder %s125, 0
    %s128 = sadd.s32 %s127, 1
    %s129 = scalar_select %p126, %s127, %s128
    %p132 = pneg %p126
    %p133 = scmp.eq.s32.totalorder %s11, 3
    %p134 = por %p132, %p133
    %p135 = scmp.ne.s32.totalorder %s127, %s130
    %p136 = scmp.eq.s32.totalorder %s11, 0
    %p137 = por %p135, %p136
    %p138 = scmp.ne.s32.totalorder %s127, %s130
    %p139 = scmp.eq.s32.totalorder %s16, 3
    %p140 = por %p138, %p139
    %p141 = scmp.ne.s32.totalorder %s130, %s131
    %p142 = scmp.eq.s32.totalorder %s16, 0
    %p143 = por %p141, %p142
    %p144 = scmp.ne.s32.totalorder %s130, %s131
    %p145 = scmp.eq.s32.totalorder %s17, 3
    %p146 = por %p144, %p145
    %p148 = scmp.ne.s32.totalorder %s131, %s147
    %p149 = scmp.eq.s32.totalorder %s17, 0
    %p150 = por %p148, %p149
    %s151 = ssub.s32 %s18, %s30
    %s152 = ssub.s32 %s19, %s26
    %s153 = sor.u32 %s151, %s152
    %p154 = scmp.eq.s32.totalorder %s153, 0
    %s156 = sadd.s32 %s155, 1
    %s157 = scalar_select %p154, %s155, %s156
    %p160 = pneg %p154
    %p161 = scmp.eq.s32.totalorder %s11, 3
    %p162 = por %p160, %p161
    %p163 = scmp.ne.s32.totalorder %s155, %s158
    %p164 = scmp.eq.s32.totalorder %s11, 0
    %p165 = por %p163, %p164
    %p166 = scmp.ne.s32.totalorder %s155, %s158
    %p167 = scmp.eq.s32.totalorder %s16, 3
    %p168 = por %p166, %p167
    %p169 = scmp.ne.s32.totalorder %s158, %s159
    %p170 = scmp.eq.s32.totalorder %s16, 0
    %p171 = por %p169, %p170
    %p172 = scmp.ne.s32.totalorder %s158, %s159
    %p173 = scmp.eq.s32.totalorder %s17, 3
    %p174 = por %p172, %p173
    %p176 = scmp.ne.s32.totalorder %s159, %s175
    %p177 = scmp.eq.s32.totalorder %s17, 0
    %p178 = por %p176, %p177
    %p179 = scmp.le.s32.totalorder 1, %s11
    %p180 = scmp.lt.s32.totalorder %s11, 5
    %p181 = pnand %p179, %p180
    %p182 = pneg %p181
    // Predicated region
    $region9: #{ldp_block_forward.7} parent=5 // pred_check
      _
    $region10: #{ldp_block_forward.7} parent=5 // pred_check_branch
      %184 = sbr.rel (%p181) target = $region12
    $region11: #{ldp_block_forward.7} parent=5 // pred_region
      %s185 = ssub.s32 %s11, 1
      // Predicated region
      $region13: #{ldp_block_forward.7} parent=11 // pred_check
        %p186 = pneg %p70
      $region14: #{ldp_block_forward.7} parent=11 // pred_check_branch
        %188 = sbr.rel (%p186) target = $region16
      $region15: #{ldp_block_forward.7} parent=11 // pred_region
        _
      $region16: #{ldp_block_forward.7} parent=11 // pred_fallthru
        _
      // Predicated region
      $region17: #{ldp_block_forward.7} parent=11 // pred_check
        %p189 = pneg %p91
      $region18: #{ldp_block_forward.7} parent=11 // pred_check_branch
        %191 = sbr.rel (%p189) target = $region20
      $region19: #{ldp_block_forward.7} parent=11 // pred_region
        _
      $region20: #{ldp_block_forward.7} parent=11 // pred_fallthru
        _
      // Predicated region
      $region21: #{ldp_block_forward.7} parent=11 // pred_check
        %p192 = pneg %p117
      $region22: #{ldp_block_forward.7} parent=11 // pred_check_branch
        %194 = sbr.rel (%p192) target = $region24
      $region23: #{ldp_block_forward.7} parent=11 // pred_region
        %p195 = scmp.lt.s32.totalorder %s21, 0
        %s196 = scalar_select %p195, %s21, 0
        %s197 = smul.addr %s196, 4
        %s198 = scalar_lea.vmem %s3, %s197
      $region24: #{ldp_block_forward.7} parent=11 // pred_fallthru
        _
      // Predicated region
      $region25: #{ldp_block_forward.7} parent=11 // pred_check
        %p199 = pneg %p143
      $region26: #{ldp_block_forward.7} parent=11 // pred_check_branch
        %201 = sbr.rel (%p199) target = $region28
      $region27: #{ldp_block_forward.7} parent=11 // pred_region
        %p202 = scmp.lt.s32.totalorder %s21, 0
        %s203 = scalar_select %p202, %s21, 0
        %s204 = scalar_lea.vmem %s4, %s203
      $region28: #{ldp_block_forward.7} parent=11 // pred_fallthru
        _
    $region12: #{ldp_block_forward.7} parent=5 // pred_fallthru
      _
    %p205 = scmp.lt.s32.totalorder %s11, 4
    // Predicated region
    $region29: #{ldp_block_forward.7} parent=5 // pred_check
      %p206 = pneg %p205
    $region30: #{ldp_block_forward.7} parent=5 // pred_check_branch
      %208 = sbr.rel (%p206) target = $region32
    $region31: #{ldp_block_forward.7} parent=5 // pred_region
      // Predicated region
      $region33: #{ldp_block_forward.7} parent=31 // pred_check
        %p209 = pneg %p43
      $region34: #{ldp_block_forward.7} parent=31 // pred_check_branch
        %211 = sbr.rel (%p209) target = $region36
      $region35: #{ldp_block_forward.7} parent=31 // pred_region
        %s212 = smul.u32 16, %s18
        %p213 = scmp.lt.s32.totalorder %s212, 63
        %s214 = scalar_select %p213, %s212, 63
        %s215 = smul.addr %s214, 8
        %s216 = scalar_lea.vmem %s0, %s215
        %s217 = smul.u32 16, %s18
      $region36: #{ldp_block_forward.7} parent=31 // pred_fallthru
        _
    $region32: #{ldp_block_forward.7} parent=5 // pred_fallthru
      _
    %p218 = scmp.le.s32.totalorder 1, %s11
    %p219 = scmp.lt.s32.totalorder %s11, 5
    %p220 = pnand %p218, %p219
    %p221 = pneg %p220
    // Predicated region
    $region37: #{ldp_block_forward.7} parent=5 // pred_check
      _
    $region38: #{ldp_block_forward.7} parent=5 // pred_check_branch
      %223 = sbr.rel (%p220) target = $region40
    $region39: #{ldp_block_forward.7} parent=5 // pred_region
      %s224 = ssub.s32 %s11, 1
      %s225 = smul.u32 16, %s20
      %p226 = scmp.lt.s32.totalorder %s225, 63
      %s227 = scalar_select %p226, %s225, 63
      %s228 = smul.addr %s227, 8
      %s229 = scalar_lea.vmem %s0, %s228
      %p230 = pneg %p49
      %p231 = pneg %p46
      %p232 = pneg %p70
      %p233 = pneg %p67
      %p234 = pneg %p91
      %p235 = pneg %p88
      %p236 = scmp.lt.s32.totalorder %s21, 0
      %s237 = scalar_select %p236, %s21, 0
      %s238 = smul.addr %s237, 4
      %s239 = scalar_lea.vmem %s3, %s238
      %p240 = pneg %p117
      %p241 = pneg %p114
      %p242 = scmp.lt.s32.totalorder %s21, 0
      %s243 = scalar_select %p242, %s21, 0
      %s244 = scalar_lea.vmem %s4, %s243
      %p245 = pneg %p143
      %p246 = pneg %p140
      %p247 = pneg %p171
      %p248 = pneg %p168
      %s249 = smul.u32 16, %s20
      %p250 = scmp.lt.s32.totalorder %s249, 63
      %s251 = scalar_select %p250, %s249, 63
      %p252 = scmp.lt.s32.totalorder %s21, 0
      %s253 = scalar_select %p252, %s21, 0
      %s254 = sadd.s32 %s253, %s251
      %s255 = smul.addr %s254, 4
      %s256 = scalar_lea.vmem %s5, %s255
      %s257 = smul.u32 16, %s20
      %p258 = scmp.lt.s32.totalorder %s257, 63
      %s259 = scalar_select %p258, %s257, 63
      %s260 = smul.addr %s259, 8
      %s261 = scalar_lea.vmem %s0, %s260
      %s262 = smul.u32 16, %s20
      %p263 = scmp.lt.s32.totalorder %s21, 0
      %s264 = scalar_select %p263, %s21, 0
      %s265 = smul.addr %s264, 4
      %s266 = scalar_lea.vmem %s3, %s265
      %p267 = scmp.lt.s32.totalorder %s21, 0
      %s268 = scalar_select %p267, %s21, 0
      %s269 = scalar_lea.vmem %s4, %s268
      %s270 = smul.u32 16, %s20
      %p271 = scmp.lt.s32.totalorder %s270, 63
      %s272 = scalar_select %p271, %s270, 63
      %p273 = scmp.lt.s32.totalorder %s21, 0
      %s274 = scalar_select %p273, %s21, 0
      %s275 = sadd.s32 %s274, %s272
      %s276 = smul.addr %s275, 4
      %s277 = scalar_lea.vmem %s5, %s276
      %s278 = smul.u32 16, %s20
      %p280 = scmp.eq.s32.totalorder %s21, 0
      // Predicated region
      $region41: #{ldp_block_forward.7} parent=39 // pred_check
        %p281 = pneg %p280
      $region42: #{ldp_block_forward.7} parent=39 // pred_check_branch
        %283 = sbr.rel (%p281) target = $region44
      $region43: #{ldp_block_forward.7} parent=39 // pred_region
        %v284 = vld [vmem:[%s261] sm:$0xff]
        %v285 = vld [vmem:[%s261 + $0x8] sm:$0xff]
        %v286 = vld [vmem:[%s261 + $0x10] sm:$0xff]
        %v287 = vld [vmem:[%s261 + $0x18] sm:$0xff]
        %v288 = vld [vmem:[%s261 + $0x20] sm:$0xff]
        %v289 = vld [vmem:[%s261 + $0x28] sm:$0xff]
        %v290 = vld [vmem:[%s261 + $0x30] sm:$0xff]
        %v291 = vld [vmem:[%s261 + $0x38] sm:$0xff]
        %v292 = vld [vmem:[%s261 + $0x40] sm:$0xff]
        %v293 = vld [vmem:[%s261 + $0x48] sm:$0xff]
        %v294 = vld [vmem:[%s261 + $0x50] sm:$0xff]
        %v295 = vld [vmem:[%s261 + $0x58] sm:$0xff]
        %v296 = vld [vmem:[%s261 + $0x60] sm:$0xff]
        %v297 = vld [vmem:[%s261 + $0x68] sm:$0xff]
        %v298 = vld [vmem:[%s261 + $0x70] sm:$0xff]
        %v299 = vld [vmem:[%s261 + $0x78] sm:$0xff]
        %v300 = vpack.c.bf16 %v285, %v284
        %v301 = vpack.c.bf16 %v287, %v286
        %v302 = vpack.c.bf16 %v289, %v288
        %v303 = vpack.c.bf16 %v291, %v290
        %v304 = vpack.c.bf16 %v293, %v292
        %v305 = vpack.c.bf16 %v295, %v294
        %v306 = vpack.c.bf16 %v297, %v296
        %v307 = vpack.c.bf16 %v299, %v298
        %v308 = vld [vmem:[%s1] sm:$0xf]
        %v309 = vld [vmem:[%s1 + $0x4] sm:$0xf]
        %v310 = vld [vmem:[%s1 + $0x8] sm:$0xf]
        %v311 = vld [vmem:[%s2] sm:$0x1]
        %v313 = vperm.slane %v311, 0
        %v318 = vunpack.c.l.b16 %v308
        %v319 = vunpack.c.l.b16 %v309
        %v320 = vunpack.c.l.b16 %v310
        %v321 = vpack.c.b16 %v319, %v318
        %v322 = vpack.c.b16 %v320, %v320
        %vm324 = vcmask 195584
        %v326 = vsel %vm324, %v300, 0
        %v329 = vsel %vm324, %v301, 0
        %v332 = vsel %vm324, %v302, 0
        %v335 = vsel %vm324, %v303, 0
        %v338 = vsel %vm324, %v304, 0
        %v341 = vsel %vm324, %v305, 0
        %v344 = vsel %vm324, %v306, 0
        %v347 = vsel %vm324, %v307, 0
        %vm349 = vcmask 1043456
        %v351 = vsel %vm349, %v322, 0
        %353 = vmatpush.bf16.msra.mxu0 0
        %354 = vmatpush.bf16.msra.mxu0 0
        %355 = vmatpush.bf16.msra.mxu0 0
        %356 = vmatpush.bf16.msra.mxu0 0
        %357 = vmatpush.bf16.msra.mxu0 0
        %358 = vmatpush.bf16.msra.mxu0 0
        %359 = vmatpush.bf16.msra.mxu0 %v351
        %360 = vmatpush.bf16.msra.mxu0 %v321
        %361 = vmatmul.bf16.gmra.mxu0 %v326
        %v362 = vpop.f32.mrf.mxu0
        %v363 = vadd.f32 %v313, %v362
        %v364 = vpop.f32.mrf.mxu0
        %v365 = vadd.f32 %v313, %v364
        %366 = vmatmul.bf16.gmra.mxu0 %v329
        %v367 = vpop.f32.mrf.mxu0
        %v368 = vadd.f32 %v313, %v367
        %v369 = vpop.f32.mrf.mxu0
        %v370 = vadd.f32 %v313, %v369
        %371 = vmatmul.bf16.gmra.mxu0 %v332
        %v372 = vpop.f32.mrf.mxu0
        %v373 = vadd.f32 %v313, %v372
        %v374 = vpop.f32.mrf.mxu0
        %v375 = vadd.f32 %v313, %v374
        %376 = vmatmul.bf16.gmra.mxu0 %v335
        %v377 = vpop.f32.mrf.mxu0
        %v378 = vadd.f32 %v313, %v377
        %v379 = vpop.f32.mrf.mxu0
        %v380 = vadd.f32 %v313, %v379
        %381 = vmatmul.bf16.gmra.mxu0 %v338
        %v382 = vpop.f32.mrf.mxu0
        %v383 = vadd.f32 %v313, %v382
        %v384 = vpop.f32.mrf.mxu0
        %v385 = vadd.f32 %v313, %v384
        %386 = vmatmul.bf16.gmra.mxu0 %v341
        %v387 = vpop.f32.mrf.mxu0
        %v388 = vadd.f32 %v313, %v387
        %v389 = vpop.f32.mrf.mxu0
        %v390 = vadd.f32 %v313, %v389
        %391 = vmatmul.bf16.gmra.mxu0 %v344
        %v392 = vpop.f32.mrf.mxu0
        %v393 = vadd.f32 %v313, %v392
        %v394 = vpop.f32.mrf.mxu0
        %v395 = vadd.f32 %v313, %v394
        %396 = vmatmul.bf16.gmra.mxu0 %v347
        %v397 = vpop.f32.mrf.mxu0
        %v398 = vadd.f32 %v313, %v397
        %v399 = vpop.f32.mrf.mxu0
        %v400 = vadd.f32 %v313, %v399
        %401 = vdwg.mxu0
        %v402 = vmul.f32 %v363, 0.5
        %v403 = vmul.f32 %v365, 0.5
        %v404 = vmul.f32 %v368, 0.5
        %v405 = vmul.f32 %v370, 0.5
        %v406 = vmul.f32 %v373, 0.5
        %v407 = vmul.f32 %v375, 0.5
        %v408 = vmul.f32 %v378, 0.5
        %v409 = vmul.f32 %v380, 0.5
        %v410 = vmul.f32 %v383, 0.5
        %v411 = vmul.f32 %v385, 0.5
        %v412 = vmul.f32 %v388, 0.5
        %v413 = vmul.f32 %v390, 0.5
        %v414 = vmul.f32 %v393, 0.5
        %v415 = vmul.f32 %v395, 0.5
        %v416 = vmul.f32 %v398, 0.5
        %v417 = vmul.f32 %v400, 0.5
        %v418 = vmul.f32 %v363, 0.044715
        %v419 = vmul.f32 %v365, 0.044715
        %v420 = vmul.f32 %v368, 0.044715
        %v421 = vmul.f32 %v370, 0.044715
        %v422 = vmul.f32 %v373, 0.044715
        %v423 = vmul.f32 %v375, 0.044715
        %v424 = vmul.f32 %v378, 0.044715
        %v425 = vmul.f32 %v380, 0.044715
        %v426 = vmul.f32 %v383, 0.044715
        %v427 = vmul.f32 %v385, 0.044715
        %v428 = vmul.f32 %v388, 0.044715
        %v429 = vmul.f32 %v390, 0.044715
        %v430 = vmul.f32 %v393, 0.044715
        %v431 = vmul.f32 %v395, 0.044715
        %v432 = vmul.f32 %v398, 0.044715
        %v433 = vmul.f32 %v400, 0.044715
        %v434 = vmul.f32 %v418, %v363
        %v435 = vmul.f32 %v419, %v365
        %v436 = vmul.f32 %v420, %v368
        %v437 = vmul.f32 %v421, %v370
        %v438 = vmul.f32 %v422, %v373
        %v439 = vmul.f32 %v423, %v375
        %v440 = vmul.f32 %v424, %v378
        %v441 = vmul.f32 %v425, %v380
        %v442 = vmul.f32 %v426, %v383
        %v443 = vmul.f32 %v427, %v385
        %v444 = vmul.f32 %v428, %v388
        %v445 = vmul.f32 %v429, %v390
        %v446 = vmul.f32 %v430, %v393
        %v447 = vmul.f32 %v431, %v395
        %v448 = vmul.f32 %v432, %v398
        %v449 = vmul.f32 %v433, %v400
        %v450 = vmul.f32 %v434, %v363
        %v451 = vmul.f32 %v435, %v365
        %v452 = vmul.f32 %v436, %v368
        %v453 = vmul.f32 %v437, %v370
        %v454 = vmul.f32 %v438, %v373
        %v455 = vmul.f32 %v439, %v375
        %v456 = vmul.f32 %v440, %v378
        %v457 = vmul.f32 %v441, %v380
        %v458 = vmul.f32 %v442, %v383
        %v459 = vmul.f32 %v443, %v385
        %v460 = vmul.f32 %v444, %v388
        %v461 = vmul.f32 %v445, %v390
        %v462 = vmul.f32 %v446, %v393
        %v463 = vmul.f32 %v447, %v395
        %v464 = vmul.f32 %v448, %v398
        %v465 = vmul.f32 %v449, %v400
        %v466 = vadd.f32 %v363, %v450
        %v467 = vadd.f32 %v365, %v451
        %v468 = vadd.f32 %v368, %v452
        %v469 = vadd.f32 %v370, %v453
        %v470 = vadd.f32 %v373, %v454
        %v471 = vadd.f32 %v375, %v455
        %v472 = vadd.f32 %v378, %v456
        %v473 = vadd.f32 %v380, %v457
        %v474 = vadd.f32 %v383, %v458
        %v475 = vadd.f32 %v385, %v459
        %v476 = vadd.f32 %v388, %v460
        %v477 = vadd.f32 %v390, %v461
        %v478 = vadd.f32 %v393, %v462
        %v479 = vadd.f32 %v395, %v463
        %v480 = vadd.f32 %v398, %v464
        %v481 = vadd.f32 %v400, %v465
        %v482 = vmul.f32 %v466, 0.7978846
        %v483 = vmul.f32 %v467, 0.7978846
        %v484 = vmul.f32 %v468, 0.7978846
        %v485 = vmul.f32 %v469, 0.7978846
        %v486 = vmul.f32 %v470, 0.7978846
        %v487 = vmul.f32 %v471, 0.7978846
        %v488 = vmul.f32 %v472, 0.7978846
        %v489 = vmul.f32 %v473, 0.7978846
        %v490 = vmul.f32 %v474, 0.7978846
        %v491 = vmul.f32 %v475, 0.7978846
        %v492 = vmul.f32 %v476, 0.7978846
        %v493 = vmul.f32 %v477, 0.7978846
        %v494 = vmul.f32 %v478, 0.7978846
        %v495 = vmul.f32 %v479, 0.7978846
        %v496 = vmul.f32 %v480, 0.7978846
        %v497 = vmul.f32 %v481, 0.7978846
        %v498 = vtanh.pop %v482
        %v499 = vtanh.pop %v483
        %v500 = vtanh.pop %v484
        %v501 = vtanh.pop %v485
        %v502 = vtanh.pop %v486
        %v503 = vtanh.pop %v487
        %v504 = vtanh.pop %v488
        %v505 = vtanh.pop %v489
        %v506 = vtanh.pop %v490
        %v507 = vtanh.pop %v491
        %v508 = vtanh.pop %v492
        %v509 = vtanh.pop %v493
        %v510 = vtanh.pop %v494
        %v511 = vtanh.pop %v495
        %v512 = vtanh.pop %v496
        %v513 = vtanh.pop %v497
        %v514 = vadd.f32 %v498, 1.0
        %v515 = vadd.f32 %v499, 1.0
        %v516 = vadd.f32 %v500, 1.0
        %v517 = vadd.f32 %v501, 1.0
        %v518 = vadd.f32 %v502, 1.0
        %v519 = vadd.f32 %v503, 1.0
        %v520 = vadd.f32 %v504, 1.0
        %v521 = vadd.f32 %v505, 1.0
        %v522 = vadd.f32 %v506, 1.0
        %v523 = vadd.f32 %v507, 1.0
        %v524 = vadd.f32 %v508, 1.0
        %v525 = vadd.f32 %v509, 1.0
        %v526 = vadd.f32 %v510, 1.0
        %v527 = vadd.f32 %v511, 1.0
        %v528 = vadd.f32 %v512, 1.0
        %v529 = vadd.f32 %v513, 1.0
        %v530 = vmul.f32 %v402, %v514
        %v531 = vmul.f32 %v403, %v515
        %v532 = vmul.f32 %v404, %v516
        %v533 = vmul.f32 %v405, %v517
        %v534 = vmul.f32 %v406, %v518
        %v535 = vmul.f32 %v407, %v519
        %v536 = vmul.f32 %v408, %v520
        %v537 = vmul.f32 %v409, %v521
        %v538 = vmul.f32 %v410, %v522
        %v539 = vmul.f32 %v411, %v523
        %v540 = vmul.f32 %v412, %v524
        %v541 = vmul.f32 %v413, %v525
        %v542 = vmul.f32 %v414, %v526
        %v543 = vmul.f32 %v415, %v527
        %v544 = vmul.f32 %v416, %v528
        %v545 = vmul.f32 %v417, %v529
        %v546 = vpack.c.bf16 %v530, %v530
        %v547 = vpack.c.bf16 %v531, %v531
        %v548 = vpack.c.bf16 %v532, %v532
        %v549 = vpack.c.bf16 %v533, %v533
        %v550 = vpack.c.bf16 %v534, %v534
        %v551 = vpack.c.bf16 %v535, %v535
        %v552 = vpack.c.bf16 %v536, %v536
        %v553 = vpack.c.bf16 %v537, %v537
        %v554 = vpack.c.bf16 %v538, %v538
        %v555 = vpack.c.bf16 %v539, %v539
        %v556 = vpack.c.bf16 %v540, %v540
        %v557 = vpack.c.bf16 %v541, %v541
        %v558 = vpack.c.bf16 %v542, %v542
        %v559 = vpack.c.bf16 %v543, %v543
        %v560 = vpack.c.bf16 %v544, %v544
        %v561 = vpack.c.bf16 %v545, %v545
        %vm562 = vcmask 257024
        %563 = vst.msk [vmem:[#allocation2] sm:$0xf] %vm562, %v546
        %564 = vst.msk [vmem:[#allocation2 + $0x4] sm:$0xf] %vm562, %v547
        %565 = vst.msk [vmem:[#allocation2 + $0x8] sm:$0xf] %vm562, %v548
        %566 = vst.msk [vmem:[#allocation2 + $0xc] sm:$0xf] %vm562, %v549
        %567 = vst.msk [vmem:[#allocation2 + $0x10] sm:$0xf] %vm562, %v550
        %568 = vst.msk [vmem:[#allocation2 + $0x14] sm:$0xf] %vm562, %v551
        %569 = vst.msk [vmem:[#allocation2 + $0x18] sm:$0xf] %vm562, %v552
        %570 = vst.msk [vmem:[#allocation2 + $0x1c] sm:$0xf] %vm562, %v553
        %571 = vst.msk [vmem:[#allocation2 + $0x20] sm:$0xf] %vm562, %v554
        %572 = vst.msk [vmem:[#allocation2 + $0x24] sm:$0xf] %vm562, %v555
        %573 = vst.msk [vmem:[#allocation2 + $0x28] sm:$0xf] %vm562, %v556
        %574 = vst.msk [vmem:[#allocation2 + $0x2c] sm:$0xf] %vm562, %v557
        %575 = vst.msk [vmem:[#allocation2 + $0x30] sm:$0xf] %vm562, %v558
        %576 = vst.msk [vmem:[#allocation2 + $0x34] sm:$0xf] %vm562, %v559
        %577 = vst.msk [vmem:[#allocation2 + $0x38] sm:$0xf] %vm562, %v560
        %578 = vst.msk [vmem:[#allocation2 + $0x3c] sm:$0xf] %vm562, %v561
      $region44: #{ldp_block_forward.7} parent=39 // pred_fallthru
        _
      %v579 = vld [vmem:[#allocation2] sm:$0xf]
      %v580 = vld [vmem:[#allocation2 + $0x4] sm:$0xf]
      %v581 = vld [vmem:[#allocation2 + $0x8] sm:$0xf]
      %v582 = vld [vmem:[#allocation2 + $0xc] sm:$0xf]
      %v583 = vld [vmem:[#allocation2 + $0x10] sm:$0xf]
      %v584 = vld [vmem:[#allocation2 + $0x14] sm:$0xf]
      %v585 = vld [vmem:[#allocation2 + $0x18] sm:$0xf]
      %v586 = vld [vmem:[#allocation2 + $0x1c] sm:$0xf]
      %v587 = vld [vmem:[#allocation2 + $0x20] sm:$0xf]
      %v588 = vld [vmem:[#allocation2 + $0x24] sm:$0xf]
      %v589 = vld [vmem:[#allocation2 + $0x28] sm:$0xf]
      %v590 = vld [vmem:[#allocation2 + $0x2c] sm:$0xf]
      %v591 = vld [vmem:[#allocation2 + $0x30] sm:$0xf]
      %v592 = vld [vmem:[#allocation2 + $0x34] sm:$0xf]
      %v593 = vld [vmem:[#allocation2 + $0x38] sm:$0xf]
      %v594 = vld [vmem:[#allocation2 + $0x3c] sm:$0xf]
      %v595 = vld [vmem:[%s266] sm:$0xf]
      %v596 = vld [vmem:[%s266 + $0x4] sm:$0xf]
      %v597 = vld [vmem:[%s266 + $0x8] sm:$0xf]
      %v598 = vld [vmem:[%s266 + $0xc] sm:$0xf]
      %v599 = vld [vmem:[%s269] sm:$0x1]
      %v601 = vperm.slane %v599, 0
      %v619 = vunpack.c.l.b16 %v579
      %v620 = vunpack.c.l.b16 %v580
      %v621 = vunpack.c.l.b16 %v581
      %v622 = vunpack.c.l.b16 %v582
      %v623 = vunpack.c.l.b16 %v583
      %v624 = vunpack.c.l.b16 %v584
      %v625 = vunpack.c.l.b16 %v585
      %v626 = vunpack.c.l.b16 %v586
      %v627 = vunpack.c.l.b16 %v587
      %v628 = vunpack.c.l.b16 %v588
      %v629 = vunpack.c.l.b16 %v589
      %v630 = vunpack.c.l.b16 %v590
      %v631 = vunpack.c.l.b16 %v591
      %v632 = vunpack.c.l.b16 %v592
      %v633 = vunpack.c.l.b16 %v593
      %v634 = vunpack.c.l.b16 %v594
      %v635 = vpack.c.b16 %v620, %v619
      %v636 = vpack.c.b16 %v622, %v621
      %v637 = vpack.c.b16 %v624, %v623
      %v638 = vpack.c.b16 %v626, %v625
      %v639 = vpack.c.b16 %v628, %v627
      %v640 = vpack.c.b16 %v630, %v629
      %v641 = vpack.c.b16 %v632, %v631
      %v642 = vpack.c.b16 %v634, %v633
      %v647 = vunpack.c.l.b16 %v595
      %v648 = vunpack.c.l.b16 %v596
      %v649 = vunpack.c.l.b16 %v597
      %v650 = vunpack.c.l.b16 %v598
      %v651 = vpack.c.b16 %v648, %v647
      %v652 = vpack.c.b16 %v650, %v649
      %vm655 = vcmask 261120
      %v657 = vsel %vm655, %v635, 0
      %v660 = vsel %vm655, %v636, 0
      %v663 = vsel %vm655, %v637, 0
      %v666 = vsel %vm655, %v638, 0
      %v669 = vsel %vm655, %v639, 0
      %v672 = vsel %vm655, %v640, 0
      %v675 = vsel %vm655, %v641, 0
      %v678 = vsel %vm655, %v642, 0
      %680 = vmatpush.bf16.msra.mxu0 0
      %681 = vmatpush.bf16.msra.mxu0 0
      %682 = vmatpush.bf16.msra.mxu0 0
      %683 = vmatpush.bf16.msra.mxu0 0
      %684 = vmatpush.bf16.msra.mxu0 0
      %685 = vmatpush.bf16.msra.mxu0 0
      %686 = vmatpush.bf16.msra.mxu0 %v652
      %687 = vmatpush.bf16.msra.mxu0 %v651
      %688 = vmatmul.bf16.gmra.mxu0 %v657
      %v689 = vpop.f32.mrf.mxu0
      %v690 = vadd.f32 %v601, %v689
      %v691 = vpop.f32.mrf.mxu0
      %v692 = vadd.f32 %v601, %v691
      %693 = vmatmul.bf16.gmra.mxu0 %v660
      %v694 = vpop.f32.mrf.mxu0
      %v695 = vadd.f32 %v601, %v694
      %v696 = vpop.f32.mrf.mxu0
      %v697 = vadd.f32 %v601, %v696
      %698 = vmatmul.bf16.gmra.mxu0 %v663
      %v699 = vpop.f32.mrf.mxu0
      %v700 = vadd.f32 %v601, %v699
      %v701 = vpop.f32.mrf.mxu0
      %v702 = vadd.f32 %v601, %v701
      %703 = vmatmul.bf16.gmra.mxu0 %v666
      %v704 = vpop.f32.mrf.mxu0
      %v705 = vadd.f32 %v601, %v704
      %v706 = vpop.f32.mrf.mxu0
      %v707 = vadd.f32 %v601, %v706
      %708 = vmatmul.bf16.gmra.mxu0 %v669
      %v709 = vpop.f32.mrf.mxu0
      %v710 = vadd.f32 %v601, %v709
      %v711 = vpop.f32.mrf.mxu0
      %v712 = vadd.f32 %v601, %v711
      %713 = vmatmul.bf16.gmra.mxu0 %v672
      %v714 = vpop.f32.mrf.mxu0
      %v715 = vadd.f32 %v601, %v714
      %v716 = vpop.f32.mrf.mxu0
      %v717 = vadd.f32 %v601, %v716
      %718 = vmatmul.bf16.gmra.mxu0 %v675
      %v719 = vpop.f32.mrf.mxu0
      %v720 = vadd.f32 %v601, %v719
      %v721 = vpop.f32.mrf.mxu0
      %v722 = vadd.f32 %v601, %v721
      %723 = vmatmul.bf16.gmra.mxu0 %v678
      %v724 = vpop.f32.mrf.mxu0
      %v725 = vadd.f32 %v601, %v724
      %v726 = vpop.f32.mrf.mxu0
      %v727 = vadd.f32 %v601, %v726
      %728 = vdwg.mxu0
      %v729 = vpack.c.bf16 %v690, %v690
      %v730 = vpack.c.bf16 %v692, %v692
      %v731 = vpack.c.bf16 %v695, %v695
      %v732 = vpack.c.bf16 %v697, %v697
      %v733 = vpack.c.bf16 %v700, %v700
      %v734 = vpack.c.bf16 %v702, %v702
      %v735 = vpack.c.bf16 %v705, %v705
      %v736 = vpack.c.bf16 %v707, %v707
      %v737 = vpack.c.bf16 %v710, %v710
      %v738 = vpack.c.bf16 %v712, %v712
      %v739 = vpack.c.bf16 %v715, %v715
      %v740 = vpack.c.bf16 %v717, %v717
      %v741 = vpack.c.bf16 %v720, %v720
      %v742 = vpack.c.bf16 %v722, %v722
      %v743 = vpack.c.bf16 %v725, %v725
      %v744 = vpack.c.bf16 %v727, %v727
      %vm745 = vcmask 257024
      %746 = vst.msk [vmem:[%s277] sm:$0xf] %vm745, %v729
      %747 = vst.msk [vmem:[%s277 + $0x4] sm:$0xf] %vm745, %v730
      %748 = vst.msk [vmem:[%s277 + $0x8] sm:$0xf] %vm745, %v731
      %749 = vst.msk [vmem:[%s277 + $0xc] sm:$0xf] %vm745, %v732
      %750 = vst.msk [vmem:[%s277 + $0x10] sm:$0xf] %vm745, %v733
      %751 = vst.msk [vmem:[%s277 + $0x14] sm:$0xf] %vm745, %v734
      %752 = vst.msk [vmem:[%s277 + $0x18] sm:$0xf] %vm745, %v735
      %753 = vst.msk [vmem:[%s277 + $0x1c] sm:$0xf] %vm745, %v736
      %754 = vst.msk [vmem:[%s277 + $0x20] sm:$0xf] %vm745, %v737
      %755 = vst.msk [vmem:[%s277 + $0x24] sm:$0xf] %vm745, %v738
      %756 = vst.msk [vmem:[%s277 + $0x28] sm:$0xf] %vm745, %v739
      %757 = vst.msk [vmem:[%s277 + $0x2c] sm:$0xf] %vm745, %v740
      %758 = vst.msk [vmem:[%s277 + $0x30] sm:$0xf] %vm745, %v741
      %759 = vst.msk [vmem:[%s277 + $0x34] sm:$0xf] %vm745, %v742
      %760 = vst.msk [vmem:[%s277 + $0x38] sm:$0xf] %vm745, %v743
      %761 = vst.msk [vmem:[%s277 + $0x3c] sm:$0xf] %vm745, %v744
      %s762 = smul.u32 16, %s20
      %p763 = scmp.lt.s32.totalorder %s762, 63
      %s764 = scalar_select %p763, %s762, 63
      %p765 = scmp.lt.s32.totalorder %s21, 0
      %s766 = scalar_select %p765, %s21, 0
      %s767 = sadd.s32 %s766, %s764
      %s768 = smul.addr %s767, 4
      %s769 = scalar_lea.vmem %s5, %s768
      // Predicated region
      $region45: #{ldp_block_forward.7} parent=39 // pred_check
        %p770 = pneg %p168
      $region46: #{ldp_block_forward.7} parent=39 // pred_check_branch
        %772 = sbr.rel (%p770) target = $region48
      $region47: #{ldp_block_forward.7} parent=39 // pred_region
        %s773 = smul.u32 16, %s20
      $region48: #{ldp_block_forward.7} parent=39 // pred_fallthru
        _
    $region40: #{ldp_block_forward.7} parent=5 // pred_fallthru
      _
    %p774 = scmp.le.s32.totalorder 2, %s11
    // Predicated region
    $region49: #{ldp_block_forward.7} parent=5 // pred_check
      %p775 = pneg %p774
    $region50: #{ldp_block_forward.7} parent=5 // pred_check_branch
      %777 = sbr.rel (%p775) target = $region52
    $region51: #{ldp_block_forward.7} parent=5 // pred_region
      %s778 = ssub.s32 %s11, 2
      // Predicated region
      $region53: #{ldp_block_forward.7} parent=51 // pred_check
        %p779 = pneg %p174
      $region54: #{ldp_block_forward.7} parent=51 // pred_check_branch
        %781 = sbr.rel (%p779) target = $region56
      $region55: #{ldp_block_forward.7} parent=51 // pred_region
        %s782 = smul.u32 16, %s22
        %p783 = scmp.lt.s32.totalorder %s782, 63
        %s784 = scalar_select %p783, %s782, 63
        %p785 = scmp.lt.s32.totalorder %s23, 0
        %s786 = scalar_select %p785, %s23, 0
        %s787 = sadd.s32 %s786, %s784
        %s788 = smul.addr %s787, 4
        %s789 = scalar_lea.vmem %s5, %s788
      $region56: #{ldp_block_forward.7} parent=51 // pred_fallthru
        _
    $region52: #{ldp_block_forward.7} parent=5 // pred_fallthru
      _
  $region6: #{ldp_block_forward.7} parent=0 // loop_footer
    %s15 = sadd.s32 1, %s11
  $region7: #{ldp_block_forward.7} parent=0 // loop_footer_branch
    %10 = sbr.rel target = $region3
  $region8: #{ldp_block_forward.7} parent=0 // loop_exit
    _

// kernel: ldp_block_forward.9
$region0: #{ldp_block_forward.9}
  #allocation0 [shape = 'u32[]', space=smem, size = 0x4, offset = 0x4, fixed_abs, tag = 'smem constant byte address 0x4 - core index']
  #allocation1 [shape = 'u32[72,128]{1,0:T(1,128)}', space=vmem, size = 0x9000, scoped, tag = 'internal scratch']
  %s0 = inlined_call_operand.vmem [shape: f32[2,1,32], index: 0, kind: input, shape index: {}]
  %s1 = inlined_call_operand.vmem [shape: bf16[32,8], index: 1, kind: input, shape index: {}]
  %s2 = inlined_call_operand.vmem [shape: f32[1,8], index: 2, kind: input, shape index: {}]
  %s3 = inlined_call_operand.vmem [shape: bf16[8,32], index: 3, kind: input, shape index: {}]
  %s4 = inlined_call_operand.vmem [shape: f32[1,32], index: 4, kind: input, shape index: {}]
  %s5 = inlined_call_operand.vmem [shape: f32[2,1,32], index: 5, kind: output, shape index: {}]
  %s6 = sld [smem:[#allocation0]]
  $region30: #{ldp_block_forward.9} parent=0
    _
  %s8 = ssub.s32 1, %s6
  %s9 = scalar_select 0, %s8, %s6
  // Predicated region
  $region2: #{ldp_block_forward.9} parent=0 // pred_check
    _
  $region3: #{ldp_block_forward.9} parent=0 // pred_check_branch
    %11 = sbr.rel (0) target = $region5
  $region4: #{ldp_block_forward.9} parent=0 // pred_region
    _
  $region5: #{ldp_block_forward.9} parent=0 // pred_fallthru
    _
  // Predicated region
  $region6: #{ldp_block_forward.9} parent=0 // pred_check
    _
  $region7: #{ldp_block_forward.9} parent=0 // pred_check_branch
    %13 = sbr.rel (0) target = $region9
  $region8: #{ldp_block_forward.9} parent=0 // pred_region
    _
  $region9: #{ldp_block_forward.9} parent=0 // pred_fallthru
    _
  // Predicated region
  $region10: #{ldp_block_forward.9} parent=0 // pred_check
    _
  $region11: #{ldp_block_forward.9} parent=0 // pred_check_branch
    %15 = sbr.rel (0) target = $region13
  $region12: #{ldp_block_forward.9} parent=0 // pred_region
    _
  $region13: #{ldp_block_forward.9} parent=0 // pred_fallthru
    _
  // Predicated region
  $region14: #{ldp_block_forward.9} parent=0 // pred_check
    _
  $region15: #{ldp_block_forward.9} parent=0 // pred_check_branch
    %17 = sbr.rel (0) target = $region17
  $region16: #{ldp_block_forward.9} parent=0 // pred_region
    _
  $region17: #{ldp_block_forward.9} parent=0 // pred_fallthru
    _
  // Predicated region
  $region18: #{ldp_block_forward.9} parent=0 // pred_check
    _
  $region19: #{ldp_block_forward.9} parent=0 // pred_check_branch
    %19 = sbr.rel (0) target = $region21
  $region20: #{ldp_block_forward.9} parent=0 // pred_region
    _
  $region21: #{ldp_block_forward.9} parent=0 // pred_fallthru
    _
  %v21 = vld [vmem:[%s0] sm:$0x1]
  %v22 = vld [vmem:[%s0 + $0x1] sm:$0x1]
  %v23 = vpack.c.bf16 %v21, %v21
  %v24 = vpack.c.bf16 %v22, %v22
  %v25 = vld [vmem:[%s1] sm:$0xf]
  %v26 = vld [vmem:[%s1 + $0x4] sm:$0xf]
  %v27 = vld [vmem:[%s1 + $0x8] sm:$0xf]
  %v28 = vld [vmem:[%s1 + $0xc] sm:$0xf]
  %v29 = vld [vmem:[%s2] sm:$0x1]
  %v31 = vperm.slane %v29, 0
  %v35 = vunpack.c.l.b16 %v23
  %v36 = vunpack.c.l.b16 %v24
  %v37 = vrot.slane %v36, 7
  %vm38 = vcmask 1041409
  %v39 = vsel %vm38, %v37, %v35
  %v40 = vpack.c.b16 %v39, %v39
  %v45 = vunpack.c.l.b16 %v25
  %v46 = vunpack.c.l.b16 %v26
  %v47 = vunpack.c.l.b16 %v27
  %v48 = vunpack.c.l.b16 %v28
  %v49 = vpack.c.b16 %v46, %v45
  %v50 = vpack.c.b16 %v48, %v47
  %vm53 = vcmask 261120
  %v55 = vsel %vm53, %v40, 0
  %57 = vmatpush.bf16.msra.mxu0 0
  %58 = vmatpush.bf16.msra.mxu0 0
  %59 = vmatpush.bf16.msra.mxu0 0
  %60 = vmatpush.bf16.msra.mxu0 0
  %61 = vmatpush.bf16.msra.mxu0 0
  %62 = vmatpush.bf16.msra.mxu0 0
  %63 = vmatpush.bf16.msra.mxu0 %v50
  %64 = vmatpush.bf16.msra.mxu0 %v49
  %65 = vmatmul.bf16.gmra.mxu0 %v55
  %v66 = vpop.f32.mrf.mxu0
  %v67 = vadd.f32 %v31, %v66
  %v68 = vpop.f32.mrf.mxu0
  %69 = vdwg.mxu0
  %v70 = vmax.f32 %v67, 0.0
  %v71 = vpack.c.bf16 %v70, %v70
  %v72 = vld [vmem:[%s3] sm:$0xf]
  %v73 = vld [vmem:[%s4] sm:$0x1]
  %v75 = vperm.slane %v73, 0
  %vm77 = vcmask 64512
  %v79 = vsel %vm77, %v71, 0
  %vm81 = vcmask 1043456
  %v83 = vsel %vm81, %v72, 0
  %85 = vmatpush.bf16.msra.mxu0 0
  %86 = vmatpush.bf16.msra.mxu0 0
  %87 = vmatpush.bf16.msra.mxu0 0
  %88 = vmatpush.bf16.msra.mxu0 0
  %89 = vmatpush.bf16.msra.mxu0 0
  %90 = vmatpush.bf16.msra.mxu0 0
  %91 = vmatpush.bf16.msra.mxu0 0
  %92 = vmatpush.bf16.msra.mxu0 %v83
  %93 = vmatmul.bf16.gmra.mxu0 %v79
  %v94 = vpop.f32.mrf.mxu0
  %v95 = vadd.f32 %v75, %v94
  %v96 = vpop.f32.mrf.mxu0
  %97 = vdwg.mxu0
  %v98 = vmul.f32 %v95, 0.16666667
  %v99 = vadd.f32 %v98, 0.5
  %v100 = vmax.f32 %v99, 0.0
  %v101 = vmin.f32 %v100, 1.0
  %v103 = vrot.slane %v101, 1
  %vm105 = vcmask 253952
  %106 = vst.msk [vmem:[%s5] sm:$0x1] %vm105, %v101
  %107 = vst.msk [vmem:[%s5 + $0x1] sm:$0x1] %vm105, %v103
  // Predicated region
  $region22: #{ldp_block_forward.9} parent=0 // pred_check
    _
  $region23: #{ldp_block_forward.9} parent=0 // pred_check_branch
    %109 = sbr.rel (0) target = $region25
  $region24: #{ldp_block_forward.9} parent=0 // pred_region
    _
  $region25: #{ldp_block_forward.9} parent=0 // pred_fallthru
    _
  // Predicated region
  $region26: #{ldp_block_forward.9} parent=0 // pred_check
    _
  $region27: #{ldp_block_forward.9} parent=0 // pred_check_branch
    %111 = sbr.rel (0) target = $region29
  $region28: #{ldp_block_forward.9} parent=0 // pred_region
    _
  $region29: #{ldp_block_forward.9} parent=0 // pred_fallthru
    _

// kernel: ldp_block_forward.10
$region0: #{ldp_block_forward.10}
  #allocation0 [shape = 'u32[]', space=smem, size = 0x4, offset = 0x4, fixed_abs, tag = 'smem constant byte address 0x4 - core index']
  #allocation1 [shape = 'u32[72,128]{1,0:T(1,128)}', space=vmem, size = 0x9000, scoped, tag = 'internal scratch']
  %s0 = inlined_call_operand.vmem [shape: bf16[2,256,32], index: 0, kind: input, shape index: {}]
  %s1 = inlined_call_operand.vmem [shape: f32[2,1,32], index: 1, kind: input, shape index: {}]
  %s2 = inlined_call_operand.vmem [shape: bf16[2,256,32], index: 2, kind: input, shape index: {}]
  %s3 = inlined_call_operand.vmem [shape: bf16[32,32], index: 3, kind: input, shape index: {}]
  %s4 = inlined_call_operand.vmem [shape: f32[1,32], index: 4, kind: input, shape index: {}]
  %s5 = inlined_call_operand.vmem [shape: f32[1,32], index: 5, kind: input, shape index: {}]
  %s6 = inlined_call_operand.vmem [shape: bf16[2,256,32], index: 6, kind: output, shape index: {}]
  %s7 = sld [smem:[#allocation0]]
  $region57: #{ldp_block_forward.10} parent=0
    _
  %s9 = ssub.s32 1, %s7
  %s10 = scalar_select 0, %s9, %s7
  loop: start=0, step=1, limit=4
  $region2: #{ldp_block_forward.10} parent=0 // loop_pre_header
    _
  $region3: #{ldp_block_forward.10} parent=0 // loop_header
    %s12 = sphi 0, %s16
    %p13 = scmp.ge.s32.totalorder %s12, 4
    %s19 = sphi 0, %s31
    %s20 = sphi 0, %s27
    %s21 = sphi 0, %s19
    %s22 = sphi 0, %s20
    %s23 = sphi 0, %s21
    %s24 = sphi 0, %s22
    %s36 = sphi 0, %s38
    %s39 = sphi 0, %s36
    %s40 = sphi 0, %s39
    %s56 = sphi 0, %s40
    %s62 = sphi 0, %s64
    %s65 = sphi 0, %s62
    %s66 = sphi 0, %s65
    %s82 = sphi 0, %s66
    %s90 = sphi 0, %s92
    %s93 = sphi 0, %s90
    %s94 = sphi 0, %s93
    %s110 = sphi 0, %s94
    %s114 = sphi 0, %s114
    %s116 = sphi 0, %s114
    %s117 = sphi 0, %s116
    %s131 = sphi 0, %s117
    %s135 = sphi 0, %s135
    %s137 = sphi 0, %s135
    %s138 = sphi 0, %s137
    %s152 = sphi 0, %s138
    %s156 = sphi 0, %s156
    %s158 = sphi 0, %s156
    %s159 = sphi 0, %s158
    %s173 = sphi 0, %s159
    %s181 = sphi 0, %s183
    %s184 = sphi 0, %s181
    %s185 = sphi 0, %s184
    %s201 = sphi 0, %s185
  $region4: #{ldp_block_forward.10} parent=0 // loop_header_branch
    %15 = sbr.rel (%p13) target = $region8
  $region5: #{ldp_block_forward.10} parent=0 // loop_body
    %s17 = ssub.s32 %s12, 1
    %s18 = ssub.s32 %s12, 2
    %s25 = sadd.s32 1, %s20
    %p26 = scmp.ge.s32.totalorder %s25, 1
    %s27 = scalar_select %p26, 0, %s25
    %s28 = sadd.s32 1, %s19
    %s29 = scalar_select %p26, %s28, %s19
    %p30 = scmp.ge.s32.totalorder %s29, 2
    %s31 = scalar_select %p30, 0, %s29
    %s32 = ssub.s32 %s19, %s31
    %s33 = ssub.s32 %s20, %s27
    %s34 = sor.u32 %s32, %s33
    %p35 = scmp.eq.s32.totalorder %s34, 0
    %s37 = sadd.s32 %s36, 1
    %s38 = scalar_select %p35, %s36, %s37
    %p41 = pneg %p35
    %p42 = scmp.eq.s32.totalorder %s12, 1
    %p43 = por %p41, %p42
    %p44 = scmp.ne.s32.totalorder %s36, %s39
    %p45 = scmp.eq.s32.totalorder %s12, 0
    %p46 = por %p44, %p45
    %p47 = scmp.ne.s32.totalorder %s36, %s39
    %p48 = scmp.eq.s32.totalorder %s17, 1
    %p49 = por %p47, %p48
    %p50 = scmp.ne.s32.totalorder %s39, %s40
    %p51 = scmp.eq.s32.totalorder %s17, 0
    %p52 = por %p50, %p51
    %p53 = scmp.ne.s32.totalorder %s39, %s40
    %p54 = scmp.eq.s32.totalorder %s18, 1
    %p55 = por %p53, %p54
    %p57 = scmp.ne.s32.totalorder %s40, %s56
    %p58 = scmp.eq.s32.totalorder %s18, 0
    %p59 = por %p57, %p58
    %s60 = ssub.s32 %s19, %s31
    %p61 = scmp.eq.s32.totalorder %s60, 0
    %s63 = sadd.s32 %s62, 1
    %s64 = scalar_select %p61, %s62, %s63
    %p67 = pneg %p61
    %p68 = scmp.eq.s32.totalorder %s12, 1
    %p69 = por %p67, %p68
    %p70 = scmp.ne.s32.totalorder %s62, %s65
    %p71 = scmp.eq.s32.totalorder %s12, 0
    %p72 = por %p70, %p71
    %p73 = scmp.ne.s32.totalorder %s62, %s65
    %p74 = scmp.eq.s32.totalorder %s17, 1
    %p75 = por %p73, %p74
    %p76 = scmp.ne.s32.totalorder %s65, %s66
    %p77 = scmp.eq.s32.totalorder %s17, 0
    %p78 = por %p76, %p77
    %p79 = scmp.ne.s32.totalorder %s65, %s66
    %p80 = scmp.eq.s32.totalorder %s18, 1
    %p81 = por %p79, %p80
    %p83 = scmp.ne.s32.totalorder %s66, %s82
    %p84 = scmp.eq.s32.totalorder %s18, 0
    %p85 = por %p83, %p84
    %s86 = ssub.s32 %s19, %s31
    %s87 = ssub.s32 %s20, %s27
    %s88 = sor.u32 %s86, %s87
    %p89 = scmp.eq.s32.totalorder %s88, 0
    %s91 = sadd.s32 %s90, 1
    %s92 = scalar_select %p89, %s90, %s91
    %p95 = pneg %p89
    %p96 = scmp.eq.s32.totalorder %s12, 1
    %p97 = por %p95, %p96
    %p98 = scmp.ne.s32.totalorder %s90, %s93
    %p99 = scmp.eq.s32.totalorder %s12, 0
    %p100 = por %p98, %p99
    %p101 = scmp.ne.s32.totalorder %s90, %s93
    %p102 = scmp.eq.s32.totalorder %s17, 1
    %p103 = por %p101, %p102
    %p104 = scmp.ne.s32.totalorder %s93, %s94
    %p105 = scmp.eq.s32.totalorder %s17, 0
    %p106 = por %p104, %p105
    %p107 = scmp.ne.s32.totalorder %s93, %s94
    %p108 = scmp.eq.s32.totalorder %s18, 1
    %p109 = por %p107, %p108
    %p111 = scmp.ne.s32.totalorder %s94, %s110
    %p112 = scmp.eq.s32.totalorder %s18, 0
    %p113 = por %p111, %p112
    %s115 = sadd.s32 %s114, 1
    %p118 = scmp.eq.s32.totalorder %s12, 1
    %p119 = scmp.ne.s32.totalorder %s114, %s116
    %p120 = scmp.eq.s32.totalorder %s12, 0
    %p121 = por %p119, %p120
    %p122 = scmp.ne.s32.totalorder %s114, %s116
    %p123 = scmp.eq.s32.totalorder %s17, 1
    %p124 = por %p122, %p123
    %p125 = scmp.ne.s32.totalorder %s116, %s117
    %p126 = scmp.eq.s32.totalorder %s17, 0
    %p127 = por %p125, %p126
    %p128 = scmp.ne.s32.totalorder %s116, %s117
    %p129 = scmp.eq.s32.totalorder %s18, 1
    %p130 = por %p128, %p129
    %p132 = scmp.ne.s32.totalorder %s117, %s131
    %p133 = scmp.eq.s32.totalorder %s18, 0
    %p134 = por %p132, %p133
    %s136 = sadd.s32 %s135, 1
    %p139 = scmp.eq.s32.totalorder %s12, 1
    %p140 = scmp.ne.s32.totalorder %s135, %s137
    %p141 = scmp.eq.s32.totalorder %s12, 0
    %p142 = por %p140, %p141
    %p143 = scmp.ne.s32.totalorder %s135, %s137
    %p144 = scmp.eq.s32.totalorder %s17, 1
    %p145 = por %p143, %p144
    %p146 = scmp.ne.s32.totalorder %s137, %s138
    %p147 = scmp.eq.s32.totalorder %s17, 0
    %p148 = por %p146, %p147
    %p149 = scmp.ne.s32.totalorder %s137, %s138
    %p150 = scmp.eq.s32.totalorder %s18, 1
    %p151 = por %p149, %p150
    %p153 = scmp.ne.s32.totalorder %s138, %s152
    %p154 = scmp.eq.s32.totalorder %s18, 0
    %p155 = por %p153, %p154
    %s157 = sadd.s32 %s156, 1
    %p160 = scmp.eq.s32.totalorder %s12, 1
    %p161 = scmp.ne.s32.totalorder %s156, %s158
    %p162 = scmp.eq.s32.totalorder %s12, 0
    %p163 = por %p161, %p162
    %p164 = scmp.ne.s32.totalorder %s156, %s158
    %p165 = scmp.eq.s32.totalorder %s17, 1
    %p166 = por %p164, %p165
    %p167 = scmp.ne.s32.totalorder %s158, %s159
    %p168 = scmp.eq.s32.totalorder %s17, 0
    %p169 = por %p167, %p168
    %p170 = scmp.ne.s32.totalorder %s158, %s159
    %p171 = scmp.eq.s32.totalorder %s18, 1
    %p172 = por %p170, %p171
    %p174 = scmp.ne.s32.totalorder %s159, %s173
    %p175 = scmp.eq.s32.totalorder %s18, 0
    %p176 = por %p174, %p175
    %s177 = ssub.s32 %s19, %s31
    %s178 = ssub.s32 %s20, %s27
    %s179 = sor.u32 %s177, %s178
    %p180 = scmp.eq.s32.totalorder %s179, 0
    %s182 = sadd.s32 %s181, 1
    %s183 = scalar_select %p180, %s181, %s182
    %p186 = pneg %p180
    %p187 = scmp.eq.s32.totalorder %s12, 1
    %p188 = por %p186, %p187
    %p189 = scmp.ne.s32.totalorder %s181, %s184
    %p190 = scmp.eq.s32.totalorder %s12, 0
    %p191 = por %p189, %p190
    %p192 = scmp.ne.s32.totalorder %s181, %s184
    %p193 = scmp.eq.s32.totalorder %s17, 1
    %p194 = por %p192, %p193
    %p195 = scmp.ne.s32.totalorder %s184, %s185
    %p196 = scmp.eq.s32.totalorder %s17, 0
    %p197 = por %p195, %p196
    %p198 = scmp.ne.s32.totalorder %s184, %s185
    %p199 = scmp.eq.s32.totalorder %s18, 1
    %p200 = por %p198, %p199
    %p202 = scmp.ne.s32.totalorder %s185, %s201
    %p203 = scmp.eq.s32.totalorder %s18, 0
    %p204 = por %p202, %p203
    %p205 = scmp.le.s32.totalorder 1, %s12
    %p206 = scmp.lt.s32.totalorder %s12, 3
    %p207 = pnand %p205, %p206
    %p208 = pneg %p207
    // Predicated region
    $region9: #{ldp_block_forward.10} parent=5 // pred_check
      _
    $region10: #{ldp_block_forward.10} parent=5 // pred_check_branch
      %210 = sbr.rel (%p207) target = $region12
    $region11: #{ldp_block_forward.10} parent=5 // pred_region
      %s211 = ssub.s32 %s12, 1
      // Predicated region
      $region13: #{ldp_block_forward.10} parent=11 // pred_check
        %p212 = pneg %p127
      $region14: #{ldp_block_forward.10} parent=11 // pred_check_branch
        %214 = sbr.rel (%p212) target = $region16
      $region15: #{ldp_block_forward.10} parent=11 // pred_region
        _
      $region16: #{ldp_block_forward.10} parent=11 // pred_fallthru
        _
      // Predicated region
      $region17: #{ldp_block_forward.10} parent=11 // pred_check
        %p215 = pneg %p148
      $region18: #{ldp_block_forward.10} parent=11 // pred_check_branch
        %217 = sbr.rel (%p215) target = $region20
      $region19: #{ldp_block_forward.10} parent=11 // pred_region
        _
      $region20: #{ldp_block_forward.10} parent=11 // pred_fallthru
        _
      // Predicated region
      $region21: #{ldp_block_forward.10} parent=11 // pred_check
        %p218 = pneg %p169
      $region22: #{ldp_block_forward.10} parent=11 // pred_check_branch
        %220 = sbr.rel (%p218) target = $region24
      $region23: #{ldp_block_forward.10} parent=11 // pred_region
        _
      $region24: #{ldp_block_forward.10} parent=11 // pred_fallthru
        _
    $region12: #{ldp_block_forward.10} parent=5 // pred_fallthru
      _
    %p221 = scmp.lt.s32.totalorder %s12, 2
    // Predicated region
    $region25: #{ldp_block_forward.10} parent=5 // pred_check
      %p222 = pneg %p221
    $region26: #{ldp_block_forward.10} parent=5 // pred_check_branch
      %224 = sbr.rel (%p222) target = $region28
    $region27: #{ldp_block_forward.10} parent=5 // pred_region
      // Predicated region
      $region29: #{ldp_block_forward.10} parent=27 // pred_check
        %p225 = pneg %p46
      $region30: #{ldp_block_forward.10} parent=27 // pred_check_branch
        %227 = sbr.rel (%p225) target = $region32
      $region31: #{ldp_block_forward.10} parent=27 // pred_region
        %s228 = smul.u32 32, %s20
        %p229 = scmp.lt.s32.totalorder %s19, 1
        %s230 = scalar_select %p229, %s19, 1
        %p231 = scmp.lt.s32.totalorder %s228, 31
        %s232 = scalar_select %p231, %s228, 31
        %s233 = smul.addr %s230, 32
        %s234 = sadd.s32 %s232, %s233
        %s235 = smul.addr %s234, 4
        %s236 = scalar_lea.vmem %s0, %s235
        %s237 = smul.u32 32, %s20
      $region32: #{ldp_block_forward.10} parent=27 // pred_fallthru
        _
      // Predicated region
      $region33: #{ldp_block_forward.10} parent=27 // pred_check
        %p238 = pneg %p72
      $region34: #{ldp_block_forward.10} parent=27 // pred_check_branch
        %240 = sbr.rel (%p238) target = $region36
      $region35: #{ldp_block_forward.10} parent=27 // pred_region
        %p241 = scmp.lt.s32.totalorder %s19, 1
        %s242 = scalar_select %p241, %s19, 1
        %s243 = scalar_lea.vmem %s1, %s242
      $region36: #{ldp_block_forward.10} parent=27 // pred_fallthru
        _
      // Predicated region
      $region37: #{ldp_block_forward.10} parent=27 // pred_check
        %p244 = pneg %p100
      $region38: #{ldp_block_forward.10} parent=27 // pred_check_branch
        %246 = sbr.rel (%p244) target = $region40
      $region39: #{ldp_block_forward.10} parent=27 // pred_region
        %s247 = smul.u32 32, %s20
        %p248 = scmp.lt.s32.totalorder %s19, 1
        %s249 = scalar_select %p248, %s19, 1
        %p250 = scmp.lt.s32.totalorder %s247, 31
        %s251 = scalar_select %p250, %s247, 31
        %s252 = smul.addr %s249, 32
        %s253 = sadd.s32 %s251, %s252
        %s254 = smul.addr %s253, 4
        %s255 = scalar_lea.vmem %s2, %s254
        %s256 = smul.u32 32, %s20
      $region40: #{ldp_block_forward.10} parent=27 // pred_fallthru
        _
    $region28: #{ldp_block_forward.10} parent=5 // pred_fallthru
      _
    %p257 = scmp.le.s32.totalorder 1, %s12
    %p258 = scmp.lt.s32.totalorder %s12, 3
    %p259 = pnand %p257, %p258
    %p260 = pneg %p259
    // Predicated region
    $region41: #{ldp_block_forward.10} parent=5 // pred_check
      _
    $region42: #{ldp_block_forward.10} parent=5 // pred_check_branch
      %262 = sbr.rel (%p259) target = $region44
    $region43: #{ldp_block_forward.10} parent=5 // pred_region
      %s263 = ssub.s32 %s12, 1
      %s264 = smul.u32 32, %s22
      %p265 = scmp.lt.s32.totalorder %s21, 1
      %s266 = scalar_select %p265, %s21, 1
      %p267 = scmp.lt.s32.totalorder %s264, 31
      %s268 = scalar_select %p267, %s264, 31
      %s269 = smul.addr %s266, 32
      %s270 = sadd.s32 %s268, %s269
      %s271 = smul.addr %s270, 4
      %s272 = scalar_lea.vmem %s0, %s271
      %p273 = pneg %p52
      %p274 = pneg %p49
      %p275 = scmp.lt.s32.totalorder %s21, 1
      %s276 = scalar_select %p275, %s21, 1
      %s277 = scalar_lea.vmem %s1, %s276
      %p278 = pneg %p78
      %p279 = pneg %p75
      %s280 = smul.u32 32, %s22
      %p281 = scmp.lt.s32.totalorder %s21, 1
      %s282 = scalar_select %p281, %s21, 1
      %p283 = scmp.lt.s32.totalorder %s280, 31
      %s284 = scalar_select %p283, %s280, 31
      %s285 = smul.addr %s282, 32
      %s286 = sadd.s32 %s284, %s285
      %s287 = smul.addr %s286, 4
      %s288 = scalar_lea.vmem %s2, %s287
      %p289 = pneg %p106
      %p290 = pneg %p103
      %p291 = pneg %p127
      %p292 = pneg %p124
      %p293 = pneg %p148
      %p294 = pneg %p145
      %p295 = pneg %p169
      %p296 = pneg %p166
      %p297 = pneg %p197
      %p298 = pneg %p194
      %s299 = smul.u32 32, %s22
      %p300 = scmp.lt.s32.totalorder %s21, 1
      %s301 = scalar_select %p300, %s21, 1
      %p302 = scmp.lt.s32.totalorder %s299, 31
      %s303 = scalar_select %p302, %s299, 31
      %s304 = smul.addr %s301, 32
      %s305 = sadd.s32 %s303, %s304
      %s306 = smul.addr %s305, 4
      %s307 = scalar_lea.vmem %s6, %s306
      %s308 = smul.u32 32, %s22
      %p309 = scmp.lt.s32.totalorder %s21, 1
      %s310 = scalar_select %p309, %s21, 1
      %p311 = scmp.lt.s32.totalorder %s308, 31
      %s312 = scalar_select %p311, %s308, 31
      %s313 = smul.addr %s310, 32
      %s314 = sadd.s32 %s312, %s313
      %s315 = smul.addr %s314, 4
      %s316 = scalar_lea.vmem %s0, %s315
      %s317 = smul.u32 32, %s22
      %p318 = scmp.lt.s32.totalorder %s21, 1
      %s319 = scalar_select %p318, %s21, 1
      %s320 = scalar_lea.vmem %s1, %s319
      %s321 = smul.u32 32, %s22
      %p322 = scmp.lt.s32.totalorder %s21, 1
      %s323 = scalar_select %p322, %s21, 1
      %p324 = scmp.lt.s32.totalorder %s321, 31
      %s325 = scalar_select %p324, %s321, 31
      %s326 = smul.addr %s323, 32
      %s327 = sadd.s32 %s325, %s326
      %s328 = smul.addr %s327, 4
      %s329 = scalar_lea.vmem %s2, %s328
      %s330 = smul.u32 32, %s22
      %s331 = smul.u32 32, %s22
      %p332 = scmp.lt.s32.totalorder %s21, 1
      %s333 = scalar_select %p332, %s21, 1
      %p334 = scmp.lt.s32.totalorder %s331, 31
      %s335 = scalar_select %p334, %s331, 31
      %s336 = smul.addr %s333, 32
      %s337 = sadd.s32 %s335, %s336
      %s338 = smul.addr %s337, 4
      %s339 = scalar_lea.vmem %s6, %s338
      %s340 = smul.u32 32, %s22
      %v342 = vld [vmem:[%s316] sm:$0xf]
      %v343 = vld [vmem:[%s316 + $0x4] sm:$0xf]
      %v344 = vld [vmem:[%s316 + $0x8] sm:$0xf]
      %v345 = vld [vmem:[%s316 + $0xc] sm:$0xf]
      %v346 = vld [vmem:[%s316 + $0x10] sm:$0xf]
      %v347 = vld [vmem:[%s316 + $0x14] sm:$0xf]
      %v348 = vld [vmem:[%s316 + $0x18] sm:$0xf]
      %v349 = vld [vmem:[%s316 + $0x1c] sm:$0xf]
      %v350 = vld [vmem:[%s316 + $0x20] sm:$0xf]
      %v351 = vld [vmem:[%s316 + $0x24] sm:$0xf]
      %v352 = vld [vmem:[%s316 + $0x28] sm:$0xf]
      %v353 = vld [vmem:[%s316 + $0x2c] sm:$0xf]
      %v354 = vld [vmem:[%s316 + $0x30] sm:$0xf]
      %v355 = vld [vmem:[%s316 + $0x34] sm:$0xf]
      %v356 = vld [vmem:[%s316 + $0x38] sm:$0xf]
      %v357 = vld [vmem:[%s316 + $0x3c] sm:$0xf]
      %v358 = vld [vmem:[%s316 + $0x40] sm:$0xf]
      %v359 = vld [vmem:[%s316 + $0x44] sm:$0xf]
      %v360 = vld [vmem:[%s316 + $0x48] sm:$0xf]
      %v361 = vld [vmem:[%s316 + $0x4c] sm:$0xf]
      %v362 = vld [vmem:[%s316 + $0x50] sm:$0xf]
      %v363 = vld [vmem:[%s316 + $0x54] sm:$0xf]
      %v364 = vld [vmem:[%s316 + $0x58] sm:$0xf]
      %v365 = vld [vmem:[%s316 + $0x5c] sm:$0xf]
      %v366 = vld [vmem:[%s316 + $0x60] sm:$0xf]
      %v367 = vld [vmem:[%s316 + $0x64] sm:$0xf]
      %v368 = vld [vmem:[%s316 + $0x68] sm:$0xf]
      %v369 = vld [vmem:[%s316 + $0x6c] sm:$0xf]
      %v370 = vld [vmem:[%s316 + $0x70] sm:$0xf]
      %v371 = vld [vmem:[%s316 + $0x74] sm:$0xf]
      %v372 = vld [vmem:[%s316 + $0x78] sm:$0xf]
      %v373 = vld [vmem:[%s316 + $0x7c] sm:$0xf]
      %v374 = vunpack.c.l.bf16 %v342
      %v375 = vunpack.c.l.bf16 %v343
      %v376 = vunpack.c.l.bf16 %v344
      %v377 = vunpack.c.l.bf16 %v345
      %v378 = vunpack.c.l.bf16 %v346
      %v379 = vunpack.c.l.bf16 %v347
      %v380 = vunpack.c.l.bf16 %v348
      %v381 = vunpack.c.l.bf16 %v349
      %v382 = vunpack.c.l.bf16 %v350
      %v383 = vunpack.c.l.bf16 %v351
      %v384 = vunpack.c.l.bf16 %v352
      %v385 = vunpack.c.l.bf16 %v353
      %v386 = vunpack.c.l.bf16 %v354
      %v387 = vunpack.c.l.bf16 %v355
      %v388 = vunpack.c.l.bf16 %v356
      %v389 = vunpack.c.l.bf16 %v357
      %v390 = vunpack.c.l.bf16 %v358
      %v391 = vunpack.c.l.bf16 %v359
      %v392 = vunpack.c.l.bf16 %v360
      %v393 = vunpack.c.l.bf16 %v361
      %v394 = vunpack.c.l.bf16 %v362
      %v395 = vunpack.c.l.bf16 %v363
      %v396 = vunpack.c.l.bf16 %v364
      %v397 = vunpack.c.l.bf16 %v365
      %v398 = vunpack.c.l.bf16 %v366
      %v399 = vunpack.c.l.bf16 %v367
      %v400 = vunpack.c.l.bf16 %v368
      %v401 = vunpack.c.l.bf16 %v369
      %v402 = vunpack.c.l.bf16 %v370
      %v403 = vunpack.c.l.bf16 %v371
      %v404 = vunpack.c.l.bf16 %v372
      %v405 = vunpack.c.l.bf16 %v373
      %v406 = vld [vmem:[%s320] sm:$0x1]
      %v408 = vperm.slane %v406, 0
      %v410 = vmul.f32 %v374, %v408
      %v411 = vmul.f32 %v375, %v408
      %v412 = vmul.f32 %v376, %v408
      %v413 = vmul.f32 %v377, %v408
      %v414 = vmul.f32 %v378, %v408
      %v415 = vmul.f32 %v379, %v408
      %v416 = vmul.f32 %v380, %v408
      %v417 = vmul.f32 %v381, %v408
      %v418 = vmul.f32 %v382, %v408
      %v419 = vmul.f32 %v383, %v408
      %v420 = vmul.f32 %v384, %v408
      %v421 = vmul.f32 %v385, %v408
      %v422 = vmul.f32 %v386, %v408
      %v423 = vmul.f32 %v387, %v408
      %v424 = vmul.f32 %v388, %v408
      %v425 = vmul.f32 %v389, %v408
      %v426 = vmul.f32 %v390, %v408
      %v427 = vmul.f32 %v391, %v408
      %v428 = vmul.f32 %v392, %v408
      %v429 = vmul.f32 %v393, %v408
      %v430 = vmul.f32 %v394, %v408
      %v431 = vmul.f32 %v395, %v408
      %v432 = vmul.f32 %v396, %v408
      %v433 = vmul.f32 %v397, %v408
      %v434 = vmul.f32 %v398, %v408
      %v435 = vmul.f32 %v399, %v408
      %v436 = vmul.f32 %v400, %v408
      %v437 = vmul.f32 %v401, %v408
      %v438 = vmul.f32 %v402, %v408
      %v439 = vmul.f32 %v403, %v408
      %v440 = vmul.f32 %v404, %v408
      %v441 = vmul.f32 %v405, %v408
      %v442 = vpack.c.bf16 %v411, %v410
      %v443 = vpack.c.bf16 %v413, %v412
      %v444 = vpack.c.bf16 %v415, %v414
      %v445 = vpack.c.bf16 %v417, %v416
      %v446 = vpack.c.bf16 %v419, %v418
      %v447 = vpack.c.bf16 %v421, %v420
      %v448 = vpack.c.bf16 %v423, %v422
      %v449 = vpack.c.bf16 %v425, %v424
      %v450 = vpack.c.bf16 %v427, %v426
      %v451 = vpack.c.bf16 %v429, %v428
      %v452 = vpack.c.bf16 %v431, %v430
      %v453 = vpack.c.bf16 %v433, %v432
      %v454 = vpack.c.bf16 %v435, %v434
      %v455 = vpack.c.bf16 %v437, %v436
      %v456 = vpack.c.bf16 %v439, %v438
      %v457 = vpack.c.bf16 %v441, %v440
      %v458 = vld [vmem:[%s3] sm:$0xf]
      %v459 = vld [vmem:[%s3 + $0x4] sm:$0xf]
      %v460 = vld [vmem:[%s3 + $0x8] sm:$0xf]
      %v461 = vld [vmem:[%s3 + $0xc] sm:$0xf]
      %v466 = vunpack.c.l.b16 %v458
      %v467 = vunpack.c.l.b16 %v459
      %v468 = vunpack.c.l.b16 %v460
      %v469 = vunpack.c.l.b16 %v461
      %v470 = vpack.c.b16 %v467, %v466
      %v471 = vpack.c.b16 %v469, %v468
      %vm474 = vcmask 261120
      %v476 = vsel %vm474, %v442, 0
      %v479 = vsel %vm474, %v443, 0
      %v482 = vsel %vm474, %v444, 0
      %v485 = vsel %vm474, %v445, 0
      %v488 = vsel %vm474, %v446, 0
      %v491 = vsel %vm474, %v447, 0
      %v494 = vsel %vm474, %v448, 0
      %v497 = vsel %vm474, %v449, 0
      %v500 = vsel %vm474, %v450, 0
      %v503 = vsel %vm474, %v451, 0
      %v506 = vsel %vm474, %v452, 0
      %v509 = vsel %vm474, %v453, 0
      %v512 = vsel %vm474, %v454, 0
      %v515 = vsel %vm474, %v455, 0
      %v518 = vsel %vm474, %v456, 0
      %v521 = vsel %vm474, %v457, 0
      %523 = vmatpush.bf16.msra.mxu0 0
      %524 = vmatpush.bf16.msra.mxu0 0
      %525 = vmatpush.bf16.msra.mxu0 0
      %526 = vmatpush.bf16.msra.mxu0 0
      %527 = vmatpush.bf16.msra.mxu0 0
      %528 = vmatpush.bf16.msra.mxu0 0
      %529 = vmatpush.bf16.msra.mxu0 %v471
      %530 = vmatpush.bf16.msra.mxu0 %v470
      %531 = vmatmul.bf16.gmra.mxu0 %v476
      %v532 = vpop.f32.mrf.mxu0
      %v533 = vadd.f32 0.0, %v532
      %v534 = vpop.f32.mrf.mxu0
      %v535 = vadd.f32 0.0, %v534
      %536 = vmatmul.bf16.gmra.mxu0 %v479
      %v537 = vpop.f32.mrf.mxu0
      %v538 = vadd.f32 0.0, %v537
      %v539 = vpop.f32.mrf.mxu0
      %v540 = vadd.f32 0.0, %v539
      %541 = vmatmul.bf16.gmra.mxu0 %v482
      %v542 = vpop.f32.mrf.mxu0
      %v543 = vadd.f32 0.0, %v542
      %v544 = vpop.f32.mrf.mxu0
      %v545 = vadd.f32 0.0, %v544
      %546 = vmatmul.bf16.gmra.mxu0 %v485
      %v547 = vpop.f32.mrf.mxu0
      %v548 = vadd.f32 0.0, %v547
      %v549 = vpop.f32.mrf.mxu0
      %v550 = vadd.f32 0.0, %v549
      %551 = vmatmul.bf16.gmra.mxu0 %v488
      %v552 = vpop.f32.mrf.mxu0
      %v553 = vadd.f32 0.0, %v552
      %v554 = vpop.f32.mrf.mxu0
      %v555 = vadd.f32 0.0, %v554
      %556 = vmatmul.bf16.gmra.mxu0 %v491
      %v557 = vpop.f32.mrf.mxu0
      %v558 = vadd.f32 0.0, %v557
      %v559 = vpop.f32.mrf.mxu0
      %v560 = vadd.f32 0.0, %v559
      %561 = vmatmul.bf16.gmra.mxu0 %v494
      %v562 = vpop.f32.mrf.mxu0
      %v563 = vadd.f32 0.0, %v562
      %v564 = vpop.f32.mrf.mxu0
      %v565 = vadd.f32 0.0, %v564
      %566 = vmatmul.bf16.gmra.mxu0 %v497
      %v567 = vpop.f32.mrf.mxu0
      %v568 = vadd.f32 0.0, %v567
      %v569 = vpop.f32.mrf.mxu0
      %v570 = vadd.f32 0.0, %v569
      %571 = vmatmul.bf16.gmra.mxu0 %v500
      %v572 = vpop.f32.mrf.mxu0
      %v573 = vadd.f32 0.0, %v572
      %v574 = vpop.f32.mrf.mxu0
      %v575 = vadd.f32 0.0, %v574
      %576 = vmatmul.bf16.gmra.mxu0 %v503
      %v577 = vpop.f32.mrf.mxu0
      %v578 = vadd.f32 0.0, %v577
      %v579 = vpop.f32.mrf.mxu0
      %v580 = vadd.f32 0.0, %v579
      %581 = vmatmul.bf16.gmra.mxu0 %v506
      %v582 = vpop.f32.mrf.mxu0
      %v583 = vadd.f32 0.0, %v582
      %v584 = vpop.f32.mrf.mxu0
      %v585 = vadd.f32 0.0, %v584
      %586 = vmatmul.bf16.gmra.mxu0 %v509
      %v587 = vpop.f32.mrf.mxu0
      %v588 = vadd.f32 0.0, %v587
      %v589 = vpop.f32.mrf.mxu0
      %v590 = vadd.f32 0.0, %v589
      %591 = vmatmul.bf16.gmra.mxu0 %v512
      %v592 = vpop.f32.mrf.mxu0
      %v593 = vadd.f32 0.0, %v592
      %v594 = vpop.f32.mrf.mxu0
      %v595 = vadd.f32 0.0, %v594
      %596 = vmatmul.bf16.gmra.mxu0 %v515
      %v597 = vpop.f32.mrf.mxu0
      %v598 = vadd.f32 0.0, %v597
      %v599 = vpop.f32.mrf.mxu0
      %v600 = vadd.f32 0.0, %v599
      %601 = vmatmul.bf16.gmra.mxu0 %v518
      %v602 = vpop.f32.mrf.mxu0
      %v603 = vadd.f32 0.0, %v602
      %v604 = vpop.f32.mrf.mxu0
      %v605 = vadd.f32 0.0, %v604
      %606 = vmatmul.bf16.gmra.mxu0 %v521
      %v607 = vpop.f32.mrf.mxu0
      %v608 = vadd.f32 0.0, %v607
      %v609 = vpop.f32.mrf.mxu0
      %v610 = vadd.f32 0.0, %v609
      %611 = vdwg.mxu0
      %v612 = vsel %vm474, %v533, 0.0
      %613 = vadd.xlane.f32.xlu0 %v612
      %v614 = vpop.xlane.xlu0 %613
      %v615 = vsel %vm474, %v535, 0.0
      %616 = vadd.xlane.f32.xlu0 %v615
      %v617 = vpop.xlane.xlu0 %616
      %v618 = vsel %vm474, %v538, 0.0
      %619 = vadd.xlane.f32.xlu0 %v618
      %v620 = vpop.xlane.xlu0 %619
      %v621 = vsel %vm474, %v540, 0.0
      %622 = vadd.xlane.f32.xlu0 %v621
      %v623 = vpop.xlane.xlu0 %622
      %v624 = vsel %vm474, %v543, 0.0
      %625 = vadd.xlane.f32.xlu0 %v624
      %v626 = vpop.xlane.xlu0 %625
      %v627 = vsel %vm474, %v545, 0.0
      %628 = vadd.xlane.f32.xlu0 %v627
      %v629 = vpop.xlane.xlu0 %628
      %v630 = vsel %vm474, %v548, 0.0
      %631 = vadd.xlane.f32.xlu0 %v630
      %v632 = vpop.xlane.xlu0 %631
      %v633 = vsel %vm474, %v550, 0.0
      %634 = vadd.xlane.f32.xlu0 %v633
      %v635 = vpop.xlane.xlu0 %634
      %v636 = vsel %vm474, %v553, 0.0
      %637 = vadd.xlane.f32.xlu0 %v636
      %v638 = vpop.xlane.xlu0 %637
      %v639 = vsel %vm474, %v555, 0.0
      %640 = vadd.xlane.f32.xlu0 %v639
      %v641 = vpop.xlane.xlu0 %640
      %v642 = vsel %vm474, %v558, 0.0
      %643 = vadd.xlane.f32.xlu0 %v642
      %v644 = vpop.xlane.xlu0 %643
      %v645 = vsel %vm474, %v560, 0.0
      %646 = vadd.xlane.f32.xlu0 %v645
      %v647 = vpop.xlane.xlu0 %646
      %v648 = vsel %vm474, %v563, 0.0
      %649 = vadd.xlane.f32.xlu0 %v648
      %v650 = vpop.xlane.xlu0 %649
      %v651 = vsel %vm474, %v565, 0.0
      %652 = vadd.xlane.f32.xlu0 %v651
      %v653 = vpop.xlane.xlu0 %652
      %v654 = vsel %vm474, %v568, 0.0
      %655 = vadd.xlane.f32.xlu0 %v654
      %v656 = vpop.xlane.xlu0 %655
      %v657 = vsel %vm474, %v570, 0.0
      %658 = vadd.xlane.f32.xlu0 %v657
      %v659 = vpop.xlane.xlu0 %658
      %v660 = vsel %vm474, %v573, 0.0
      %661 = vadd.xlane.f32.xlu0 %v660
      %v662 = vpop.xlane.xlu0 %661
      %v663 = vsel %vm474, %v575, 0.0
      %664 = vadd.xlane.f32.xlu0 %v663
      %v665 = vpop.xlane.xlu0 %664
      %v666 = vsel %vm474, %v578, 0.0
      %667 = vadd.xlane.f32.xlu0 %v666
      %v668 = vpop.xlane.xlu0 %667
      %v669 = vsel %vm474, %v580, 0.0
      %670 = vadd.xlane.f32.xlu0 %v669
      %v671 = vpop.xlane.xlu0 %670
      %v672 = vsel %vm474, %v583, 0.0
      %673 = vadd.xlane.f32.xlu0 %v672
      %v674 = vpop.xlane.xlu0 %673
      %v675 = vsel %vm474, %v585, 0.0
      %676 = vadd.xlane.f32.xlu0 %v675
      %v677 = vpop.xlane.xlu0 %676
      %v678 = vsel %vm474, %v588, 0.0
      %679 = vadd.xlane.f32.xlu0 %v678
      %v680 = vpop.xlane.xlu0 %679
      %v681 = vsel %vm474, %v590, 0.0
      %682 = vadd.xlane.f32.xlu0 %v681
      %v683 = vpop.xlane.xlu0 %682
      %v684 = vsel %vm474, %v593, 0.0
      %685 = vadd.xlane.f32.xlu0 %v684
      %v686 = vpop.xlane.xlu0 %685
      %v687 = vsel %vm474, %v595, 0.0
      %688 = vadd.xlane.f32.xlu0 %v687
      %v689 = vpop.xlane.xlu0 %688
      %v690 = vsel %vm474, %v598, 0.0
      %691 = vadd.xlane.f32.xlu0 %v690
      %v692 = vpop.xlane.xlu0 %691
      %v693 = vsel %vm474, %v600, 0.0
      %694 = vadd.xlane.f32.xlu0 %v693
      %v695 = vpop.xlane.xlu0 %694
      %v696 = vsel %vm474, %v603, 0.0
      %697 = vadd.xlane.f32.xlu0 %v696
      %v698 = vpop.xlane.xlu0 %697
      %v699 = vsel %vm474, %v605, 0.0
      %700 = vadd.xlane.f32.xlu0 %v699
      %v701 = vpop.xlane.xlu0 %700
      %v702 = vsel %vm474, %v608, 0.0
      %703 = vadd.xlane.f32.xlu0 %v702
      %v704 = vpop.xlane.xlu0 %703
      %v705 = vsel %vm474, %v610, 0.0
      %706 = vadd.xlane.f32.xlu0 %v705
      %v707 = vpop.xlane.xlu0 %706
      %v708 = vrcp.pop 32.0
      %v709 = vmul.f32 32.0, %v708
      %v710 = vsub.f32 1.0, %v709
      %v711 = vmul.f32 %v708, %v710
      %v712 = vadd.f32 %v708, %v711
      %vm713 = vweird.f32 %v708
      %v714 = vsel %vm713, %v708, %v712
      %v715 = vmul.f32 %v614, %v714
      %v716 = vmul.f32 %v617, %v714
      %v717 = vmul.f32 %v620, %v714
      %v718 = vmul.f32 %v623, %v714
      %v719 = vmul.f32 %v626, %v714
      %v720 = vmul.f32 %v629, %v714
      %v721 = vmul.f32 %v632, %v714
      %v722 = vmul.f32 %v635, %v714
      %v723 = vmul.f32 %v638, %v714
      %v724 = vmul.f32 %v641, %v714
      %v725 = vmul.f32 %v644, %v714
      %v726 = vmul.f32 %v647, %v714
      %v727 = vmul.f32 %v650, %v714
      %v728 = vmul.f32 %v653, %v714
      %v729 = vmul.f32 %v656, %v714
      %v730 = vmul.f32 %v659, %v714
      %v731 = vmul.f32 %v662, %v714
      %v732 = vmul.f32 %v665, %v714
      %v733 = vmul.f32 %v668, %v714
      %v734 = vmul.f32 %v671, %v714
      %v735 = vmul.f32 %v674, %v714
      %v736 = vmul.f32 %v677, %v714
      %v737 = vmul.f32 %v680, %v714
      %v738 = vmul.f32 %v683, %v714
      %v739 = vmul.f32 %v686, %v714
      %v740 = vmul.f32 %v689, %v714
      %v741 = vmul.f32 %v692, %v714
      %v742 = vmul.f32 %v695, %v714
      %v743 = vmul.f32 %v698, %v714
      %v744 = vmul.f32 %v701, %v714
      %v745 = vmul.f32 %v704, %v714
      %v746 = vmul.f32 %v707, %v714
      %v747 = vsub.f32 %v533, %v715
      %v748 = vsub.f32 %v535, %v716
      %v749 = vsub.f32 %v538, %v717
      %v750 = vsub.f32 %v540, %v718
      %v751 = vsub.f32 %v543, %v719
      %v752 = vsub.f32 %v545, %v720
      %v753 = vsub.f32 %v548, %v721
      %v754 = vsub.f32 %v550, %v722
      %v755 = vsub.f32 %v553, %v723
      %v756 = vsub.f32 %v555, %v724
      %v757 = vsub.f32 %v558, %v725
      %v758 = vsub.f32 %v560, %v726
      %v759 = vsub.f32 %v563, %v727
      %v760 = vsub.f32 %v565, %v728
      %v761 = vsub.f32 %v568, %v729
      %v762 = vsub.f32 %v570, %v730
      %v763 = vsub.f32 %v573, %v731
      %v764 = vsub.f32 %v575, %v732
      %v765 = vsub.f32 %v578, %v733
      %v766 = vsub.f32 %v580, %v734
      %v767 = vsub.f32 %v583, %v735
      %v768 = vsub.f32 %v585, %v736
      %v769 = vsub.f32 %v588, %v737
      %v770 = vsub.f32 %v590, %v738
      %v771 = vsub.f32 %v593, %v739
      %v772 = vsub.f32 %v595, %v740
      %v773 = vsub.f32 %v598, %v741
      %v774 = vsub.f32 %v600, %v742
      %v775 = vsub.f32 %v603, %v743
      %v776 = vsub.f32 %v605, %v744
      %v777 = vsub.f32 %v608, %v745
      %v778 = vsub.f32 %v610, %v746
      %v779 = vmul.f32 %v747, %v747
      %v780 = vmul.f32 %v748, %v748
      %v781 = vmul.f32 %v749, %v749
      %v782 = vmul.f32 %v750, %v750
      %v783 = vmul.f32 %v751, %v751
      %v784 = vmul.f32 %v752, %v752
      %v785 = vmul.f32 %v753, %v753
      %v786 = vmul.f32 %v754, %v754
      %v787 = vmul.f32 %v755, %v755
      %v788 = vmul.f32 %v756, %v756
      %v789 = vmul.f32 %v757, %v757
      %v790 = vmul.f32 %v758, %v758
      %v791 = vmul.f32 %v759, %v759
      %v792 = vmul.f32 %v760, %v760
      %v793 = vmul.f32 %v761, %v761
      %v794 = vmul.f32 %v762, %v762
      %v795 = vmul.f32 %v763, %v763
      %v796 = vmul.f32 %v764, %v764
      %v797 = vmul.f32 %v765, %v765
      %v798 = vmul.f32 %v766, %v766
      %v799 = vmul.f32 %v767, %v767
      %v800 = vmul.f32 %v768, %v768
      %v801 = vmul.f32 %v769, %v769
      %v802 = vmul.f32 %v770, %v770
      %v803 = vmul.f32 %v771, %v771
      %v804 = vmul.f32 %v772, %v772
      %v805 = vmul.f32 %v773, %v773
      %v806 = vmul.f32 %v774, %v774
      %v807 = vmul.f32 %v775, %v775
      %v808 = vmul.f32 %v776, %v776
      %v809 = vmul.f32 %v777, %v777
      %v810 = vmul.f32 %v778, %v778
      %v811 = vsel %vm474, %v779, 0.0
      %812 = vadd.xlane.f32.xlu0 %v811
      %v813 = vpop.xlane.xlu0 %812
      %v814 = vsel %vm474, %v780, 0.0
      %815 = vadd.xlane.f32.xlu0 %v814
      %v816 = vpop.xlane.xlu0 %815
      %v817 = vsel %vm474, %v781, 0.0
      %818 = vadd.xlane.f32.xlu0 %v817
      %v819 = vpop.xlane.xlu0 %818
      %v820 = vsel %vm474, %v782, 0.0
      %821 = vadd.xlane.f32.xlu0 %v820
      %v822 = vpop.xlane.xlu0 %821
      %v823 = vsel %vm474, %v783, 0.0
      %824 = vadd.xlane.f32.xlu0 %v823
      %v825 = vpop.xlane.xlu0 %824
      %v826 = vsel %vm474, %v784, 0.0
      %827 = vadd.xlane.f32.xlu0 %v826
      %v828 = vpop.xlane.xlu0 %827
      %v829 = vsel %vm474, %v785, 0.0
      %830 = vadd.xlane.f32.xlu0 %v829
      %v831 = vpop.xlane.xlu0 %830
      %v832 = vsel %vm474, %v786, 0.0
      %833 = vadd.xlane.f32.xlu0 %v832
      %v834 = vpop.xlane.xlu0 %833
      %v835 = vsel %vm474, %v787, 0.0
      %836 = vadd.xlane.f32.xlu0 %v835
      %v837 = vpop.xlane.xlu0 %836
      %v838 = vsel %vm474, %v788, 0.0
      %839 = vadd.xlane.f32.xlu0 %v838
      %v840 = vpop.xlane.xlu0 %839
      %v841 = vsel %vm474, %v789, 0.0
      %842 = vadd.xlane.f32.xlu0 %v841
      %v843 = vpop.xlane.xlu0 %842
      %v844 = vsel %vm474, %v790, 0.0
      %845 = vadd.xlane.f32.xlu0 %v844
      %v846 = vpop.xlane.xlu0 %845
      %v847 = vsel %vm474, %v791, 0.0
      %848 = vadd.xlane.f32.xlu0 %v847
      %v849 = vpop.xlane.xlu0 %848
      %v850 = vsel %vm474, %v792, 0.0
      %851 = vadd.xlane.f32.xlu0 %v850
      %v852 = vpop.xlane.xlu0 %851
      %v853 = vsel %vm474, %v793, 0.0
      %854 = vadd.xlane.f32.xlu0 %v853
      %v855 = vpop.xlane.xlu0 %854
      %v856 = vsel %vm474, %v794, 0.0
      %857 = vadd.xlane.f32.xlu0 %v856
      %v858 = vpop.xlane.xlu0 %857
      %v859 = vsel %vm474, %v795, 0.0
      %860 = vadd.xlane.f32.xlu0 %v859
      %v861 = vpop.xlane.xlu0 %860
      %v862 = vsel %vm474, %v796, 0.0
      %863 = vadd.xlane.f32.xlu0 %v862
      %v864 = vpop.xlane.xlu0 %863
      %v865 = vsel %vm474, %v797, 0.0
      %866 = vadd.xlane.f32.xlu0 %v865
      %v867 = vpop.xlane.xlu0 %866
      %v868 = vsel %vm474, %v798, 0.0
      %869 = vadd.xlane.f32.xlu0 %v868
      %v870 = vpop.xlane.xlu0 %869
      %v871 = vsel %vm474, %v799, 0.0
      %872 = vadd.xlane.f32.xlu0 %v871
      %v873 = vpop.xlane.xlu0 %872
      %v874 = vsel %vm474, %v800, 0.0
      %875 = vadd.xlane.f32.xlu0 %v874
      %v876 = vpop.xlane.xlu0 %875
      %v877 = vsel %vm474, %v801, 0.0
      %878 = vadd.xlane.f32.xlu0 %v877
      %v879 = vpop.xlane.xlu0 %878
      %v880 = vsel %vm474, %v802, 0.0
      %881 = vadd.xlane.f32.xlu0 %v880
      %v882 = vpop.xlane.xlu0 %881
      %v883 = vsel %vm474, %v803, 0.0
      %884 = vadd.xlane.f32.xlu0 %v883
      %v885 = vpop.xlane.xlu0 %884
      %v886 = vsel %vm474, %v804, 0.0
      %887 = vadd.xlane.f32.xlu0 %v886
      %v888 = vpop.xlane.xlu0 %887
      %v889 = vsel %vm474, %v805, 0.0
      %890 = vadd.xlane.f32.xlu0 %v889
      %v891 = vpop.xlane.xlu0 %890
      %v892 = vsel %vm474, %v806, 0.0
      %893 = vadd.xlane.f32.xlu0 %v892
      %v894 = vpop.xlane.xlu0 %893
      %v895 = vsel %vm474, %v807, 0.0
      %896 = vadd.xlane.f32.xlu0 %v895
      %v897 = vpop.xlane.xlu0 %896
      %v898 = vsel %vm474, %v808, 0.0
      %899 = vadd.xlane.f32.xlu0 %v898
      %v900 = vpop.xlane.xlu0 %899
      %v901 = vsel %vm474, %v809, 0.0
      %902 = vadd.xlane.f32.xlu0 %v901
      %v903 = vpop.xlane.xlu0 %902
      %v904 = vsel %vm474, %v810, 0.0
      %905 = vadd.xlane.f32.xlu0 %v904
      %v906 = vpop.xlane.xlu0 %905
      %v907 = vmul.f32 %v813, %v714
      %v908 = vmul.f32 %v816, %v714
      %v909 = vmul.f32 %v819, %v714
      %v910 = vmul.f32 %v822, %v714
      %v911 = vmul.f32 %v825, %v714
      %v912 = vmul.f32 %v828, %v714
      %v913 = vmul.f32 %v831, %v714
      %v914 = vmul.f32 %v834, %v714
      %v915 = vmul.f32 %v837, %v714
      %v916 = vmul.f32 %v840, %v714
      %v917 = vmul.f32 %v843, %v714
      %v918 = vmul.f32 %v846, %v714
      %v919 = vmul.f32 %v849, %v714
      %v920 = vmul.f32 %v852, %v714
      %v921 = vmul.f32 %v855, %v714
      %v922 = vmul.f32 %v858, %v714
      %v923 = vmul.f32 %v861, %v714
      %v924 = vmul.f32 %v864, %v714
      %v925 = vmul.f32 %v867, %v714
      %v926 = vmul.f32 %v870, %v714
      %v927 = vmul.f32 %v873, %v714
      %v928 = vmul.f32 %v876, %v714
      %v929 = vmul.f32 %v879, %v714
      %v930 = vmul.f32 %v882, %v714
      %v931 = vmul.f32 %v885, %v714
      %v932 = vmul.f32 %v888, %v714
      %v933 = vmul.f32 %v891, %v714
      %v934 = vmul.f32 %v894, %v714
      %v935 = vmul.f32 %v897, %v714
      %v936 = vmul.f32 %v900, %v714
      %v937 = vmul.f32 %v903, %v714
      %v938 = vmul.f32 %v906, %v714
      %v939 = vadd.f32 %v907, 1e-05
      %v940 = vadd.f32 %v908, 1e-05
      %v941 = vadd.f32 %v909, 1e-05
      %v942 = vadd.f32 %v910, 1e-05
      %v943 = vadd.f32 %v911, 1e-05
      %v944 = vadd.f32 %v912, 1e-05
      %v945 = vadd.f32 %v913, 1e-05
      %v946 = vadd.f32 %v914, 1e-05
      %v947 = vadd.f32 %v915, 1e-05
      %v948 = vadd.f32 %v916, 1e-05
      %v949 = vadd.f32 %v917, 1e-05
      %v950 = vadd.f32 %v918, 1e-05
      %v951 = vadd.f32 %v919, 1e-05
      %v952 = vadd.f32 %v920, 1e-05
      %v953 = vadd.f32 %v921, 1e-05
      %v954 = vadd.f32 %v922, 1e-05
      %v955 = vadd.f32 %v923, 1e-05
      %v956 = vadd.f32 %v924, 1e-05
      %v957 = vadd.f32 %v925, 1e-05
      %v958 = vadd.f32 %v926, 1e-05
      %v959 = vadd.f32 %v927, 1e-05
      %v960 = vadd.f32 %v928, 1e-05
      %v961 = vadd.f32 %v929, 1e-05
      %v962 = vadd.f32 %v930, 1e-05
      %v963 = vadd.f32 %v931, 1e-05
      %v964 = vadd.f32 %v932, 1e-05
      %v965 = vadd.f32 %v933, 1e-05
      %v966 = vadd.f32 %v934, 1e-05
      %v967 = vadd.f32 %v935, 1e-05
      %v968 = vadd.f32 %v936, 1e-05
      %v969 = vadd.f32 %v937, 1e-05
      %v970 = vadd.f32 %v938, 1e-05
      %v971 = vrsqrt.pop %v939
      %v972 = vmul.f32 %v971, %v939
      %v973 = vmul.f32 %v972, %v971
      %v974 = vmul.f32 0.5, %v973
      %v975 = vsub.f32 1.5, %v974
      %v976 = vmul.f32 %v971, %v975
      %vm977 = vweird.f32 %v939
      %vm978 = vweird.f32 %v971
      %vm979 = vmor %vm977, %vm978
      %v980 = vsel %vm979, %v971, %v976
      %v981 = vrsqrt.pop %v940
      %v982 = vmul.f32 %v981, %v940
      %v983 = vmul.f32 %v982, %v981
      %v984 = vmul.f32 0.5, %v983
      %v985 = vsub.f32 1.5, %v984
      %v986 = vmul.f32 %v981, %v985
      %vm987 = vweird.f32 %v940
      %vm988 = vweird.f32 %v981
      %vm989 = vmor %vm987, %vm988
      %v990 = vsel %vm989, %v981, %v986
      %v991 = vrsqrt.pop %v941
      %v992 = vmul.f32 %v991, %v941
      %v993 = vmul.f32 %v992, %v991
      %v994 = vmul.f32 0.5, %v993
      %v995 = vsub.f32 1.5, %v994
      %v996 = vmul.f32 %v991, %v995
      %vm997 = vweird.f32 %v941
      %vm998 = vweird.f32 %v991
      %vm999 = vmor %vm997, %vm998
      %v1000 = vsel %vm999, %v991, %v996
      %v1001 = vrsqrt.pop %v942
      %v1002 = vmul.f32 %v1001, %v942
      %v1003 = vmul.f32 %v1002, %v1001
      %v1004 = vmul.f32 0.5, %v1003
      %v1005 = vsub.f32 1.5, %v1004
      %v1006 = vmul.f32 %v1001, %v1005
      %vm1007 = vweird.f32 %v942
      %vm1008 = vweird.f32 %v1001
      %vm1009 = vmor %vm1007, %vm1008
      %v1010 = vsel %vm1009, %v1001, %v1006
      %v1011 = vrsqrt.pop %v943
      %v1012 = vmul.f32 %v1011, %v943
      %v1013 = vmul.f32 %v1012, %v1011
      %v1014 = vmul.f32 0.5, %v1013
      %v1015 = vsub.f32 1.5, %v1014
      %v1016 = vmul.f32 %v1011, %v1015
      %vm1017 = vweird.f32 %v943
      %vm1018 = vweird.f32 %v1011
      %vm1019 = vmor %vm1017, %vm1018
      %v1020 = vsel %vm1019, %v1011, %v1016
      %v1021 = vrsqrt.pop %v944
      %v1022 = vmul.f32 %v1021, %v944
      %v1023 = vmul.f32 %v1022, %v1021
      %v1024 = vmul.f32 0.5, %v1023
      %v1025 = vsub.f32 1.5, %v1024
      %v1026 = vmul.f32 %v1021, %v1025
      %vm1027 = vweird.f32 %v944
      %vm1028 = vweird.f32 %v1021
      %vm1029 = vmor %vm1027, %vm1028
      %v1030 = vsel %vm1029, %v1021, %v1026
      %v1031 = vrsqrt.pop %v945
      %v1032 = vmul.f32 %v1031, %v945
      %v1033 = vmul.f32 %v1032, %v1031
      %v1034 = vmul.f32 0.5, %v1033
      %v1035 = vsub.f32 1.5, %v1034
      %v1036 = vmul.f32 %v1031, %v1035
      %vm1037 = vweird.f32 %v945
      %vm1038 = vweird.f32 %v1031
      %vm1039 = vmor %vm1037, %vm1038
      %v1040 = vsel %vm1039, %v1031, %v1036
      %v1041 = vrsqrt.pop %v946
      %v1042 = vmul.f32 %v1041, %v946
      %v1043 = vmul.f32 %v1042, %v1041
      %v1044 = vmul.f32 0.5, %v1043
      %v1045 = vsub.f32 1.5, %v1044
      %v1046 = vmul.f32 %v1041, %v1045
      %vm1047 = vweird.f32 %v946
      %vm1048 = vweird.f32 %v1041
      %vm1049 = vmor %vm1047, %vm1048
      %v1050 = vsel %vm1049, %v1041, %v1046
      %v1051 = vrsqrt.pop %v947
      %v1052 = vmul.f32 %v1051, %v947
      %v1053 = vmul.f32 %v1052, %v1051
      %v1054 = vmul.f32 0.5, %v1053
      %v1055 = vsub.f32 1.5, %v1054
      %v1056 = vmul.f32 %v1051, %v1055
      %vm1057 = vweird.f32 %v947
      %vm1058 = vweird.f32 %v1051
      %vm1059 = vmor %vm1057, %vm1058
      %v1060 = vsel %vm1059, %v1051, %v1056
      %v1061 = vrsqrt.pop %v948
      %v1062 = vmul.f32 %v1061, %v948
      %v1063 = vmul.f32 %v1062, %v1061
      %v1064 = vmul.f32 0.5, %v1063
      %v1065 = vsub.f32 1.5, %v1064
      %v1066 = vmul.f32 %v1061, %v1065
      %vm1067 = vweird.f32 %v948
      %vm1068 = vweird.f32 %v1061
      %vm1069 = vmor %vm1067, %vm1068
      %v1070 = vsel %vm1069, %v1061, %v1066
      %v1071 = vrsqrt.pop %v949
      %v1072 = vmul.f32 %v1071, %v949
      %v1073 = vmul.f32 %v1072, %v1071
      %v1074 = vmul.f32 0.5, %v1073
      %v1075 = vsub.f32 1.5, %v1074
      %v1076 = vmul.f32 %v1071, %v1075
      %vm1077 = vweird.f32 %v949
      %vm1078 = vweird.f32 %v1071
      %vm1079 = vmor %vm1077, %vm1078
      %v1080 = vsel %vm1079, %v1071, %v1076
      %v1081 = vrsqrt.pop %v950
      %v1082 = vmul.f32 %v1081, %v950
      %v1083 = vmul.f32 %v1082, %v1081
      %v1084 = vmul.f32 0.5, %v1083
      %v1085 = vsub.f32 1.5, %v1084
      %v1086 = vmul.f32 %v1081, %v1085
      %vm1087 = vweird.f32 %v950
      %vm1088 = vweird.f32 %v1081
      %vm1089 = vmor %vm1087, %vm1088
      %v1090 = vsel %vm1089, %v1081, %v1086
      %v1091 = vrsqrt.pop %v951
      %v1092 = vmul.f32 %v1091, %v951
      %v1093 = vmul.f32 %v1092, %v1091
      %v1094 = vmul.f32 0.5, %v1093
      %v1095 = vsub.f32 1.5, %v1094
      %v1096 = vmul.f32 %v1091, %v1095
      %vm1097 = vweird.f32 %v951
      %vm1098 = vweird.f32 %v1091
      %vm1099 = vmor %vm1097, %vm1098
      %v1100 = vsel %vm1099, %v1091, %v1096
      %v1101 = vrsqrt.pop %v952
      %v1102 = vmul.f32 %v1101, %v952
      %v1103 = vmul.f32 %v1102, %v1101
      %v1104 = vmul.f32 0.5, %v1103
      %v1105 = vsub.f32 1.5, %v1104
      %v1106 = vmul.f32 %v1101, %v1105
      %vm1107 = vweird.f32 %v952
      %vm1108 = vweird.f32 %v1101
      %vm1109 = vmor %vm1107, %vm1108
      %v1110 = vsel %vm1109, %v1101, %v1106
      %v1111 = vrsqrt.pop %v953
      %v1112 = vmul.f32 %v1111, %v953
      %v1113 = vmul.f32 %v1112, %v1111
      %v1114 = vmul.f32 0.5, %v1113
      %v1115 = vsub.f32 1.5, %v1114
      %v1116 = vmul.f32 %v1111, %v1115
      %vm1117 = vweird.f32 %v953
      %vm1118 = vweird.f32 %v1111
      %vm1119 = vmor %vm1117, %vm1118
      %v1120 = vsel %vm1119, %v1111, %v1116
      %v1121 = vrsqrt.pop %v954
      %v1122 = vmul.f32 %v1121, %v954
      %v1123 = vmul.f32 %v1122, %v1121
      %v1124 = vmul.f32 0.5, %v1123
      %v1125 = vsub.f32 1.5, %v1124
      %v1126 = vmul.f32 %v1121, %v1125
      %vm1127 = vweird.f32 %v954
      %vm1128 = vweird.f32 %v1121
      %vm1129 = vmor %vm1127, %vm1128
      %v1130 = vsel %vm1129, %v1121, %v1126
      %v1131 = vrsqrt.pop %v955
      %v1132 = vmul.f32 %v1131, %v955
      %v1133 = vmul.f32 %v1132, %v1131
      %v1134 = vmul.f32 0.5, %v1133
      %v1135 = vsub.f32 1.5, %v1134
      %v1136 = vmul.f32 %v1131, %v1135
      %vm1137 = vweird.f32 %v955
      %vm1138 = vweird.f32 %v1131
      %vm1139 = vmor %vm1137, %vm1138
      %v1140 = vsel %vm1139, %v1131, %v1136
      %v1141 = vrsqrt.pop %v956
      %v1142 = vmul.f32 %v1141, %v956
      %v1143 = vmul.f32 %v1142, %v1141
      %v1144 = vmul.f32 0.5, %v1143
      %v1145 = vsub.f32 1.5, %v1144
      %v1146 = vmul.f32 %v1141, %v1145
      %vm1147 = vweird.f32 %v956
      %vm1148 = vweird.f32 %v1141
      %vm1149 = vmor %vm1147, %vm1148
      %v1150 = vsel %vm1149, %v1141, %v1146
      %v1151 = vrsqrt.pop %v957
      %v1152 = vmul.f32 %v1151, %v957
      %v1153 = vmul.f32 %v1152, %v1151
      %v1154 = vmul.f32 0.5, %v1153
      %v1155 = vsub.f32 1.5, %v1154
      %v1156 = vmul.f32 %v1151, %v1155
      %vm1157 = vweird.f32 %v957
      %vm1158 = vweird.f32 %v1151
      %vm1159 = vmor %vm1157, %vm1158
      %v1160 = vsel %vm1159, %v1151, %v1156
      %v1161 = vrsqrt.pop %v958
      %v1162 = vmul.f32 %v1161, %v958
      %v1163 = vmul.f32 %v1162, %v1161
      %v1164 = vmul.f32 0.5, %v1163
      %v1165 = vsub.f32 1.5, %v1164
      %v1166 = vmul.f32 %v1161, %v1165
      %vm1167 = vweird.f32 %v958
      %vm1168 = vweird.f32 %v1161
      %vm1169 = vmor %vm1167, %vm1168
      %v1170 = vsel %vm1169, %v1161, %v1166
      %v1171 = vrsqrt.pop %v959
      %v1172 = vmul.f32 %v1171, %v959
      %v1173 = vmul.f32 %v1172, %v1171
      %v1174 = vmul.f32 0.5, %v1173
      %v1175 = vsub.f32 1.5, %v1174
      %v1176 = vmul.f32 %v1171, %v1175
      %vm1177 = vweird.f32 %v959
      %vm1178 = vweird.f32 %v1171
      %vm1179 = vmor %vm1177, %vm1178
      %v1180 = vsel %vm1179, %v1171, %v1176
      %v1181 = vrsqrt.pop %v960
      %v1182 = vmul.f32 %v1181, %v960
      %v1183 = vmul.f32 %v1182, %v1181
      %v1184 = vmul.f32 0.5, %v1183
      %v1185 = vsub.f32 1.5, %v1184
      %v1186 = vmul.f32 %v1181, %v1185
      %vm1187 = vweird.f32 %v960
      %vm1188 = vweird.f32 %v1181
      %vm1189 = vmor %vm1187, %vm1188
      %v1190 = vsel %vm1189, %v1181, %v1186
      %v1191 = vrsqrt.pop %v961
      %v1192 = vmul.f32 %v1191, %v961
      %v1193 = vmul.f32 %v1192, %v1191
      %v1194 = vmul.f32 0.5, %v1193
      %v1195 = vsub.f32 1.5, %v1194
      %v1196 = vmul.f32 %v1191, %v1195
      %vm1197 = vweird.f32 %v961
      %vm1198 = vweird.f32 %v1191
      %vm1199 = vmor %vm1197, %vm1198
      %v1200 = vsel %vm1199, %v1191, %v1196
      %v1201 = vrsqrt.pop %v962
      %v1202 = vmul.f32 %v1201, %v962
      %v1203 = vmul.f32 %v1202, %v1201
      %v1204 = vmul.f32 0.5, %v1203
      %v1205 = vsub.f32 1.5, %v1204
      %v1206 = vmul.f32 %v1201, %v1205
      %vm1207 = vweird.f32 %v962
      %vm1208 = vweird.f32 %v1201
      %vm1209 = vmor %vm1207, %vm1208
      %v1210 = vsel %vm1209, %v1201, %v1206
      %v1211 = vrsqrt.pop %v963
      %v1212 = vmul.f32 %v1211, %v963
      %v1213 = vmul.f32 %v1212, %v1211
      %v1214 = vmul.f32 0.5, %v1213
      %v1215 = vsub.f32 1.5, %v1214
      %v1216 = vmul.f32 %v1211, %v1215
      %vm1217 = vweird.f32 %v963
      %vm1218 = vweird.f32 %v1211
      %vm1219 = vmor %vm1217, %vm1218
      %v1220 = vsel %vm1219, %v1211, %v1216
      %v1221 = vrsqrt.pop %v964
      %v1222 = vmul.f32 %v1221, %v964
      %v1223 = vmul.f32 %v1222, %v1221
      %v1224 = vmul.f32 0.5, %v1223
      %v1225 = vsub.f32 1.5, %v1224
      %v1226 = vmul.f32 %v1221, %v1225
      %vm1227 = vweird.f32 %v964
      %vm1228 = vweird.f32 %v1221
      %vm1229 = vmor %vm1227, %vm1228
      %v1230 = vsel %vm1229, %v1221, %v1226
      %v1231 = vrsqrt.pop %v965
      %v1232 = vmul.f32 %v1231, %v965
      %v1233 = vmul.f32 %v1232, %v1231
      %v1234 = vmul.f32 0.5, %v1233
      %v1235 = vsub.f32 1.5, %v1234
      %v1236 = vmul.f32 %v1231, %v1235
      %vm1237 = vweird.f32 %v965
      %vm1238 = vweird.f32 %v1231
      %vm1239 = vmor %vm1237, %vm1238
      %v1240 = vsel %vm1239, %v1231, %v1236
      %v1241 = vrsqrt.pop %v966
      %v1242 = vmul.f32 %v1241, %v966
      %v1243 = vmul.f32 %v1242, %v1241
      %v1244 = vmul.f32 0.5, %v1243
      %v1245 = vsub.f32 1.5, %v1244
      %v1246 = vmul.f32 %v1241, %v1245
      %vm1247 = vweird.f32 %v966
      %vm1248 = vweird.f32 %v1241
      %vm1249 = vmor %vm1247, %vm1248
      %v1250 = vsel %vm1249, %v1241, %v1246
      %v1251 = vrsqrt.pop %v967
      %v1252 = vmul.f32 %v1251, %v967
      %v1253 = vmul.f32 %v1252, %v1251
      %v1254 = vmul.f32 0.5, %v1253
      %v1255 = vsub.f32 1.5, %v1254
      %v1256 = vmul.f32 %v1251, %v1255
      %vm1257 = vweird.f32 %v967
      %vm1258 = vweird.f32 %v1251
      %vm1259 = vmor %vm1257, %vm1258
      %v1260 = vsel %vm1259, %v1251, %v1256
      %v1261 = vrsqrt.pop %v968
      %v1262 = vmul.f32 %v1261, %v968
      %v1263 = vmul.f32 %v1262, %v1261
      %v1264 = vmul.f32 0.5, %v1263
      %v1265 = vsub.f32 1.5, %v1264
      %v1266 = vmul.f32 %v1261, %v1265
      %vm1267 = vweird.f32 %v968
      %vm1268 = vweird.f32 %v1261
      %vm1269 = vmor %vm1267, %vm1268
      %v1270 = vsel %vm1269, %v1261, %v1266
      %v1271 = vrsqrt.pop %v969
      %v1272 = vmul.f32 %v1271, %v969
      %v1273 = vmul.f32 %v1272, %v1271
      %v1274 = vmul.f32 0.5, %v1273
      %v1275 = vsub.f32 1.5, %v1274
      %v1276 = vmul.f32 %v1271, %v1275
      %vm1277 = vweird.f32 %v969
      %vm1278 = vweird.f32 %v1271
      %vm1279 = vmor %vm1277, %vm1278
      %v1280 = vsel %vm1279, %v1271, %v1276
      %v1281 = vrsqrt.pop %v970
      %v1282 = vmul.f32 %v1281, %v970
      %v1283 = vmul.f32 %v1282, %v1281
      %v1284 = vmul.f32 0.5, %v1283
      %v1285 = vsub.f32 1.5, %v1284
      %v1286 = vmul.f32 %v1281, %v1285
      %vm1287 = vweird.f32 %v970
      %vm1288 = vweird.f32 %v1281
      %vm1289 = vmor %vm1287, %vm1288
      %v1290 = vsel %vm1289, %v1281, %v1286
      %v1291 = vmul.f32 %v747, %v980
      %v1292 = vmul.f32 %v748, %v990
      %v1293 = vmul.f32 %v749, %v1000
      %v1294 = vmul.f32 %v750, %v1010
      %v1295 = vmul.f32 %v751, %v1020
      %v1296 = vmul.f32 %v752, %v1030
      %v1297 = vmul.f32 %v753, %v1040
      %v1298 = vmul.f32 %v754, %v1050
      %v1299 = vmul.f32 %v755, %v1060
      %v1300 = vmul.f32 %v756, %v1070
      %v1301 = vmul.f32 %v757, %v1080
      %v1302 = vmul.f32 %v758, %v1090
      %v1303 = vmul.f32 %v759, %v1100
      %v1304 = vmul.f32 %v760, %v1110
      %v1305 = vmul.f32 %v761, %v1120
      %v1306 = vmul.f32 %v762, %v1130
      %v1307 = vmul.f32 %v763, %v1140
      %v1308 = vmul.f32 %v764, %v1150
      %v1309 = vmul.f32 %v765, %v1160
      %v1310 = vmul.f32 %v766, %v1170
      %v1311 = vmul.f32 %v767, %v1180
      %v1312 = vmul.f32 %v768, %v1190
      %v1313 = vmul.f32 %v769, %v1200
      %v1314 = vmul.f32 %v770, %v1210
      %v1315 = vmul.f32 %v771, %v1220
      %v1316 = vmul.f32 %v772, %v1230
      %v1317 = vmul.f32 %v773, %v1240
      %v1318 = vmul.f32 %v774, %v1250
      %v1319 = vmul.f32 %v775, %v1260
      %v1320 = vmul.f32 %v776, %v1270
      %v1321 = vmul.f32 %v777, %v1280
      %v1322 = vmul.f32 %v778, %v1290
      %v1323 = vld [vmem:[%s4] sm:$0x1]
      %v1325 = vperm.slane %v1323, 0
      %v1327 = vmul.f32 %v1291, %v1325
      %v1328 = vmul.f32 %v1292, %v1325
      %v1329 = vmul.f32 %v1293, %v1325
      %v1330 = vmul.f32 %v1294, %v1325
      %v1331 = vmul.f32 %v1295, %v1325
      %v1332 = vmul.f32 %v1296, %v1325
      %v1333 = vmul.f32 %v1297, %v1325
      %v1334 = vmul.f32 %v1298, %v1325
      %v1335 = vmul.f32 %v1299, %v1325
      %v1336 = vmul.f32 %v1300, %v1325
      %v1337 = vmul.f32 %v1301, %v1325
      %v1338 = vmul.f32 %v1302, %v1325
      %v1339 = vmul.f32 %v1303, %v1325
      %v1340 = vmul.f32 %v1304, %v1325
      %v1341 = vmul.f32 %v1305, %v1325
      %v1342 = vmul.f32 %v1306, %v1325
      %v1343 = vmul.f32 %v1307, %v1325
      %v1344 = vmul.f32 %v1308, %v1325
      %v1345 = vmul.f32 %v1309, %v1325
      %v1346 = vmul.f32 %v1310, %v1325
      %v1347 = vmul.f32 %v1311, %v1325
      %v1348 = vmul.f32 %v1312, %v1325
      %v1349 = vmul.f32 %v1313, %v1325
      %v1350 = vmul.f32 %v1314, %v1325
      %v1351 = vmul.f32 %v1315, %v1325
      %v1352 = vmul.f32 %v1316, %v1325
      %v1353 = vmul.f32 %v1317, %v1325
      %v1354 = vmul.f32 %v1318, %v1325
      %v1355 = vmul.f32 %v1319, %v1325
      %v1356 = vmul.f32 %v1320, %v1325
      %v1357 = vmul.f32 %v1321, %v1325
      %v1358 = vmul.f32 %v1322, %v1325
      %v1359 = vld [vmem:[%s5] sm:$0x1]
      %v1361 = vperm.slane %v1359, 0
      %v1363 = vadd.f32 %v1327, %v1361
      %v1364 = vadd.f32 %v1328, %v1361
      %v1365 = vadd.f32 %v1329, %v1361
      %v1366 = vadd.f32 %v1330, %v1361
      %v1367 = vadd.f32 %v1331, %v1361
      %v1368 = vadd.f32 %v1332, %v1361
      %v1369 = vadd.f32 %v1333, %v1361
      %v1370 = vadd.f32 %v1334, %v1361
      %v1371 = vadd.f32 %v1335, %v1361
      %v1372 = vadd.f32 %v1336, %v1361
      %v1373 = vadd.f32 %v1337, %v1361
      %v1374 = vadd.f32 %v1338, %v1361
      %v1375 = vadd.f32 %v1339, %v1361
      %v1376 = vadd.f32 %v1340, %v1361
      %v1377 = vadd.f32 %v1341, %v1361
      %v1378 = vadd.f32 %v1342, %v1361
      %v1379 = vadd.f32 %v1343, %v1361
      %v1380 = vadd.f32 %v1344, %v1361
      %v1381 = vadd.f32 %v1345, %v1361
      %v1382 = vadd.f32 %v1346, %v1361
      %v1383 = vadd.f32 %v1347, %v1361
      %v1384 = vadd.f32 %v1348, %v1361
      %v1385 = vadd.f32 %v1349, %v1361
      %v1386 = vadd.f32 %v1350, %v1361
      %v1387 = vadd.f32 %v1351, %v1361
      %v1388 = vadd.f32 %v1352, %v1361
      %v1389 = vadd.f32 %v1353, %v1361
      %v1390 = vadd.f32 %v1354, %v1361
      %v1391 = vadd.f32 %v1355, %v1361
      %v1392 = vadd.f32 %v1356, %v1361
      %v1393 = vadd.f32 %v1357, %v1361
      %v1394 = vadd.f32 %v1358, %v1361
      %v1395 = vld [vmem:[%s329] sm:$0xf]
      %v1396 = vld [vmem:[%s329 + $0x4] sm:$0xf]
      %v1397 = vld [vmem:[%s329 + $0x8] sm:$0xf]
      %v1398 = vld [vmem:[%s329 + $0xc] sm:$0xf]
      %v1399 = vld [vmem:[%s329 + $0x10] sm:$0xf]
      %v1400 = vld [vmem:[%s329 + $0x14] sm:$0xf]
      %v1401 = vld [vmem:[%s329 + $0x18] sm:$0xf]
      %v1402 = vld [vmem:[%s329 + $0x1c] sm:$0xf]
      %v1403 = vld [vmem:[%s329 + $0x20] sm:$0xf]
      %v1404 = vld [vmem:[%s329 + $0x24] sm:$0xf]
      %v1405 = vld [vmem:[%s329 + $0x28] sm:$0xf]
      %v1406 = vld [vmem:[%s329 + $0x2c] sm:$0xf]
      %v1407 = vld [vmem:[%s329 + $0x30] sm:$0xf]
      %v1408 = vld [vmem:[%s329 + $0x34] sm:$0xf]
      %v1409 = vld [vmem:[%s329 + $0x38] sm:$0xf]
      %v1410 = vld [vmem:[%s329 + $0x3c] sm:$0xf]
      %v1411 = vld [vmem:[%s329 + $0x40] sm:$0xf]
      %v1412 = vld [vmem:[%s329 + $0x44] sm:$0xf]
      %v1413 = vld [vmem:[%s329 + $0x48] sm:$0xf]
      %v1414 = vld [vmem:[%s329 + $0x4c] sm:$0xf]
      %v1415 = vld [vmem:[%s329 + $0x50] sm:$0xf]
      %v1416 = vld [vmem:[%s329 + $0x54] sm:$0xf]
      %v1417 = vld [vmem:[%s329 + $0x58] sm:$0xf]
      %v1418 = vld [vmem:[%s329 + $0x5c] sm:$0xf]
      %v1419 = vld [vmem:[%s329 + $0x60] sm:$0xf]
      %v1420 = vld [vmem:[%s329 + $0x64] sm:$0xf]
      %v1421 = vld [vmem:[%s329 + $0x68] sm:$0xf]
      %v1422 = vld [vmem:[%s329 + $0x6c] sm:$0xf]
      %v1423 = vld [vmem:[%s329 + $0x70] sm:$0xf]
      %v1424 = vld [vmem:[%s329 + $0x74] sm:$0xf]
      %v1425 = vld [vmem:[%s329 + $0x78] sm:$0xf]
      %v1426 = vld [vmem:[%s329 + $0x7c] sm:$0xf]
      %v1427 = vunpack.c.l.bf16 %v1395
      %v1428 = vunpack.c.l.bf16 %v1396
      %v1429 = vunpack.c.l.bf16 %v1397
      %v1430 = vunpack.c.l.bf16 %v1398
      %v1431 = vunpack.c.l.bf16 %v1399
      %v1432 = vunpack.c.l.bf16 %v1400
      %v1433 = vunpack.c.l.bf16 %v1401
      %v1434 = vunpack.c.l.bf16 %v1402
      %v1435 = vunpack.c.l.bf16 %v1403
      %v1436 = vunpack.c.l.bf16 %v1404
      %v1437 = vunpack.c.l.bf16 %v1405
      %v1438 = vunpack.c.l.bf16 %v1406
      %v1439 = vunpack.c.l.bf16 %v1407
      %v1440 = vunpack.c.l.bf16 %v1408
      %v1441 = vunpack.c.l.bf16 %v1409
      %v1442 = vunpack.c.l.bf16 %v1410
      %v1443 = vunpack.c.l.bf16 %v1411
      %v1444 = vunpack.c.l.bf16 %v1412
      %v1445 = vunpack.c.l.bf16 %v1413
      %v1446 = vunpack.c.l.bf16 %v1414
      %v1447 = vunpack.c.l.bf16 %v1415
      %v1448 = vunpack.c.l.bf16 %v1416
      %v1449 = vunpack.c.l.bf16 %v1417
      %v1450 = vunpack.c.l.bf16 %v1418
      %v1451 = vunpack.c.l.bf16 %v1419
      %v1452 = vunpack.c.l.bf16 %v1420
      %v1453 = vunpack.c.l.bf16 %v1421
      %v1454 = vunpack.c.l.bf16 %v1422
      %v1455 = vunpack.c.l.bf16 %v1423
      %v1456 = vunpack.c.l.bf16 %v1424
      %v1457 = vunpack.c.l.bf16 %v1425
      %v1458 = vunpack.c.l.bf16 %v1426
      %v1459 = vadd.f32 %v1363, %v1427
      %v1460 = vadd.f32 %v1364, %v1428
      %v1461 = vadd.f32 %v1365, %v1429
      %v1462 = vadd.f32 %v1366, %v1430
      %v1463 = vadd.f32 %v1367, %v1431
      %v1464 = vadd.f32 %v1368, %v1432
      %v1465 = vadd.f32 %v1369, %v1433
      %v1466 = vadd.f32 %v1370, %v1434
      %v1467 = vadd.f32 %v1371, %v1435
      %v1468 = vadd.f32 %v1372, %v1436
      %v1469 = vadd.f32 %v1373, %v1437
      %v1470 = vadd.f32 %v1374, %v1438
      %v1471 = vadd.f32 %v1375, %v1439
      %v1472 = vadd.f32 %v1376, %v1440
      %v1473 = vadd.f32 %v1377, %v1441
      %v1474 = vadd.f32 %v1378, %v1442
      %v1475 = vadd.f32 %v1379, %v1443
      %v1476 = vadd.f32 %v1380, %v1444
      %v1477 = vadd.f32 %v1381, %v1445
      %v1478 = vadd.f32 %v1382, %v1446
      %v1479 = vadd.f32 %v1383, %v1447
      %v1480 = vadd.f32 %v1384, %v1448
      %v1481 = vadd.f32 %v1385, %v1449
      %v1482 = vadd.f32 %v1386, %v1450
      %v1483 = vadd.f32 %v1387, %v1451
      %v1484 = vadd.f32 %v1388, %v1452
      %v1485 = vadd.f32 %v1389, %v1453
      %v1486 = vadd.f32 %v1390, %v1454
      %v1487 = vadd.f32 %v1391, %v1455
      %v1488 = vadd.f32 %v1392, %v1456
      %v1489 = vadd.f32 %v1393, %v1457
      %v1490 = vadd.f32 %v1394, %v1458
      %v1491 = vpack.c.bf16 %v1459, %v1459
      %v1492 = vpack.c.bf16 %v1460, %v1460
      %v1493 = vpack.c.bf16 %v1461, %v1461
      %v1494 = vpack.c.bf16 %v1462, %v1462
      %v1495 = vpack.c.bf16 %v1463, %v1463
      %v1496 = vpack.c.bf16 %v1464, %v1464
      %v1497 = vpack.c.bf16 %v1465, %v1465
      %v1498 = vpack.c.bf16 %v1466, %v1466
      %v1499 = vpack.c.bf16 %v1467, %v1467
      %v1500 = vpack.c.bf16 %v1468, %v1468
      %v1501 = vpack.c.bf16 %v1469, %v1469
      %v1502 = vpack.c.bf16 %v1470, %v1470
      %v1503 = vpack.c.bf16 %v1471, %v1471
      %v1504 = vpack.c.bf16 %v1472, %v1472
      %v1505 = vpack.c.bf16 %v1473, %v1473
      %v1506 = vpack.c.bf16 %v1474, %v1474
      %v1507 = vpack.c.bf16 %v1475, %v1475
      %v1508 = vpack.c.bf16 %v1476, %v1476
      %v1509 = vpack.c.bf16 %v1477, %v1477
      %v1510 = vpack.c.bf16 %v1478, %v1478
      %v1511 = vpack.c.bf16 %v1479, %v1479
      %v1512 = vpack.c.bf16 %v1480, %v1480
      %v1513 = vpack.c.bf16 %v1481, %v1481
      %v1514 = vpack.c.bf16 %v1482, %v1482
      %v1515 = vpack.c.bf16 %v1483, %v1483
      %v1516 = vpack.c.bf16 %v1484, %v1484
      %v1517 = vpack.c.bf16 %v1485, %v1485
      %v1518 = vpack.c.bf16 %v1486, %v1486
      %v1519 = vpack.c.bf16 %v1487, %v1487
      %v1520 = vpack.c.bf16 %v1488, %v1488
      %v1521 = vpack.c.bf16 %v1489, %v1489
      %v1522 = vpack.c.bf16 %v1490, %v1490
      %vm1523 = vcmask 257024
      %1524 = vst.msk [vmem:[%s339] sm:$0xf] %vm1523, %v1491
      %1525 = vst.msk [vmem:[%s339 + $0x4] sm:$0xf] %vm1523, %v1492
      %1526 = vst.msk [vmem:[%s339 + $0x8] sm:$0xf] %vm1523, %v1493
      %1527 = vst.msk [vmem:[%s339 + $0xc] sm:$0xf] %vm1523, %v1494
      %1528 = vst.msk [vmem:[%s339 + $0x10] sm:$0xf] %vm1523, %v1495
      %1529 = vst.msk [vmem:[%s339 + $0x14] sm:$0xf] %vm1523, %v1496
      %1530 = vst.msk [vmem:[%s339 + $0x18] sm:$0xf] %vm1523, %v1497
      %1531 = vst.msk [vmem:[%s339 + $0x1c] sm:$0xf] %vm1523, %v1498
      %1532 = vst.msk [vmem:[%s339 + $0x20] sm:$0xf] %vm1523, %v1499
      %1533 = vst.msk [vmem:[%s339 + $0x24] sm:$0xf] %vm1523, %v1500
      %1534 = vst.msk [vmem:[%s339 + $0x28] sm:$0xf] %vm1523, %v1501
      %1535 = vst.msk [vmem:[%s339 + $0x2c] sm:$0xf] %vm1523, %v1502
      %1536 = vst.msk [vmem:[%s339 + $0x30] sm:$0xf] %vm1523, %v1503
      %1537 = vst.msk [vmem:[%s339 + $0x34] sm:$0xf] %vm1523, %v1504
      %1538 = vst.msk [vmem:[%s339 + $0x38] sm:$0xf] %vm1523, %v1505
      %1539 = vst.msk [vmem:[%s339 + $0x3c] sm:$0xf] %vm1523, %v1506
      %1540 = vst.msk [vmem:[%s339 + $0x40] sm:$0xf] %vm1523, %v1507
      %1541 = vst.msk [vmem:[%s339 + $0x44] sm:$0xf] %vm1523, %v1508
      %1542 = vst.msk [vmem:[%s339 + $0x48] sm:$0xf] %vm1523, %v1509
      %1543 = vst.msk [vmem:[%s339 + $0x4c] sm:$0xf] %vm1523, %v1510
      %1544 = vst.msk [vmem:[%s339 + $0x50] sm:$0xf] %vm1523, %v1511
      %1545 = vst.msk [vmem:[%s339 + $0x54] sm:$0xf] %vm1523, %v1512
      %1546 = vst.msk [vmem:[%s339 + $0x58] sm:$0xf] %vm1523, %v1513
      %1547 = vst.msk [vmem:[%s339 + $0x5c] sm:$0xf] %vm1523, %v1514
      %1548 = vst.msk [vmem:[%s339 + $0x60] sm:$0xf] %vm1523, %v1515
      %1549 = vst.msk [vmem:[%s339 + $0x64] sm:$0xf] %vm1523, %v1516
      %1550 = vst.msk [vmem:[%s339 + $0x68] sm:$0xf] %vm1523, %v1517
      %1551 = vst.msk [vmem:[%s339 + $0x6c] sm:$0xf] %vm1523, %v1518
      %1552 = vst.msk [vmem:[%s339 + $0x70] sm:$0xf] %vm1523, %v1519
      %1553 = vst.msk [vmem:[%s339 + $0x74] sm:$0xf] %vm1523, %v1520
      %1554 = vst.msk [vmem:[%s339 + $0x78] sm:$0xf] %vm1523, %v1521
      %1555 = vst.msk [vmem:[%s339 + $0x7c] sm:$0xf] %vm1523, %v1522
      %s1556 = smul.u32 32, %s22
      %p1557 = scmp.lt.s32.totalorder %s21, 1
      %s1558 = scalar_select %p1557, %s21, 1
      %p1559 = scmp.lt.s32.totalorder %s1556, 31
      %s1560 = scalar_select %p1559, %s1556, 31
      %s1561 = smul.addr %s1558, 32
      %s1562 = sadd.s32 %s1560, %s1561
      %s1563 = smul.addr %s1562, 4
      %s1564 = scalar_lea.vmem %s6, %s1563
      // Predicated region
      $region45: #{ldp_block_forward.10} parent=43 // pred_check
        %p1565 = pneg %p194
      $region46: #{ldp_block_forward.10} parent=43 // pred_check_branch
        %1567 = sbr.rel (%p1565) target = $region48
      $region47: #{ldp_block_forward.10} parent=43 // pred_region
        %s1568 = smul.u32 32, %s22
      $region48: #{ldp_block_forward.10} parent=43 // pred_fallthru
        _
    $region44: #{ldp_block_forward.10} parent=5 // pred_fallthru
      _
    %p1569 = scmp.le.s32.totalorder 2, %s12
    // Predicated region
    $region49: #{ldp_block_forward.10} parent=5 // pred_check
      %p1570 = pneg %p1569
    $region50: #{ldp_block_forward.10} parent=5 // pred_check_branch
      %1572 = sbr.rel (%p1570) target = $region52
    $region51: #{ldp_block_forward.10} parent=5 // pred_region
      %s1573 = ssub.s32 %s12, 2
      // Predicated region
      $region53: #{ldp_block_forward.10} parent=51 // pred_check
        %p1574 = pneg %p200
      $region54: #{ldp_block_forward.10} parent=51 // pred_check_branch
        %1576 = sbr.rel (%p1574) target = $region56
      $region55: #{ldp_block_forward.10} parent=51 // pred_region
        %s1577 = smul.u32 32, %s24
        %p1578 = scmp.lt.s32.totalorder %s23, 1
        %s1579 = scalar_select %p1578, %s23, 1
        %p1580 = scmp.lt.s32.totalorder %s1577, 31
        %s1581 = scalar_select %p1580, %s1577, 31
        %s1582 = smul.addr %s1579, 32
        %s1583 = sadd.s32 %s1581, %s1582
        %s1584 = smul.addr %s1583, 4
        %s1585 = scalar_lea.vmem %s6, %s1584
      $region56: #{ldp_block_forward.10} parent=51 // pred_fallthru
        _
    $region52: #{ldp_block_forward.10} parent=5 // pred_fallthru
      _
  $region6: #{ldp_block_forward.10} parent=0 // loop_footer
    %s16 = sadd.s32 1, %s12
  $region7: #{ldp_block_forward.10} parent=0 // loop_footer_branch
    %11 = sbr.rel target = $region3
  $region8: #{ldp_block_forward.10} parent=0 // loop_exit
    _

// kernel: ldp_block_forward.13
$region0: #{ldp_block_forward.13}
  #allocation0 [shape = 'u32[]', space=smem, size = 0x4, offset = 0x4, fixed_abs, tag = 'smem constant byte address 0x4 - core index']
  #allocation1 [shape = 'u32[72,128]{1,0:T(1,128)}', space=vmem, size = 0x9000, scoped, tag = 'internal scratch']
  %s0 = inlined_call_operand.vmem [shape: bf16[2,64,32], index: 0, kind: input, shape index: {}]
  %s1 = inlined_call_operand.vmem [shape: f32[2,1,32], index: 1, kind: input, shape index: {}]
  %s2 = inlined_call_operand.vmem [shape: bf16[32,32], index: 2, kind: input, shape index: {}]
  %s3 = inlined_call_operand.vmem [shape: f32[1,32], index: 3, kind: input, shape index: {}]
  %s4 = inlined_call_operand.vmem [shape: f32[1,32], index: 4, kind: input, shape index: {}]
  %s5 = inlined_call_operand.vmem [shape: f32[2,64,32], index: 5, kind: output, shape index: {}]
  %s6 = sld [smem:[#allocation0]]
  $region53: #{ldp_block_forward.13} parent=0
    _
  %s8 = ssub.s32 1, %s6
  %s9 = scalar_select 0, %s8, %s6
  loop: start=0, step=1, limit=4
  $region2: #{ldp_block_forward.13} parent=0 // loop_pre_header
    _
  $region3: #{ldp_block_forward.13} parent=0 // loop_header
    %s11 = sphi 0, %s15
    %p12 = scmp.ge.s32.totalorder %s11, 4
    %s18 = sphi 0, %s30
    %s19 = sphi 0, %s26
    %s20 = sphi 0, %s18
    %s21 = sphi 0, %s19
    %s22 = sphi 0, %s20
    %s23 = sphi 0, %s21
    %s35 = sphi 0, %s37
    %s38 = sphi 0, %s35
    %s39 = sphi 0, %s38
    %s55 = sphi 0, %s39
    %s61 = sphi 0, %s63
    %s64 = sphi 0, %s61
    %s65 = sphi 0, %s64
    %s81 = sphi 0, %s65
    %s85 = sphi 0, %s85
    %s87 = sphi 0, %s85
    %s88 = sphi 0, %s87
    %s102 = sphi 0, %s88
    %s106 = sphi 0, %s106
    %s108 = sphi 0, %s106
    %s109 = sphi 0, %s108
    %s123 = sphi 0, %s109
    %s127 = sphi 0, %s127
    %s129 = sphi 0, %s127
    %s130 = sphi 0, %s129
    %s144 = sphi 0, %s130
    %s152 = sphi 0, %s154
    %s155 = sphi 0, %s152
    %s156 = sphi 0, %s155
    %s172 = sphi 0, %s156
  $region4: #{ldp_block_forward.13} parent=0 // loop_header_branch
    %14 = sbr.rel (%p12) target = $region8
  $region5: #{ldp_block_forward.13} parent=0 // loop_body
    %s16 = ssub.s32 %s11, 1
    %s17 = ssub.s32 %s11, 2
    %s24 = sadd.s32 1, %s19
    %p25 = scmp.ge.s32.totalorder %s24, 1
    %s26 = scalar_select %p25, 0, %s24
    %s27 = sadd.s32 1, %s18
    %s28 = scalar_select %p25, %s27, %s18
    %p29 = scmp.ge.s32.totalorder %s28, 2
    %s30 = scalar_select %p29, 0, %s28
    %s31 = ssub.s32 %s18, %s30
    %s32 = ssub.s32 %s19, %s26
    %s33 = sor.u32 %s31, %s32
    %p34 = scmp.eq.s32.totalorder %s33, 0
    %s36 = sadd.s32 %s35, 1
    %s37 = scalar_select %p34, %s35, %s36
    %p40 = pneg %p34
    %p41 = scmp.eq.s32.totalorder %s11, 1
    %p42 = por %p40, %p41
    %p43 = scmp.ne.s32.totalorder %s35, %s38
    %p44 = scmp.eq.s32.totalorder %s11, 0
    %p45 = por %p43, %p44
    %p46 = scmp.ne.s32.totalorder %s35, %s38
    %p47 = scmp.eq.s32.totalorder %s16, 1
    %p48 = por %p46, %p47
    %p49 = scmp.ne.s32.totalorder %s38, %s39
    %p50 = scmp.eq.s32.totalorder %s16, 0
    %p51 = por %p49, %p50
    %p52 = scmp.ne.s32.totalorder %s38, %s39
    %p53 = scmp.eq.s32.totalorder %s17, 1
    %p54 = por %p52, %p53
    %p56 = scmp.ne.s32.totalorder %s39, %s55
    %p57 = scmp.eq.s32.totalorder %s17, 0
    %p58 = por %p56, %p57
    %s59 = ssub.s32 %s18, %s30
    %p60 = scmp.eq.s32.totalorder %s59, 0
    %s62 = sadd.s32 %s61, 1
    %s63 = scalar_select %p60, %s61, %s62
    %p66 = pneg %p60
    %p67 = scmp.eq.s32.totalorder %s11, 1
    %p68 = por %p66, %p67
    %p69 = scmp.ne.s32.totalorder %s61, %s64
    %p70 = scmp.eq.s32.totalorder %s11, 0
    %p71 = por %p69, %p70
    %p72 = scmp.ne.s32.totalorder %s61, %s64
    %p73 = scmp.eq.s32.totalorder %s16, 1
    %p74 = por %p72, %p73
    %p75 = scmp.ne.s32.totalorder %s64, %s65
    %p76 = scmp.eq.s32.totalorder %s16, 0
    %p77 = por %p75, %p76
    %p78 = scmp.ne.s32.totalorder %s64, %s65
    %p79 = scmp.eq.s32.totalorder %s17, 1
    %p80 = por %p78, %p79
    %p82 = scmp.ne.s32.totalorder %s65, %s81
    %p83 = scmp.eq.s32.totalorder %s17, 0
    %p84 = por %p82, %p83
    %s86 = sadd.s32 %s85, 1
    %p89 = scmp.eq.s32.totalorder %s11, 1
    %p90 = scmp.ne.s32.totalorder %s85, %s87
    %p91 = scmp.eq.s32.totalorder %s11, 0
    %p92 = por %p90, %p91
    %p93 = scmp.ne.s32.totalorder %s85, %s87
    %p94 = scmp.eq.s32.totalorder %s16, 1
    %p95 = por %p93, %p94
    %p96 = scmp.ne.s32.totalorder %s87, %s88
    %p97 = scmp.eq.s32.totalorder %s16, 0
    %p98 = por %p96, %p97
    %p99 = scmp.ne.s32.totalorder %s87, %s88
    %p100 = scmp.eq.s32.totalorder %s17, 1
    %p101 = por %p99, %p100
    %p103 = scmp.ne.s32.totalorder %s88, %s102
    %p104 = scmp.eq.s32.totalorder %s17, 0
    %p105 = por %p103, %p104
    %s107 = sadd.s32 %s106, 1
    %p110 = scmp.eq.s32.totalorder %s11, 1
    %p111 = scmp.ne.s32.totalorder %s106, %s108
    %p112 = scmp.eq.s32.totalorder %s11, 0
    %p113 = por %p111, %p112
    %p114 = scmp.ne.s32.totalorder %s106, %s108
    %p115 = scmp.eq.s32.totalorder %s16, 1
    %p116 = por %p114, %p115
    %p117 = scmp.ne.s32.totalorder %s108, %s109
    %p118 = scmp.eq.s32.totalorder %s16, 0
    %p119 = por %p117, %p118
    %p120 = scmp.ne.s32.totalorder %s108, %s109
    %p121 = scmp.eq.s32.totalorder %s17, 1
    %p122 = por %p120, %p121
    %p124 = scmp.ne.s32.totalorder %s109, %s123
    %p125 = scmp.eq.s32.totalorder %s17, 0
    %p126 = por %p124, %p125
    %s128 = sadd.s32 %s127, 1
    %p131 = scmp.eq.s32.totalorder %s11, 1
    %p132 = scmp.ne.s32.totalorder %s127, %s129
    %p133 = scmp.eq.s32.totalorder %s11, 0
    %p134 = por %p132, %p133
    %p135 = scmp.ne.s32.totalorder %s127, %s129
    %p136 = scmp.eq.s32.totalorder %s16, 1
    %p137 = por %p135, %p136
    %p138 = scmp.ne.s32.totalorder %s129, %s130
    %p139 = scmp.eq.s32.totalorder %s16, 0
    %p140 = por %p138, %p139
    %p141 = scmp.ne.s32.totalorder %s129, %s130
    %p142 = scmp.eq.s32.totalorder %s17, 1
    %p143 = por %p141, %p142
    %p145 = scmp.ne.s32.totalorder %s130, %s144
    %p146 = scmp.eq.s32.totalorder %s17, 0
    %p147 = por %p145, %p146
    %s148 = ssub.s32 %s18, %s30
    %s149 = ssub.s32 %s19, %s26
    %s150 = sor.u32 %s148, %s149
    %p151 = scmp.eq.s32.totalorder %s150, 0
    %s153 = sadd.s32 %s152, 1
    %s154 = scalar_select %p151, %s152, %s153
    %p157 = pneg %p151
    %p158 = scmp.eq.s32.totalorder %s11, 1
    %p159 = por %p157, %p158
    %p160 = scmp.ne.s32.totalorder %s152, %s155
    %p161 = scmp.eq.s32.totalorder %s11, 0
    %p162 = por %p160, %p161
    %p163 = scmp.ne.s32.totalorder %s152, %s155
    %p164 = scmp.eq.s32.totalorder %s16, 1
    %p165 = por %p163, %p164
    %p166 = scmp.ne.s32.totalorder %s155, %s156
    %p167 = scmp.eq.s32.totalorder %s16, 0
    %p168 = por %p166, %p167
    %p169 = scmp.ne.s32.totalorder %s155, %s156
    %p170 = scmp.eq.s32.totalorder %s17, 1
    %p171 = por %p169, %p170
    %p173 = scmp.ne.s32.totalorder %s156, %s172
    %p174 = scmp.eq.s32.totalorder %s17, 0
    %p175 = por %p173, %p174
    %p176 = scmp.le.s32.totalorder 1, %s11
    %p177 = scmp.lt.s32.totalorder %s11, 3
    %p178 = pnand %p176, %p177
    %p179 = pneg %p178
    // Predicated region
    $region9: #{ldp_block_forward.13} parent=5 // pred_check
      _
    $region10: #{ldp_block_forward.13} parent=5 // pred_check_branch
      %181 = sbr.rel (%p178) target = $region12
    $region11: #{ldp_block_forward.13} parent=5 // pred_region
      %s182 = ssub.s32 %s11, 1
      // Predicated region
      $region13: #{ldp_block_forward.13} parent=11 // pred_check
        %p183 = pneg %p98
      $region14: #{ldp_block_forward.13} parent=11 // pred_check_branch
        %185 = sbr.rel (%p183) target = $region16
      $region15: #{ldp_block_forward.13} parent=11 // pred_region
        _
      $region16: #{ldp_block_forward.13} parent=11 // pred_fallthru
        _
      // Predicated region
      $region17: #{ldp_block_forward.13} parent=11 // pred_check
        %p186 = pneg %p119
      $region18: #{ldp_block_forward.13} parent=11 // pred_check_branch
        %188 = sbr.rel (%p186) target = $region20
      $region19: #{ldp_block_forward.13} parent=11 // pred_region
        _
      $region20: #{ldp_block_forward.13} parent=11 // pred_fallthru
        _
      // Predicated region
      $region21: #{ldp_block_forward.13} parent=11 // pred_check
        %p189 = pneg %p140
      $region22: #{ldp_block_forward.13} parent=11 // pred_check_branch
        %191 = sbr.rel (%p189) target = $region24
      $region23: #{ldp_block_forward.13} parent=11 // pred_region
        _
      $region24: #{ldp_block_forward.13} parent=11 // pred_fallthru
        _
    $region12: #{ldp_block_forward.13} parent=5 // pred_fallthru
      _
    %p192 = scmp.lt.s32.totalorder %s11, 2
    // Predicated region
    $region25: #{ldp_block_forward.13} parent=5 // pred_check
      %p193 = pneg %p192
    $region26: #{ldp_block_forward.13} parent=5 // pred_check_branch
      %195 = sbr.rel (%p193) target = $region28
    $region27: #{ldp_block_forward.13} parent=5 // pred_region
      // Predicated region
      $region29: #{ldp_block_forward.13} parent=27 // pred_check
        %p196 = pneg %p45
      $region30: #{ldp_block_forward.13} parent=27 // pred_check_branch
        %198 = sbr.rel (%p196) target = $region32
      $region31: #{ldp_block_forward.13} parent=27 // pred_region
        %s199 = smul.u32 8, %s19
        %p200 = scmp.lt.s32.totalorder %s18, 1
        %s201 = scalar_select %p200, %s18, 1
        %p202 = scmp.lt.s32.totalorder %s199, 7
        %s203 = scalar_select %p202, %s199, 7
        %s204 = smul.addr %s201, 8
        %s205 = sadd.s32 %s203, %s204
        %s206 = smul.addr %s205, 4
        %s207 = scalar_lea.vmem %s0, %s206
        %s208 = smul.u32 8, %s19
      $region32: #{ldp_block_forward.13} parent=27 // pred_fallthru
        _
      // Predicated region
      $region33: #{ldp_block_forward.13} parent=27 // pred_check
        %p209 = pneg %p71
      $region34: #{ldp_block_forward.13} parent=27 // pred_check_branch
        %211 = sbr.rel (%p209) target = $region36
      $region35: #{ldp_block_forward.13} parent=27 // pred_region
        %p212 = scmp.lt.s32.totalorder %s18, 1
        %s213 = scalar_select %p212, %s18, 1
        %s214 = scalar_lea.vmem %s1, %s213
      $region36: #{ldp_block_forward.13} parent=27 // pred_fallthru
        _
    $region28: #{ldp_block_forward.13} parent=5 // pred_fallthru
      _
    %p215 = scmp.le.s32.totalorder 1, %s11
    %p216 = scmp.lt.s32.totalorder %s11, 3
    %p217 = pnand %p215, %p216
    %p218 = pneg %p217
    // Predicated region
    $region37: #{ldp_block_forward.13} parent=5 // pred_check
      _
    $region38: #{ldp_block_forward.13} parent=5 // pred_check_branch
      %220 = sbr.rel (%p217) target = $region40
    $region39: #{ldp_block_forward.13} parent=5 // pred_region
      %s221 = ssub.s32 %s11, 1
      %s222 = smul.u32 8, %s21
      %p223 = scmp.lt.s32.totalorder %s20, 1
      %s224 = scalar_select %p223, %s20, 1
      %p225 = scmp.lt.s32.totalorder %s222, 7
      %s226 = scalar_select %p225, %s222, 7
      %s227 = smul.addr %s224, 8
      %s228 = sadd.s32 %s226, %s227
      %s229 = smul.addr %s228, 4
      %s230 = scalar_lea.vmem %s0, %s229
      %p231 = pneg %p51
      %p232 = pneg %p48
      %p233 = scmp.lt.s32.totalorder %s20, 1
      %s234 = scalar_select %p233, %s20, 1
      %s235 = scalar_lea.vmem %s1, %s234
      %p236 = pneg %p77
      %p237 = pneg %p74
      %p238 = pneg %p98
      %p239 = pneg %p95
      %p240 = pneg %p119
      %p241 = pneg %p116
      %p242 = pneg %p140
      %p243 = pneg %p137
      %p244 = pneg %p168
      %p245 = pneg %p165
      %s246 = smul.u32 8, %s21
      %p247 = scmp.lt.s32.totalorder %s20, 1
      %s248 = scalar_select %p247, %s20, 1
      %p249 = scmp.lt.s32.totalorder %s246, 7
      %s250 = scalar_select %p249, %s246, 7
      %s251 = smul.addr %s248, 8
      %s252 = sadd.s32 %s250, %s251
      %s253 = smul.addr %s252, 8
      %s254 = scalar_lea.vmem %s5, %s253
      %s255 = smul.u32 8, %s21
      %p256 = scmp.lt.s32.totalorder %s20, 1
      %s257 = scalar_select %p256, %s20, 1
      %p258 = scmp.lt.s32.totalorder %s255, 7
      %s259 = scalar_select %p258, %s255, 7
      %s260 = smul.addr %s257, 8
      %s261 = sadd.s32 %s259, %s260
      %s262 = smul.addr %s261, 4
      %s263 = scalar_lea.vmem %s0, %s262
      %s264 = smul.u32 8, %s21
      %p265 = scmp.lt.s32.totalorder %s20, 1
      %s266 = scalar_select %p265, %s20, 1
      %s267 = scalar_lea.vmem %s1, %s266
      %s268 = smul.u32 8, %s21
      %p269 = scmp.lt.s32.totalorder %s20, 1
      %s270 = scalar_select %p269, %s20, 1
      %p271 = scmp.lt.s32.totalorder %s268, 7
      %s272 = scalar_select %p271, %s268, 7
      %s273 = smul.addr %s270, 8
      %s274 = sadd.s32 %s272, %s273
      %s275 = smul.addr %s274, 8
      %s276 = scalar_lea.vmem %s5, %s275
      %s277 = smul.u32 8, %s21
      %v279 = vld [vmem:[%s263] sm:$0xf]
      %v280 = vld [vmem:[%s263 + $0x4] sm:$0xf]
      %v281 = vld [vmem:[%s263 + $0x8] sm:$0xf]
      %v282 = vld [vmem:[%s263 + $0xc] sm:$0xf]
      %v283 = vld [vmem:[%s263 + $0x10] sm:$0xf]
      %v284 = vld [vmem:[%s263 + $0x14] sm:$0xf]
      %v285 = vld [vmem:[%s263 + $0x18] sm:$0xf]
      %v286 = vld [vmem:[%s263 + $0x1c] sm:$0xf]
      %v287 = vunpack.c.l.bf16 %v279
      %v288 = vunpack.c.l.bf16 %v280
      %v289 = vunpack.c.l.bf16 %v281
      %v290 = vunpack.c.l.bf16 %v282
      %v291 = vunpack.c.l.bf16 %v283
      %v292 = vunpack.c.l.bf16 %v284
      %v293 = vunpack.c.l.bf16 %v285
      %v294 = vunpack.c.l.bf16 %v286
      %v295 = vld [vmem:[%s267] sm:$0x1]
      %v297 = vperm.slane %v295, 0
      %v299 = vmul.f32 %v287, %v297
      %v300 = vmul.f32 %v288, %v297
      %v301 = vmul.f32 %v289, %v297
      %v302 = vmul.f32 %v290, %v297
      %v303 = vmul.f32 %v291, %v297
      %v304 = vmul.f32 %v292, %v297
      %v305 = vmul.f32 %v293, %v297
      %v306 = vmul.f32 %v294, %v297
      %v307 = vpack.c.bf16 %v300, %v299
      %v308 = vpack.c.bf16 %v302, %v301
      %v309 = vpack.c.bf16 %v304, %v303
      %v310 = vpack.c.bf16 %v306, %v305
      %v311 = vld [vmem:[%s2] sm:$0xf]
      %v312 = vld [vmem:[%s2 + $0x4] sm:$0xf]
      %v313 = vld [vmem:[%s2 + $0x8] sm:$0xf]
      %v314 = vld [vmem:[%s2 + $0xc] sm:$0xf]
      %v319 = vunpack.c.l.b16 %v311
      %v320 = vunpack.c.l.b16 %v312
      %v321 = vunpack.c.l.b16 %v313
      %v322 = vunpack.c.l.b16 %v314
      %v323 = vpack.c.b16 %v320, %v319
      %v324 = vpack.c.b16 %v322, %v321
      %vm327 = vcmask 261120
      %v329 = vsel %vm327, %v307, 0
      %v332 = vsel %vm327, %v308, 0
      %v335 = vsel %vm327, %v309, 0
      %v338 = vsel %vm327, %v310, 0
      %340 = vmatpush.bf16.msra.mxu0 0
      %341 = vmatpush.bf16.msra.mxu0 0
      %342 = vmatpush.bf16.msra.mxu0 0
      %343 = vmatpush.bf16.msra.mxu0 0
      %344 = vmatpush.bf16.msra.mxu0 0
      %345 = vmatpush.bf16.msra.mxu0 0
      %346 = vmatpush.bf16.msra.mxu0 %v324
      %347 = vmatpush.bf16.msra.mxu0 %v323
      %348 = vmatmul.bf16.gmra.mxu0 %v329
      %v349 = vpop.f32.mrf.mxu0
      %v350 = vadd.f32 0.0, %v349
      %v351 = vpop.f32.mrf.mxu0
      %v352 = vadd.f32 0.0, %v351
      %353 = vmatmul.bf16.gmra.mxu0 %v332
      %v354 = vpop.f32.mrf.mxu0
      %v355 = vadd.f32 0.0, %v354
      %v356 = vpop.f32.mrf.mxu0
      %v357 = vadd.f32 0.0, %v356
      %358 = vmatmul.bf16.gmra.mxu0 %v335
      %v359 = vpop.f32.mrf.mxu0
      %v360 = vadd.f32 0.0, %v359
      %v361 = vpop.f32.mrf.mxu0
      %v362 = vadd.f32 0.0, %v361
      %363 = vmatmul.bf16.gmra.mxu0 %v338
      %v364 = vpop.f32.mrf.mxu0
      %v365 = vadd.f32 0.0, %v364
      %v366 = vpop.f32.mrf.mxu0
      %v367 = vadd.f32 0.0, %v366
      %368 = vdwg.mxu0
      %v369 = vsel %vm327, %v350, 0.0
      %370 = vadd.xlane.f32.xlu0 %v369
      %v371 = vpop.xlane.xlu0 %370
      %v372 = vsel %vm327, %v352, 0.0
      %373 = vadd.xlane.f32.xlu0 %v372
      %v374 = vpop.xlane.xlu0 %373
      %v375 = vsel %vm327, %v355, 0.0
      %376 = vadd.xlane.f32.xlu0 %v375
      %v377 = vpop.xlane.xlu0 %376
      %v378 = vsel %vm327, %v357, 0.0
      %379 = vadd.xlane.f32.xlu0 %v378
      %v380 = vpop.xlane.xlu0 %379
      %v381 = vsel %vm327, %v360, 0.0
      %382 = vadd.xlane.f32.xlu0 %v381
      %v383 = vpop.xlane.xlu0 %382
      %v384 = vsel %vm327, %v362, 0.0
      %385 = vadd.xlane.f32.xlu0 %v384
      %v386 = vpop.xlane.xlu0 %385
      %v387 = vsel %vm327, %v365, 0.0
      %388 = vadd.xlane.f32.xlu0 %v387
      %v389 = vpop.xlane.xlu0 %388
      %v390 = vsel %vm327, %v367, 0.0
      %391 = vadd.xlane.f32.xlu0 %v390
      %v392 = vpop.xlane.xlu0 %391
      %v393 = vrcp.pop 32.0
      %v394 = vmul.f32 32.0, %v393
      %v395 = vsub.f32 1.0, %v394
      %v396 = vmul.f32 %v393, %v395
      %v397 = vadd.f32 %v393, %v396
      %vm398 = vweird.f32 %v393
      %v399 = vsel %vm398, %v393, %v397
      %v400 = vmul.f32 %v371, %v399
      %v401 = vmul.f32 %v374, %v399
      %v402 = vmul.f32 %v377, %v399
      %v403 = vmul.f32 %v380, %v399
      %v404 = vmul.f32 %v383, %v399
      %v405 = vmul.f32 %v386, %v399
      %v406 = vmul.f32 %v389, %v399
      %v407 = vmul.f32 %v392, %v399
      %v408 = vsub.f32 %v350, %v400
      %v409 = vsub.f32 %v352, %v401
      %v410 = vsub.f32 %v355, %v402
      %v411 = vsub.f32 %v357, %v403
      %v412 = vsub.f32 %v360, %v404
      %v413 = vsub.f32 %v362, %v405
      %v414 = vsub.f32 %v365, %v406
      %v415 = vsub.f32 %v367, %v407
      %v416 = vmul.f32 %v408, %v408
      %v417 = vmul.f32 %v409, %v409
      %v418 = vmul.f32 %v410, %v410
      %v419 = vmul.f32 %v411, %v411
      %v420 = vmul.f32 %v412, %v412
      %v421 = vmul.f32 %v413, %v413
      %v422 = vmul.f32 %v414, %v414
      %v423 = vmul.f32 %v415, %v415
      %v424 = vsel %vm327, %v416, 0.0
      %425 = vadd.xlane.f32.xlu0 %v424
      %v426 = vpop.xlane.xlu0 %425
      %v427 = vsel %vm327, %v417, 0.0
      %428 = vadd.xlane.f32.xlu0 %v427
      %v429 = vpop.xlane.xlu0 %428
      %v430 = vsel %vm327, %v418, 0.0
      %431 = vadd.xlane.f32.xlu0 %v430
      %v432 = vpop.xlane.xlu0 %431
      %v433 = vsel %vm327, %v419, 0.0
      %434 = vadd.xlane.f32.xlu0 %v433
      %v435 = vpop.xlane.xlu0 %434
      %v436 = vsel %vm327, %v420, 0.0
      %437 = vadd.xlane.f32.xlu0 %v436
      %v438 = vpop.xlane.xlu0 %437
      %v439 = vsel %vm327, %v421, 0.0
      %440 = vadd.xlane.f32.xlu0 %v439
      %v441 = vpop.xlane.xlu0 %440
      %v442 = vsel %vm327, %v422, 0.0
      %443 = vadd.xlane.f32.xlu0 %v442
      %v444 = vpop.xlane.xlu0 %443
      %v445 = vsel %vm327, %v423, 0.0
      %446 = vadd.xlane.f32.xlu0 %v445
      %v447 = vpop.xlane.xlu0 %446
      %v448 = vmul.f32 %v426, %v399
      %v449 = vmul.f32 %v429, %v399
      %v450 = vmul.f32 %v432, %v399
      %v451 = vmul.f32 %v435, %v399
      %v452 = vmul.f32 %v438, %v399
      %v453 = vmul.f32 %v441, %v399
      %v454 = vmul.f32 %v444, %v399
      %v455 = vmul.f32 %v447, %v399
      %v456 = vadd.f32 %v448, 1e-05
      %v457 = vadd.f32 %v449, 1e-05
      %v458 = vadd.f32 %v450, 1e-05
      %v459 = vadd.f32 %v451, 1e-05
      %v460 = vadd.f32 %v452, 1e-05
      %v461 = vadd.f32 %v453, 1e-05
      %v462 = vadd.f32 %v454, 1e-05
      %v463 = vadd.f32 %v455, 1e-05
      %v464 = vrsqrt.pop %v456
      %v465 = vmul.f32 %v464, %v456
      %v466 = vmul.f32 %v465, %v464
      %v467 = vmul.f32 0.5, %v466
      %v468 = vsub.f32 1.5, %v467
      %v469 = vmul.f32 %v464, %v468
      %vm470 = vweird.f32 %v456
      %vm471 = vweird.f32 %v464
      %vm472 = vmor %vm470, %vm471
      %v473 = vsel %vm472, %v464, %v469
      %v474 = vrsqrt.pop %v457
      %v475 = vmul.f32 %v474, %v457
      %v476 = vmul.f32 %v475, %v474
      %v477 = vmul.f32 0.5, %v476
      %v478 = vsub.f32 1.5, %v477
      %v479 = vmul.f32 %v474, %v478
      %vm480 = vweird.f32 %v457
      %vm481 = vweird.f32 %v474
      %vm482 = vmor %vm480, %vm481
      %v483 = vsel %vm482, %v474, %v479
      %v484 = vrsqrt.pop %v458
      %v485 = vmul.f32 %v484, %v458
      %v486 = vmul.f32 %v485, %v484
      %v487 = vmul.f32 0.5, %v486
      %v488 = vsub.f32 1.5, %v487
      %v489 = vmul.f32 %v484, %v488
      %vm490 = vweird.f32 %v458
      %vm491 = vweird.f32 %v484
      %vm492 = vmor %vm490, %vm491
      %v493 = vsel %vm492, %v484, %v489
      %v494 = vrsqrt.pop %v459
      %v495 = vmul.f32 %v494, %v459
      %v496 = vmul.f32 %v495, %v494
      %v497 = vmul.f32 0.5, %v496
      %v498 = vsub.f32 1.5, %v497
      %v499 = vmul.f32 %v494, %v498
      %vm500 = vweird.f32 %v459
      %vm501 = vweird.f32 %v494
      %vm502 = vmor %vm500, %vm501
      %v503 = vsel %vm502, %v494, %v499
      %v504 = vrsqrt.pop %v460
      %v505 = vmul.f32 %v504, %v460
      %v506 = vmul.f32 %v505, %v504
      %v507 = vmul.f32 0.5, %v506
      %v508 = vsub.f32 1.5, %v507
      %v509 = vmul.f32 %v504, %v508
      %vm510 = vweird.f32 %v460
      %vm511 = vweird.f32 %v504
      %vm512 = vmor %vm510, %vm511
      %v513 = vsel %vm512, %v504, %v509
      %v514 = vrsqrt.pop %v461
      %v515 = vmul.f32 %v514, %v461
      %v516 = vmul.f32 %v515, %v514
      %v517 = vmul.f32 0.5, %v516
      %v518 = vsub.f32 1.5, %v517
      %v519 = vmul.f32 %v514, %v518
      %vm520 = vweird.f32 %v461
      %vm521 = vweird.f32 %v514
      %vm522 = vmor %vm520, %vm521
      %v523 = vsel %vm522, %v514, %v519
      %v524 = vrsqrt.pop %v462
      %v525 = vmul.f32 %v524, %v462
      %v526 = vmul.f32 %v525, %v524
      %v527 = vmul.f32 0.5, %v526
      %v528 = vsub.f32 1.5, %v527
      %v529 = vmul.f32 %v524, %v528
      %vm530 = vweird.f32 %v462
      %vm531 = vweird.f32 %v524
      %vm532 = vmor %vm530, %vm531
      %v533 = vsel %vm532, %v524, %v529
      %v534 = vrsqrt.pop %v463
      %v535 = vmul.f32 %v534, %v463
      %v536 = vmul.f32 %v535, %v534
      %v537 = vmul.f32 0.5, %v536
      %v538 = vsub.f32 1.5, %v537
      %v539 = vmul.f32 %v534, %v538
      %vm540 = vweird.f32 %v463
      %vm541 = vweird.f32 %v534
      %vm542 = vmor %vm540, %vm541
      %v543 = vsel %vm542, %v534, %v539
      %v544 = vmul.f32 %v408, %v473
      %v545 = vmul.f32 %v409, %v483
      %v546 = vmul.f32 %v410, %v493
      %v547 = vmul.f32 %v411, %v503
      %v548 = vmul.f32 %v412, %v513
      %v549 = vmul.f32 %v413, %v523
      %v550 = vmul.f32 %v414, %v533
      %v551 = vmul.f32 %v415, %v543
      %v552 = vld [vmem:[%s3] sm:$0x1]
      %v554 = vperm.slane %v552, 0
      %v556 = vmul.f32 %v544, %v554
      %v557 = vmul.f32 %v545, %v554
      %v558 = vmul.f32 %v546, %v554
      %v559 = vmul.f32 %v547, %v554
      %v560 = vmul.f32 %v548, %v554
      %v561 = vmul.f32 %v549, %v554
      %v562 = vmul.f32 %v550, %v554
      %v563 = vmul.f32 %v551, %v554
      %v564 = vld [vmem:[%s4] sm:$0x1]
      %v566 = vperm.slane %v564, 0
      %v568 = vadd.f32 %v556, %v566
      %v569 = vadd.f32 %v557, %v566
      %v570 = vadd.f32 %v558, %v566
      %v571 = vadd.f32 %v559, %v566
      %v572 = vadd.f32 %v560, %v566
      %v573 = vadd.f32 %v561, %v566
      %v574 = vadd.f32 %v562, %v566
      %v575 = vadd.f32 %v563, %v566
      %576 = vst.msk [vmem:[%s276] sm:$0xff] %vm327, %v568
      %577 = vst.msk [vmem:[%s276 + $0x8] sm:$0xff] %vm327, %v569
      %578 = vst.msk [vmem:[%s276 + $0x10] sm:$0xff] %vm327, %v570
      %579 = vst.msk [vmem:[%s276 + $0x18] sm:$0xff] %vm327, %v571
      %580 = vst.msk [vmem:[%s276 + $0x20] sm:$0xff] %vm327, %v572
      %581 = vst.msk [vmem:[%s276 + $0x28] sm:$0xff] %vm327, %v573
      %582 = vst.msk [vmem:[%s276 + $0x30] sm:$0xff] %vm327, %v574
      %583 = vst.msk [vmem:[%s276 + $0x38] sm:$0xff] %vm327, %v575
      %s584 = smul.u32 8, %s21
      %p585 = scmp.lt.s32.totalorder %s20, 1
      %s586 = scalar_select %p585, %s20, 1
      %p587 = scmp.lt.s32.totalorder %s584, 7
      %s588 = scalar_select %p587, %s584, 7
      %s589 = smul.addr %s586, 8
      %s590 = sadd.s32 %s588, %s589
      %s591 = smul.addr %s590, 8
      %s592 = scalar_lea.vmem %s5, %s591
      // Predicated region
      $region41: #{ldp_block_forward.13} parent=39 // pred_check
        %p593 = pneg %p165
      $region42: #{ldp_block_forward.13} parent=39 // pred_check_branch
        %595 = sbr.rel (%p593) target = $region44
      $region43: #{ldp_block_forward.13} parent=39 // pred_region
        %s596 = smul.u32 8, %s21
      $region44: #{ldp_block_forward.13} parent=39 // pred_fallthru
        _
    $region40: #{ldp_block_forward.13} parent=5 // pred_fallthru
      _
    %p597 = scmp.le.s32.totalorder 2, %s11
    // Predicated region
    $region45: #{ldp_block_forward.13} parent=5 // pred_check
      %p598 = pneg %p597
    $region46: #{ldp_block_forward.13} parent=5 // pred_check_branch
      %600 = sbr.rel (%p598) target = $region48
    $region47: #{ldp_block_forward.13} parent=5 // pred_region
      %s601 = ssub.s32 %s11, 2
      // Predicated region
      $region49: #{ldp_block_forward.13} parent=47 // pred_check
        %p602 = pneg %p171
      $region50: #{ldp_block_forward.13} parent=47 // pred_check_branch
        %604 = sbr.rel (%p602) target = $region52
      $region51: #{ldp_block_forward.13} parent=47 // pred_region
        %s605 = smul.u32 8, %s23
        %p606 = scmp.lt.s32.totalorder %s22, 1
        %s607 = scalar_select %p606, %s22, 1
        %p608 = scmp.lt.s32.totalorder %s605, 7
        %s609 = scalar_select %p608, %s605, 7
        %s610 = smul.addr %s607, 8
        %s611 = sadd.s32 %s609, %s610
        %s612 = smul.addr %s611, 8
        %s613 = scalar_lea.vmem %s5, %s612
      $region52: #{ldp_block_forward.13} parent=47 // pred_fallthru
        _
    $region48: #{ldp_block_forward.13} parent=5 // pred_fallthru
      _
  $region6: #{ldp_block_forward.13} parent=0 // loop_footer
    %s15 = sadd.s32 1, %s11
  $region7: #{ldp_block_forward.13} parent=0 // loop_footer_branch
    %10 = sbr.rel target = $region3
  $region8: #{ldp_block_forward.13} parent=0 // loop_exit
    _

// kernel: ldp_block_forward.8
$region0: #{ldp_block_forward.8}
  #allocation0 [shape = 'u32[]', space=smem, size = 0x4, offset = 0x4, fixed_abs, tag = 'smem constant byte address 0x4 - core index']
  #allocation1 [shape = 'u32[72,128]{1,0:T(1,128)}', space=vmem, size = 0x9000, scoped, tag = 'internal scratch']
  %s0 = inlined_call_operand.vmem [shape: bf16[2,18,18,32], index: 0, kind: input, shape index: {}]
  %s1 = inlined_call_operand.vmem [shape: f32[9,32], index: 1, kind: input, shape index: {}]
  %s2 = inlined_call_operand.vmem [shape: f32[1,32], index: 2, kind: input, shape index: {}]
  %s3 = inlined_call_operand.vmem [shape: f32[1,32], index: 3, kind: input, shape index: {}]
  %s4 = inlined_call_operand.vmem [shape: bf16[2,16,16,32], index: 4, kind: output, shape index: {0}]
  %s5 = inlined_call_operand.vmem [shape: f32[2,1,32], index: 5, kind: output, shape index: {1}]
  %6 = xla_tuple %s4, %s5
  %s7 = sld [smem:[#allocation0]]
  $region57: #{ldp_block_forward.8} parent=0
    _
  %s9 = ssub.s32 1, %s7
  %s10 = scalar_select 0, %s9, %s7
  loop: start=0, step=1, limit=4
  $region2: #{ldp_block_forward.8} parent=0 // loop_pre_header
    _
  $region3: #{ldp_block_forward.8} parent=0 // loop_header
    %s12 = sphi 0, %s16
    %p13 = scmp.ge.s32.totalorder %s12, 4
    %s22 = sphi 0, %s24
    %s25 = sphi 0, %s22
    %s26 = sphi 0, %s25
    %s42 = sphi 0, %s26
    %s46 = sphi 0, %s46
    %s48 = sphi 0, %s46
    %s49 = sphi 0, %s48
    %s63 = sphi 0, %s49
    %s67 = sphi 0, %s67
    %s69 = sphi 0, %s67
    %s70 = sphi 0, %s69
    %s84 = sphi 0, %s70
    %s88 = sphi 0, %s88
    %s90 = sphi 0, %s88
    %s91 = sphi 0, %s90
    %s105 = sphi 0, %s91
    %s111 = sphi 0, %s113
    %s114 = sphi 0, %s111
    %s115 = sphi 0, %s114
    %s131 = sphi 0, %s115
    %s137 = sphi 0, %s139
    %s140 = sphi 0, %s137
    %s141 = sphi 0, %s140
    %s157 = sphi 0, %s141
  $region4: #{ldp_block_forward.8} parent=0 // loop_header_branch
    %15 = sbr.rel (%p13) target = $region8
  $region5: #{ldp_block_forward.8} parent=0 // loop_body
    %s17 = ssub.s32 %s12, 1
    %s18 = ssub.s32 %s12, 2
    %s19 = sadd.s32 %s12, 1
    %s20 = ssub.s32 %s12, %s19
    %p21 = scmp.eq.s32.totalorder %s20, 0
    %s23 = sadd.s32 %s22, 1
    %s24 = scalar_select %p21, %s22, %s23
    %p27 = pneg %p21
    %p28 = scmp.eq.s32.totalorder %s12, 1
    %p29 = por %p27, %p28
    %p30 = scmp.ne.s32.totalorder %s22, %s25
    %p31 = scmp.eq.s32.totalorder %s12, 0
    %p32 = por %p30, %p31
    %p33 = scmp.ne.s32.totalorder %s22, %s25
    %p34 = scmp.eq.s32.totalorder %s17, 1
    %p35 = por %p33, %p34
    %p36 = scmp.ne.s32.totalorder %s25, %s26
    %p37 = scmp.eq.s32.totalorder %s17, 0
    %p38 = por %p36, %p37
    %p39 = scmp.ne.s32.totalorder %s25, %s26
    %p40 = scmp.eq.s32.totalorder %s18, 1
    %p41 = por %p39, %p40
    %p43 = scmp.ne.s32.totalorder %s26, %s42
    %p44 = scmp.eq.s32.totalorder %s18, 0
    %p45 = por %p43, %p44
    %s47 = sadd.s32 %s46, 1
    %p50 = scmp.eq.s32.totalorder %s12, 1
    %p51 = scmp.ne.s32.totalorder %s46, %s48
    %p52 = scmp.eq.s32.totalorder %s12, 0
    %p53 = por %p51, %p52
    %p54 = scmp.ne.s32.totalorder %s46, %s48
    %p55 = scmp.eq.s32.totalorder %s17, 1
    %p56 = por %p54, %p55
    %p57 = scmp.ne.s32.totalorder %s48, %s49
    %p58 = scmp.eq.s32.totalorder %s17, 0
    %p59 = por %p57, %p58
    %p60 = scmp.ne.s32.totalorder %s48, %s49
    %p61 = scmp.eq.s32.totalorder %s18, 1
    %p62 = por %p60, %p61
    %p64 = scmp.ne.s32.totalorder %s49, %s63
    %p65 = scmp.eq.s32.totalorder %s18, 0
    %p66 = por %p64, %p65
    %s68 = sadd.s32 %s67, 1
    %p71 = scmp.eq.s32.totalorder %s12, 1
    %p72 = scmp.ne.s32.totalorder %s67, %s69
    %p73 = scmp.eq.s32.totalorder %s12, 0
    %p74 = por %p72, %p73
    %p75 = scmp.ne.s32.totalorder %s67, %s69
    %p76 = scmp.eq.s32.totalorder %s17, 1
    %p77 = por %p75, %p76
    %p78 = scmp.ne.s32.totalorder %s69, %s70
    %p79 = scmp.eq.s32.totalorder %s17, 0
    %p80 = por %p78, %p79
    %p81 = scmp.ne.s32.totalorder %s69, %s70
    %p82 = scmp.eq.s32.totalorder %s18, 1
    %p83 = por %p81, %p82
    %p85 = scmp.ne.s32.totalorder %s70, %s84
    %p86 = scmp.eq.s32.totalorder %s18, 0
    %p87 = por %p85, %p86
    %s89 = sadd.s32 %s88, 1
    %p92 = scmp.eq.s32.totalorder %s12, 1
    %p93 = scmp.ne.s32.totalorder %s88, %s90
    %p94 = scmp.eq.s32.totalorder %s12, 0
    %p95 = por %p93, %p94
    %p96 = scmp.ne.s32.totalorder %s88, %s90
    %p97 = scmp.eq.s32.totalorder %s17, 1
    %p98 = por %p96, %p97
    %p99 = scmp.ne.s32.totalorder %s90, %s91
    %p100 = scmp.eq.s32.totalorder %s17, 0
    %p101 = por %p99, %p100
    %p102 = scmp.ne.s32.totalorder %s90, %s91
    %p103 = scmp.eq.s32.totalorder %s18, 1
    %p104 = por %p102, %p103
    %p106 = scmp.ne.s32.totalorder %s91, %s105
    %p107 = scmp.eq.s32.totalorder %s18, 0
    %p108 = por %p106, %p107
    %s109 = ssub.s32 %s12, %s19
    %p110 = scmp.eq.s32.totalorder %s109, 0
    %s112 = sadd.s32 %s111, 1
    %s113 = scalar_select %p110, %s111, %s112
    %p116 = pneg %p110
    %p117 = scmp.eq.s32.totalorder %s12, 1
    %p118 = por %p116, %p117
    %p119 = scmp.ne.s32.totalorder %s111, %s114
    %p120 = scmp.eq.s32.totalorder %s12, 0
    %p121 = por %p119, %p120
    %p122 = scmp.ne.s32.totalorder %s111, %s114
    %p123 = scmp.eq.s32.totalorder %s17, 1
    %p124 = por %p122, %p123
    %p125 = scmp.ne.s32.totalorder %s114, %s115
    %p126 = scmp.eq.s32.totalorder %s17, 0
    %p127 = por %p125, %p126
    %p128 = scmp.ne.s32.totalorder %s114, %s115
    %p129 = scmp.eq.s32.totalorder %s18, 1
    %p130 = por %p128, %p129
    %p132 = scmp.ne.s32.totalorder %s115, %s131
    %p133 = scmp.eq.s32.totalorder %s18, 0
    %p134 = por %p132, %p133
    %s135 = ssub.s32 %s12, %s19
    %p136 = scmp.eq.s32.totalorder %s135, 0
    %s138 = sadd.s32 %s137, 1
    %s139 = scalar_select %p136, %s137, %s138
    %p142 = pneg %p136
    %p143 = scmp.eq.s32.totalorder %s12, 1
    %p144 = por %p142, %p143
    %p145 = scmp.ne.s32.totalorder %s137, %s140
    %p146 = scmp.eq.s32.totalorder %s12, 0
    %p147 = por %p145, %p146
    %p148 = scmp.ne.s32.totalorder %s137, %s140
    %p149 = scmp.eq.s32.totalorder %s17, 1
    %p150 = por %p148, %p149
    %p151 = scmp.ne.s32.totalorder %s140, %s141
    %p152 = scmp.eq.s32.totalorder %s17, 0
    %p153 = por %p151, %p152
    %p154 = scmp.ne.s32.totalorder %s140, %s141
    %p155 = scmp.eq.s32.totalorder %s18, 1
    %p156 = por %p154, %p155
    %p158 = scmp.ne.s32.totalorder %s141, %s157
    %p159 = scmp.eq.s32.totalorder %s18, 0
    %p160 = por %p158, %p159
    %p161 = scmp.le.s32.totalorder 1, %s12
    %p162 = scmp.lt.s32.totalorder %s12, 3
    %p163 = pnand %p161, %p162
    %p164 = pneg %p163
    // Predicated region
    $region9: #{ldp_block_forward.8} parent=5 // pred_check
      _
    $region10: #{ldp_block_forward.8} parent=5 // pred_check_branch
      %166 = sbr.rel (%p163) target = $region12
    $region11: #{ldp_block_forward.8} parent=5 // pred_region
      %s167 = ssub.s32 %s12, 1
      // Predicated region
      $region13: #{ldp_block_forward.8} parent=11 // pred_check
        %p168 = pneg %p59
      $region14: #{ldp_block_forward.8} parent=11 // pred_check_branch
        %170 = sbr.rel (%p168) target = $region16
      $region15: #{ldp_block_forward.8} parent=11 // pred_region
        _
      $region16: #{ldp_block_forward.8} parent=11 // pred_fallthru
        _
      // Predicated region
      $region17: #{ldp_block_forward.8} parent=11 // pred_check
        %p171 = pneg %p80
      $region18: #{ldp_block_forward.8} parent=11 // pred_check_branch
        %173 = sbr.rel (%p171) target = $region20
      $region19: #{ldp_block_forward.8} parent=11 // pred_region
        _
      $region20: #{ldp_block_forward.8} parent=11 // pred_fallthru
        _
      // Predicated region
      $region21: #{ldp_block_forward.8} parent=11 // pred_check
        %p174 = pneg %p101
      $region22: #{ldp_block_forward.8} parent=11 // pred_check_branch
        %176 = sbr.rel (%p174) target = $region24
      $region23: #{ldp_block_forward.8} parent=11 // pred_region
        _
      $region24: #{ldp_block_forward.8} parent=11 // pred_fallthru
        _
    $region12: #{ldp_block_forward.8} parent=5 // pred_fallthru
      _
    %p177 = scmp.lt.s32.totalorder %s12, 2
    // Predicated region
    $region25: #{ldp_block_forward.8} parent=5 // pred_check
      %p178 = pneg %p177
    $region26: #{ldp_block_forward.8} parent=5 // pred_check_branch
      %180 = sbr.rel (%p178) target = $region28
    $region27: #{ldp_block_forward.8} parent=5 // pred_region
      // Predicated region
      $region29: #{ldp_block_forward.8} parent=27 // pred_check
        %p181 = pneg %p32
      $region30: #{ldp_block_forward.8} parent=27 // pred_check_branch
        %183 = sbr.rel (%p181) target = $region32
      $region31: #{ldp_block_forward.8} parent=27 // pred_region
        %p184 = scmp.lt.s32.totalorder %s12, 1
        %s185 = scalar_select %p184, %s12, 1
        %s186 = smul.addr %s185, 54
        %s187 = smul.addr %s186, 4
        %s188 = scalar_lea.vmem %s0, %s187
      $region32: #{ldp_block_forward.8} parent=27 // pred_fallthru
        _
    $region28: #{ldp_block_forward.8} parent=5 // pred_fallthru
      _
    %p189 = scmp.le.s32.totalorder 1, %s12
    %p190 = scmp.lt.s32.totalorder %s12, 3
    %p191 = pnand %p189, %p190
    %p192 = pneg %p191
    // Predicated region
    $region33: #{ldp_block_forward.8} parent=5 // pred_check
      _
    $region34: #{ldp_block_forward.8} parent=5 // pred_check_branch
      %194 = sbr.rel (%p191) target = $region36
    $region35: #{ldp_block_forward.8} parent=5 // pred_region
      %s195 = ssub.s32 %s12, 1
      %p196 = scmp.lt.s32.totalorder %s17, 1
      %s197 = scalar_select %p196, %s17, 1
      %s198 = smul.addr %s197, 54
      %s199 = smul.addr %s198, 4
      %s200 = scalar_lea.vmem %s0, %s199
      %p201 = pneg %p38
      %p202 = pneg %p35
      %p203 = pneg %p59
      %p204 = pneg %p56
      %p205 = pneg %p80
      %p206 = pneg %p77
      %p207 = pneg %p101
      %p208 = pneg %p98
      %p209 = pneg %p127
      %p210 = pneg %p124
      %p211 = scmp.lt.s32.totalorder %s17, 1
      %s212 = scalar_select %p211, %s17, 1
      %s213 = smul.addr %s212, 32
      %s214 = smul.addr %s213, 4
      %s215 = scalar_lea.vmem %s4, %s214
      %p216 = pneg %p153
      %p217 = pneg %p150
      %p218 = scmp.lt.s32.totalorder %s17, 1
      %s219 = scalar_select %p218, %s17, 1
      %s220 = scalar_lea.vmem %s5, %s219
      %p221 = scmp.lt.s32.totalorder %s17, 1
      %s222 = scalar_select %p221, %s17, 1
      %s223 = smul.addr %s222, 54
      %s224 = smul.addr %s223, 4
      %s225 = scalar_lea.vmem %s0, %s224
      %p226 = scmp.lt.s32.totalorder %s17, 1
      %s227 = scalar_select %p226, %s17, 1
      %s228 = smul.addr %s227, 32
      %s229 = smul.addr %s228, 4
      %s230 = scalar_lea.vmem %s4, %s229
      %p231 = scmp.lt.s32.totalorder %s17, 1
      %s232 = scalar_select %p231, %s17, 1
      %s233 = scalar_lea.vmem %s5, %s232
      %v234 = vld [vmem:[%s1] sm:$0xff]
      %v235 = vld [vmem:[%s1 + $0x8] sm:$0x1]
      %v236 = vld [vmem:[%s2] sm:$0x1]
      %v237 = vld [vmem:[%s3] sm:$0x1]
      %vm238 = vcmask 253952
      %239 = vst.msk [vmem:[%s233] sm:$0x1] %vm238, 0.0
      %s240 = smul.u32 0, 3
      %s241 = smul.addr %s240, 4
      %s242 = scalar_lea.vmem %s225, %s241
      %v243 = vld [vmem:[%s242] sm:$0xf]
      %v244 = vld [vmem:[%s242 + $0x4] sm:$0xf]
      %v245 = vld [vmem:[%s242 + $0xc] sm:$0xf]
      %v246 = vld [vmem:[%s242 + $0x10] sm:$0xf]
      %v247 = vld [vmem:[%s242 + $0x18] sm:$0xf]
      %v248 = vld [vmem:[%s242 + $0x1c] sm:$0xf]
      %v249 = vld [vmem:[%s242 + $0x24] sm:$0xf]
      %v250 = vld [vmem:[%s242 + $0x28] sm:$0xf]
      %v251 = vld [vmem:[%s242 + $0x30] sm:$0xf]
      %v252 = vld [vmem:[%s242 + $0x34] sm:$0xf]
      %v253 = vld [vmem:[%s242 + $0x3c] sm:$0xf]
      %v254 = vld [vmem:[%s242 + $0x40] sm:$0xf]
      %v255 = vld [vmem:[%s242 + $0x48] sm:$0xf]
      %v256 = vld [vmem:[%s242 + $0x4c] sm:$0xf]
      %v257 = vld [vmem:[%s242 + $0x54] sm:$0xf]
      %v258 = vld [vmem:[%s242 + $0x58] sm:$0xf]
      %v259 = vunpack.c.l.bf16 %v243
      %v260 = vunpack.c.l.bf16 %v244
      %v261 = vunpack.c.l.bf16 %v245
      %v262 = vunpack.c.l.bf16 %v246
      %v263 = vunpack.c.l.bf16 %v247
      %v264 = vunpack.c.l.bf16 %v248
      %v265 = vunpack.c.l.bf16 %v249
      %v266 = vunpack.c.l.bf16 %v250
      %v267 = vunpack.c.l.bf16 %v251
      %v268 = vunpack.c.l.bf16 %v252
      %v269 = vunpack.c.l.bf16 %v253
      %v270 = vunpack.c.l.bf16 %v254
      %v271 = vunpack.c.l.bf16 %v255
      %v272 = vunpack.c.l.bf16 %v256
      %v273 = vunpack.c.l.bf16 %v257
      %v274 = vunpack.c.l.bf16 %v258
      %v275 = vperm.slane %v234, 0
      %v276 = vmul.f32 %v259, %v275
      %v277 = vmul.f32 %v260, %v275
      %v278 = vmul.f32 %v261, %v275
      %v279 = vmul.f32 %v262, %v275
      %v280 = vmul.f32 %v263, %v275
      %v281 = vmul.f32 %v264, %v275
      %v282 = vmul.f32 %v265, %v275
      %v283 = vmul.f32 %v266, %v275
      %v284 = vmul.f32 %v267, %v275
      %v285 = vmul.f32 %v268, %v275
      %v286 = vmul.f32 %v269, %v275
      %v287 = vmul.f32 %v270, %v275
      %v288 = vmul.f32 %v271, %v275
      %v289 = vmul.f32 %v272, %v275
      %v290 = vmul.f32 %v273, %v275
      %v291 = vmul.f32 %v274, %v275
      %v292 = vld [vmem:[%s242 + $0x8] sm:$0x1]
      %v293 = vld [vmem:[%s242 + $0x14] sm:$0x1]
      %v294 = vld [vmem:[%s242 + $0x20] sm:$0x1]
      %v295 = vld [vmem:[%s242 + $0x2c] sm:$0x1]
      %v296 = vld [vmem:[%s242 + $0x38] sm:$0x1]
      %v297 = vld [vmem:[%s242 + $0x44] sm:$0x1]
      %v298 = vld [vmem:[%s242 + $0x50] sm:$0x1]
      %v299 = vld [vmem:[%s242 + $0x5c] sm:$0x1]
      %v300 = vunpack.c.l.bf16 %v292
      %v301 = vunpack.c.l.bf16 %v293
      %v302 = vunpack.c.l.bf16 %v294
      %v303 = vunpack.c.l.bf16 %v295
      %v304 = vunpack.c.l.bf16 %v296
      %v305 = vunpack.c.l.bf16 %v297
      %v306 = vunpack.c.l.bf16 %v298
      %v307 = vunpack.c.l.bf16 %v299
      %v308 = vperm.slane %v234, 1
      %v309 = vmul.f32 %v259, %v308
      %v310 = vmul.f32 %v260, %v308
      %v311 = vmul.f32 %v300, %v308
      %v312 = vmul.f32 %v261, %v308
      %v313 = vmul.f32 %v262, %v308
      %v314 = vmul.f32 %v301, %v308
      %v315 = vmul.f32 %v263, %v308
      %v316 = vmul.f32 %v264, %v308
      %v317 = vmul.f32 %v302, %v308
      %v318 = vmul.f32 %v265, %v308
      %v319 = vmul.f32 %v266, %v308
      %v320 = vmul.f32 %v303, %v308
      %v321 = vmul.f32 %v267, %v308
      %v322 = vmul.f32 %v268, %v308
      %v323 = vmul.f32 %v304, %v308
      %v324 = vmul.f32 %v269, %v308
      %v325 = vmul.f32 %v270, %v308
      %v326 = vmul.f32 %v305, %v308
      %v327 = vmul.f32 %v271, %v308
      %v328 = vmul.f32 %v272, %v308
      %v329 = vmul.f32 %v306, %v308
      %v330 = vmul.f32 %v273, %v308
      %v331 = vmul.f32 %v274, %v308
      %v332 = vmul.f32 %v307, %v308
      %v333 = vld [vmem:[%s242] sm:$0xe]
      %v334 = vld [vmem:[%s242 + $0xc] sm:$0xe]
      %v335 = vld [vmem:[%s242 + $0x18] sm:$0xe]
      %v336 = vld [vmem:[%s242 + $0x24] sm:$0xe]
      %v337 = vld [vmem:[%s242 + $0x30] sm:$0xe]
      %v338 = vld [vmem:[%s242 + $0x3c] sm:$0xe]
      %v339 = vld [vmem:[%s242 + $0x48] sm:$0xe]
      %v340 = vld [vmem:[%s242 + $0x54] sm:$0xe]
      %v341 = vunpack.c.l.bf16 %v333
      %v342 = vunpack.c.l.bf16 %v334
      %v343 = vunpack.c.l.bf16 %v335
      %v344 = vunpack.c.l.bf16 %v336
      %v345 = vunpack.c.l.bf16 %v337
      %v346 = vunpack.c.l.bf16 %v338
      %v347 = vunpack.c.l.bf16 %v339
      %v348 = vunpack.c.l.bf16 %v340
      %v349 = vperm.slane %v234, 2
      %v350 = vmul.f32 %v341, %v349
      %v351 = vmul.f32 %v260, %v349
      %v352 = vmul.f32 %v300, %v349
      %v353 = vmul.f32 %v342, %v349
      %v354 = vmul.f32 %v262, %v349
      %v355 = vmul.f32 %v301, %v349
      %v356 = vmul.f32 %v343, %v349
      %v357 = vmul.f32 %v264, %v349
      %v358 = vmul.f32 %v302, %v349
      %v359 = vmul.f32 %v344, %v349
      %v360 = vmul.f32 %v266, %v349
      %v361 = vmul.f32 %v303, %v349
      %v362 = vmul.f32 %v345, %v349
      %v363 = vmul.f32 %v268, %v349
      %v364 = vmul.f32 %v304, %v349
      %v365 = vmul.f32 %v346, %v349
      %v366 = vmul.f32 %v270, %v349
      %v367 = vmul.f32 %v305, %v349
      %v368 = vmul.f32 %v347, %v349
      %v369 = vmul.f32 %v272, %v349
      %v370 = vmul.f32 %v306, %v349
      %v371 = vmul.f32 %v348, %v349
      %v372 = vmul.f32 %v274, %v349
      %v373 = vmul.f32 %v307, %v349
      %s374 = sadd.s32 0, 1
      %s375 = smul.u32 %s374, 3
      %s376 = smul.addr %s375, 4
      %s377 = scalar_lea.vmem %s225, %s376
      %v378 = vld [vmem:[%s377] sm:$0xf]
      %v379 = vld [vmem:[%s377 + $0x4] sm:$0xf]
      %v380 = vld [vmem:[%s377 + $0xc] sm:$0xf]
      %v381 = vld [vmem:[%s377 + $0x10] sm:$0xf]
      %v382 = vld [vmem:[%s377 + $0x18] sm:$0xf]
      %v383 = vld [vmem:[%s377 + $0x1c] sm:$0xf]
      %v384 = vld [vmem:[%s377 + $0x24] sm:$0xf]
      %v385 = vld [vmem:[%s377 + $0x28] sm:$0xf]
      %v386 = vld [vmem:[%s377 + $0x30] sm:$0xf]
      %v387 = vld [vmem:[%s377 + $0x34] sm:$0xf]
      %v388 = vld [vmem:[%s377 + $0x3c] sm:$0xf]
      %v389 = vld [vmem:[%s377 + $0x40] sm:$0xf]
      %v390 = vld [vmem:[%s377 + $0x48] sm:$0xf]
      %v391 = vld [vmem:[%s377 + $0x4c] sm:$0xf]
      %v392 = vld [vmem:[%s377 + $0x54] sm:$0xf]
      %v393 = vld [vmem:[%s377 + $0x58] sm:$0xf]
      %v394 = vunpack.c.l.bf16 %v378
      %v395 = vunpack.c.l.bf16 %v379
      %v396 = vunpack.c.l.bf16 %v380
      %v397 = vunpack.c.l.bf16 %v381
      %v398 = vunpack.c.l.bf16 %v382
      %v399 = vunpack.c.l.bf16 %v383
      %v400 = vunpack.c.l.bf16 %v384
      %v401 = vunpack.c.l.bf16 %v385
      %v402 = vunpack.c.l.bf16 %v386
      %v403 = vunpack.c.l.bf16 %v387
      %v404 = vunpack.c.l.bf16 %v388
      %v405 = vunpack.c.l.bf16 %v389
      %v406 = vunpack.c.l.bf16 %v390
      %v407 = vunpack.c.l.bf16 %v391
      %v408 = vunpack.c.l.bf16 %v392
      %v409 = vunpack.c.l.bf16 %v393
      %v410 = vperm.slane %v234, 3
      %v411 = vmul.f32 %v394, %v410
      %v412 = vmul.f32 %v395, %v410
      %v413 = vmul.f32 %v396, %v410
      %v414 = vmul.f32 %v397, %v410
      %v415 = vmul.f32 %v398, %v410
      %v416 = vmul.f32 %v399, %v410
      %v417 = vmul.f32 %v400, %v410
      %v418 = vmul.f32 %v401, %v410
      %v419 = vmul.f32 %v402, %v410
      %v420 = vmul.f32 %v403, %v410
      %v421 = vmul.f32 %v404, %v410
      %v422 = vmul.f32 %v405, %v410
      %v423 = vmul.f32 %v406, %v410
      %v424 = vmul.f32 %v407, %v410
      %v425 = vmul.f32 %v408, %v410
      %v426 = vmul.f32 %v409, %v410
      %v427 = vld [vmem:[%s377 + $0x8] sm:$0x1]
      %v428 = vld [vmem:[%s377 + $0x14] sm:$0x1]
      %v429 = vld [vmem:[%s377 + $0x20] sm:$0x1]
      %v430 = vld [vmem:[%s377 + $0x2c] sm:$0x1]
      %v431 = vld [vmem:[%s377 + $0x38] sm:$0x1]
      %v432 = vld [vmem:[%s377 + $0x44] sm:$0x1]
      %v433 = vld [vmem:[%s377 + $0x50] sm:$0x1]
      %v434 = vld [vmem:[%s377 + $0x5c] sm:$0x1]
      %v435 = vunpack.c.l.bf16 %v427
      %v436 = vunpack.c.l.bf16 %v428
      %v437 = vunpack.c.l.bf16 %v429
      %v438 = vunpack.c.l.bf16 %v430
      %v439 = vunpack.c.l.bf16 %v431
      %v440 = vunpack.c.l.bf16 %v432
      %v441 = vunpack.c.l.bf16 %v433
      %v442 = vunpack.c.l.bf16 %v434
      %v443 = vperm.slane %v234, 4
      %v444 = vmul.f32 %v394, %v443
      %v445 = vmul.f32 %v395, %v443
      %v446 = vmul.f32 %v435, %v443
      %v447 = vmul.f32 %v396, %v443
      %v448 = vmul.f32 %v397, %v443
      %v449 = vmul.f32 %v436, %v443
      %v450 = vmul.f32 %v398, %v443
      %v451 = vmul.f32 %v399, %v443
      %v452 = vmul.f32 %v437, %v443
      %v453 = vmul.f32 %v400, %v443
      %v454 = vmul.f32 %v401, %v443
      %v455 = vmul.f32 %v438, %v443
      %v456 = vmul.f32 %v402, %v443
      %v457 = vmul.f32 %v403, %v443
      %v458 = vmul.f32 %v439, %v443
      %v459 = vmul.f32 %v404, %v443
      %v460 = vmul.f32 %v405, %v443
      %v461 = vmul.f32 %v440, %v443
      %v462 = vmul.f32 %v406, %v443
      %v463 = vmul.f32 %v407, %v443
      %v464 = vmul.f32 %v441, %v443
      %v465 = vmul.f32 %v408, %v443
      %v466 = vmul.f32 %v409, %v443
      %v467 = vmul.f32 %v442, %v443
      %v468 = vld [vmem:[%s377] sm:$0xe]
      %v469 = vld [vmem:[%s377 + $0xc] sm:$0xe]
      %v470 = vld [vmem:[%s377 + $0x18] sm:$0xe]
      %v471 = vld [vmem:[%s377 + $0x24] sm:$0xe]
      %v472 = vld [vmem:[%s377 + $0x30] sm:$0xe]
      %v473 = vld [vmem:[%s377 + $0x3c] sm:$0xe]
      %v474 = vld [vmem:[%s377 + $0x48] sm:$0xe]
      %v475 = vld [vmem:[%s377 + $0x54] sm:$0xe]
      %v476 = vunpack.c.l.bf16 %v468
      %v477 = vunpack.c.l.bf16 %v469
      %v478 = vunpack.c.l.bf16 %v470
      %v479 = vunpack.c.l.bf16 %v471
      %v480 = vunpack.c.l.bf16 %v472
      %v481 = vunpack.c.l.bf16 %v473
      %v482 = vunpack.c.l.bf16 %v474
      %v483 = vunpack.c.l.bf16 %v475
      %v484 = vperm.slane %v234, 5
      %v485 = vmul.f32 %v476, %v484
      %v486 = vmul.f32 %v395, %v484
      %v487 = vmul.f32 %v435, %v484
      %v488 = vmul.f32 %v477, %v484
      %v489 = vmul.f32 %v397, %v484
      %v490 = vmul.f32 %v436, %v484
      %v491 = vmul.f32 %v478, %v484
      %v492 = vmul.f32 %v399, %v484
      %v493 = vmul.f32 %v437, %v484
      %v494 = vmul.f32 %v479, %v484
      %v495 = vmul.f32 %v401, %v484
      %v496 = vmul.f32 %v438, %v484
      %v497 = vmul.f32 %v480, %v484
      %v498 = vmul.f32 %v403, %v484
      %v499 = vmul.f32 %v439, %v484
      %v500 = vmul.f32 %v481, %v484
      %v501 = vmul.f32 %v405, %v484
      %v502 = vmul.f32 %v440, %v484
      %v503 = vmul.f32 %v482, %v484
      %v504 = vmul.f32 %v407, %v484
      %v505 = vmul.f32 %v441, %v484
      %v506 = vmul.f32 %v483, %v484
      %v507 = vmul.f32 %v409, %v484
      %v508 = vmul.f32 %v442, %v484
      %s509 = sadd.s32 0, 2
      %s510 = smul.u32 %s509, 3
      %s511 = smul.addr %s510, 4
      %s512 = scalar_lea.vmem %s225, %s511
      %v513 = vld [vmem:[%s512] sm:$0xf]
      %v514 = vld [vmem:[%s512 + $0x4] sm:$0xf]
      %v515 = vld [vmem:[%s512 + $0xc] sm:$0xf]
      %v516 = vld [vmem:[%s512 + $0x10] sm:$0xf]
      %v517 = vld [vmem:[%s512 + $0x18] sm:$0xf]
      %v518 = vld [vmem:[%s512 + $0x1c] sm:$0xf]
      %v519 = vld [vmem:[%s512 + $0x24] sm:$0xf]
      %v520 = vld [vmem:[%s512 + $0x28] sm:$0xf]
      %v521 = vld [vmem:[%s512 + $0x30] sm:$0xf]
      %v522 = vld [vmem:[%s512 + $0x34] sm:$0xf]
      %v523 = vld [vmem:[%s512 + $0x3c] sm:$0xf]
      %v524 = vld [vmem:[%s512 + $0x40] sm:$0xf]
      %v525 = vld [vmem:[%s512 + $0x48] sm:$0xf]
      %v526 = vld [vmem:[%s512 + $0x4c] sm:$0xf]
      %v527 = vld [vmem:[%s512 + $0x54] sm:$0xf]
      %v528 = vld [vmem:[%s512 + $0x58] sm:$0xf]
      %v529 = vunpack.c.l.bf16 %v513
      %v530 = vunpack.c.l.bf16 %v514
      %v531 = vunpack.c.l.bf16 %v515
      %v532 = vunpack.c.l.bf16 %v516
      %v533 = vunpack.c.l.bf16 %v517
      %v534 = vunpack.c.l.bf16 %v518
      %v535 = vunpack.c.l.bf16 %v519
      %v536 = vunpack.c.l.bf16 %v520
      %v537 = vunpack.c.l.bf16 %v521
      %v538 = vunpack.c.l.bf16 %v522
      %v539 = vunpack.c.l.bf16 %v523
      %v540 = vunpack.c.l.bf16 %v524
      %v541 = vunpack.c.l.bf16 %v525
      %v542 = vunpack.c.l.bf16 %v526
      %v543 = vunpack.c.l.bf16 %v527
      %v544 = vunpack.c.l.bf16 %v528
      %v545 = vperm.slane %v234, 6
      %v546 = vmul.f32 %v529, %v545
      %v547 = vmul.f32 %v530, %v545
      %v548 = vmul.f32 %v531, %v545
      %v549 = vmul.f32 %v532, %v545
      %v550 = vmul.f32 %v533, %v545
      %v551 = vmul.f32 %v534, %v545
      %v552 = vmul.f32 %v535, %v545
      %v553 = vmul.f32 %v536, %v545
      %v554 = vmul.f32 %v537, %v545
      %v555 = vmul.f32 %v538, %v545
      %v556 = vmul.f32 %v539, %v545
      %v557 = vmul.f32 %v540, %v545
      %v558 = vmul.f32 %v541, %v545
      %v559 = vmul.f32 %v542, %v545
      %v560 = vmul.f32 %v543, %v545
      %v561 = vmul.f32 %v544, %v545
      %v562 = vld [vmem:[%s512 + $0x8] sm:$0x1]
      %v563 = vld [vmem:[%s512 + $0x14] sm:$0x1]
      %v564 = vld [vmem:[%s512 + $0x20] sm:$0x1]
      %v565 = vld [vmem:[%s512 + $0x2c] sm:$0x1]
      %v566 = vld [vmem:[%s512 + $0x38] sm:$0x1]
      %v567 = vld [vmem:[%s512 + $0x44] sm:$0x1]
      %v568 = vld [vmem:[%s512 + $0x50] sm:$0x1]
      %v569 = vld [vmem:[%s512 + $0x5c] sm:$0x1]
      %v570 = vunpack.c.l.bf16 %v562
      %v571 = vunpack.c.l.bf16 %v563
      %v572 = vunpack.c.l.bf16 %v564
      %v573 = vunpack.c.l.bf16 %v565
      %v574 = vunpack.c.l.bf16 %v566
      %v575 = vunpack.c.l.bf16 %v567
      %v576 = vunpack.c.l.bf16 %v568
      %v577 = vunpack.c.l.bf16 %v569
      %v578 = vperm.slane %v234, 7
      %v579 = vmul.f32 %v529, %v578
      %v580 = vmul.f32 %v530, %v578
      %v581 = vmul.f32 %v570, %v578
      %v582 = vmul.f32 %v531, %v578
      %v583 = vmul.f32 %v532, %v578
      %v584 = vmul.f32 %v571, %v578
      %v585 = vmul.f32 %v533, %v578
      %v586 = vmul.f32 %v534, %v578
      %v587 = vmul.f32 %v572, %v578
      %v588 = vmul.f32 %v535, %v578
      %v589 = vmul.f32 %v536, %v578
      %v590 = vmul.f32 %v573, %v578
      %v591 = vmul.f32 %v537, %v578
      %v592 = vmul.f32 %v538, %v578
      %v593 = vmul.f32 %v574, %v578
      %v594 = vmul.f32 %v539, %v578
      %v595 = vmul.f32 %v540, %v578
      %v596 = vmul.f32 %v575, %v578
      %v597 = vmul.f32 %v541, %v578
      %v598 = vmul.f32 %v542, %v578
      %v599 = vmul.f32 %v576, %v578
      %v600 = vmul.f32 %v543, %v578
      %v601 = vmul.f32 %v544, %v578
      %v602 = vmul.f32 %v577, %v578
      %v603 = vld [vmem:[%s512] sm:$0xe]
      %v604 = vld [vmem:[%s512 + $0xc] sm:$0xe]
      %v605 = vld [vmem:[%s512 + $0x18] sm:$0xe]
      %v606 = vld [vmem:[%s512 + $0x24] sm:$0xe]
      %v607 = vld [vmem:[%s512 + $0x30] sm:$0xe]
      %v608 = vld [vmem:[%s512 + $0x3c] sm:$0xe]
      %v609 = vld [vmem:[%s512 + $0x48] sm:$0xe]
      %v610 = vld [vmem:[%s512 + $0x54] sm:$0xe]
      %v611 = vunpack.c.l.bf16 %v603
      %v612 = vunpack.c.l.bf16 %v604
      %v613 = vunpack.c.l.bf16 %v605
      %v614 = vunpack.c.l.bf16 %v606
      %v615 = vunpack.c.l.bf16 %v607
      %v616 = vunpack.c.l.bf16 %v608
      %v617 = vunpack.c.l.bf16 %v609
      %v618 = vunpack.c.l.bf16 %v610
      %v619 = vperm.slane %v235, 0
      %v620 = vmul.f32 %v611, %v619
      %v621 = vmul.f32 %v530, %v619
      %v622 = vmul.f32 %v570, %v619
      %v623 = vmul.f32 %v612, %v619
      %v624 = vmul.f32 %v532, %v619
      %v625 = vmul.f32 %v571, %v619
      %v626 = vmul.f32 %v613, %v619
      %v627 = vmul.f32 %v534, %v619
      %v628 = vmul.f32 %v572, %v619
      %v629 = vmul.f32 %v614, %v619
      %v630 = vmul.f32 %v536, %v619
      %v631 = vmul.f32 %v573, %v619
      %v632 = vmul.f32 %v615, %v619
      %v633 = vmul.f32 %v538, %v619
      %v634 = vmul.f32 %v574, %v619
      %v635 = vmul.f32 %v616, %v619
      %v636 = vmul.f32 %v540, %v619
      %v637 = vmul.f32 %v575, %v619
      %v638 = vmul.f32 %v617, %v619
      %v639 = vmul.f32 %v542, %v619
      %v640 = vmul.f32 %v576, %v619
      %v641 = vmul.f32 %v618, %v619
      %v642 = vmul.f32 %v544, %v619
      %v643 = vmul.f32 %v577, %v619
      %vm668 = vcmask 1046528
      %v669 = vrot.slane %v309, 1
      %v670 = vrot.slane %v310, 1
      %v671 = vsel %vm668, %v669, %v670
      %v672 = vrot.slane %v311, 1
      %v673 = vsel %vm668, %v670, %v672
      %v674 = vrot.slane %v312, 1
      %v675 = vrot.slane %v313, 1
      %v676 = vsel %vm668, %v674, %v675
      %v677 = vrot.slane %v314, 1
      %v678 = vsel %vm668, %v675, %v677
      %v679 = vrot.slane %v315, 1
      %v680 = vrot.slane %v316, 1
      %v681 = vsel %vm668, %v679, %v680
      %v682 = vrot.slane %v317, 1
      %v683 = vsel %vm668, %v680, %v682
      %v684 = vrot.slane %v318, 1
      %v685 = vrot.slane %v319, 1
      %v686 = vsel %vm668, %v684, %v685
      %v687 = vrot.slane %v320, 1
      %v688 = vsel %vm668, %v685, %v687
      %v689 = vrot.slane %v321, 1
      %v690 = vrot.slane %v322, 1
      %v691 = vsel %vm668, %v689, %v690
      %v692 = vrot.slane %v323, 1
      %v693 = vsel %vm668, %v690, %v692
      %v694 = vrot.slane %v324, 1
      %v695 = vrot.slane %v325, 1
      %v696 = vsel %vm668, %v694, %v695
      %v697 = vrot.slane %v326, 1
      %v698 = vsel %vm668, %v695, %v697
      %v699 = vrot.slane %v327, 1
      %v700 = vrot.slane %v328, 1
      %v701 = vsel %vm668, %v699, %v700
      %v702 = vrot.slane %v329, 1
      %v703 = vsel %vm668, %v700, %v702
      %v704 = vrot.slane %v330, 1
      %v705 = vrot.slane %v331, 1
      %v706 = vsel %vm668, %v704, %v705
      %v707 = vrot.slane %v332, 1
      %v708 = vsel %vm668, %v705, %v707
      %v725 = vadd.f32 %v276, %v671
      %v726 = vadd.f32 %v277, %v673
      %v727 = vadd.f32 %v278, %v676
      %v728 = vadd.f32 %v279, %v678
      %v729 = vadd.f32 %v280, %v681
      %v730 = vadd.f32 %v281, %v683
      %v731 = vadd.f32 %v282, %v686
      %v732 = vadd.f32 %v283, %v688
      %v733 = vadd.f32 %v284, %v691
      %v734 = vadd.f32 %v285, %v693
      %v735 = vadd.f32 %v286, %v696
      %v736 = vadd.f32 %v287, %v698
      %v737 = vadd.f32 %v288, %v701
      %v738 = vadd.f32 %v289, %v703
      %v739 = vadd.f32 %v290, %v706
      %v740 = vadd.f32 %v291, %v708
      %vm757 = vcmask 1041408
      %v758 = vrot.slane %v411, 6
      %v759 = vrot.slane %v412, 6
      %v760 = vsel %vm757, %v758, %v759
      %v761 = vrot.slane %v413, 6
      %v762 = vrot.slane %v414, 6
      %v763 = vsel %vm757, %v761, %v762
      %v764 = vrot.slane %v415, 6
      %v765 = vrot.slane %v416, 6
      %v766 = vsel %vm757, %v764, %v765
      %v767 = vrot.slane %v417, 6
      %v768 = vrot.slane %v418, 6
      %v769 = vsel %vm757, %v767, %v768
      %v770 = vrot.slane %v419, 6
      %v771 = vrot.slane %v420, 6
      %v772 = vsel %vm757, %v770, %v771
      %v773 = vrot.slane %v421, 6
      %v774 = vrot.slane %v422, 6
      %v775 = vsel %vm757, %v773, %v774
      %v776 = vrot.slane %v423, 6
      %v777 = vrot.slane %v424, 6
      %v778 = vsel %vm757, %v776, %v777
      %v779 = vrot.slane %v425, 6
      %v780 = vrot.slane %v426, 6
      %v781 = vsel %vm757, %v779, %v780
      %v806 = vadd.f32 %v350, %v758
      %v807 = vadd.f32 %v351, %v760
      %v808 = vadd.f32 %v352, %v759
      %v809 = vadd.f32 %v353, %v761
      %v810 = vadd.f32 %v354, %v763
      %v811 = vadd.f32 %v355, %v762
      %v812 = vadd.f32 %v356, %v764
      %v813 = vadd.f32 %v357, %v766
      %v814 = vadd.f32 %v358, %v765
      %v815 = vadd.f32 %v359, %v767
      %v816 = vadd.f32 %v360, %v769
      %v817 = vadd.f32 %v361, %v768
      %v818 = vadd.f32 %v362, %v770
      %v819 = vadd.f32 %v363, %v772
      %v820 = vadd.f32 %v364, %v771
      %v821 = vadd.f32 %v365, %v773
      %v822 = vadd.f32 %v366, %v775
      %v823 = vadd.f32 %v367, %v774
      %v824 = vadd.f32 %v368, %v776
      %v825 = vadd.f32 %v369, %v778
      %v826 = vadd.f32 %v370, %v777
      %v827 = vadd.f32 %v371, %v779
      %v828 = vadd.f32 %v372, %v781
      %v829 = vadd.f32 %v373, %v780
      %v854 = vrot.slane %v485, 1
      %v855 = vrot.slane %v486, 1
      %v856 = vsel %vm668, %v854, %v855
      %v857 = vrot.slane %v487, 1
      %v858 = vsel %vm668, %v855, %v857
      %v859 = vrot.slane %v488, 1
      %v860 = vrot.slane %v489, 1
      %v861 = vsel %vm668, %v859, %v860
      %v862 = vrot.slane %v490, 1
      %v863 = vsel %vm668, %v860, %v862
      %v864 = vrot.slane %v491, 1
      %v865 = vrot.slane %v492, 1
      %v866 = vsel %vm668, %v864, %v865
      %v867 = vrot.slane %v493, 1
      %v868 = vsel %vm668, %v865, %v867
      %v869 = vrot.slane %v494, 1
      %v870 = vrot.slane %v495, 1
      %v871 = vsel %vm668, %v869, %v870
      %v872 = vrot.slane %v496, 1
      %v873 = vsel %vm668, %v870, %v872
      %v874 = vrot.slane %v497, 1
      %v875 = vrot.slane %v498, 1
      %v876 = vsel %vm668, %v874, %v875
      %v877 = vrot.slane %v499, 1
      %v878 = vsel %vm668, %v875, %v877
      %v879 = vrot.slane %v500, 1
      %v880 = vrot.slane %v501, 1
      %v881 = vsel %vm668, %v879, %v880
      %v882 = vrot.slane %v502, 1
      %v883 = vsel %vm668, %v880, %v882
      %v884 = vrot.slane %v503, 1
      %v885 = vrot.slane %v504, 1
      %v886 = vsel %vm668, %v884, %v885
      %v887 = vrot.slane %v505, 1
      %v888 = vsel %vm668, %v885, %v887
      %v889 = vrot.slane %v506, 1
      %v890 = vrot.slane %v507, 1
      %v891 = vsel %vm668, %v889, %v890
      %v892 = vrot.slane %v508, 1
      %v893 = vsel %vm668, %v890, %v892
      %v918 = vadd.f32 %v444, %v856
      %v919 = vadd.f32 %v445, %v858
      %v920 = vadd.f32 %v446, %v857
      %v921 = vadd.f32 %v447, %v861
      %v922 = vadd.f32 %v448, %v863
      %v923 = vadd.f32 %v449, %v862
      %v924 = vadd.f32 %v450, %v866
      %v925 = vadd.f32 %v451, %v868
      %v926 = vadd.f32 %v452, %v867
      %v927 = vadd.f32 %v453, %v871
      %v928 = vadd.f32 %v454, %v873
      %v929 = vadd.f32 %v455, %v872
      %v930 = vadd.f32 %v456, %v876
      %v931 = vadd.f32 %v457, %v878
      %v932 = vadd.f32 %v458, %v877
      %v933 = vadd.f32 %v459, %v881
      %v934 = vadd.f32 %v460, %v883
      %v935 = vadd.f32 %v461, %v882
      %v936 = vadd.f32 %v462, %v886
      %v937 = vadd.f32 %v463, %v888
      %v938 = vadd.f32 %v464, %v887
      %v939 = vadd.f32 %v465, %v891
      %v940 = vadd.f32 %v466, %v893
      %v941 = vadd.f32 %v467, %v892
      %v966 = vrot.slane %v579, 1
      %v967 = vrot.slane %v580, 1
      %v968 = vsel %vm668, %v966, %v967
      %v969 = vrot.slane %v581, 1
      %v970 = vsel %vm668, %v967, %v969
      %v971 = vrot.slane %v582, 1
      %v972 = vrot.slane %v583, 1
      %v973 = vsel %vm668, %v971, %v972
      %v974 = vrot.slane %v584, 1
      %v975 = vsel %vm668, %v972, %v974
      %v976 = vrot.slane %v585, 1
      %v977 = vrot.slane %v586, 1
      %v978 = vsel %vm668, %v976, %v977
      %v979 = vrot.slane %v587, 1
      %v980 = vsel %vm668, %v977, %v979
      %v981 = vrot.slane %v588, 1
      %v982 = vrot.slane %v589, 1
      %v983 = vsel %vm668, %v981, %v982
      %v984 = vrot.slane %v590, 1
      %v985 = vsel %vm668, %v982, %v984
      %v986 = vrot.slane %v591, 1
      %v987 = vrot.slane %v592, 1
      %v988 = vsel %vm668, %v986, %v987
      %v989 = vrot.slane %v593, 1
      %v990 = vsel %vm668, %v987, %v989
      %v991 = vrot.slane %v594, 1
      %v992 = vrot.slane %v595, 1
      %v993 = vsel %vm668, %v991, %v992
      %v994 = vrot.slane %v596, 1
      %v995 = vsel %vm668, %v992, %v994
      %v996 = vrot.slane %v597, 1
      %v997 = vrot.slane %v598, 1
      %v998 = vsel %vm668, %v996, %v997
      %v999 = vrot.slane %v599, 1
      %v1000 = vsel %vm668, %v997, %v999
      %v1001 = vrot.slane %v600, 1
      %v1002 = vrot.slane %v601, 1
      %v1003 = vsel %vm668, %v1001, %v1002
      %v1004 = vrot.slane %v602, 1
      %v1005 = vsel %vm668, %v1002, %v1004
      %v1022 = vadd.f32 %v546, %v968
      %v1023 = vadd.f32 %v547, %v970
      %v1024 = vadd.f32 %v548, %v973
      %v1025 = vadd.f32 %v549, %v975
      %v1026 = vadd.f32 %v550, %v978
      %v1027 = vadd.f32 %v551, %v980
      %v1028 = vadd.f32 %v552, %v983
      %v1029 = vadd.f32 %v553, %v985
      %v1030 = vadd.f32 %v554, %v988
      %v1031 = vadd.f32 %v555, %v990
      %v1032 = vadd.f32 %v556, %v993
      %v1033 = vadd.f32 %v557, %v995
      %v1034 = vadd.f32 %v558, %v998
      %v1035 = vadd.f32 %v559, %v1000
      %v1036 = vadd.f32 %v560, %v1003
      %v1037 = vadd.f32 %v561, %v1005
      %vm1062 = vcmask 1045504
      %v1063 = vrot.slane %v806, 2
      %v1064 = vrot.slane %v807, 2
      %v1065 = vsel %vm1062, %v1063, %v1064
      %v1066 = vrot.slane %v808, 2
      %v1067 = vsel %vm1062, %v1064, %v1066
      %v1068 = vrot.slane %v809, 2
      %v1069 = vrot.slane %v810, 2
      %v1070 = vsel %vm1062, %v1068, %v1069
      %v1071 = vrot.slane %v811, 2
      %v1072 = vsel %vm1062, %v1069, %v1071
      %v1073 = vrot.slane %v812, 2
      %v1074 = vrot.slane %v813, 2
      %v1075 = vsel %vm1062, %v1073, %v1074
      %v1076 = vrot.slane %v814, 2
      %v1077 = vsel %vm1062, %v1074, %v1076
      %v1078 = vrot.slane %v815, 2
      %v1079 = vrot.slane %v816, 2
      %v1080 = vsel %vm1062, %v1078, %v1079
      %v1081 = vrot.slane %v817, 2
      %v1082 = vsel %vm1062, %v1079, %v1081
      %v1083 = vrot.slane %v818, 2
      %v1084 = vrot.slane %v819, 2
      %v1085 = vsel %vm1062, %v1083, %v1084
      %v1086 = vrot.slane %v820, 2
      %v1087 = vsel %vm1062, %v1084, %v1086
      %v1088 = vrot.slane %v821, 2
      %v1089 = vrot.slane %v822, 2
      %v1090 = vsel %vm1062, %v1088, %v1089
      %v1091 = vrot.slane %v823, 2
      %v1092 = vsel %vm1062, %v1089, %v1091
      %v1093 = vrot.slane %v824, 2
      %v1094 = vrot.slane %v825, 2
      %v1095 = vsel %vm1062, %v1093, %v1094
      %v1096 = vrot.slane %v826, 2
      %v1097 = vsel %vm1062, %v1094, %v1096
      %v1098 = vrot.slane %v827, 2
      %v1099 = vrot.slane %v828, 2
      %v1100 = vsel %vm1062, %v1098, %v1099
      %v1101 = vrot.slane %v829, 2
      %v1102 = vsel %vm1062, %v1099, %v1101
      %v1119 = vadd.f32 %v725, %v1065
      %v1120 = vadd.f32 %v726, %v1067
      %v1121 = vadd.f32 %v727, %v1070
      %v1122 = vadd.f32 %v728, %v1072
      %v1123 = vadd.f32 %v729, %v1075
      %v1124 = vadd.f32 %v730, %v1077
      %v1125 = vadd.f32 %v731, %v1080
      %v1126 = vadd.f32 %v732, %v1082
      %v1127 = vadd.f32 %v733, %v1085
      %v1128 = vadd.f32 %v734, %v1087
      %v1129 = vadd.f32 %v735, %v1090
      %v1130 = vadd.f32 %v736, %v1092
      %v1131 = vadd.f32 %v737, %v1095
      %v1132 = vadd.f32 %v738, %v1097
      %v1133 = vadd.f32 %v739, %v1100
      %v1134 = vadd.f32 %v740, %v1102
      %vm1151 = vcmask 1040384
      %v1152 = vrot.slane %v1022, 7
      %v1153 = vrot.slane %v1023, 7
      %v1154 = vsel %vm1151, %v1152, %v1153
      %v1155 = vrot.slane %v1024, 7
      %v1156 = vrot.slane %v1025, 7
      %v1157 = vsel %vm1151, %v1155, %v1156
      %v1158 = vrot.slane %v1026, 7
      %v1159 = vrot.slane %v1027, 7
      %v1160 = vsel %vm1151, %v1158, %v1159
      %v1161 = vrot.slane %v1028, 7
      %v1162 = vrot.slane %v1029, 7
      %v1163 = vsel %vm1151, %v1161, %v1162
      %v1164 = vrot.slane %v1030, 7
      %v1165 = vrot.slane %v1031, 7
      %v1166 = vsel %vm1151, %v1164, %v1165
      %v1167 = vrot.slane %v1032, 7
      %v1168 = vrot.slane %v1033, 7
      %v1169 = vsel %vm1151, %v1167, %v1168
      %v1170 = vrot.slane %v1034, 7
      %v1171 = vrot.slane %v1035, 7
      %v1172 = vsel %vm1151, %v1170, %v1171
      %v1173 = vrot.slane %v1036, 7
      %v1174 = vrot.slane %v1037, 7
      %v1175 = vsel %vm1151, %v1173, %v1174
      %v1200 = vadd.f32 %v918, %v1152
      %v1201 = vadd.f32 %v919, %v1154
      %v1202 = vadd.f32 %v920, %v1153
      %v1203 = vadd.f32 %v921, %v1155
      %v1204 = vadd.f32 %v922, %v1157
      %v1205 = vadd.f32 %v923, %v1156
      %v1206 = vadd.f32 %v924, %v1158
      %v1207 = vadd.f32 %v925, %v1160
      %v1208 = vadd.f32 %v926, %v1159
      %v1209 = vadd.f32 %v927, %v1161
      %v1210 = vadd.f32 %v928, %v1163
      %v1211 = vadd.f32 %v929, %v1162
      %v1212 = vadd.f32 %v930, %v1164
      %v1213 = vadd.f32 %v931, %v1166
      %v1214 = vadd.f32 %v932, %v1165
      %v1215 = vadd.f32 %v933, %v1167
      %v1216 = vadd.f32 %v934, %v1169
      %v1217 = vadd.f32 %v935, %v1168
      %v1218 = vadd.f32 %v936, %v1170
      %v1219 = vadd.f32 %v937, %v1172
      %v1220 = vadd.f32 %v938, %v1171
      %v1221 = vadd.f32 %v939, %v1173
      %v1222 = vadd.f32 %v940, %v1175
      %v1223 = vadd.f32 %v941, %v1174
      %v1248 = vrot.slane %v1200, 1
      %v1249 = vrot.slane %v1201, 1
      %v1250 = vsel %vm668, %v1248, %v1249
      %v1251 = vrot.slane %v1202, 1
      %v1252 = vsel %vm668, %v1249, %v1251
      %v1253 = vrot.slane %v1203, 1
      %v1254 = vrot.slane %v1204, 1
      %v1255 = vsel %vm668, %v1253, %v1254
      %v1256 = vrot.slane %v1205, 1
      %v1257 = vsel %vm668, %v1254, %v1256
      %v1258 = vrot.slane %v1206, 1
      %v1259 = vrot.slane %v1207, 1
      %v1260 = vsel %vm668, %v1258, %v1259
      %v1261 = vrot.slane %v1208, 1
      %v1262 = vsel %vm668, %v1259, %v1261
      %v1263 = vrot.slane %v1209, 1
      %v1264 = vrot.slane %v1210, 1
      %v1265 = vsel %vm668, %v1263, %v1264
      %v1266 = vrot.slane %v1211, 1
      %v1267 = vsel %vm668, %v1264, %v1266
      %v1268 = vrot.slane %v1212, 1
      %v1269 = vrot.slane %v1213, 1
      %v1270 = vsel %vm668, %v1268, %v1269
      %v1271 = vrot.slane %v1214, 1
      %v1272 = vsel %vm668, %v1269, %v1271
      %v1273 = vrot.slane %v1215, 1
      %v1274 = vrot.slane %v1216, 1
      %v1275 = vsel %vm668, %v1273, %v1274
      %v1276 = vrot.slane %v1217, 1
      %v1277 = vsel %vm668, %v1274, %v1276
      %v1278 = vrot.slane %v1218, 1
      %v1279 = vrot.slane %v1219, 1
      %v1280 = vsel %vm668, %v1278, %v1279
      %v1281 = vrot.slane %v1220, 1
      %v1282 = vsel %vm668, %v1279, %v1281
      %v1283 = vrot.slane %v1221, 1
      %v1284 = vrot.slane %v1222, 1
      %v1285 = vsel %vm668, %v1283, %v1284
      %v1286 = vrot.slane %v1223, 1
      %v1287 = vsel %vm668, %v1284, %v1286
      %v1304 = vadd.f32 %v1119, %v1250
      %v1305 = vadd.f32 %v1120, %v1252
      %v1306 = vadd.f32 %v1121, %v1255
      %v1307 = vadd.f32 %v1122, %v1257
      %v1308 = vadd.f32 %v1123, %v1260
      %v1309 = vadd.f32 %v1124, %v1262
      %v1310 = vadd.f32 %v1125, %v1265
      %v1311 = vadd.f32 %v1126, %v1267
      %v1312 = vadd.f32 %v1127, %v1270
      %v1313 = vadd.f32 %v1128, %v1272
      %v1314 = vadd.f32 %v1129, %v1275
      %v1315 = vadd.f32 %v1130, %v1277
      %v1316 = vadd.f32 %v1131, %v1280
      %v1317 = vadd.f32 %v1132, %v1282
      %v1318 = vadd.f32 %v1133, %v1285
      %v1319 = vadd.f32 %v1134, %v1287
      %v1344 = vrot.slane %v620, 2
      %v1345 = vrot.slane %v621, 2
      %v1346 = vsel %vm1062, %v1344, %v1345
      %v1347 = vrot.slane %v622, 2
      %v1348 = vsel %vm1062, %v1345, %v1347
      %v1349 = vrot.slane %v623, 2
      %v1350 = vrot.slane %v624, 2
      %v1351 = vsel %vm1062, %v1349, %v1350
      %v1352 = vrot.slane %v625, 2
      %v1353 = vsel %vm1062, %v1350, %v1352
      %v1354 = vrot.slane %v626, 2
      %v1355 = vrot.slane %v627, 2
      %v1356 = vsel %vm1062, %v1354, %v1355
      %v1357 = vrot.slane %v628, 2
      %v1358 = vsel %vm1062, %v1355, %v1357
      %v1359 = vrot.slane %v629, 2
      %v1360 = vrot.slane %v630, 2
      %v1361 = vsel %vm1062, %v1359, %v1360
      %v1362 = vrot.slane %v631, 2
      %v1363 = vsel %vm1062, %v1360, %v1362
      %v1364 = vrot.slane %v632, 2
      %v1365 = vrot.slane %v633, 2
      %v1366 = vsel %vm1062, %v1364, %v1365
      %v1367 = vrot.slane %v634, 2
      %v1368 = vsel %vm1062, %v1365, %v1367
      %v1369 = vrot.slane %v635, 2
      %v1370 = vrot.slane %v636, 2
      %v1371 = vsel %vm1062, %v1369, %v1370
      %v1372 = vrot.slane %v637, 2
      %v1373 = vsel %vm1062, %v1370, %v1372
      %v1374 = vrot.slane %v638, 2
      %v1375 = vrot.slane %v639, 2
      %v1376 = vsel %vm1062, %v1374, %v1375
      %v1377 = vrot.slane %v640, 2
      %v1378 = vsel %vm1062, %v1375, %v1377
      %v1379 = vrot.slane %v641, 2
      %v1380 = vrot.slane %v642, 2
      %v1381 = vsel %vm1062, %v1379, %v1380
      %v1382 = vrot.slane %v643, 2
      %v1383 = vsel %vm1062, %v1380, %v1382
      %v1400 = vadd.f32 %v1304, %v1346
      %v1401 = vadd.f32 %v1305, %v1348
      %v1402 = vadd.f32 %v1306, %v1351
      %v1403 = vadd.f32 %v1307, %v1353
      %v1404 = vadd.f32 %v1308, %v1356
      %v1405 = vadd.f32 %v1309, %v1358
      %v1406 = vadd.f32 %v1310, %v1361
      %v1407 = vadd.f32 %v1311, %v1363
      %v1408 = vadd.f32 %v1312, %v1366
      %v1409 = vadd.f32 %v1313, %v1368
      %v1410 = vadd.f32 %v1314, %v1371
      %v1411 = vadd.f32 %v1315, %v1373
      %v1412 = vadd.f32 %v1316, %v1376
      %v1413 = vadd.f32 %v1317, %v1378
      %v1414 = vadd.f32 %v1318, %v1381
      %v1415 = vadd.f32 %v1319, %v1383
      %vm1416 = vcmask 261120
      %v1417 = vsel %vm1416, %v1400, 0.0
      %1418 = vadd.xlane.f32.xlu0 %v1417
      %v1419 = vpop.xlane.xlu0 %1418
      %v1420 = vsel %vm1416, %v1401, 0.0
      %1421 = vadd.xlane.f32.xlu0 %v1420
      %v1422 = vpop.xlane.xlu0 %1421
      %v1423 = vsel %vm1416, %v1402, 0.0
      %1424 = vadd.xlane.f32.xlu0 %v1423
      %v1425 = vpop.xlane.xlu0 %1424
      %v1426 = vsel %vm1416, %v1403, 0.0
      %1427 = vadd.xlane.f32.xlu0 %v1426
      %v1428 = vpop.xlane.xlu0 %1427
      %v1429 = vsel %vm1416, %v1404, 0.0
      %1430 = vadd.xlane.f32.xlu0 %v1429
      %v1431 = vpop.xlane.xlu0 %1430
      %v1432 = vsel %vm1416, %v1405, 0.0
      %1433 = vadd.xlane.f32.xlu0 %v1432
      %v1434 = vpop.xlane.xlu0 %1433
      %v1435 = vsel %vm1416, %v1406, 0.0
      %1436 = vadd.xlane.f32.xlu0 %v1435
      %v1437 = vpop.xlane.xlu0 %1436
      %v1438 = vsel %vm1416, %v1407, 0.0
      %1439 = vadd.xlane.f32.xlu0 %v1438
      %v1440 = vpop.xlane.xlu0 %1439
      %v1441 = vsel %vm1416, %v1408, 0.0
      %1442 = vadd.xlane.f32.xlu0 %v1441
      %v1443 = vpop.xlane.xlu0 %1442
      %v1444 = vsel %vm1416, %v1409, 0.0
      %1445 = vadd.xlane.f32.xlu0 %v1444
      %v1446 = vpop.xlane.xlu0 %1445
      %v1447 = vsel %vm1416, %v1410, 0.0
      %1448 = vadd.xlane.f32.xlu0 %v1447
      %v1449 = vpop.xlane.xlu0 %1448
      %v1450 = vsel %vm1416, %v1411, 0.0
      %1451 = vadd.xlane.f32.xlu0 %v1450
      %v1452 = vpop.xlane.xlu0 %1451
      %v1453 = vsel %vm1416, %v1412, 0.0
      %1454 = vadd.xlane.f32.xlu0 %v1453
      %v1455 = vpop.xlane.xlu0 %1454
      %v1456 = vsel %vm1416, %v1413, 0.0
      %1457 = vadd.xlane.f32.xlu0 %v1456
      %v1458 = vpop.xlane.xlu0 %1457
      %v1459 = vsel %vm1416, %v1414, 0.0
      %1460 = vadd.xlane.f32.xlu0 %v1459
      %v1461 = vpop.xlane.xlu0 %1460
      %v1462 = vsel %vm1416, %v1415, 0.0
      %1463 = vadd.xlane.f32.xlu0 %v1462
      %v1464 = vpop.xlane.xlu0 %1463
      %v1465 = vrcp.pop 32.0
      %v1466 = vmul.f32 32.0, %v1465
      %v1467 = vsub.f32 1.0, %v1466
      %v1468 = vmul.f32 %v1465, %v1467
      %v1469 = vadd.f32 %v1465, %v1468
      %vm1470 = vweird.f32 %v1465
      %v1471 = vsel %vm1470, %v1465, %v1469
      %v1472 = vmul.f32 %v1419, %v1471
      %v1473 = vmul.f32 %v1422, %v1471
      %v1474 = vmul.f32 %v1425, %v1471
      %v1475 = vmul.f32 %v1428, %v1471
      %v1476 = vmul.f32 %v1431, %v1471
      %v1477 = vmul.f32 %v1434, %v1471
      %v1478 = vmul.f32 %v1437, %v1471
      %v1479 = vmul.f32 %v1440, %v1471
      %v1480 = vmul.f32 %v1443, %v1471
      %v1481 = vmul.f32 %v1446, %v1471
      %v1482 = vmul.f32 %v1449, %v1471
      %v1483 = vmul.f32 %v1452, %v1471
      %v1484 = vmul.f32 %v1455, %v1471
      %v1485 = vmul.f32 %v1458, %v1471
      %v1486 = vmul.f32 %v1461, %v1471
      %v1487 = vmul.f32 %v1464, %v1471
      %v1488 = vsub.f32 %v1400, %v1472
      %v1489 = vsub.f32 %v1401, %v1473
      %v1490 = vsub.f32 %v1402, %v1474
      %v1491 = vsub.f32 %v1403, %v1475
      %v1492 = vsub.f32 %v1404, %v1476
      %v1493 = vsub.f32 %v1405, %v1477
      %v1494 = vsub.f32 %v1406, %v1478
      %v1495 = vsub.f32 %v1407, %v1479
      %v1496 = vsub.f32 %v1408, %v1480
      %v1497 = vsub.f32 %v1409, %v1481
      %v1498 = vsub.f32 %v1410, %v1482
      %v1499 = vsub.f32 %v1411, %v1483
      %v1500 = vsub.f32 %v1412, %v1484
      %v1501 = vsub.f32 %v1413, %v1485
      %v1502 = vsub.f32 %v1414, %v1486
      %v1503 = vsub.f32 %v1415, %v1487
      %v1504 = vmul.f32 %v1488, %v1488
      %v1505 = vmul.f32 %v1489, %v1489
      %v1506 = vmul.f32 %v1490, %v1490
      %v1507 = vmul.f32 %v1491, %v1491
      %v1508 = vmul.f32 %v1492, %v1492
      %v1509 = vmul.f32 %v1493, %v1493
      %v1510 = vmul.f32 %v1494, %v1494
      %v1511 = vmul.f32 %v1495, %v1495
      %v1512 = vmul.f32 %v1496, %v1496
      %v1513 = vmul.f32 %v1497, %v1497
      %v1514 = vmul.f32 %v1498, %v1498
      %v1515 = vmul.f32 %v1499, %v1499
      %v1516 = vmul.f32 %v1500, %v1500
      %v1517 = vmul.f32 %v1501, %v1501
      %v1518 = vmul.f32 %v1502, %v1502
      %v1519 = vmul.f32 %v1503, %v1503
      %v1520 = vsel %vm1416, %v1504, 0.0
      %1521 = vadd.xlane.f32.xlu0 %v1520
      %v1522 = vpop.xlane.xlu0 %1521
      %v1523 = vsel %vm1416, %v1505, 0.0
      %1524 = vadd.xlane.f32.xlu0 %v1523
      %v1525 = vpop.xlane.xlu0 %1524
      %v1526 = vsel %vm1416, %v1506, 0.0
      %1527 = vadd.xlane.f32.xlu0 %v1526
      %v1528 = vpop.xlane.xlu0 %1527
      %v1529 = vsel %vm1416, %v1507, 0.0
      %1530 = vadd.xlane.f32.xlu0 %v1529
      %v1531 = vpop.xlane.xlu0 %1530
      %v1532 = vsel %vm1416, %v1508, 0.0
      %1533 = vadd.xlane.f32.xlu0 %v1532
      %v1534 = vpop.xlane.xlu0 %1533
      %v1535 = vsel %vm1416, %v1509, 0.0
      %1536 = vadd.xlane.f32.xlu0 %v1535
      %v1537 = vpop.xlane.xlu0 %1536
      %v1538 = vsel %vm1416, %v1510, 0.0
      %1539 = vadd.xlane.f32.xlu0 %v1538
      %v1540 = vpop.xlane.xlu0 %1539
      %v1541 = vsel %vm1416, %v1511, 0.0
      %1542 = vadd.xlane.f32.xlu0 %v1541
      %v1543 = vpop.xlane.xlu0 %1542
      %v1544 = vsel %vm1416, %v1512, 0.0
      %1545 = vadd.xlane.f32.xlu0 %v1544
      %v1546 = vpop.xlane.xlu0 %1545
      %v1547 = vsel %vm1416, %v1513, 0.0
      %1548 = vadd.xlane.f32.xlu0 %v1547
      %v1549 = vpop.xlane.xlu0 %1548
      %v1550 = vsel %vm1416, %v1514, 0.0
      %1551 = vadd.xlane.f32.xlu0 %v1550
      %v1552 = vpop.xlane.xlu0 %1551
      %v1553 = vsel %vm1416, %v1515, 0.0
      %1554 = vadd.xlane.f32.xlu0 %v1553
      %v1555 = vpop.xlane.xlu0 %1554
      %v1556 = vsel %vm1416, %v1516, 0.0
      %1557 = vadd.xlane.f32.xlu0 %v1556
      %v1558 = vpop.xlane.xlu0 %1557
      %v1559 = vsel %vm1416, %v1517, 0.0
      %1560 = vadd.xlane.f32.xlu0 %v1559
      %v1561 = vpop.xlane.xlu0 %1560
      %v1562 = vsel %vm1416, %v1518, 0.0
      %1563 = vadd.xlane.f32.xlu0 %v1562
      %v1564 = vpop.xlane.xlu0 %1563
      %v1565 = vsel %vm1416, %v1519, 0.0
      %1566 = vadd.xlane.f32.xlu0 %v1565
      %v1567 = vpop.xlane.xlu0 %1566
      %v1568 = vmul.f32 %v1522, %v1471
      %v1569 = vmul.f32 %v1525, %v1471
      %v1570 = vmul.f32 %v1528, %v1471
      %v1571 = vmul.f32 %v1531, %v1471
      %v1572 = vmul.f32 %v1534, %v1471
      %v1573 = vmul.f32 %v1537, %v1471
      %v1574 = vmul.f32 %v1540, %v1471
      %v1575 = vmul.f32 %v1543, %v1471
      %v1576 = vmul.f32 %v1546, %v1471
      %v1577 = vmul.f32 %v1549, %v1471
      %v1578 = vmul.f32 %v1552, %v1471
      %v1579 = vmul.f32 %v1555, %v1471
      %v1580 = vmul.f32 %v1558, %v1471
      %v1581 = vmul.f32 %v1561, %v1471
      %v1582 = vmul.f32 %v1564, %v1471
      %v1583 = vmul.f32 %v1567, %v1471
      %v1584 = vadd.f32 %v1568, 1e-05
      %v1585 = vadd.f32 %v1569, 1e-05
      %v1586 = vadd.f32 %v1570, 1e-05
      %v1587 = vadd.f32 %v1571, 1e-05
      %v1588 = vadd.f32 %v1572, 1e-05
      %v1589 = vadd.f32 %v1573, 1e-05
      %v1590 = vadd.f32 %v1574, 1e-05
      %v1591 = vadd.f32 %v1575, 1e-05
      %v1592 = vadd.f32 %v1576, 1e-05
      %v1593 = vadd.f32 %v1577, 1e-05
      %v1594 = vadd.f32 %v1578, 1e-05
      %v1595 = vadd.f32 %v1579, 1e-05
      %v1596 = vadd.f32 %v1580, 1e-05
      %v1597 = vadd.f32 %v1581, 1e-05
      %v1598 = vadd.f32 %v1582, 1e-05
      %v1599 = vadd.f32 %v1583, 1e-05
      %v1600 = vrsqrt.pop %v1584
      %v1601 = vmul.f32 %v1600, %v1584
      %v1602 = vmul.f32 %v1601, %v1600
      %v1603 = vmul.f32 0.5, %v1602
      %v1604 = vsub.f32 1.5, %v1603
      %v1605 = vmul.f32 %v1600, %v1604
      %vm1606 = vweird.f32 %v1584
      %vm1607 = vweird.f32 %v1600
      %vm1608 = vmor %vm1606, %vm1607
      %v1609 = vsel %vm1608, %v1600, %v1605
      %v1610 = vrsqrt.pop %v1585
      %v1611 = vmul.f32 %v1610, %v1585
      %v1612 = vmul.f32 %v1611, %v1610
      %v1613 = vmul.f32 0.5, %v1612
      %v1614 = vsub.f32 1.5, %v1613
      %v1615 = vmul.f32 %v1610, %v1614
      %vm1616 = vweird.f32 %v1585
      %vm1617 = vweird.f32 %v1610
      %vm1618 = vmor %vm1616, %vm1617
      %v1619 = vsel %vm1618, %v1610, %v1615
      %v1620 = vrsqrt.pop %v1586
      %v1621 = vmul.f32 %v1620, %v1586
      %v1622 = vmul.f32 %v1621, %v1620
      %v1623 = vmul.f32 0.5, %v1622
      %v1624 = vsub.f32 1.5, %v1623
      %v1625 = vmul.f32 %v1620, %v1624
      %vm1626 = vweird.f32 %v1586
      %vm1627 = vweird.f32 %v1620
      %vm1628 = vmor %vm1626, %vm1627
      %v1629 = vsel %vm1628, %v1620, %v1625
      %v1630 = vrsqrt.pop %v1587
      %v1631 = vmul.f32 %v1630, %v1587
      %v1632 = vmul.f32 %v1631, %v1630
      %v1633 = vmul.f32 0.5, %v1632
      %v1634 = vsub.f32 1.5, %v1633
      %v1635 = vmul.f32 %v1630, %v1634
      %vm1636 = vweird.f32 %v1587
      %vm1637 = vweird.f32 %v1630
      %vm1638 = vmor %vm1636, %vm1637
      %v1639 = vsel %vm1638, %v1630, %v1635
      %v1640 = vrsqrt.pop %v1588
      %v1641 = vmul.f32 %v1640, %v1588
      %v1642 = vmul.f32 %v1641, %v1640
      %v1643 = vmul.f32 0.5, %v1642
      %v1644 = vsub.f32 1.5, %v1643
      %v1645 = vmul.f32 %v1640, %v1644
      %vm1646 = vweird.f32 %v1588
      %vm1647 = vweird.f32 %v1640
      %vm1648 = vmor %vm1646, %vm1647
      %v1649 = vsel %vm1648, %v1640, %v1645
      %v1650 = vrsqrt.pop %v1589
      %v1651 = vmul.f32 %v1650, %v1589
      %v1652 = vmul.f32 %v1651, %v1650
      %v1653 = vmul.f32 0.5, %v1652
      %v1654 = vsub.f32 1.5, %v1653
      %v1655 = vmul.f32 %v1650, %v1654
      %vm1656 = vweird.f32 %v1589
      %vm1657 = vweird.f32 %v1650
      %vm1658 = vmor %vm1656, %vm1657
      %v1659 = vsel %vm1658, %v1650, %v1655
      %v1660 = vrsqrt.pop %v1590
      %v1661 = vmul.f32 %v1660, %v1590
      %v1662 = vmul.f32 %v1661, %v1660
      %v1663 = vmul.f32 0.5, %v1662
      %v1664 = vsub.f32 1.5, %v1663
      %v1665 = vmul.f32 %v1660, %v1664
      %vm1666 = vweird.f32 %v1590
      %vm1667 = vweird.f32 %v1660
      %vm1668 = vmor %vm1666, %vm1667
      %v1669 = vsel %vm1668, %v1660, %v1665
      %v1670 = vrsqrt.pop %v1591
      %v1671 = vmul.f32 %v1670, %v1591
      %v1672 = vmul.f32 %v1671, %v1670
      %v1673 = vmul.f32 0.5, %v1672
      %v1674 = vsub.f32 1.5, %v1673
      %v1675 = vmul.f32 %v1670, %v1674
      %vm1676 = vweird.f32 %v1591
      %vm1677 = vweird.f32 %v1670
      %vm1678 = vmor %vm1676, %vm1677
      %v1679 = vsel %vm1678, %v1670, %v1675
      %v1680 = vrsqrt.pop %v1592
      %v1681 = vmul.f32 %v1680, %v1592
      %v1682 = vmul.f32 %v1681, %v1680
      %v1683 = vmul.f32 0.5, %v1682
      %v1684 = vsub.f32 1.5, %v1683
      %v1685 = vmul.f32 %v1680, %v1684
      %vm1686 = vweird.f32 %v1592
      %vm1687 = vweird.f32 %v1680
      %vm1688 = vmor %vm1686, %vm1687
      %v1689 = vsel %vm1688, %v1680, %v1685
      %v1690 = vrsqrt.pop %v1593
      %v1691 = vmul.f32 %v1690, %v1593
      %v1692 = vmul.f32 %v1691, %v1690
      %v1693 = vmul.f32 0.5, %v1692
      %v1694 = vsub.f32 1.5, %v1693
      %v1695 = vmul.f32 %v1690, %v1694
      %vm1696 = vweird.f32 %v1593
      %vm1697 = vweird.f32 %v1690
      %vm1698 = vmor %vm1696, %vm1697
      %v1699 = vsel %vm1698, %v1690, %v1695
      %v1700 = vrsqrt.pop %v1594
      %v1701 = vmul.f32 %v1700, %v1594
      %v1702 = vmul.f32 %v1701, %v1700
      %v1703 = vmul.f32 0.5, %v1702
      %v1704 = vsub.f32 1.5, %v1703
      %v1705 = vmul.f32 %v1700, %v1704
      %vm1706 = vweird.f32 %v1594
      %vm1707 = vweird.f32 %v1700
      %vm1708 = vmor %vm1706, %vm1707
      %v1709 = vsel %vm1708, %v1700, %v1705
      %v1710 = vrsqrt.pop %v1595
      %v1711 = vmul.f32 %v1710, %v1595
      %v1712 = vmul.f32 %v1711, %v1710
      %v1713 = vmul.f32 0.5, %v1712
      %v1714 = vsub.f32 1.5, %v1713
      %v1715 = vmul.f32 %v1710, %v1714
      %vm1716 = vweird.f32 %v1595
      %vm1717 = vweird.f32 %v1710
      %vm1718 = vmor %vm1716, %vm1717
      %v1719 = vsel %vm1718, %v1710, %v1715
      %v1720 = vrsqrt.pop %v1596
      %v1721 = vmul.f32 %v1720, %v1596
      %v1722 = vmul.f32 %v1721, %v1720
      %v1723 = vmul.f32 0.5, %v1722
      %v1724 = vsub.f32 1.5, %v1723
      %v1725 = vmul.f32 %v1720, %v1724
      %vm1726 = vweird.f32 %v1596
      %vm1727 = vweird.f32 %v1720
      %vm1728 = vmor %vm1726, %vm1727
      %v1729 = vsel %vm1728, %v1720, %v1725
      %v1730 = vrsqrt.pop %v1597
      %v1731 = vmul.f32 %v1730, %v1597
      %v1732 = vmul.f32 %v1731, %v1730
      %v1733 = vmul.f32 0.5, %v1732
      %v1734 = vsub.f32 1.5, %v1733
      %v1735 = vmul.f32 %v1730, %v1734
      %vm1736 = vweird.f32 %v1597
      %vm1737 = vweird.f32 %v1730
      %vm1738 = vmor %vm1736, %vm1737
      %v1739 = vsel %vm1738, %v1730, %v1735
      %v1740 = vrsqrt.pop %v1598
      %v1741 = vmul.f32 %v1740, %v1598
      %v1742 = vmul.f32 %v1741, %v1740
      %v1743 = vmul.f32 0.5, %v1742
      %v1744 = vsub.f32 1.5, %v1743
      %v1745 = vmul.f32 %v1740, %v1744
      %vm1746 = vweird.f32 %v1598
      %vm1747 = vweird.f32 %v1740
      %vm1748 = vmor %vm1746, %vm1747
      %v1749 = vsel %vm1748, %v1740, %v1745
      %v1750 = vrsqrt.pop %v1599
      %v1751 = vmul.f32 %v1750, %v1599
      %v1752 = vmul.f32 %v1751, %v1750
      %v1753 = vmul.f32 0.5, %v1752
      %v1754 = vsub.f32 1.5, %v1753
      %v1755 = vmul.f32 %v1750, %v1754
      %vm1756 = vweird.f32 %v1599
      %vm1757 = vweird.f32 %v1750
      %vm1758 = vmor %vm1756, %vm1757
      %v1759 = vsel %vm1758, %v1750, %v1755
      %v1760 = vmul.f32 %v1488, %v1609
      %v1761 = vmul.f32 %v1489, %v1619
      %v1762 = vmul.f32 %v1490, %v1629
      %v1763 = vmul.f32 %v1491, %v1639
      %v1764 = vmul.f32 %v1492, %v1649
      %v1765 = vmul.f32 %v1493, %v1659
      %v1766 = vmul.f32 %v1494, %v1669
      %v1767 = vmul.f32 %v1495, %v1679
      %v1768 = vmul.f32 %v1496, %v1689
      %v1769 = vmul.f32 %v1497, %v1699
      %v1770 = vmul.f32 %v1498, %v1709
      %v1771 = vmul.f32 %v1499, %v1719
      %v1772 = vmul.f32 %v1500, %v1729
      %v1773 = vmul.f32 %v1501, %v1739
      %v1774 = vmul.f32 %v1502, %v1749
      %v1775 = vmul.f32 %v1503, %v1759
      %v1777 = vperm.slane %v236, 0
      %v1779 = vmul.f32 %v1760, %v1777
      %v1780 = vmul.f32 %v1761, %v1777
      %v1781 = vmul.f32 %v1762, %v1777
      %v1782 = vmul.f32 %v1763, %v1777
      %v1783 = vmul.f32 %v1764, %v1777
      %v1784 = vmul.f32 %v1765, %v1777
      %v1785 = vmul.f32 %v1766, %v1777
      %v1786 = vmul.f32 %v1767, %v1777
      %v1787 = vmul.f32 %v1768, %v1777
      %v1788 = vmul.f32 %v1769, %v1777
      %v1789 = vmul.f32 %v1770, %v1777
      %v1790 = vmul.f32 %v1771, %v1777
      %v1791 = vmul.f32 %v1772, %v1777
      %v1792 = vmul.f32 %v1773, %v1777
      %v1793 = vmul.f32 %v1774, %v1777
      %v1794 = vmul.f32 %v1775, %v1777
      %v1796 = vperm.slane %v237, 0
      %v1798 = vadd.f32 %v1779, %v1796
      %v1799 = vadd.f32 %v1780, %v1796
      %v1800 = vadd.f32 %v1781, %v1796
      %v1801 = vadd.f32 %v1782, %v1796
      %v1802 = vadd.f32 %v1783, %v1796
      %v1803 = vadd.f32 %v1784, %v1796
      %v1804 = vadd.f32 %v1785, %v1796
      %v1805 = vadd.f32 %v1786, %v1796
      %v1806 = vadd.f32 %v1787, %v1796
      %v1807 = vadd.f32 %v1788, %v1796
      %v1808 = vadd.f32 %v1789, %v1796
      %v1809 = vadd.f32 %v1790, %v1796
      %v1810 = vadd.f32 %v1791, %v1796
      %v1811 = vadd.f32 %v1792, %v1796
      %v1812 = vadd.f32 %v1793, %v1796
      %v1813 = vadd.f32 %v1794, %v1796
      %v1814 = vadd.f32 %v1798, 3.0
      %v1815 = vadd.f32 %v1799, 3.0
      %v1816 = vadd.f32 %v1800, 3.0
      %v1817 = vadd.f32 %v1801, 3.0
      %v1818 = vadd.f32 %v1802, 3.0
      %v1819 = vadd.f32 %v1803, 3.0
      %v1820 = vadd.f32 %v1804, 3.0
      %v1821 = vadd.f32 %v1805, 3.0
      %v1822 = vadd.f32 %v1806, 3.0
      %v1823 = vadd.f32 %v1807, 3.0
      %v1824 = vadd.f32 %v1808, 3.0
      %v1825 = vadd.f32 %v1809, 3.0
      %v1826 = vadd.f32 %v1810, 3.0
      %v1827 = vadd.f32 %v1811, 3.0
      %v1828 = vadd.f32 %v1812, 3.0
      %v1829 = vadd.f32 %v1813, 3.0
      %v1830 = vmax.f32 %v1814, 0.0
      %v1831 = vmax.f32 %v1815, 0.0
      %v1832 = vmax.f32 %v1816, 0.0
      %v1833 = vmax.f32 %v1817, 0.0
      %v1834 = vmax.f32 %v1818, 0.0
      %v1835 = vmax.f32 %v1819, 0.0
      %v1836 = vmax.f32 %v1820, 0.0
      %v1837 = vmax.f32 %v1821, 0.0
      %v1838 = vmax.f32 %v1822, 0.0
      %v1839 = vmax.f32 %v1823, 0.0
      %v1840 = vmax.f32 %v1824, 0.0
      %v1841 = vmax.f32 %v1825, 0.0
      %v1842 = vmax.f32 %v1826, 0.0
      %v1843 = vmax.f32 %v1827, 0.0
      %v1844 = vmax.f32 %v1828, 0.0
      %v1845 = vmax.f32 %v1829, 0.0
      %v1846 = vmin.f32 %v1830, 6.0
      %v1847 = vmin.f32 %v1831, 6.0
      %v1848 = vmin.f32 %v1832, 6.0
      %v1849 = vmin.f32 %v1833, 6.0
      %v1850 = vmin.f32 %v1834, 6.0
      %v1851 = vmin.f32 %v1835, 6.0
      %v1852 = vmin.f32 %v1836, 6.0
      %v1853 = vmin.f32 %v1837, 6.0
      %v1854 = vmin.f32 %v1838, 6.0
      %v1855 = vmin.f32 %v1839, 6.0
      %v1856 = vmin.f32 %v1840, 6.0
      %v1857 = vmin.f32 %v1841, 6.0
      %v1858 = vmin.f32 %v1842, 6.0
      %v1859 = vmin.f32 %v1843, 6.0
      %v1860 = vmin.f32 %v1844, 6.0
      %v1861 = vmin.f32 %v1845, 6.0
      %v1862 = vmul.f32 %v1798, %v1846
      %v1863 = vmul.f32 %v1799, %v1847
      %v1864 = vmul.f32 %v1800, %v1848
      %v1865 = vmul.f32 %v1801, %v1849
      %v1866 = vmul.f32 %v1802, %v1850
      %v1867 = vmul.f32 %v1803, %v1851
      %v1868 = vmul.f32 %v1804, %v1852
      %v1869 = vmul.f32 %v1805, %v1853
      %v1870 = vmul.f32 %v1806, %v1854
      %v1871 = vmul.f32 %v1807, %v1855
      %v1872 = vmul.f32 %v1808, %v1856
      %v1873 = vmul.f32 %v1809, %v1857
      %v1874 = vmul.f32 %v1810, %v1858
      %v1875 = vmul.f32 %v1811, %v1859
      %v1876 = vmul.f32 %v1812, %v1860
      %v1877 = vmul.f32 %v1813, %v1861
      %v1878 = vmul.f32 %v1862, 0.16666667
      %v1879 = vmul.f32 %v1863, 0.16666667
      %v1880 = vmul.f32 %v1864, 0.16666667
      %v1881 = vmul.f32 %v1865, 0.16666667
      %v1882 = vmul.f32 %v1866, 0.16666667
      %v1883 = vmul.f32 %v1867, 0.16666667
      %v1884 = vmul.f32 %v1868, 0.16666667
      %v1885 = vmul.f32 %v1869, 0.16666667
      %v1886 = vmul.f32 %v1870, 0.16666667
      %v1887 = vmul.f32 %v1871, 0.16666667
      %v1888 = vmul.f32 %v1872, 0.16666667
      %v1889 = vmul.f32 %v1873, 0.16666667
      %v1890 = vmul.f32 %v1874, 0.16666667
      %v1891 = vmul.f32 %v1875, 0.16666667
      %v1892 = vmul.f32 %v1876, 0.16666667
      %v1893 = vmul.f32 %v1877, 0.16666667
      %v1894 = vpack.c.bf16 %v1878, %v1878
      %v1895 = vpack.c.bf16 %v1879, %v1879
      %v1896 = vpack.c.bf16 %v1880, %v1880
      %v1897 = vpack.c.bf16 %v1881, %v1881
      %v1898 = vpack.c.bf16 %v1882, %v1882
      %v1899 = vpack.c.bf16 %v1883, %v1883
      %v1900 = vpack.c.bf16 %v1884, %v1884
      %v1901 = vpack.c.bf16 %v1885, %v1885
      %v1902 = vpack.c.bf16 %v1886, %v1886
      %v1903 = vpack.c.bf16 %v1887, %v1887
      %v1904 = vpack.c.bf16 %v1888, %v1888
      %v1905 = vpack.c.bf16 %v1889, %v1889
      %v1906 = vpack.c.bf16 %v1890, %v1890
      %v1907 = vpack.c.bf16 %v1891, %v1891
      %v1908 = vpack.c.bf16 %v1892, %v1892
      %v1909 = vpack.c.bf16 %v1893, %v1893
      %s1910 = smul.u32 0, 2
      %s1911 = smul.addr %s1910, 4
      %s1912 = scalar_lea.vmem %s230, %s1911
      %vm1913 = vcmask 257024
      %1914 = vst.msk [vmem:[%s1912] sm:$0xf] %vm1913, %v1894
      %1915 = vst.msk [vmem:[%s1912 + $0x4] sm:$0xf] %vm1913, %v1895
      %1916 = vst.msk [vmem:[%s1912 + $0x8] sm:$0xf] %vm1913, %v1896
      %1917 = vst.msk [vmem:[%s1912 + $0xc] sm:$0xf] %vm1913, %v1897
      %1918 = vst.msk [vmem:[%s1912 + $0x10] sm:$0xf] %vm1913, %v1898
      %1919 = vst.msk [vmem:[%s1912 + $0x14] sm:$0xf] %vm1913, %v1899
      %1920 = vst.msk [vmem:[%s1912 + $0x18] sm:$0xf] %vm1913, %v1900
      %1921 = vst.msk [vmem:[%s1912 + $0x1c] sm:$0xf] %vm1913, %v1901
      %1922 = vst.msk [vmem:[%s1912 + $0x20] sm:$0xf] %vm1913, %v1902
      %1923 = vst.msk [vmem:[%s1912 + $0x24] sm:$0xf] %vm1913, %v1903
      %1924 = vst.msk [vmem:[%s1912 + $0x28] sm:$0xf] %vm1913, %v1904
      %1925 = vst.msk [vmem:[%s1912 + $0x2c] sm:$0xf] %vm1913, %v1905
      %1926 = vst.msk [vmem:[%s1912 + $0x30] sm:$0xf] %vm1913, %v1906
      %1927 = vst.msk [vmem:[%s1912 + $0x34] sm:$0xf] %vm1913, %v1907
      %1928 = vst.msk [vmem:[%s1912 + $0x38] sm:$0xf] %vm1913, %v1908
      %1929 = vst.msk [vmem:[%s1912 + $0x3c] sm:$0xf] %vm1913, %v1909
      %v1930 = vld [vmem:[%s233] sm:$0x1]
      %v1931 = vsel %vm1416, %v1878, 0.0
      %v1932 = vsel %vm1416, %v1880, 0.0
      %v1933 = vadd.f32 %v1931, %v1932
      %v1934 = vsel %vm1416, %v1882, 0.0
      %v1935 = vadd.f32 %v1933, %v1934
      %v1936 = vsel %vm1416, %v1884, 0.0
      %v1937 = vadd.f32 %v1935, %v1936
      %v1938 = vsel %vm1416, %v1886, 0.0
      %v1939 = vadd.f32 %v1937, %v1938
      %v1940 = vsel %vm1416, %v1888, 0.0
      %v1941 = vadd.f32 %v1939, %v1940
      %v1942 = vsel %vm1416, %v1890, 0.0
      %v1943 = vadd.f32 %v1941, %v1942
      %v1944 = vsel %vm1416, %v1892, 0.0
      %v1945 = vadd.f32 %v1943, %v1944
      %v1946 = vsel %vm1416, %v1879, 0.0
      %v1947 = vsel %vm1416, %v1881, 0.0
      %v1948 = vadd.f32 %v1946, %v1947
      %v1949 = vsel %vm1416, %v1883, 0.0
      %v1950 = vadd.f32 %v1948, %v1949
      %v1951 = vsel %vm1416, %v1885, 0.0
      %v1952 = vadd.f32 %v1950, %v1951
      %v1953 = vsel %vm1416, %v1887, 0.0
      %v1954 = vadd.f32 %v1952, %v1953
      %v1955 = vsel %vm1416, %v1889, 0.0
      %v1956 = vadd.f32 %v1954, %v1955
      %v1957 = vsel %vm1416, %v1891, 0.0
      %v1958 = vadd.f32 %v1956, %v1957
      %v1959 = vsel %vm1416, %v1893, 0.0
      %v1960 = vadd.f32 %v1958, %v1959
      %v1961 = vsel %vm1416, %v1945, 0.0
      %v1962 = vsel %vm1416, %v1960, 0.0
      %v1963 = vadd.f32 %v1961, %v1962
      %v1964 = vrot.slane %v1963, 4
      %v1965 = vadd.f32 %v1963, %v1964
      %v1966 = vrot.slane %v1965, 2
      %v1967 = vadd.f32 %v1965, %v1966
      %v1968 = vrot.slane %v1967, 1
      %v1969 = vadd.f32 %v1967, %v1968
      %v1970 = vmul.f32 %v1969, 0.00390625
      %v1971 = vadd.f32 %v1930, %v1970
      %1972 = vst.msk [vmem:[%s233] sm:$0x1] %vm238, %v1971
      %s1973 = smul.u32 8, 3
      %s1974 = smul.addr %s1973, 4
      %s1975 = scalar_lea.vmem %s225, %s1974
      %v1976 = vld [vmem:[%s1975] sm:$0xf]
      %v1977 = vld [vmem:[%s1975 + $0x4] sm:$0xf]
      %v1978 = vld [vmem:[%s1975 + $0xc] sm:$0xf]
      %v1979 = vld [vmem:[%s1975 + $0x10] sm:$0xf]
      %v1980 = vld [vmem:[%s1975 + $0x18] sm:$0xf]
      %v1981 = vld [vmem:[%s1975 + $0x1c] sm:$0xf]
      %v1982 = vld [vmem:[%s1975 + $0x24] sm:$0xf]
      %v1983 = vld [vmem:[%s1975 + $0x28] sm:$0xf]
      %v1984 = vld [vmem:[%s1975 + $0x30] sm:$0xf]
      %v1985 = vld [vmem:[%s1975 + $0x34] sm:$0xf]
      %v1986 = vld [vmem:[%s1975 + $0x3c] sm:$0xf]
      %v1987 = vld [vmem:[%s1975 + $0x40] sm:$0xf]
      %v1988 = vld [vmem:[%s1975 + $0x48] sm:$0xf]
      %v1989 = vld [vmem:[%s1975 + $0x4c] sm:$0xf]
      %v1990 = vld [vmem:[%s1975 + $0x54] sm:$0xf]
      %v1991 = vld [vmem:[%s1975 + $0x58] sm:$0xf]
      %v1992 = vunpack.c.l.bf16 %v1976
      %v1993 = vunpack.c.l.bf16 %v1977
      %v1994 = vunpack.c.l.bf16 %v1978
      %v1995 = vunpack.c.l.bf16 %v1979
      %v1996 = vunpack.c.l.bf16 %v1980
      %v1997 = vunpack.c.l.bf16 %v1981
      %v1998 = vunpack.c.l.bf16 %v1982
      %v1999 = vunpack.c.l.bf16 %v1983
      %v2000 = vunpack.c.l.bf16 %v1984
      %v2001 = vunpack.c.l.bf16 %v1985
      %v2002 = vunpack.c.l.bf16 %v1986
      %v2003 = vunpack.c.l.bf16 %v1987
      %v2004 = vunpack.c.l.bf16 %v1988
      %v2005 = vunpack.c.l.bf16 %v1989
      %v2006 = vunpack.c.l.bf16 %v1990
      %v2007 = vunpack.c.l.bf16 %v1991
      %v2008 = vmul.f32 %v1992, %v275
      %v2009 = vmul.f32 %v1993, %v275
      %v2010 = vmul.f32 %v1994, %v275
      %v2011 = vmul.f32 %v1995, %v275
      %v2012 = vmul.f32 %v1996, %v275
      %v2013 = vmul.f32 %v1997, %v275
      %v2014 = vmul.f32 %v1998, %v275
      %v2015 = vmul.f32 %v1999, %v275
      %v2016 = vmul.f32 %v2000, %v275
      %v2017 = vmul.f32 %v2001, %v275
      %v2018 = vmul.f32 %v2002, %v275
      %v2019 = vmul.f32 %v2003, %v275
      %v2020 = vmul.f32 %v2004, %v275
      %v2021 = vmul.f32 %v2005, %v275
      %v2022 = vmul.f32 %v2006, %v275
      %v2023 = vmul.f32 %v2007, %v275
      %v2024 = vld [vmem:[%s1975 + $0x8] sm:$0x1]
      %v2025 = vld [vmem:[%s1975 + $0x14] sm:$0x1]
      %v2026 = vld [vmem:[%s1975 + $0x20] sm:$0x1]
      %v2027 = vld [vmem:[%s1975 + $0x2c] sm:$0x1]
      %v2028 = vld [vmem:[%s1975 + $0x38] sm:$0x1]
      %v2029 = vld [vmem:[%s1975 + $0x44] sm:$0x1]
      %v2030 = vld [vmem:[%s1975 + $0x50] sm:$0x1]
      %v2031 = vld [vmem:[%s1975 + $0x5c] sm:$0x1]
      %v2032 = vunpack.c.l.bf16 %v2024
      %v2033 = vunpack.c.l.bf16 %v2025
      %v2034 = vunpack.c.l.bf16 %v2026
      %v2035 = vunpack.c.l.bf16 %v2027
      %v2036 = vunpack.c.l.bf16 %v2028
      %v2037 = vunpack.c.l.bf16 %v2029
      %v2038 = vunpack.c.l.bf16 %v2030
      %v2039 = vunpack.c.l.bf16 %v2031
      %v2040 = vmul.f32 %v1992, %v308
      %v2041 = vmul.f32 %v1993, %v308
      %v2042 = vmul.f32 %v2032, %v308
      %v2043 = vmul.f32 %v1994, %v308
      %v2044 = vmul.f32 %v1995, %v308
      %v2045 = vmul.f32 %v2033, %v308
      %v2046 = vmul.f32 %v1996, %v308
      %v2047 = vmul.f32 %v1997, %v308
      %v2048 = vmul.f32 %v2034, %v308
      %v2049 = vmul.f32 %v1998, %v308
      %v2050 = vmul.f32 %v1999, %v308
      %v2051 = vmul.f32 %v2035, %v308
      %v2052 = vmul.f32 %v2000, %v308
      %v2053 = vmul.f32 %v2001, %v308
      %v2054 = vmul.f32 %v2036, %v308
      %v2055 = vmul.f32 %v2002, %v308
      %v2056 = vmul.f32 %v2003, %v308
      %v2057 = vmul.f32 %v2037, %v308
      %v2058 = vmul.f32 %v2004, %v308
      %v2059 = vmul.f32 %v2005, %v308
      %v2060 = vmul.f32 %v2038, %v308
      %v2061 = vmul.f32 %v2006, %v308
      %v2062 = vmul.f32 %v2007, %v308
      %v2063 = vmul.f32 %v2039, %v308
      %v2064 = vld [vmem:[%s1975] sm:$0xe]
      %v2065 = vld [vmem:[%s1975 + $0xc] sm:$0xe]
      %v2066 = vld [vmem:[%s1975 + $0x18] sm:$0xe]
      %v2067 = vld [vmem:[%s1975 + $0x24] sm:$0xe]
      %v2068 = vld [vmem:[%s1975 + $0x30] sm:$0xe]
      %v2069 = vld [vmem:[%s1975 + $0x3c] sm:$0xe]
      %v2070 = vld [vmem:[%s1975 + $0x48] sm:$0xe]
      %v2071 = vld [vmem:[%s1975 + $0x54] sm:$0xe]
      %v2072 = vunpack.c.l.bf16 %v2064
      %v2073 = vunpack.c.l.bf16 %v2065
      %v2074 = vunpack.c.l.bf16 %v2066
      %v2075 = vunpack.c.l.bf16 %v2067
      %v2076 = vunpack.c.l.bf16 %v2068
      %v2077 = vunpack.c.l.bf16 %v2069
      %v2078 = vunpack.c.l.bf16 %v2070
      %v2079 = vunpack.c.l.bf16 %v2071
      %v2080 = vmul.f32 %v2072, %v349
      %v2081 = vmul.f32 %v1993, %v349
      %v2082 = vmul.f32 %v2032, %v349
      %v2083 = vmul.f32 %v2073, %v349
      %v2084 = vmul.f32 %v1995, %v349
      %v2085 = vmul.f32 %v2033, %v349
      %v2086 = vmul.f32 %v2074, %v349
      %v2087 = vmul.f32 %v1997, %v349
      %v2088 = vmul.f32 %v2034, %v349
      %v2089 = vmul.f32 %v2075, %v349
      %v2090 = vmul.f32 %v1999, %v349
      %v2091 = vmul.f32 %v2035, %v349
      %v2092 = vmul.f32 %v2076, %v349
      %v2093 = vmul.f32 %v2001, %v349
      %v2094 = vmul.f32 %v2036, %v349
      %v2095 = vmul.f32 %v2077, %v349
      %v2096 = vmul.f32 %v2003, %v349
      %v2097 = vmul.f32 %v2037, %v349
      %v2098 = vmul.f32 %v2078, %v349
      %v2099 = vmul.f32 %v2005, %v349
      %v2100 = vmul.f32 %v2038, %v349
      %v2101 = vmul.f32 %v2079, %v349
      %v2102 = vmul.f32 %v2007, %v349
      %v2103 = vmul.f32 %v2039, %v349
      %s2104 = sadd.s32 8, 1
      %s2105 = smul.u32 %s2104, 3
      %s2106 = smul.addr %s2105, 4
      %s2107 = scalar_lea.vmem %s225, %s2106
      %v2108 = vld [vmem:[%s2107] sm:$0xf]
      %v2109 = vld [vmem:[%s2107 + $0x4] sm:$0xf]
      %v2110 = vld [vmem:[%s2107 + $0xc] sm:$0xf]
      %v2111 = vld [vmem:[%s2107 + $0x10] sm:$0xf]
      %v2112 = vld [vmem:[%s2107 + $0x18] sm:$0xf]
      %v2113 = vld [vmem:[%s2107 + $0x1c] sm:$0xf]
      %v2114 = vld [vmem:[%s2107 + $0x24] sm:$0xf]
      %v2115 = vld [vmem:[%s2107 + $0x28] sm:$0xf]
      %v2116 = vld [vmem:[%s2107 + $0x30] sm:$0xf]
      %v2117 = vld [vmem:[%s2107 + $0x34] sm:$0xf]
      %v2118 = vld [vmem:[%s2107 + $0x3c] sm:$0xf]
      %v2119 = vld [vmem:[%s2107 + $0x40] sm:$0xf]
      %v2120 = vld [vmem:[%s2107 + $0x48] sm:$0xf]
      %v2121 = vld [vmem:[%s2107 + $0x4c] sm:$0xf]
      %v2122 = vld [vmem:[%s2107 + $0x54] sm:$0xf]
      %v2123 = vld [vmem:[%s2107 + $0x58] sm:$0xf]
      %v2124 = vunpack.c.l.bf16 %v2108
      %v2125 = vunpack.c.l.bf16 %v2109
      %v2126 = vunpack.c.l.bf16 %v2110
      %v2127 = vunpack.c.l.bf16 %v2111
      %v2128 = vunpack.c.l.bf16 %v2112
      %v2129 = vunpack.c.l.bf16 %v2113
      %v2130 = vunpack.c.l.bf16 %v2114
      %v2131 = vunpack.c.l.bf16 %v2115
      %v2132 = vunpack.c.l.bf16 %v2116
      %v2133 = vunpack.c.l.bf16 %v2117
      %v2134 = vunpack.c.l.bf16 %v2118
      %v2135 = vunpack.c.l.bf16 %v2119
      %v2136 = vunpack.c.l.bf16 %v2120
      %v2137 = vunpack.c.l.bf16 %v2121
      %v2138 = vunpack.c.l.bf16 %v2122
      %v2139 = vunpack.c.l.bf16 %v2123
      %v2140 = vmul.f32 %v2124, %v410
      %v2141 = vmul.f32 %v2125, %v410
      %v2142 = vmul.f32 %v2126, %v410
      %v2143 = vmul.f32 %v2127, %v410
      %v2144 = vmul.f32 %v2128, %v410
      %v2145 = vmul.f32 %v2129, %v410
      %v2146 = vmul.f32 %v2130, %v410
      %v2147 = vmul.f32 %v2131, %v410
      %v2148 = vmul.f32 %v2132, %v410
      %v2149 = vmul.f32 %v2133, %v410
      %v2150 = vmul.f32 %v2134, %v410
      %v2151 = vmul.f32 %v2135, %v410
      %v2152 = vmul.f32 %v2136, %v410
      %v2153 = vmul.f32 %v2137, %v410
      %v2154 = vmul.f32 %v2138, %v410
      %v2155 = vmul.f32 %v2139, %v410
      %v2156 = vld [vmem:[%s2107 + $0x8] sm:$0x1]
      %v2157 = vld [vmem:[%s2107 + $0x14] sm:$0x1]
      %v2158 = vld [vmem:[%s2107 + $0x20] sm:$0x1]
      %v2159 = vld [vmem:[%s2107 + $0x2c] sm:$0x1]
      %v2160 = vld [vmem:[%s2107 + $0x38] sm:$0x1]
      %v2161 = vld [vmem:[%s2107 + $0x44] sm:$0x1]
      %v2162 = vld [vmem:[%s2107 + $0x50] sm:$0x1]
      %v2163 = vld [vmem:[%s2107 + $0x5c] sm:$0x1]
      %v2164 = vunpack.c.l.bf16 %v2156
      %v2165 = vunpack.c.l.bf16 %v2157
      %v2166 = vunpack.c.l.bf16 %v2158
      %v2167 = vunpack.c.l.bf16 %v2159
      %v2168 = vunpack.c.l.bf16 %v2160
      %v2169 = vunpack.c.l.bf16 %v2161
      %v2170 = vunpack.c.l.bf16 %v2162
      %v2171 = vunpack.c.l.bf16 %v2163
      %v2172 = vmul.f32 %v2124, %v443
      %v2173 = vmul.f32 %v2125, %v443
      %v2174 = vmul.f32 %v2164, %v443
      %v2175 = vmul.f32 %v2126, %v443
      %v2176 = vmul.f32 %v2127, %v443
      %v2177 = vmul.f32 %v2165, %v443
      %v2178 = vmul.f32 %v2128, %v443
      %v2179 = vmul.f32 %v2129, %v443
      %v2180 = vmul.f32 %v2166, %v443
      %v2181 = vmul.f32 %v2130, %v443
      %v2182 = vmul.f32 %v2131, %v443
      %v2183 = vmul.f32 %v2167, %v443
      %v2184 = vmul.f32 %v2132, %v443
      %v2185 = vmul.f32 %v2133, %v443
      %v2186 = vmul.f32 %v2168, %v443
      %v2187 = vmul.f32 %v2134, %v443
      %v2188 = vmul.f32 %v2135, %v443
      %v2189 = vmul.f32 %v2169, %v443
      %v2190 = vmul.f32 %v2136, %v443
      %v2191 = vmul.f32 %v2137, %v443
      %v2192 = vmul.f32 %v2170, %v443
      %v2193 = vmul.f32 %v2138, %v443
      %v2194 = vmul.f32 %v2139, %v443
      %v2195 = vmul.f32 %v2171, %v443
      %v2196 = vld [vmem:[%s2107] sm:$0xe]
      %v2197 = vld [vmem:[%s2107 + $0xc] sm:$0xe]
      %v2198 = vld [vmem:[%s2107 + $0x18] sm:$0xe]
      %v2199 = vld [vmem:[%s2107 + $0x24] sm:$0xe]
      %v2200 = vld [vmem:[%s2107 + $0x30] sm:$0xe]
      %v2201 = vld [vmem:[%s2107 + $0x3c] sm:$0xe]
      %v2202 = vld [vmem:[%s2107 + $0x48] sm:$0xe]
      %v2203 = vld [vmem:[%s2107 + $0x54] sm:$0xe]
      %v2204 = vunpack.c.l.bf16 %v2196
      %v2205 = vunpack.c.l.bf16 %v2197
      %v2206 = vunpack.c.l.bf16 %v2198
      %v2207 = vunpack.c.l.bf16 %v2199
      %v2208 = vunpack.c.l.bf16 %v2200
      %v2209 = vunpack.c.l.bf16 %v2201
      %v2210 = vunpack.c.l.bf16 %v2202
      %v2211 = vunpack.c.l.bf16 %v2203
      %v2212 = vmul.f32 %v2204, %v484
      %v2213 = vmul.f32 %v2125, %v484
      %v2214 = vmul.f32 %v2164, %v484
      %v2215 = vmul.f32 %v2205, %v484
      %v2216 = vmul.f32 %v2127, %v484
      %v2217 = vmul.f32 %v2165, %v484
      %v2218 = vmul.f32 %v2206, %v484
      %v2219 = vmul.f32 %v2129, %v484
      %v2220 = vmul.f32 %v2166, %v484
      %v2221 = vmul.f32 %v2207, %v484
      %v2222 = vmul.f32 %v2131, %v484
      %v2223 = vmul.f32 %v2167, %v484
      %v2224 = vmul.f32 %v2208, %v484
      %v2225 = vmul.f32 %v2133, %v484
      %v2226 = vmul.f32 %v2168, %v484
      %v2227 = vmul.f32 %v2209, %v484
      %v2228 = vmul.f32 %v2135, %v484
      %v2229 = vmul.f32 %v2169, %v484
      %v2230 = vmul.f32 %v2210, %v484
      %v2231 = vmul.f32 %v2137, %v484
      %v2232 = vmul.f32 %v2170, %v484
      %v2233 = vmul.f32 %v2211, %v484
      %v2234 = vmul.f32 %v2139, %v484
      %v2235 = vmul.f32 %v2171, %v484
      %s2236 = sadd.s32 8, 2
      %s2237 = smul.u32 %s2236, 3
      %s2238 = smul.addr %s2237, 4
      %s2239 = scalar_lea.vmem %s225, %s2238
      %v2240 = vld [vmem:[%s2239] sm:$0xf]
      %v2241 = vld [vmem:[%s2239 + $0x4] sm:$0xf]
      %v2242 = vld [vmem:[%s2239 + $0xc] sm:$0xf]
      %v2243 = vld [vmem:[%s2239 + $0x10] sm:$0xf]
      %v2244 = vld [vmem:[%s2239 + $0x18] sm:$0xf]
      %v2245 = vld [vmem:[%s2239 + $0x1c] sm:$0xf]
      %v2246 = vld [vmem:[%s2239 + $0x24] sm:$0xf]
      %v2247 = vld [vmem:[%s2239 + $0x28] sm:$0xf]
      %v2248 = vld [vmem:[%s2239 + $0x30] sm:$0xf]
      %v2249 = vld [vmem:[%s2239 + $0x34] sm:$0xf]
      %v2250 = vld [vmem:[%s2239 + $0x3c] sm:$0xf]
      %v2251 = vld [vmem:[%s2239 + $0x40] sm:$0xf]
      %v2252 = vld [vmem:[%s2239 + $0x48] sm:$0xf]
      %v2253 = vld [vmem:[%s2239 + $0x4c] sm:$0xf]
      %v2254 = vld [vmem:[%s2239 + $0x54] sm:$0xf]
      %v2255 = vld [vmem:[%s2239 + $0x58] sm:$0xf]
      %v2256 = vunpack.c.l.bf16 %v2240
      %v2257 = vunpack.c.l.bf16 %v2241
      %v2258 = vunpack.c.l.bf16 %v2242
      %v2259 = vunpack.c.l.bf16 %v2243
      %v2260 = vunpack.c.l.bf16 %v2244
      %v2261 = vunpack.c.l.bf16 %v2245
      %v2262 = vunpack.c.l.bf16 %v2246
      %v2263 = vunpack.c.l.bf16 %v2247
      %v2264 = vunpack.c.l.bf16 %v2248
      %v2265 = vunpack.c.l.bf16 %v2249
      %v2266 = vunpack.c.l.bf16 %v2250
      %v2267 = vunpack.c.l.bf16 %v2251
      %v2268 = vunpack.c.l.bf16 %v2252
      %v2269 = vunpack.c.l.bf16 %v2253
      %v2270 = vunpack.c.l.bf16 %v2254
      %v2271 = vunpack.c.l.bf16 %v2255
      %v2272 = vmul.f32 %v2256, %v545
      %v2273 = vmul.f32 %v2257, %v545
      %v2274 = vmul.f32 %v2258, %v545
      %v2275 = vmul.f32 %v2259, %v545
      %v2276 = vmul.f32 %v2260, %v545
      %v2277 = vmul.f32 %v2261, %v545
      %v2278 = vmul.f32 %v2262, %v545
      %v2279 = vmul.f32 %v2263, %v545
      %v2280 = vmul.f32 %v2264, %v545
      %v2281 = vmul.f32 %v2265, %v545
      %v2282 = vmul.f32 %v2266, %v545
      %v2283 = vmul.f32 %v2267, %v545
      %v2284 = vmul.f32 %v2268, %v545
      %v2285 = vmul.f32 %v2269, %v545
      %v2286 = vmul.f32 %v2270, %v545
      %v2287 = vmul.f32 %v2271, %v545
      %v2288 = vld [vmem:[%s2239 + $0x8] sm:$0x1]
      %v2289 = vld [vmem:[%s2239 + $0x14] sm:$0x1]
      %v2290 = vld [vmem:[%s2239 + $0x20] sm:$0x1]
      %v2291 = vld [vmem:[%s2239 + $0x2c] sm:$0x1]
      %v2292 = vld [vmem:[%s2239 + $0x38] sm:$0x1]
      %v2293 = vld [vmem:[%s2239 + $0x44] sm:$0x1]
      %v2294 = vld [vmem:[%s2239 + $0x50] sm:$0x1]
      %v2295 = vld [vmem:[%s2239 + $0x5c] sm:$0x1]
      %v2296 = vunpack.c.l.bf16 %v2288
      %v2297 = vunpack.c.l.bf16 %v2289
      %v2298 = vunpack.c.l.bf16 %v2290
      %v2299 = vunpack.c.l.bf16 %v2291
      %v2300 = vunpack.c.l.bf16 %v2292
      %v2301 = vunpack.c.l.bf16 %v2293
      %v2302 = vunpack.c.l.bf16 %v2294
      %v2303 = vunpack.c.l.bf16 %v2295
      %v2304 = vmul.f32 %v2256, %v578
      %v2305 = vmul.f32 %v2257, %v578
      %v2306 = vmul.f32 %v2296, %v578
      %v2307 = vmul.f32 %v2258, %v578
      %v2308 = vmul.f32 %v2259, %v578
      %v2309 = vmul.f32 %v2297, %v578
      %v2310 = vmul.f32 %v2260, %v578
      %v2311 = vmul.f32 %v2261, %v578
      %v2312 = vmul.f32 %v2298, %v578
      %v2313 = vmul.f32 %v2262, %v578
      %v2314 = vmul.f32 %v2263, %v578
      %v2315 = vmul.f32 %v2299, %v578
      %v2316 = vmul.f32 %v2264, %v578
      %v2317 = vmul.f32 %v2265, %v578
      %v2318 = vmul.f32 %v2300, %v578
      %v2319 = vmul.f32 %v2266, %v578
      %v2320 = vmul.f32 %v2267, %v578
      %v2321 = vmul.f32 %v2301, %v578
      %v2322 = vmul.f32 %v2268, %v578
      %v2323 = vmul.f32 %v2269, %v578
      %v2324 = vmul.f32 %v2302, %v578
      %v2325 = vmul.f32 %v2270, %v578
      %v2326 = vmul.f32 %v2271, %v578
      %v2327 = vmul.f32 %v2303, %v578
      %v2328 = vld [vmem:[%s2239] sm:$0xe]
      %v2329 = vld [vmem:[%s2239 + $0xc] sm:$0xe]
      %v2330 = vld [vmem:[%s2239 + $0x18] sm:$0xe]
      %v2331 = vld [vmem:[%s2239 + $0x24] sm:$0xe]
      %v2332 = vld [vmem:[%s2239 + $0x30] sm:$0xe]
      %v2333 = vld [vmem:[%s2239 + $0x3c] sm:$0xe]
      %v2334 = vld [vmem:[%s2239 + $0x48] sm:$0xe]
      %v2335 = vld [vmem:[%s2239 + $0x54] sm:$0xe]
      %v2336 = vunpack.c.l.bf16 %v2328
      %v2337 = vunpack.c.l.bf16 %v2329
      %v2338 = vunpack.c.l.bf16 %v2330
      %v2339 = vunpack.c.l.bf16 %v2331
      %v2340 = vunpack.c.l.bf16 %v2332
      %v2341 = vunpack.c.l.bf16 %v2333
      %v2342 = vunpack.c.l.bf16 %v2334
      %v2343 = vunpack.c.l.bf16 %v2335
      %v2344 = vmul.f32 %v2336, %v619
      %v2345 = vmul.f32 %v2257, %v619
      %v2346 = vmul.f32 %v2296, %v619
      %v2347 = vmul.f32 %v2337, %v619
      %v2348 = vmul.f32 %v2259, %v619
      %v2349 = vmul.f32 %v2297, %v619
      %v2350 = vmul.f32 %v2338, %v619
      %v2351 = vmul.f32 %v2261, %v619
      %v2352 = vmul.f32 %v2298, %v619
      %v2353 = vmul.f32 %v2339, %v619
      %v2354 = vmul.f32 %v2263, %v619
      %v2355 = vmul.f32 %v2299, %v619
      %v2356 = vmul.f32 %v2340, %v619
      %v2357 = vmul.f32 %v2265, %v619
      %v2358 = vmul.f32 %v2300, %v619
      %v2359 = vmul.f32 %v2341, %v619
      %v2360 = vmul.f32 %v2267, %v619
      %v2361 = vmul.f32 %v2301, %v619
      %v2362 = vmul.f32 %v2342, %v619
      %v2363 = vmul.f32 %v2269, %v619
      %v2364 = vmul.f32 %v2302, %v619
      %v2365 = vmul.f32 %v2343, %v619
      %v2366 = vmul.f32 %v2271, %v619
      %v2367 = vmul.f32 %v2303, %v619
      %v2392 = vrot.slane %v2040, 1
      %v2393 = vrot.slane %v2041, 1
      %v2394 = vsel %vm668, %v2392, %v2393
      %v2395 = vrot.slane %v2042, 1
      %v2396 = vsel %vm668, %v2393, %v2395
      %v2397 = vrot.slane %v2043, 1
      %v2398 = vrot.slane %v2044, 1
      %v2399 = vsel %vm668, %v2397, %v2398
      %v2400 = vrot.slane %v2045, 1
      %v2401 = vsel %vm668, %v2398, %v2400
      %v2402 = vrot.slane %v2046, 1
      %v2403 = vrot.slane %v2047, 1
      %v2404 = vsel %vm668, %v2402, %v2403
      %v2405 = vrot.slane %v2048, 1
      %v2406 = vsel %vm668, %v2403, %v2405
      %v2407 = vrot.slane %v2049, 1
      %v2408 = vrot.slane %v2050, 1
      %v2409 = vsel %vm668, %v2407, %v2408
      %v2410 = vrot.slane %v2051, 1
      %v2411 = vsel %vm668, %v2408, %v2410
      %v2412 = vrot.slane %v2052, 1
      %v2413 = vrot.slane %v2053, 1
      %v2414 = vsel %vm668, %v2412, %v2413
      %v2415 = vrot.slane %v2054, 1
      %v2416 = vsel %vm668, %v2413, %v2415
      %v2417 = vrot.slane %v2055, 1
      %v2418 = vrot.slane %v2056, 1
      %v2419 = vsel %vm668, %v2417, %v2418
      %v2420 = vrot.slane %v2057, 1
      %v2421 = vsel %vm668, %v2418, %v2420
      %v2422 = vrot.slane %v2058, 1
      %v2423 = vrot.slane %v2059, 1
      %v2424 = vsel %vm668, %v2422, %v2423
      %v2425 = vrot.slane %v2060, 1
      %v2426 = vsel %vm668, %v2423, %v2425
      %v2427 = vrot.slane %v2061, 1
      %v2428 = vrot.slane %v2062, 1
      %v2429 = vsel %vm668, %v2427, %v2428
      %v2430 = vrot.slane %v2063, 1
      %v2431 = vsel %vm668, %v2428, %v2430
      %v2448 = vadd.f32 %v2008, %v2394
      %v2449 = vadd.f32 %v2009, %v2396
      %v2450 = vadd.f32 %v2010, %v2399
      %v2451 = vadd.f32 %v2011, %v2401
      %v2452 = vadd.f32 %v2012, %v2404
      %v2453 = vadd.f32 %v2013, %v2406
      %v2454 = vadd.f32 %v2014, %v2409
      %v2455 = vadd.f32 %v2015, %v2411
      %v2456 = vadd.f32 %v2016, %v2414
      %v2457 = vadd.f32 %v2017, %v2416
      %v2458 = vadd.f32 %v2018, %v2419
      %v2459 = vadd.f32 %v2019, %v2421
      %v2460 = vadd.f32 %v2020, %v2424
      %v2461 = vadd.f32 %v2021, %v2426
      %v2462 = vadd.f32 %v2022, %v2429
      %v2463 = vadd.f32 %v2023, %v2431
      %v2480 = vrot.slane %v2140, 6
      %v2481 = vrot.slane %v2141, 6
      %v2482 = vsel %vm757, %v2480, %v2481
      %v2483 = vrot.slane %v2142, 6
      %v2484 = vrot.slane %v2143, 6
      %v2485 = vsel %vm757, %v2483, %v2484
      %v2486 = vrot.slane %v2144, 6
      %v2487 = vrot.slane %v2145, 6
      %v2488 = vsel %vm757, %v2486, %v2487
      %v2489 = vrot.slane %v2146, 6
      %v2490 = vrot.slane %v2147, 6
      %v2491 = vsel %vm757, %v2489, %v2490
      %v2492 = vrot.slane %v2148, 6
      %v2493 = vrot.slane %v2149, 6
      %v2494 = vsel %vm757, %v2492, %v2493
      %v2495 = vrot.slane %v2150, 6
      %v2496 = vrot.slane %v2151, 6
      %v2497 = vsel %vm757, %v2495, %v2496
      %v2498 = vrot.slane %v2152, 6
      %v2499 = vrot.slane %v2153, 6
      %v2500 = vsel %vm757, %v2498, %v2499
      %v2501 = vrot.slane %v2154, 6
      %v2502 = vrot.slane %v2155, 6
      %v2503 = vsel %vm757, %v2501, %v2502
      %v2528 = vadd.f32 %v2080, %v2480
      %v2529 = vadd.f32 %v2081, %v2482
      %v2530 = vadd.f32 %v2082, %v2481
      %v2531 = vadd.f32 %v2083, %v2483
      %v2532 = vadd.f32 %v2084, %v2485
      %v2533 = vadd.f32 %v2085, %v2484
      %v2534 = vadd.f32 %v2086, %v2486
      %v2535 = vadd.f32 %v2087, %v2488
      %v2536 = vadd.f32 %v2088, %v2487
      %v2537 = vadd.f32 %v2089, %v2489
      %v2538 = vadd.f32 %v2090, %v2491
      %v2539 = vadd.f32 %v2091, %v2490
      %v2540 = vadd.f32 %v2092, %v2492
      %v2541 = vadd.f32 %v2093, %v2494
      %v2542 = vadd.f32 %v2094, %v2493
      %v2543 = vadd.f32 %v2095, %v2495
      %v2544 = vadd.f32 %v2096, %v2497
      %v2545 = vadd.f32 %v2097, %v2496
      %v2546 = vadd.f32 %v2098, %v2498
      %v2547 = vadd.f32 %v2099, %v2500
      %v2548 = vadd.f32 %v2100, %v2499
      %v2549 = vadd.f32 %v2101, %v2501
      %v2550 = vadd.f32 %v2102, %v2503
      %v2551 = vadd.f32 %v2103, %v2502
      %v2576 = vrot.slane %v2212, 1
      %v2577 = vrot.slane %v2213, 1
      %v2578 = vsel %vm668, %v2576, %v2577
      %v2579 = vrot.slane %v2214, 1
      %v2580 = vsel %vm668, %v2577, %v2579
      %v2581 = vrot.slane %v2215, 1
      %v2582 = vrot.slane %v2216, 1
      %v2583 = vsel %vm668, %v2581, %v2582
      %v2584 = vrot.slane %v2217, 1
      %v2585 = vsel %vm668, %v2582, %v2584
      %v2586 = vrot.slane %v2218, 1
      %v2587 = vrot.slane %v2219, 1
      %v2588 = vsel %vm668, %v2586, %v2587
      %v2589 = vrot.slane %v2220, 1
      %v2590 = vsel %vm668, %v2587, %v2589
      %v2591 = vrot.slane %v2221, 1
      %v2592 = vrot.slane %v2222, 1
      %v2593 = vsel %vm668, %v2591, %v2592
      %v2594 = vrot.slane %v2223, 1
      %v2595 = vsel %vm668, %v2592, %v2594
      %v2596 = vrot.slane %v2224, 1
      %v2597 = vrot.slane %v2225, 1
      %v2598 = vsel %vm668, %v2596, %v2597
      %v2599 = vrot.slane %v2226, 1
      %v2600 = vsel %vm668, %v2597, %v2599
      %v2601 = vrot.slane %v2227, 1
      %v2602 = vrot.slane %v2228, 1
      %v2603 = vsel %vm668, %v2601, %v2602
      %v2604 = vrot.slane %v2229, 1
      %v2605 = vsel %vm668, %v2602, %v2604
      %v2606 = vrot.slane %v2230, 1
      %v2607 = vrot.slane %v2231, 1
      %v2608 = vsel %vm668, %v2606, %v2607
      %v2609 = vrot.slane %v2232, 1
      %v2610 = vsel %vm668, %v2607, %v2609
      %v2611 = vrot.slane %v2233, 1
      %v2612 = vrot.slane %v2234, 1
      %v2613 = vsel %vm668, %v2611, %v2612
      %v2614 = vrot.slane %v2235, 1
      %v2615 = vsel %vm668, %v2612, %v2614
      %v2640 = vadd.f32 %v2172, %v2578
      %v2641 = vadd.f32 %v2173, %v2580
      %v2642 = vadd.f32 %v2174, %v2579
      %v2643 = vadd.f32 %v2175, %v2583
      %v2644 = vadd.f32 %v2176, %v2585
      %v2645 = vadd.f32 %v2177, %v2584
      %v2646 = vadd.f32 %v2178, %v2588
      %v2647 = vadd.f32 %v2179, %v2590
      %v2648 = vadd.f32 %v2180, %v2589
      %v2649 = vadd.f32 %v2181, %v2593
      %v2650 = vadd.f32 %v2182, %v2595
      %v2651 = vadd.f32 %v2183, %v2594
      %v2652 = vadd.f32 %v2184, %v2598
      %v2653 = vadd.f32 %v2185, %v2600
      %v2654 = vadd.f32 %v2186, %v2599
      %v2655 = vadd.f32 %v2187, %v2603
      %v2656 = vadd.f32 %v2188, %v2605
      %v2657 = vadd.f32 %v2189, %v2604
      %v2658 = vadd.f32 %v2190, %v2608
      %v2659 = vadd.f32 %v2191, %v2610
      %v2660 = vadd.f32 %v2192, %v2609
      %v2661 = vadd.f32 %v2193, %v2613
      %v2662 = vadd.f32 %v2194, %v2615
      %v2663 = vadd.f32 %v2195, %v2614
      %v2688 = vrot.slane %v2304, 1
      %v2689 = vrot.slane %v2305, 1
      %v2690 = vsel %vm668, %v2688, %v2689
      %v2691 = vrot.slane %v2306, 1
      %v2692 = vsel %vm668, %v2689, %v2691
      %v2693 = vrot.slane %v2307, 1
      %v2694 = vrot.slane %v2308, 1
      %v2695 = vsel %vm668, %v2693, %v2694
      %v2696 = vrot.slane %v2309, 1
      %v2697 = vsel %vm668, %v2694, %v2696
      %v2698 = vrot.slane %v2310, 1
      %v2699 = vrot.slane %v2311, 1
      %v2700 = vsel %vm668, %v2698, %v2699
      %v2701 = vrot.slane %v2312, 1
      %v2702 = vsel %vm668, %v2699, %v2701
      %v2703 = vrot.slane %v2313, 1
      %v2704 = vrot.slane %v2314, 1
      %v2705 = vsel %vm668, %v2703, %v2704
      %v2706 = vrot.slane %v2315, 1
      %v2707 = vsel %vm668, %v2704, %v2706
      %v2708 = vrot.slane %v2316, 1
      %v2709 = vrot.slane %v2317, 1
      %v2710 = vsel %vm668, %v2708, %v2709
      %v2711 = vrot.slane %v2318, 1
      %v2712 = vsel %vm668, %v2709, %v2711
      %v2713 = vrot.slane %v2319, 1
      %v2714 = vrot.slane %v2320, 1
      %v2715 = vsel %vm668, %v2713, %v2714
      %v2716 = vrot.slane %v2321, 1
      %v2717 = vsel %vm668, %v2714, %v2716
      %v2718 = vrot.slane %v2322, 1
      %v2719 = vrot.slane %v2323, 1
      %v2720 = vsel %vm668, %v2718, %v2719
      %v2721 = vrot.slane %v2324, 1
      %v2722 = vsel %vm668, %v2719, %v2721
      %v2723 = vrot.slane %v2325, 1
      %v2724 = vrot.slane %v2326, 1
      %v2725 = vsel %vm668, %v2723, %v2724
      %v2726 = vrot.slane %v2327, 1
      %v2727 = vsel %vm668, %v2724, %v2726
      %v2744 = vadd.f32 %v2272, %v2690
      %v2745 = vadd.f32 %v2273, %v2692
      %v2746 = vadd.f32 %v2274, %v2695
      %v2747 = vadd.f32 %v2275, %v2697
      %v2748 = vadd.f32 %v2276, %v2700
      %v2749 = vadd.f32 %v2277, %v2702
      %v2750 = vadd.f32 %v2278, %v2705
      %v2751 = vadd.f32 %v2279, %v2707
      %v2752 = vadd.f32 %v2280, %v2710
      %v2753 = vadd.f32 %v2281, %v2712
      %v2754 = vadd.f32 %v2282, %v2715
      %v2755 = vadd.f32 %v2283, %v2717
      %v2756 = vadd.f32 %v2284, %v2720
      %v2757 = vadd.f32 %v2285, %v2722
      %v2758 = vadd.f32 %v2286, %v2725
      %v2759 = vadd.f32 %v2287, %v2727
      %v2784 = vrot.slane %v2528, 2
      %v2785 = vrot.slane %v2529, 2
      %v2786 = vsel %vm1062, %v2784, %v2785
      %v2787 = vrot.slane %v2530, 2
      %v2788 = vsel %vm1062, %v2785, %v2787
      %v2789 = vrot.slane %v2531, 2
      %v2790 = vrot.slane %v2532, 2
      %v2791 = vsel %vm1062, %v2789, %v2790
      %v2792 = vrot.slane %v2533, 2
      %v2793 = vsel %vm1062, %v2790, %v2792
      %v2794 = vrot.slane %v2534, 2
      %v2795 = vrot.slane %v2535, 2
      %v2796 = vsel %vm1062, %v2794, %v2795
      %v2797 = vrot.slane %v2536, 2
      %v2798 = vsel %vm1062, %v2795, %v2797
      %v2799 = vrot.slane %v2537, 2
      %v2800 = vrot.slane %v2538, 2
      %v2801 = vsel %vm1062, %v2799, %v2800
      %v2802 = vrot.slane %v2539, 2
      %v2803 = vsel %vm1062, %v2800, %v2802
      %v2804 = vrot.slane %v2540, 2
      %v2805 = vrot.slane %v2541, 2
      %v2806 = vsel %vm1062, %v2804, %v2805
      %v2807 = vrot.slane %v2542, 2
      %v2808 = vsel %vm1062, %v2805, %v2807
      %v2809 = vrot.slane %v2543, 2
      %v2810 = vrot.slane %v2544, 2
      %v2811 = vsel %vm1062, %v2809, %v2810
      %v2812 = vrot.slane %v2545, 2
      %v2813 = vsel %vm1062, %v2810, %v2812
      %v2814 = vrot.slane %v2546, 2
      %v2815 = vrot.slane %v2547, 2
      %v2816 = vsel %vm1062, %v2814, %v2815
      %v2817 = vrot.slane %v2548, 2
      %v2818 = vsel %vm1062, %v2815, %v2817
      %v2819 = vrot.slane %v2549, 2
      %v2820 = vrot.slane %v2550, 2
      %v2821 = vsel %vm1062, %v2819, %v2820
      %v2822 = vrot.slane %v2551, 2
      %v2823 = vsel %vm1062, %v2820, %v2822
      %v2840 = vadd.f32 %v2448, %v2786
      %v2841 = vadd.f32 %v2449, %v2788
      %v2842 = vadd.f32 %v2450, %v2791
      %v2843 = vadd.f32 %v2451, %v2793
      %v2844 = vadd.f32 %v2452, %v2796
      %v2845 = vadd.f32 %v2453, %v2798
      %v2846 = vadd.f32 %v2454, %v2801
      %v2847 = vadd.f32 %v2455, %v2803
      %v2848 = vadd.f32 %v2456, %v2806
      %v2849 = vadd.f32 %v2457, %v2808
      %v2850 = vadd.f32 %v2458, %v2811
      %v2851 = vadd.f32 %v2459, %v2813
      %v2852 = vadd.f32 %v2460, %v2816
      %v2853 = vadd.f32 %v2461, %v2818
      %v2854 = vadd.f32 %v2462, %v2821
      %v2855 = vadd.f32 %v2463, %v2823
      %v2872 = vrot.slane %v2744, 7
      %v2873 = vrot.slane %v2745, 7
      %v2874 = vsel %vm1151, %v2872, %v2873
      %v2875 = vrot.slane %v2746, 7
      %v2876 = vrot.slane %v2747, 7
      %v2877 = vsel %vm1151, %v2875, %v2876
      %v2878 = vrot.slane %v2748, 7
      %v2879 = vrot.slane %v2749, 7
      %v2880 = vsel %vm1151, %v2878, %v2879
      %v2881 = vrot.slane %v2750, 7
      %v2882 = vrot.slane %v2751, 7
      %v2883 = vsel %vm1151, %v2881, %v2882
      %v2884 = vrot.slane %v2752, 7
      %v2885 = vrot.slane %v2753, 7
      %v2886 = vsel %vm1151, %v2884, %v2885
      %v2887 = vrot.slane %v2754, 7
      %v2888 = vrot.slane %v2755, 7
      %v2889 = vsel %vm1151, %v2887, %v2888
      %v2890 = vrot.slane %v2756, 7
      %v2891 = vrot.slane %v2757, 7
      %v2892 = vsel %vm1151, %v2890, %v2891
      %v2893 = vrot.slane %v2758, 7
      %v2894 = vrot.slane %v2759, 7
      %v2895 = vsel %vm1151, %v2893, %v2894
      %v2920 = vadd.f32 %v2640, %v2872
      %v2921 = vadd.f32 %v2641, %v2874
      %v2922 = vadd.f32 %v2642, %v2873
      %v2923 = vadd.f32 %v2643, %v2875
      %v2924 = vadd.f32 %v2644, %v2877
      %v2925 = vadd.f32 %v2645, %v2876
      %v2926 = vadd.f32 %v2646, %v2878
      %v2927 = vadd.f32 %v2647, %v2880
      %v2928 = vadd.f32 %v2648, %v2879
      %v2929 = vadd.f32 %v2649, %v2881
      %v2930 = vadd.f32 %v2650, %v2883
      %v2931 = vadd.f32 %v2651, %v2882
      %v2932 = vadd.f32 %v2652, %v2884
      %v2933 = vadd.f32 %v2653, %v2886
      %v2934 = vadd.f32 %v2654, %v2885
      %v2935 = vadd.f32 %v2655, %v2887
      %v2936 = vadd.f32 %v2656, %v2889
      %v2937 = vadd.f32 %v2657, %v2888
      %v2938 = vadd.f32 %v2658, %v2890
      %v2939 = vadd.f32 %v2659, %v2892
      %v2940 = vadd.f32 %v2660, %v2891
      %v2941 = vadd.f32 %v2661, %v2893
      %v2942 = vadd.f32 %v2662, %v2895
      %v2943 = vadd.f32 %v2663, %v2894
      %v2968 = vrot.slane %v2920, 1
      %v2969 = vrot.slane %v2921, 1
      %v2970 = vsel %vm668, %v2968, %v2969
      %v2971 = vrot.slane %v2922, 1
      %v2972 = vsel %vm668, %v2969, %v2971
      %v2973 = vrot.slane %v2923, 1
      %v2974 = vrot.slane %v2924, 1
      %v2975 = vsel %vm668, %v2973, %v2974
      %v2976 = vrot.slane %v2925, 1
      %v2977 = vsel %vm668, %v2974, %v2976
      %v2978 = vrot.slane %v2926, 1
      %v2979 = vrot.slane %v2927, 1
      %v2980 = vsel %vm668, %v2978, %v2979
      %v2981 = vrot.slane %v2928, 1
      %v2982 = vsel %vm668, %v2979, %v2981
      %v2983 = vrot.slane %v2929, 1
      %v2984 = vrot.slane %v2930, 1
      %v2985 = vsel %vm668, %v2983, %v2984
      %v2986 = vrot.slane %v2931, 1
      %v2987 = vsel %vm668, %v2984, %v2986
      %v2988 = vrot.slane %v2932, 1
      %v2989 = vrot.slane %v2933, 1
      %v2990 = vsel %vm668, %v2988, %v2989
      %v2991 = vrot.slane %v2934, 1
      %v2992 = vsel %vm668, %v2989, %v2991
      %v2993 = vrot.slane %v2935, 1
      %v2994 = vrot.slane %v2936, 1
      %v2995 = vsel %vm668, %v2993, %v2994
      %v2996 = vrot.slane %v2937, 1
      %v2997 = vsel %vm668, %v2994, %v2996
      %v2998 = vrot.slane %v2938, 1
      %v2999 = vrot.slane %v2939, 1
      %v3000 = vsel %vm668, %v2998, %v2999
      %v3001 = vrot.slane %v2940, 1
      %v3002 = vsel %vm668, %v2999, %v3001
      %v3003 = vrot.slane %v2941, 1
      %v3004 = vrot.slane %v2942, 1
      %v3005 = vsel %vm668, %v3003, %v3004
      %v3006 = vrot.slane %v2943, 1
      %v3007 = vsel %vm668, %v3004, %v3006
      %v3024 = vadd.f32 %v2840, %v2970
      %v3025 = vadd.f32 %v2841, %v2972
      %v3026 = vadd.f32 %v2842, %v2975
      %v3027 = vadd.f32 %v2843, %v2977
      %v3028 = vadd.f32 %v2844, %v2980
      %v3029 = vadd.f32 %v2845, %v2982
      %v3030 = vadd.f32 %v2846, %v2985
      %v3031 = vadd.f32 %v2847, %v2987
      %v3032 = vadd.f32 %v2848, %v2990
      %v3033 = vadd.f32 %v2849, %v2992
      %v3034 = vadd.f32 %v2850, %v2995
      %v3035 = vadd.f32 %v2851, %v2997
      %v3036 = vadd.f32 %v2852, %v3000
      %v3037 = vadd.f32 %v2853, %v3002
      %v3038 = vadd.f32 %v2854, %v3005
      %v3039 = vadd.f32 %v2855, %v3007
      %v3064 = vrot.slane %v2344, 2
      %v3065 = vrot.slane %v2345, 2
      %v3066 = vsel %vm1062, %v3064, %v3065
      %v3067 = vrot.slane %v2346, 2
      %v3068 = vsel %vm1062, %v3065, %v3067
      %v3069 = vrot.slane %v2347, 2
      %v3070 = vrot.slane %v2348, 2
      %v3071 = vsel %vm1062, %v3069, %v3070
      %v3072 = vrot.slane %v2349, 2
      %v3073 = vsel %vm1062, %v3070, %v3072
      %v3074 = vrot.slane %v2350, 2
      %v3075 = vrot.slane %v2351, 2
      %v3076 = vsel %vm1062, %v3074, %v3075
      %v3077 = vrot.slane %v2352, 2
      %v3078 = vsel %vm1062, %v3075, %v3077
      %v3079 = vrot.slane %v2353, 2
      %v3080 = vrot.slane %v2354, 2
      %v3081 = vsel %vm1062, %v3079, %v3080
      %v3082 = vrot.slane %v2355, 2
      %v3083 = vsel %vm1062, %v3080, %v3082
      %v3084 = vrot.slane %v2356, 2
      %v3085 = vrot.slane %v2357, 2
      %v3086 = vsel %vm1062, %v3084, %v3085
      %v3087 = vrot.slane %v2358, 2
      %v3088 = vsel %vm1062, %v3085, %v3087
      %v3089 = vrot.slane %v2359, 2
      %v3090 = vrot.slane %v2360, 2
      %v3091 = vsel %vm1062, %v3089, %v3090
      %v3092 = vrot.slane %v2361, 2
      %v3093 = vsel %vm1062, %v3090, %v3092
      %v3094 = vrot.slane %v2362, 2
      %v3095 = vrot.slane %v2363, 2
      %v3096 = vsel %vm1062, %v3094, %v3095
      %v3097 = vrot.slane %v2364, 2
      %v3098 = vsel %vm1062, %v3095, %v3097
      %v3099 = vrot.slane %v2365, 2
      %v3100 = vrot.slane %v2366, 2
      %v3101 = vsel %vm1062, %v3099, %v3100
      %v3102 = vrot.slane %v2367, 2
      %v3103 = vsel %vm1062, %v3100, %v3102
      %v3120 = vadd.f32 %v3024, %v3066
      %v3121 = vadd.f32 %v3025, %v3068
      %v3122 = vadd.f32 %v3026, %v3071
      %v3123 = vadd.f32 %v3027, %v3073
      %v3124 = vadd.f32 %v3028, %v3076
      %v3125 = vadd.f32 %v3029, %v3078
      %v3126 = vadd.f32 %v3030, %v3081
      %v3127 = vadd.f32 %v3031, %v3083
      %v3128 = vadd.f32 %v3032, %v3086
      %v3129 = vadd.f32 %v3033, %v3088
      %v3130 = vadd.f32 %v3034, %v3091
      %v3131 = vadd.f32 %v3035, %v3093
      %v3132 = vadd.f32 %v3036, %v3096
      %v3133 = vadd.f32 %v3037, %v3098
      %v3134 = vadd.f32 %v3038, %v3101
      %v3135 = vadd.f32 %v3039, %v3103
      %v3136 = vsel %vm1416, %v3120, 0.0
      %3137 = vadd.xlane.f32.xlu0 %v3136
      %v3138 = vpop.xlane.xlu0 %3137
      %v3139 = vsel %vm1416, %v3121, 0.0
      %3140 = vadd.xlane.f32.xlu0 %v3139
      %v3141 = vpop.xlane.xlu0 %3140
      %v3142 = vsel %vm1416, %v3122, 0.0
      %3143 = vadd.xlane.f32.xlu0 %v3142
      %v3144 = vpop.xlane.xlu0 %3143
      %v3145 = vsel %vm1416, %v3123, 0.0
      %3146 = vadd.xlane.f32.xlu0 %v3145
      %v3147 = vpop.xlane.xlu0 %3146
      %v3148 = vsel %vm1416, %v3124, 0.0
      %3149 = vadd.xlane.f32.xlu0 %v3148
      %v3150 = vpop.xlane.xlu0 %3149
      %v3151 = vsel %vm1416, %v3125, 0.0
      %3152 = vadd.xlane.f32.xlu0 %v3151
      %v3153 = vpop.xlane.xlu0 %3152
      %v3154 = vsel %vm1416, %v3126, 0.0
      %3155 = vadd.xlane.f32.xlu0 %v3154
      %v3156 = vpop.xlane.xlu0 %3155
      %v3157 = vsel %vm1416, %v3127, 0.0
      %3158 = vadd.xlane.f32.xlu0 %v3157
      %v3159 = vpop.xlane.xlu0 %3158
      %v3160 = vsel %vm1416, %v3128, 0.0
      %3161 = vadd.xlane.f32.xlu0 %v3160
      %v3162 = vpop.xlane.xlu0 %3161
      %v3163 = vsel %vm1416, %v3129, 0.0
      %3164 = vadd.xlane.f32.xlu0 %v3163
      %v3165 = vpop.xlane.xlu0 %3164
      %v3166 = vsel %vm1416, %v3130, 0.0
      %3167 = vadd.xlane.f32.xlu0 %v3166
      %v3168 = vpop.xlane.xlu0 %3167
      %v3169 = vsel %vm1416, %v3131, 0.0
      %3170 = vadd.xlane.f32.xlu0 %v3169
      %v3171 = vpop.xlane.xlu0 %3170
      %v3172 = vsel %vm1416, %v3132, 0.0
      %3173 = vadd.xlane.f32.xlu0 %v3172
      %v3174 = vpop.xlane.xlu0 %3173
      %v3175 = vsel %vm1416, %v3133, 0.0
      %3176 = vadd.xlane.f32.xlu0 %v3175
      %v3177 = vpop.xlane.xlu0 %3176
      %v3178 = vsel %vm1416, %v3134, 0.0
      %3179 = vadd.xlane.f32.xlu0 %v3178
      %v3180 = vpop.xlane.xlu0 %3179
      %v3181 = vsel %vm1416, %v3135, 0.0
      %3182 = vadd.xlane.f32.xlu0 %v3181
      %v3183 = vpop.xlane.xlu0 %3182
      %v3184 = vmul.f32 %v3138, %v1471
      %v3185 = vmul.f32 %v3141, %v1471
      %v3186 = vmul.f32 %v3144, %v1471
      %v3187 = vmul.f32 %v3147, %v1471
      %v3188 = vmul.f32 %v3150, %v1471
      %v3189 = vmul.f32 %v3153, %v1471
      %v3190 = vmul.f32 %v3156, %v1471
      %v3191 = vmul.f32 %v3159, %v1471
      %v3192 = vmul.f32 %v3162, %v1471
      %v3193 = vmul.f32 %v3165, %v1471
      %v3194 = vmul.f32 %v3168, %v1471
      %v3195 = vmul.f32 %v3171, %v1471
      %v3196 = vmul.f32 %v3174, %v1471
      %v3197 = vmul.f32 %v3177, %v1471
      %v3198 = vmul.f32 %v3180, %v1471
      %v3199 = vmul.f32 %v3183, %v1471
      %v3200 = vsub.f32 %v3120, %v3184
      %v3201 = vsub.f32 %v3121, %v3185
      %v3202 = vsub.f32 %v3122, %v3186
      %v3203 = vsub.f32 %v3123, %v3187
      %v3204 = vsub.f32 %v3124, %v3188
      %v3205 = vsub.f32 %v3125, %v3189
      %v3206 = vsub.f32 %v3126, %v3190
      %v3207 = vsub.f32 %v3127, %v3191
      %v3208 = vsub.f32 %v3128, %v3192
      %v3209 = vsub.f32 %v3129, %v3193
      %v3210 = vsub.f32 %v3130, %v3194
      %v3211 = vsub.f32 %v3131, %v3195
      %v3212 = vsub.f32 %v3132, %v3196
      %v3213 = vsub.f32 %v3133, %v3197
      %v3214 = vsub.f32 %v3134, %v3198
      %v3215 = vsub.f32 %v3135, %v3199
      %v3216 = vmul.f32 %v3200, %v3200
      %v3217 = vmul.f32 %v3201, %v3201
      %v3218 = vmul.f32 %v3202, %v3202
      %v3219 = vmul.f32 %v3203, %v3203
      %v3220 = vmul.f32 %v3204, %v3204
      %v3221 = vmul.f32 %v3205, %v3205
      %v3222 = vmul.f32 %v3206, %v3206
      %v3223 = vmul.f32 %v3207, %v3207
      %v3224 = vmul.f32 %v3208, %v3208
      %v3225 = vmul.f32 %v3209, %v3209
      %v3226 = vmul.f32 %v3210, %v3210
      %v3227 = vmul.f32 %v3211, %v3211
      %v3228 = vmul.f32 %v3212, %v3212
      %v3229 = vmul.f32 %v3213, %v3213
      %v3230 = vmul.f32 %v3214, %v3214
      %v3231 = vmul.f32 %v3215, %v3215
      %v3232 = vsel %vm1416, %v3216, 0.0
      %3233 = vadd.xlane.f32.xlu0 %v3232
      %v3234 = vpop.xlane.xlu0 %3233
      %v3235 = vsel %vm1416, %v3217, 0.0
      %3236 = vadd.xlane.f32.xlu0 %v3235
      %v3237 = vpop.xlane.xlu0 %3236
      %v3238 = vsel %vm1416, %v3218, 0.0
      %3239 = vadd.xlane.f32.xlu0 %v3238
      %v3240 = vpop.xlane.xlu0 %3239
      %v3241 = vsel %vm1416, %v3219, 0.0
      %3242 = vadd.xlane.f32.xlu0 %v3241
      %v3243 = vpop.xlane.xlu0 %3242
      %v3244 = vsel %vm1416, %v3220, 0.0
      %3245 = vadd.xlane.f32.xlu0 %v3244
      %v3246 = vpop.xlane.xlu0 %3245
      %v3247 = vsel %vm1416, %v3221, 0.0
      %3248 = vadd.xlane.f32.xlu0 %v3247
      %v3249 = vpop.xlane.xlu0 %3248
      %v3250 = vsel %vm1416, %v3222, 0.0
      %3251 = vadd.xlane.f32.xlu0 %v3250
      %v3252 = vpop.xlane.xlu0 %3251
      %v3253 = vsel %vm1416, %v3223, 0.0
      %3254 = vadd.xlane.f32.xlu0 %v3253
      %v3255 = vpop.xlane.xlu0 %3254
      %v3256 = vsel %vm1416, %v3224, 0.0
      %3257 = vadd.xlane.f32.xlu0 %v3256
      %v3258 = vpop.xlane.xlu0 %3257
      %v3259 = vsel %vm1416, %v3225, 0.0
      %3260 = vadd.xlane.f32.xlu0 %v3259
      %v3261 = vpop.xlane.xlu0 %3260
      %v3262 = vsel %vm1416, %v3226, 0.0
      %3263 = vadd.xlane.f32.xlu0 %v3262
      %v3264 = vpop.xlane.xlu0 %3263
      %v3265 = vsel %vm1416, %v3227, 0.0
      %3266 = vadd.xlane.f32.xlu0 %v3265
      %v3267 = vpop.xlane.xlu0 %3266
      %v3268 = vsel %vm1416, %v3228, 0.0
      %3269 = vadd.xlane.f32.xlu0 %v3268
      %v3270 = vpop.xlane.xlu0 %3269
      %v3271 = vsel %vm1416, %v3229, 0.0
      %3272 = vadd.xlane.f32.xlu0 %v3271
      %v3273 = vpop.xlane.xlu0 %3272
      %v3274 = vsel %vm1416, %v3230, 0.0
      %3275 = vadd.xlane.f32.xlu0 %v3274
      %v3276 = vpop.xlane.xlu0 %3275
      %v3277 = vsel %vm1416, %v3231, 0.0
      %3278 = vadd.xlane.f32.xlu0 %v3277
      %v3279 = vpop.xlane.xlu0 %3278
      %v3280 = vmul.f32 %v3234, %v1471
      %v3281 = vmul.f32 %v3237, %v1471
      %v3282 = vmul.f32 %v3240, %v1471
      %v3283 = vmul.f32 %v3243, %v1471
      %v3284 = vmul.f32 %v3246, %v1471
      %v3285 = vmul.f32 %v3249, %v1471
      %v3286 = vmul.f32 %v3252, %v1471
      %v3287 = vmul.f32 %v3255, %v1471
      %v3288 = vmul.f32 %v3258, %v1471
      %v3289 = vmul.f32 %v3261, %v1471
      %v3290 = vmul.f32 %v3264, %v1471
      %v3291 = vmul.f32 %v3267, %v1471
      %v3292 = vmul.f32 %v3270, %v1471
      %v3293 = vmul.f32 %v3273, %v1471
      %v3294 = vmul.f32 %v3276, %v1471
      %v3295 = vmul.f32 %v3279, %v1471
      %v3296 = vadd.f32 %v3280, 1e-05
      %v3297 = vadd.f32 %v3281, 1e-05
      %v3298 = vadd.f32 %v3282, 1e-05
      %v3299 = vadd.f32 %v3283, 1e-05
      %v3300 = vadd.f32 %v3284, 1e-05
      %v3301 = vadd.f32 %v3285, 1e-05
      %v3302 = vadd.f32 %v3286, 1e-05
      %v3303 = vadd.f32 %v3287, 1e-05
      %v3304 = vadd.f32 %v3288, 1e-05
      %v3305 = vadd.f32 %v3289, 1e-05
      %v3306 = vadd.f32 %v3290, 1e-05
      %v3307 = vadd.f32 %v3291, 1e-05
      %v3308 = vadd.f32 %v3292, 1e-05
      %v3309 = vadd.f32 %v3293, 1e-05
      %v3310 = vadd.f32 %v3294, 1e-05
      %v3311 = vadd.f32 %v3295, 1e-05
      %v3312 = vrsqrt.pop %v3296
      %v3313 = vmul.f32 %v3312, %v3296
      %v3314 = vmul.f32 %v3313, %v3312
      %v3315 = vmul.f32 0.5, %v3314
      %v3316 = vsub.f32 1.5, %v3315
      %v3317 = vmul.f32 %v3312, %v3316
      %vm3318 = vweird.f32 %v3296
      %vm3319 = vweird.f32 %v3312
      %vm3320 = vmor %vm3318, %vm3319
      %v3321 = vsel %vm3320, %v3312, %v3317
      %v3322 = vrsqrt.pop %v3297
      %v3323 = vmul.f32 %v3322, %v3297
      %v3324 = vmul.f32 %v3323, %v3322
      %v3325 = vmul.f32 0.5, %v3324
      %v3326 = vsub.f32 1.5, %v3325
      %v3327 = vmul.f32 %v3322, %v3326
      %vm3328 = vweird.f32 %v3297
      %vm3329 = vweird.f32 %v3322
      %vm3330 = vmor %vm3328, %vm3329
      %v3331 = vsel %vm3330, %v3322, %v3327
      %v3332 = vrsqrt.pop %v3298
      %v3333 = vmul.f32 %v3332, %v3298
      %v3334 = vmul.f32 %v3333, %v3332
      %v3335 = vmul.f32 0.5, %v3334
      %v3336 = vsub.f32 1.5, %v3335
      %v3337 = vmul.f32 %v3332, %v3336
      %vm3338 = vweird.f32 %v3298
      %vm3339 = vweird.f32 %v3332
      %vm3340 = vmor %vm3338, %vm3339
      %v3341 = vsel %vm3340, %v3332, %v3337
      %v3342 = vrsqrt.pop %v3299
      %v3343 = vmul.f32 %v3342, %v3299
      %v3344 = vmul.f32 %v3343, %v3342
      %v3345 = vmul.f32 0.5, %v3344
      %v3346 = vsub.f32 1.5, %v3345
      %v3347 = vmul.f32 %v3342, %v3346
      %vm3348 = vweird.f32 %v3299
      %vm3349 = vweird.f32 %v3342
      %vm3350 = vmor %vm3348, %vm3349
      %v3351 = vsel %vm3350, %v3342, %v3347
      %v3352 = vrsqrt.pop %v3300
      %v3353 = vmul.f32 %v3352, %v3300
      %v3354 = vmul.f32 %v3353, %v3352
      %v3355 = vmul.f32 0.5, %v3354
      %v3356 = vsub.f32 1.5, %v3355
      %v3357 = vmul.f32 %v3352, %v3356
      %vm3358 = vweird.f32 %v3300
      %vm3359 = vweird.f32 %v3352
      %vm3360 = vmor %vm3358, %vm3359
      %v3361 = vsel %vm3360, %v3352, %v3357
      %v3362 = vrsqrt.pop %v3301
      %v3363 = vmul.f32 %v3362, %v3301
      %v3364 = vmul.f32 %v3363, %v3362
      %v3365 = vmul.f32 0.5, %v3364
      %v3366 = vsub.f32 1.5, %v3365
      %v3367 = vmul.f32 %v3362, %v3366
      %vm3368 = vweird.f32 %v3301
      %vm3369 = vweird.f32 %v3362
      %vm3370 = vmor %vm3368, %vm3369
      %v3371 = vsel %vm3370, %v3362, %v3367
      %v3372 = vrsqrt.pop %v3302
      %v3373 = vmul.f32 %v3372, %v3302
      %v3374 = vmul.f32 %v3373, %v3372
      %v3375 = vmul.f32 0.5, %v3374
      %v3376 = vsub.f32 1.5, %v3375
      %v3377 = vmul.f32 %v3372, %v3376
      %vm3378 = vweird.f32 %v3302
      %vm3379 = vweird.f32 %v3372
      %vm3380 = vmor %vm3378, %vm3379
      %v3381 = vsel %vm3380, %v3372, %v3377
      %v3382 = vrsqrt.pop %v3303
      %v3383 = vmul.f32 %v3382, %v3303
      %v3384 = vmul.f32 %v3383, %v3382
      %v3385 = vmul.f32 0.5, %v3384
      %v3386 = vsub.f32 1.5, %v3385
      %v3387 = vmul.f32 %v3382, %v3386
      %vm3388 = vweird.f32 %v3303
      %vm3389 = vweird.f32 %v3382
      %vm3390 = vmor %vm3388, %vm3389
      %v3391 = vsel %vm3390, %v3382, %v3387
      %v3392 = vrsqrt.pop %v3304
      %v3393 = vmul.f32 %v3392, %v3304
      %v3394 = vmul.f32 %v3393, %v3392
      %v3395 = vmul.f32 0.5, %v3394
      %v3396 = vsub.f32 1.5, %v3395
      %v3397 = vmul.f32 %v3392, %v3396
      %vm3398 = vweird.f32 %v3304
      %vm3399 = vweird.f32 %v3392
      %vm3400 = vmor %vm3398, %vm3399
      %v3401 = vsel %vm3400, %v3392, %v3397
      %v3402 = vrsqrt.pop %v3305
      %v3403 = vmul.f32 %v3402, %v3305
      %v3404 = vmul.f32 %v3403, %v3402
      %v3405 = vmul.f32 0.5, %v3404
      %v3406 = vsub.f32 1.5, %v3405
      %v3407 = vmul.f32 %v3402, %v3406
      %vm3408 = vweird.f32 %v3305
      %vm3409 = vweird.f32 %v3402
      %vm3410 = vmor %vm3408, %vm3409
      %v3411 = vsel %vm3410, %v3402, %v3407
      %v3412 = vrsqrt.pop %v3306
      %v3413 = vmul.f32 %v3412, %v3306
      %v3414 = vmul.f32 %v3413, %v3412
      %v3415 = vmul.f32 0.5, %v3414
      %v3416 = vsub.f32 1.5, %v3415
      %v3417 = vmul.f32 %v3412, %v3416
      %vm3418 = vweird.f32 %v3306
      %vm3419 = vweird.f32 %v3412
      %vm3420 = vmor %vm3418, %vm3419
      %v3421 = vsel %vm3420, %v3412, %v3417
      %v3422 = vrsqrt.pop %v3307
      %v3423 = vmul.f32 %v3422, %v3307
      %v3424 = vmul.f32 %v3423, %v3422
      %v3425 = vmul.f32 0.5, %v3424
      %v3426 = vsub.f32 1.5, %v3425
      %v3427 = vmul.f32 %v3422, %v3426
      %vm3428 = vweird.f32 %v3307
      %vm3429 = vweird.f32 %v3422
      %vm3430 = vmor %vm3428, %vm3429
      %v3431 = vsel %vm3430, %v3422, %v3427
      %v3432 = vrsqrt.pop %v3308
      %v3433 = vmul.f32 %v3432, %v3308
      %v3434 = vmul.f32 %v3433, %v3432
      %v3435 = vmul.f32 0.5, %v3434
      %v3436 = vsub.f32 1.5, %v3435
      %v3437 = vmul.f32 %v3432, %v3436
      %vm3438 = vweird.f32 %v3308
      %vm3439 = vweird.f32 %v3432
      %vm3440 = vmor %vm3438, %vm3439
      %v3441 = vsel %vm3440, %v3432, %v3437
      %v3442 = vrsqrt.pop %v3309
      %v3443 = vmul.f32 %v3442, %v3309
      %v3444 = vmul.f32 %v3443, %v3442
      %v3445 = vmul.f32 0.5, %v3444
      %v3446 = vsub.f32 1.5, %v3445
      %v3447 = vmul.f32 %v3442, %v3446
      %vm3448 = vweird.f32 %v3309
      %vm3449 = vweird.f32 %v3442
      %vm3450 = vmor %vm3448, %vm3449
      %v3451 = vsel %vm3450, %v3442, %v3447
      %v3452 = vrsqrt.pop %v3310
      %v3453 = vmul.f32 %v3452, %v3310
      %v3454 = vmul.f32 %v3453, %v3452
      %v3455 = vmul.f32 0.5, %v3454
      %v3456 = vsub.f32 1.5, %v3455
      %v3457 = vmul.f32 %v3452, %v3456
      %vm3458 = vweird.f32 %v3310
      %vm3459 = vweird.f32 %v3452
      %vm3460 = vmor %vm3458, %vm3459
      %v3461 = vsel %vm3460, %v3452, %v3457
      %v3462 = vrsqrt.pop %v3311
      %v3463 = vmul.f32 %v3462, %v3311
      %v3464 = vmul.f32 %v3463, %v3462
      %v3465 = vmul.f32 0.5, %v3464
      %v3466 = vsub.f32 1.5, %v3465
      %v3467 = vmul.f32 %v3462, %v3466
      %vm3468 = vweird.f32 %v3311
      %vm3469 = vweird.f32 %v3462
      %vm3470 = vmor %vm3468, %vm3469
      %v3471 = vsel %vm3470, %v3462, %v3467
      %v3472 = vmul.f32 %v3200, %v3321
      %v3473 = vmul.f32 %v3201, %v3331
      %v3474 = vmul.f32 %v3202, %v3341
      %v3475 = vmul.f32 %v3203, %v3351
      %v3476 = vmul.f32 %v3204, %v3361
      %v3477 = vmul.f32 %v3205, %v3371
      %v3478 = vmul.f32 %v3206, %v3381
      %v3479 = vmul.f32 %v3207, %v3391
      %v3480 = vmul.f32 %v3208, %v3401
      %v3481 = vmul.f32 %v3209, %v3411
      %v3482 = vmul.f32 %v3210, %v3421
      %v3483 = vmul.f32 %v3211, %v3431
      %v3484 = vmul.f32 %v3212, %v3441
      %v3485 = vmul.f32 %v3213, %v3451
      %v3486 = vmul.f32 %v3214, %v3461
      %v3487 = vmul.f32 %v3215, %v3471
      %v3488 = vmul.f32 %v3472, %v1777
      %v3489 = vmul.f32 %v3473, %v1777
      %v3490 = vmul.f32 %v3474, %v1777
      %v3491 = vmul.f32 %v3475, %v1777
      %v3492 = vmul.f32 %v3476, %v1777
      %v3493 = vmul.f32 %v3477, %v1777
      %v3494 = vmul.f32 %v3478, %v1777
      %v3495 = vmul.f32 %v3479, %v1777
      %v3496 = vmul.f32 %v3480, %v1777
      %v3497 = vmul.f32 %v3481, %v1777
      %v3498 = vmul.f32 %v3482, %v1777
      %v3499 = vmul.f32 %v3483, %v1777
      %v3500 = vmul.f32 %v3484, %v1777
      %v3501 = vmul.f32 %v3485, %v1777
      %v3502 = vmul.f32 %v3486, %v1777
      %v3503 = vmul.f32 %v3487, %v1777
      %v3504 = vadd.f32 %v3488, %v1796
      %v3505 = vadd.f32 %v3489, %v1796
      %v3506 = vadd.f32 %v3490, %v1796
      %v3507 = vadd.f32 %v3491, %v1796
      %v3508 = vadd.f32 %v3492, %v1796
      %v3509 = vadd.f32 %v3493, %v1796
      %v3510 = vadd.f32 %v3494, %v1796
      %v3511 = vadd.f32 %v3495, %v1796
      %v3512 = vadd.f32 %v3496, %v1796
      %v3513 = vadd.f32 %v3497, %v1796
      %v3514 = vadd.f32 %v3498, %v1796
      %v3515 = vadd.f32 %v3499, %v1796
      %v3516 = vadd.f32 %v3500, %v1796
      %v3517 = vadd.f32 %v3501, %v1796
      %v3518 = vadd.f32 %v3502, %v1796
      %v3519 = vadd.f32 %v3503, %v1796
      %v3520 = vadd.f32 %v3504, 3.0
      %v3521 = vadd.f32 %v3505, 3.0
      %v3522 = vadd.f32 %v3506, 3.0
      %v3523 = vadd.f32 %v3507, 3.0
      %v3524 = vadd.f32 %v3508, 3.0
      %v3525 = vadd.f32 %v3509, 3.0
      %v3526 = vadd.f32 %v3510, 3.0
      %v3527 = vadd.f32 %v3511, 3.0
      %v3528 = vadd.f32 %v3512, 3.0
      %v3529 = vadd.f32 %v3513, 3.0
      %v3530 = vadd.f32 %v3514, 3.0
      %v3531 = vadd.f32 %v3515, 3.0
      %v3532 = vadd.f32 %v3516, 3.0
      %v3533 = vadd.f32 %v3517, 3.0
      %v3534 = vadd.f32 %v3518, 3.0
      %v3535 = vadd.f32 %v3519, 3.0
      %v3536 = vmax.f32 %v3520, 0.0
      %v3537 = vmax.f32 %v3521, 0.0
      %v3538 = vmax.f32 %v3522, 0.0
      %v3539 = vmax.f32 %v3523, 0.0
      %v3540 = vmax.f32 %v3524, 0.0
      %v3541 = vmax.f32 %v3525, 0.0
      %v3542 = vmax.f32 %v3526, 0.0
      %v3543 = vmax.f32 %v3527, 0.0
      %v3544 = vmax.f32 %v3528, 0.0
      %v3545 = vmax.f32 %v3529, 0.0
      %v3546 = vmax.f32 %v3530, 0.0
      %v3547 = vmax.f32 %v3531, 0.0
      %v3548 = vmax.f32 %v3532, 0.0
      %v3549 = vmax.f32 %v3533, 0.0
      %v3550 = vmax.f32 %v3534, 0.0
      %v3551 = vmax.f32 %v3535, 0.0
      %v3552 = vmin.f32 %v3536, 6.0
      %v3553 = vmin.f32 %v3537, 6.0
      %v3554 = vmin.f32 %v3538, 6.0
      %v3555 = vmin.f32 %v3539, 6.0
      %v3556 = vmin.f32 %v3540, 6.0
      %v3557 = vmin.f32 %v3541, 6.0
      %v3558 = vmin.f32 %v3542, 6.0
      %v3559 = vmin.f32 %v3543, 6.0
      %v3560 = vmin.f32 %v3544, 6.0
      %v3561 = vmin.f32 %v3545, 6.0
      %v3562 = vmin.f32 %v3546, 6.0
      %v3563 = vmin.f32 %v3547, 6.0
      %v3564 = vmin.f32 %v3548, 6.0
      %v3565 = vmin.f32 %v3549, 6.0
      %v3566 = vmin.f32 %v3550, 6.0
      %v3567 = vmin.f32 %v3551, 6.0
      %v3568 = vmul.f32 %v3504, %v3552
      %v3569 = vmul.f32 %v3505, %v3553
      %v3570 = vmul.f32 %v3506, %v3554
      %v3571 = vmul.f32 %v3507, %v3555
      %v3572 = vmul.f32 %v3508, %v3556
      %v3573 = vmul.f32 %v3509, %v3557
      %v3574 = vmul.f32 %v3510, %v3558
      %v3575 = vmul.f32 %v3511, %v3559
      %v3576 = vmul.f32 %v3512, %v3560
      %v3577 = vmul.f32 %v3513, %v3561
      %v3578 = vmul.f32 %v3514, %v3562
      %v3579 = vmul.f32 %v3515, %v3563
      %v3580 = vmul.f32 %v3516, %v3564
      %v3581 = vmul.f32 %v3517, %v3565
      %v3582 = vmul.f32 %v3518, %v3566
      %v3583 = vmul.f32 %v3519, %v3567
      %v3584 = vmul.f32 %v3568, 0.16666667
      %v3585 = vmul.f32 %v3569, 0.16666667
      %v3586 = vmul.f32 %v3570, 0.16666667
      %v3587 = vmul.f32 %v3571, 0.16666667
      %v3588 = vmul.f32 %v3572, 0.16666667
      %v3589 = vmul.f32 %v3573, 0.16666667
      %v3590 = vmul.f32 %v3574, 0.16666667
      %v3591 = vmul.f32 %v3575, 0.16666667
      %v3592 = vmul.f32 %v3576, 0.16666667
      %v3593 = vmul.f32 %v3577, 0.16666667
      %v3594 = vmul.f32 %v3578, 0.16666667
      %v3595 = vmul.f32 %v3579, 0.16666667
      %v3596 = vmul.f32 %v3580, 0.16666667
      %v3597 = vmul.f32 %v3581, 0.16666667
      %v3598 = vmul.f32 %v3582, 0.16666667
      %v3599 = vmul.f32 %v3583, 0.16666667
      %v3600 = vpack.c.bf16 %v3584, %v3584
      %v3601 = vpack.c.bf16 %v3585, %v3585
      %v3602 = vpack.c.bf16 %v3586, %v3586
      %v3603 = vpack.c.bf16 %v3587, %v3587
      %v3604 = vpack.c.bf16 %v3588, %v3588
      %v3605 = vpack.c.bf16 %v3589, %v3589
      %v3606 = vpack.c.bf16 %v3590, %v3590
      %v3607 = vpack.c.bf16 %v3591, %v3591
      %v3608 = vpack.c.bf16 %v3592, %v3592
      %v3609 = vpack.c.bf16 %v3593, %v3593
      %v3610 = vpack.c.bf16 %v3594, %v3594
      %v3611 = vpack.c.bf16 %v3595, %v3595
      %v3612 = vpack.c.bf16 %v3596, %v3596
      %v3613 = vpack.c.bf16 %v3597, %v3597
      %v3614 = vpack.c.bf16 %v3598, %v3598
      %v3615 = vpack.c.bf16 %v3599, %v3599
      %s3616 = smul.u32 8, 2
      %s3617 = smul.addr %s3616, 4
      %s3618 = scalar_lea.vmem %s230, %s3617
      %3619 = vst.msk [vmem:[%s3618] sm:$0xf] %vm1913, %v3600
      %3620 = vst.msk [vmem:[%s3618 + $0x4] sm:$0xf] %vm1913, %v3601
      %3621 = vst.msk [vmem:[%s3618 + $0x8] sm:$0xf] %vm1913, %v3602
      %3622 = vst.msk [vmem:[%s3618 + $0xc] sm:$0xf] %vm1913, %v3603
      %3623 = vst.msk [vmem:[%s3618 + $0x10] sm:$0xf] %vm1913, %v3604
      %3624 = vst.msk [vmem:[%s3618 + $0x14] sm:$0xf] %vm1913, %v3605
      %3625 = vst.msk [vmem:[%s3618 + $0x18] sm:$0xf] %vm1913, %v3606
      %3626 = vst.msk [vmem:[%s3618 + $0x1c] sm:$0xf] %vm1913, %v3607
      %3627 = vst.msk [vmem:[%s3618 + $0x20] sm:$0xf] %vm1913, %v3608
      %3628 = vst.msk [vmem:[%s3618 + $0x24] sm:$0xf] %vm1913, %v3609
      %3629 = vst.msk [vmem:[%s3618 + $0x28] sm:$0xf] %vm1913, %v3610
      %3630 = vst.msk [vmem:[%s3618 + $0x2c] sm:$0xf] %vm1913, %v3611
      %3631 = vst.msk [vmem:[%s3618 + $0x30] sm:$0xf] %vm1913, %v3612
      %3632 = vst.msk [vmem:[%s3618 + $0x34] sm:$0xf] %vm1913, %v3613
      %3633 = vst.msk [vmem:[%s3618 + $0x38] sm:$0xf] %vm1913, %v3614
      %3634 = vst.msk [vmem:[%s3618 + $0x3c] sm:$0xf] %vm1913, %v3615
      %v3635 = vld [vmem:[%s233] sm:$0x1]
      %v3636 = vsel %vm1416, %v3584, 0.0
      %v3637 = vsel %vm1416, %v3586, 0.0
      %v3638 = vadd.f32 %v3636, %v3637
      %v3639 = vsel %vm1416, %v3588, 0.0
      %v3640 = vadd.f32 %v3638, %v3639
      %v3641 = vsel %vm1416, %v3590, 0.0
      %v3642 = vadd.f32 %v3640, %v3641
      %v3643 = vsel %vm1416, %v3592, 0.0
      %v3644 = vadd.f32 %v3642, %v3643
      %v3645 = vsel %vm1416, %v3594, 0.0
      %v3646 = vadd.f32 %v3644, %v3645
      %v3647 = vsel %vm1416, %v3596, 0.0
      %v3648 = vadd.f32 %v3646, %v3647
      %v3649 = vsel %vm1416, %v3598, 0.0
      %v3650 = vadd.f32 %v3648, %v3649
      %v3651 = vsel %vm1416, %v3585, 0.0
      %v3652 = vsel %vm1416, %v3587, 0.0
      %v3653 = vadd.f32 %v3651, %v3652
      %v3654 = vsel %vm1416, %v3589, 0.0
      %v3655 = vadd.f32 %v3653, %v3654
      %v3656 = vsel %vm1416, %v3591, 0.0
      %v3657 = vadd.f32 %v3655, %v3656
      %v3658 = vsel %vm1416, %v3593, 0.0
      %v3659 = vadd.f32 %v3657, %v3658
      %v3660 = vsel %vm1416, %v3595, 0.0
      %v3661 = vadd.f32 %v3659, %v3660
      %v3662 = vsel %vm1416, %v3597, 0.0
      %v3663 = vadd.f32 %v3661, %v3662
      %v3664 = vsel %vm1416, %v3599, 0.0
      %v3665 = vadd.f32 %v3663, %v3664
      %v3666 = vsel %vm1416, %v3650, 0.0
      %v3667 = vsel %vm1416, %v3665, 0.0
      %v3668 = vadd.f32 %v3666, %v3667
      %v3669 = vrot.slane %v3668, 4
      %v3670 = vadd.f32 %v3668, %v3669
      %v3671 = vrot.slane %v3670, 2
      %v3672 = vadd.f32 %v3670, %v3671
      %v3673 = vrot.slane %v3672, 1
      %v3674 = vadd.f32 %v3672, %v3673
      %v3675 = vmul.f32 %v3674, 0.00390625
      %v3676 = vadd.f32 %v3635, %v3675
      %3677 = vst.msk [vmem:[%s233] sm:$0x1] %vm238, %v3676
      %p3678 = scmp.lt.s32.totalorder %s17, 1
      %s3679 = scalar_select %p3678, %s17, 1
      %s3680 = smul.addr %s3679, 32
      %s3681 = smul.addr %s3680, 4
      %s3682 = scalar_lea.vmem %s4, %s3681
      %p3683 = scmp.lt.s32.totalorder %s17, 1
      %s3684 = scalar_select %p3683, %s17, 1
      %s3685 = scalar_lea.vmem %s5, %s3684
      // Predicated region
      $region37: #{ldp_block_forward.8} parent=35 // pred_check
        %p3686 = pneg %p124
      $region38: #{ldp_block_forward.8} parent=35 // pred_check_branch
        %3688 = sbr.rel (%p3686) target = $region40
      $region39: #{ldp_block_forward.8} parent=35 // pred_region
        _
      $region40: #{ldp_block_forward.8} parent=35 // pred_fallthru
        _
      // Predicated region
      $region41: #{ldp_block_forward.8} parent=35 // pred_check
        %p3689 = pneg %p150
      $region42: #{ldp_block_forward.8} parent=35 // pred_check_branch
        %3691 = sbr.rel (%p3689) target = $region44
      $region43: #{ldp_block_forward.8} parent=35 // pred_region
        _
      $region44: #{ldp_block_forward.8} parent=35 // pred_fallthru
        _
    $region36: #{ldp_block_forward.8} parent=5 // pred_fallthru
      _
    %p3692 = scmp.le.s32.totalorder 2, %s12
    // Predicated region
    $region45: #{ldp_block_forward.8} parent=5 // pred_check
      %p3693 = pneg %p3692
    $region46: #{ldp_block_forward.8} parent=5 // pred_check_branch
      %3695 = sbr.rel (%p3693) target = $region48
    $region47: #{ldp_block_forward.8} parent=5 // pred_region
      %s3696 = ssub.s32 %s12, 2
      // Predicated region
      $region49: #{ldp_block_forward.8} parent=47 // pred_check
        %p3697 = pneg %p130
      $region50: #{ldp_block_forward.8} parent=47 // pred_check_branch
        %3699 = sbr.rel (%p3697) target = $region52
      $region51: #{ldp_block_forward.8} parent=47 // pred_region
        %p3700 = scmp.lt.s32.totalorder %s18, 1
        %s3701 = scalar_select %p3700, %s18, 1
        %s3702 = smul.addr %s3701, 32
        %s3703 = smul.addr %s3702, 4
        %s3704 = scalar_lea.vmem %s4, %s3703
      $region52: #{ldp_block_forward.8} parent=47 // pred_fallthru
        _
      // Predicated region
      $region53: #{ldp_block_forward.8} parent=47 // pred_check
        %p3705 = pneg %p156
      $region54: #{ldp_block_forward.8} parent=47 // pred_check_branch
        %3707 = sbr.rel (%p3705) target = $region56
      $region55: #{ldp_block_forward.8} parent=47 // pred_region
        %p3708 = scmp.lt.s32.totalorder %s18, 1
        %s3709 = scalar_select %p3708, %s18, 1
        %s3710 = scalar_lea.vmem %s5, %s3709
      $region56: #{ldp_block_forward.8} parent=47 // pred_fallthru
        _
    $region48: #{ldp_block_forward.8} parent=5 // pred_fallthru
      _
  $region6: #{ldp_block_forward.8} parent=0 // loop_footer
    %s16 = sadd.s32 1, %s12
  $region7: #{ldp_block_forward.8} parent=0 // loop_footer_branch
    %11 = sbr.rel target = $region3
  $region8: #{ldp_block_forward.8} parent=0 // loop_exit
    _

// kernel: ldp_block_forward.11
$region0: #{ldp_block_forward.11}
  #allocation0 [shape = 'u32[]', space=smem, size = 0x4, offset = 0x4, fixed_abs, tag = 'smem constant byte address 0x4 - core index']
  #allocation1 [shape = 'u32[72,128]{1,0:T(1,128)}', space=vmem, size = 0x9000, scoped, tag = 'internal scratch']
  %s0 = inlined_call_operand.vmem [shape: bf16[2,9,9,32], index: 0, kind: input, shape index: {}]
  %s1 = inlined_call_operand.vmem [shape: bf16[2,9,9,32], index: 1, kind: input, shape index: {}]
  %s2 = inlined_call_operand.vmem [shape: bf16[2,9,9,32], index: 2, kind: input, shape index: {}]
  %s3 = inlined_call_operand.vmem [shape: bf16[2,9,9,32], index: 3, kind: input, shape index: {}]
  %s4 = inlined_call_operand.vmem [shape: f32[9,32], index: 4, kind: input, shape index: {}]
  %s5 = inlined_call_operand.vmem [shape: f32[1,32], index: 5, kind: input, shape index: {}]
  %s6 = inlined_call_operand.vmem [shape: f32[1,32], index: 6, kind: input, shape index: {}]
  %s7 = inlined_call_operand.vmem [shape: bf16[2,8,8,32], index: 7, kind: output, shape index: {0}]
  %s8 = inlined_call_operand.vmem [shape: f32[2,1,32], index: 8, kind: output, shape index: {1}]
  %9 = xla_tuple %s7, %s8
  %s10 = sld [smem:[#allocation0]]
  $region69: #{ldp_block_forward.11} parent=0
    _
  %s12 = ssub.s32 1, %s10
  %s13 = scalar_select 0, %s12, %s10
  loop: start=0, step=1, limit=4
  $region2: #{ldp_block_forward.11} parent=0 // loop_pre_header
    _
  $region3: #{ldp_block_forward.11} parent=0 // loop_header
    %s15 = sphi 0, %s19
    %p16 = scmp.ge.s32.totalorder %s15, 4
    %s25 = sphi 0, %s27
    %s28 = sphi 0, %s25
    %s29 = sphi 0, %s28
    %s45 = sphi 0, %s29
    %s51 = sphi 0, %s53
    %s54 = sphi 0, %s51
    %s55 = sphi 0, %s54
    %s71 = sphi 0, %s55
    %s77 = sphi 0, %s79
    %s80 = sphi 0, %s77
    %s81 = sphi 0, %s80
    %s97 = sphi 0, %s81
    %s103 = sphi 0, %s105
    %s106 = sphi 0, %s103
    %s107 = sphi 0, %s106
    %s123 = sphi 0, %s107
    %s127 = sphi 0, %s127
    %s129 = sphi 0, %s127
    %s130 = sphi 0, %s129
    %s144 = sphi 0, %s130
    %s148 = sphi 0, %s148
    %s150 = sphi 0, %s148
    %s151 = sphi 0, %s150
    %s165 = sphi 0, %s151
    %s169 = sphi 0, %s169
    %s171 = sphi 0, %s169
    %s172 = sphi 0, %s171
    %s186 = sphi 0, %s172
    %s192 = sphi 0, %s194
    %s195 = sphi 0, %s192
    %s196 = sphi 0, %s195
    %s212 = sphi 0, %s196
    %s218 = sphi 0, %s220
    %s221 = sphi 0, %s218
    %s222 = sphi 0, %s221
    %s238 = sphi 0, %s222
  $region4: #{ldp_block_forward.11} parent=0 // loop_header_branch
    %18 = sbr.rel (%p16) target = $region8
  $region5: #{ldp_block_forward.11} parent=0 // loop_body
    %s20 = ssub.s32 %s15, 1
    %s21 = ssub.s32 %s15, 2
    %s22 = sadd.s32 %s15, 1
    %s23 = ssub.s32 %s15, %s22
    %p24 = scmp.eq.s32.totalorder %s23, 0
    %s26 = sadd.s32 %s25, 1
    %s27 = scalar_select %p24, %s25, %s26
    %p30 = pneg %p24
    %p31 = scmp.eq.s32.totalorder %s15, 1
    %p32 = por %p30, %p31
    %p33 = scmp.ne.s32.totalorder %s25, %s28
    %p34 = scmp.eq.s32.totalorder %s15, 0
    %p35 = por %p33, %p34
    %p36 = scmp.ne.s32.totalorder %s25, %s28
    %p37 = scmp.eq.s32.totalorder %s20, 1
    %p38 = por %p36, %p37
    %p39 = scmp.ne.s32.totalorder %s28, %s29
    %p40 = scmp.eq.s32.totalorder %s20, 0
    %p41 = por %p39, %p40
    %p42 = scmp.ne.s32.totalorder %s28, %s29
    %p43 = scmp.eq.s32.totalorder %s21, 1
    %p44 = por %p42, %p43
    %p46 = scmp.ne.s32.totalorder %s29, %s45
    %p47 = scmp.eq.s32.totalorder %s21, 0
    %p48 = por %p46, %p47
    %s49 = ssub.s32 %s15, %s22
    %p50 = scmp.eq.s32.totalorder %s49, 0
    %s52 = sadd.s32 %s51, 1
    %s53 = scalar_select %p50, %s51, %s52
    %p56 = pneg %p50
    %p57 = scmp.eq.s32.totalorder %s15, 1
    %p58 = por %p56, %p57
    %p59 = scmp.ne.s32.totalorder %s51, %s54
    %p60 = scmp.eq.s32.totalorder %s15, 0
    %p61 = por %p59, %p60
    %p62 = scmp.ne.s32.totalorder %s51, %s54
    %p63 = scmp.eq.s32.totalorder %s20, 1
    %p64 = por %p62, %p63
    %p65 = scmp.ne.s32.totalorder %s54, %s55
    %p66 = scmp.eq.s32.totalorder %s20, 0
    %p67 = por %p65, %p66
    %p68 = scmp.ne.s32.totalorder %s54, %s55
    %p69 = scmp.eq.s32.totalorder %s21, 1
    %p70 = por %p68, %p69
    %p72 = scmp.ne.s32.totalorder %s55, %s71
    %p73 = scmp.eq.s32.totalorder %s21, 0
    %p74 = por %p72, %p73
    %s75 = ssub.s32 %s15, %s22
    %p76 = scmp.eq.s32.totalorder %s75, 0
    %s78 = sadd.s32 %s77, 1
    %s79 = scalar_select %p76, %s77, %s78
    %p82 = pneg %p76
    %p83 = scmp.eq.s32.totalorder %s15, 1
    %p84 = por %p82, %p83
    %p85 = scmp.ne.s32.totalorder %s77, %s80
    %p86 = scmp.eq.s32.totalorder %s15, 0
    %p87 = por %p85, %p86
    %p88 = scmp.ne.s32.totalorder %s77, %s80
    %p89 = scmp.eq.s32.totalorder %s20, 1
    %p90 = por %p88, %p89
    %p91 = scmp.ne.s32.totalorder %s80, %s81
    %p92 = scmp.eq.s32.totalorder %s20, 0
    %p93 = por %p91, %p92
    %p94 = scmp.ne.s32.totalorder %s80, %s81
    %p95 = scmp.eq.s32.totalorder %s21, 1
    %p96 = por %p94, %p95
    %p98 = scmp.ne.s32.totalorder %s81, %s97
    %p99 = scmp.eq.s32.totalorder %s21, 0
    %p100 = por %p98, %p99
    %s101 = ssub.s32 %s15, %s22
    %p102 = scmp.eq.s32.totalorder %s101, 0
    %s104 = sadd.s32 %s103, 1
    %s105 = scalar_select %p102, %s103, %s104
    %p108 = pneg %p102
    %p109 = scmp.eq.s32.totalorder %s15, 1
    %p110 = por %p108, %p109
    %p111 = scmp.ne.s32.totalorder %s103, %s106
    %p112 = scmp.eq.s32.totalorder %s15, 0
    %p113 = por %p111, %p112
    %p114 = scmp.ne.s32.totalorder %s103, %s106
    %p115 = scmp.eq.s32.totalorder %s20, 1
    %p116 = por %p114, %p115
    %p117 = scmp.ne.s32.totalorder %s106, %s107
    %p118 = scmp.eq.s32.totalorder %s20, 0
    %p119 = por %p117, %p118
    %p120 = scmp.ne.s32.totalorder %s106, %s107
    %p121 = scmp.eq.s32.totalorder %s21, 1
    %p122 = por %p120, %p121
    %p124 = scmp.ne.s32.totalorder %s107, %s123
    %p125 = scmp.eq.s32.totalorder %s21, 0
    %p126 = por %p124, %p125
    %s128 = sadd.s32 %s127, 1
    %p131 = scmp.eq.s32.totalorder %s15, 1
    %p132 = scmp.ne.s32.totalorder %s127, %s129
    %p133 = scmp.eq.s32.totalorder %s15, 0
    %p134 = por %p132, %p133
    %p135 = scmp.ne.s32.totalorder %s127, %s129
    %p136 = scmp.eq.s32.totalorder %s20, 1
    %p137 = por %p135, %p136
    %p138 = scmp.ne.s32.totalorder %s129, %s130
    %p139 = scmp.eq.s32.totalorder %s20, 0
    %p140 = por %p138, %p139
    %p141 = scmp.ne.s32.totalorder %s129, %s130
    %p142 = scmp.eq.s32.totalorder %s21, 1
    %p143 = por %p141, %p142
    %p145 = scmp.ne.s32.totalorder %s130, %s144
    %p146 = scmp.eq.s32.totalorder %s21, 0
    %p147 = por %p145, %p146
    %s149 = sadd.s32 %s148, 1
    %p152 = scmp.eq.s32.totalorder %s15, 1
    %p153 = scmp.ne.s32.totalorder %s148, %s150
    %p154 = scmp.eq.s32.totalorder %s15, 0
    %p155 = por %p153, %p154
    %p156 = scmp.ne.s32.totalorder %s148, %s150
    %p157 = scmp.eq.s32.totalorder %s20, 1
    %p158 = por %p156, %p157
    %p159 = scmp.ne.s32.totalorder %s150, %s151
    %p160 = scmp.eq.s32.totalorder %s20, 0
    %p161 = por %p159, %p160
    %p162 = scmp.ne.s32.totalorder %s150, %s151
    %p163 = scmp.eq.s32.totalorder %s21, 1
    %p164 = por %p162, %p163
    %p166 = scmp.ne.s32.totalorder %s151, %s165
    %p167 = scmp.eq.s32.totalorder %s21, 0
    %p168 = por %p166, %p167
    %s170 = sadd.s32 %s169, 1
    %p173 = scmp.eq.s32.totalorder %s15, 1
    %p174 = scmp.ne.s32.totalorder %s169, %s171
    %p175 = scmp.eq.s32.totalorder %s15, 0
    %p176 = por %p174, %p175
    %p177 = scmp.ne.s32.totalorder %s169, %s171
    %p178 = scmp.eq.s32.totalorder %s20, 1
    %p179 = por %p177, %p178
    %p180 = scmp.ne.s32.totalorder %s171, %s172
    %p181 = scmp.eq.s32.totalorder %s20, 0
    %p182 = por %p180, %p181
    %p183 = scmp.ne.s32.totalorder %s171, %s172
    %p184 = scmp.eq.s32.totalorder %s21, 1
    %p185 = por %p183, %p184
    %p187 = scmp.ne.s32.totalorder %s172, %s186
    %p188 = scmp.eq.s32.totalorder %s21, 0
    %p189 = por %p187, %p188
    %s190 = ssub.s32 %s15, %s22
    %p191 = scmp.eq.s32.totalorder %s190, 0
    %s193 = sadd.s32 %s192, 1
    %s194 = scalar_select %p191, %s192, %s193
    %p197 = pneg %p191
    %p198 = scmp.eq.s32.totalorder %s15, 1
    %p199 = por %p197, %p198
    %p200 = scmp.ne.s32.totalorder %s192, %s195
    %p201 = scmp.eq.s32.totalorder %s15, 0
    %p202 = por %p200, %p201
    %p203 = scmp.ne.s32.totalorder %s192, %s195
    %p204 = scmp.eq.s32.totalorder %s20, 1
    %p205 = por %p203, %p204
    %p206 = scmp.ne.s32.totalorder %s195, %s196
    %p207 = scmp.eq.s32.totalorder %s20, 0
    %p208 = por %p206, %p207
    %p209 = scmp.ne.s32.totalorder %s195, %s196
    %p210 = scmp.eq.s32.totalorder %s21, 1
    %p211 = por %p209, %p210
    %p213 = scmp.ne.s32.totalorder %s196, %s212
    %p214 = scmp.eq.s32.totalorder %s21, 0
    %p215 = por %p213, %p214
    %s216 = ssub.s32 %s15, %s22
    %p217 = scmp.eq.s32.totalorder %s216, 0
    %s219 = sadd.s32 %s218, 1
    %s220 = scalar_select %p217, %s218, %s219
    %p223 = pneg %p217
    %p224 = scmp.eq.s32.totalorder %s15, 1
    %p225 = por %p223, %p224
    %p226 = scmp.ne.s32.totalorder %s218, %s221
    %p227 = scmp.eq.s32.totalorder %s15, 0
    %p228 = por %p226, %p227
    %p229 = scmp.ne.s32.totalorder %s218, %s221
    %p230 = scmp.eq.s32.totalorder %s20, 1
    %p231 = por %p229, %p230
    %p232 = scmp.ne.s32.totalorder %s221, %s222
    %p233 = scmp.eq.s32.totalorder %s20, 0
    %p234 = por %p232, %p233
    %p235 = scmp.ne.s32.totalorder %s221, %s222
    %p236 = scmp.eq.s32.totalorder %s21, 1
    %p237 = por %p235, %p236
    %p239 = scmp.ne.s32.totalorder %s222, %s238
    %p240 = scmp.eq.s32.totalorder %s21, 0
    %p241 = por %p239, %p240
    %p242 = scmp.le.s32.totalorder 1, %s15
    %p243 = scmp.lt.s32.totalorder %s15, 3
    %p244 = pnand %p242, %p243
    %p245 = pneg %p244
    // Predicated region
    $region9: #{ldp_block_forward.11} parent=5 // pred_check
      _
    $region10: #{ldp_block_forward.11} parent=5 // pred_check_branch
      %247 = sbr.rel (%p244) target = $region12
    $region11: #{ldp_block_forward.11} parent=5 // pred_region
      %s248 = ssub.s32 %s15, 1
      // Predicated region
      $region13: #{ldp_block_forward.11} parent=11 // pred_check
        %p249 = pneg %p140
      $region14: #{ldp_block_forward.11} parent=11 // pred_check_branch
        %251 = sbr.rel (%p249) target = $region16
      $region15: #{ldp_block_forward.11} parent=11 // pred_region
        _
      $region16: #{ldp_block_forward.11} parent=11 // pred_fallthru
        _
      // Predicated region
      $region17: #{ldp_block_forward.11} parent=11 // pred_check
        %p252 = pneg %p161
      $region18: #{ldp_block_forward.11} parent=11 // pred_check_branch
        %254 = sbr.rel (%p252) target = $region20
      $region19: #{ldp_block_forward.11} parent=11 // pred_region
        _
      $region20: #{ldp_block_forward.11} parent=11 // pred_fallthru
        _
      // Predicated region
      $region21: #{ldp_block_forward.11} parent=11 // pred_check
        %p255 = pneg %p182
      $region22: #{ldp_block_forward.11} parent=11 // pred_check_branch
        %257 = sbr.rel (%p255) target = $region24
      $region23: #{ldp_block_forward.11} parent=11 // pred_region
        _
      $region24: #{ldp_block_forward.11} parent=11 // pred_fallthru
        _
    $region12: #{ldp_block_forward.11} parent=5 // pred_fallthru
      _
    %p258 = scmp.lt.s32.totalorder %s15, 2
    // Predicated region
    $region25: #{ldp_block_forward.11} parent=5 // pred_check
      %p259 = pneg %p258
    $region26: #{ldp_block_forward.11} parent=5 // pred_check_branch
      %261 = sbr.rel (%p259) target = $region28
    $region27: #{ldp_block_forward.11} parent=5 // pred_region
      // Predicated region
      $region29: #{ldp_block_forward.11} parent=27 // pred_check
        %p262 = pneg %p35
      $region30: #{ldp_block_forward.11} parent=27 // pred_check_branch
        %264 = sbr.rel (%p262) target = $region32
      $region31: #{ldp_block_forward.11} parent=27 // pred_region
        %p265 = scmp.lt.s32.totalorder %s15, 1
        %s266 = scalar_select %p265, %s15, 1
        %s267 = smul.addr %s266, 18
        %s268 = smul.addr %s267, 4
        %s269 = scalar_lea.vmem %s0, %s268
      $region32: #{ldp_block_forward.11} parent=27 // pred_fallthru
        _
      // Predicated region
      $region33: #{ldp_block_forward.11} parent=27 // pred_check
        %p270 = pneg %p61
      $region34: #{ldp_block_forward.11} parent=27 // pred_check_branch
        %272 = sbr.rel (%p270) target = $region36
      $region35: #{ldp_block_forward.11} parent=27 // pred_region
        %p273 = scmp.lt.s32.totalorder %s15, 1
        %s274 = scalar_select %p273, %s15, 1
        %s275 = smul.addr %s274, 18
        %s276 = smul.addr %s275, 4
        %s277 = scalar_lea.vmem %s1, %s276
      $region36: #{ldp_block_forward.11} parent=27 // pred_fallthru
        _
      // Predicated region
      $region37: #{ldp_block_forward.11} parent=27 // pred_check
        %p278 = pneg %p87
      $region38: #{ldp_block_forward.11} parent=27 // pred_check_branch
        %280 = sbr.rel (%p278) target = $region40
      $region39: #{ldp_block_forward.11} parent=27 // pred_region
        %p281 = scmp.lt.s32.totalorder %s15, 1
        %s282 = scalar_select %p281, %s15, 1
        %s283 = smul.addr %s282, 18
        %s284 = smul.addr %s283, 4
        %s285 = scalar_lea.vmem %s2, %s284
      $region40: #{ldp_block_forward.11} parent=27 // pred_fallthru
        _
      // Predicated region
      $region41: #{ldp_block_forward.11} parent=27 // pred_check
        %p286 = pneg %p113
      $region42: #{ldp_block_forward.11} parent=27 // pred_check_branch
        %288 = sbr.rel (%p286) target = $region44
      $region43: #{ldp_block_forward.11} parent=27 // pred_region
        %p289 = scmp.lt.s32.totalorder %s15, 1
        %s290 = scalar_select %p289, %s15, 1
        %s291 = smul.addr %s290, 18
        %s292 = smul.addr %s291, 4
        %s293 = scalar_lea.vmem %s3, %s292
      $region44: #{ldp_block_forward.11} parent=27 // pred_fallthru
        _
    $region28: #{ldp_block_forward.11} parent=5 // pred_fallthru
      _
    %p294 = scmp.le.s32.totalorder 1, %s15
    %p295 = scmp.lt.s32.totalorder %s15, 3
    %p296 = pnand %p294, %p295
    %p297 = pneg %p296
    // Predicated region
    $region45: #{ldp_block_forward.11} parent=5 // pred_check
      _
    $region46: #{ldp_block_forward.11} parent=5 // pred_check_branch
      %299 = sbr.rel (%p296) target = $region48
    $region47: #{ldp_block_forward.11} parent=5 // pred_region
      %s300 = ssub.s32 %s15, 1
      %p301 = scmp.lt.s32.totalorder %s20, 1
      %s302 = scalar_select %p301, %s20, 1
      %s303 = smul.addr %s302, 18
      %s304 = smul.addr %s303, 4
      %s305 = scalar_lea.vmem %s0, %s304
      %p306 = pneg %p41
      %p307 = pneg %p38
      %p308 = scmp.lt.s32.totalorder %s20, 1
      %s309 = scalar_select %p308, %s20, 1
      %s310 = smul.addr %s309, 18
      %s311 = smul.addr %s310, 4
      %s312 = scalar_lea.vmem %s1, %s311
      %p313 = pneg %p67
      %p314 = pneg %p64
      %p315 = scmp.lt.s32.totalorder %s20, 1
      %s316 = scalar_select %p315, %s20, 1
      %s317 = smul.addr %s316, 18
      %s318 = smul.addr %s317, 4
      %s319 = scalar_lea.vmem %s2, %s318
      %p320 = pneg %p93
      %p321 = pneg %p90
      %p322 = scmp.lt.s32.totalorder %s20, 1
      %s323 = scalar_select %p322, %s20, 1
      %s324 = smul.addr %s323, 18
      %s325 = smul.addr %s324, 4
      %s326 = scalar_lea.vmem %s3, %s325
      %p327 = pneg %p119
      %p328 = pneg %p116
      %p329 = pneg %p140
      %p330 = pneg %p137
      %p331 = pneg %p161
      %p332 = pneg %p158
      %p333 = pneg %p182
      %p334 = pneg %p179
      %p335 = pneg %p208
      %p336 = pneg %p205
      %p337 = scmp.lt.s32.totalorder %s20, 1
      %s338 = scalar_select %p337, %s20, 1
      %s339 = smul.addr %s338, 8
      %s340 = smul.addr %s339, 4
      %s341 = scalar_lea.vmem %s7, %s340
      %p342 = pneg %p234
      %p343 = pneg %p231
      %p344 = scmp.lt.s32.totalorder %s20, 1
      %s345 = scalar_select %p344, %s20, 1
      %s346 = scalar_lea.vmem %s8, %s345
      %p347 = scmp.lt.s32.totalorder %s20, 1
      %s348 = scalar_select %p347, %s20, 1
      %s349 = smul.addr %s348, 18
      %s350 = smul.addr %s349, 4
      %s351 = scalar_lea.vmem %s0, %s350
      %p352 = scmp.lt.s32.totalorder %s20, 1
      %s353 = scalar_select %p352, %s20, 1
      %s354 = smul.addr %s353, 18
      %s355 = smul.addr %s354, 4
      %s356 = scalar_lea.vmem %s1, %s355
      %p357 = scmp.lt.s32.totalorder %s20, 1
      %s358 = scalar_select %p357, %s20, 1
      %s359 = smul.addr %s358, 18
      %s360 = smul.addr %s359, 4
      %s361 = scalar_lea.vmem %s2, %s360
      %p362 = scmp.lt.s32.totalorder %s20, 1
      %s363 = scalar_select %p362, %s20, 1
      %s364 = smul.addr %s363, 18
      %s365 = smul.addr %s364, 4
      %s366 = scalar_lea.vmem %s3, %s365
      %p367 = scmp.lt.s32.totalorder %s20, 1
      %s368 = scalar_select %p367, %s20, 1
      %s369 = smul.addr %s368, 8
      %s370 = smul.addr %s369, 4
      %s371 = scalar_lea.vmem %s7, %s370
      %p372 = scmp.lt.s32.totalorder %s20, 1
      %s373 = scalar_select %p372, %s20, 1
      %s374 = scalar_lea.vmem %s8, %s373
      %v375 = vld [vmem:[%s4] sm:$0xff]
      %v376 = vld [vmem:[%s4 + $0x8] sm:$0x1]
      %v377 = vld [vmem:[%s5] sm:$0x1]
      %v378 = vld [vmem:[%s6] sm:$0x1]
      %vm379 = vcmask 253952
      %380 = vst.msk [vmem:[%s374] sm:$0x1] %vm379, 0.0
      %s381 = smul.u32 0, 2
      %s382 = smul.addr %s381, 4
      %s383 = scalar_lea.vmem %s351, %s382
      %v384 = vld [vmem:[%s383] sm:$0xf]
      %v385 = vld [vmem:[%s383 + $0x8] sm:$0xf]
      %v386 = vld [vmem:[%s383 + $0x10] sm:$0xf]
      %v387 = vld [vmem:[%s383 + $0x18] sm:$0xf]
      %v388 = vunpack.c.l.bf16 %v384
      %v389 = vunpack.c.l.bf16 %v385
      %v390 = vunpack.c.l.bf16 %v386
      %v391 = vunpack.c.l.bf16 %v387
      %v392 = vperm.slane %v375, 0
      %v393 = vmul.f32 %v388, %v392
      %v394 = vmul.f32 %v389, %v392
      %v395 = vmul.f32 %v390, %v392
      %v396 = vmul.f32 %v391, %v392
      %s397 = smul.addr %s381, 4
      %s398 = scalar_lea.vmem %s356, %s397
      %v399 = vld [vmem:[%s398] sm:$0xf]
      %v400 = vld [vmem:[%s398 + $0x8] sm:$0xf]
      %v401 = vld [vmem:[%s398 + $0x10] sm:$0xf]
      %v402 = vld [vmem:[%s398 + $0x18] sm:$0xf]
      %v403 = vunpack.c.l.bf16 %v399
      %v404 = vunpack.c.l.bf16 %v400
      %v405 = vunpack.c.l.bf16 %v401
      %v406 = vunpack.c.l.bf16 %v402
      %v407 = vperm.slane %v375, 1
      %v408 = vmul.f32 %v403, %v407
      %v409 = vmul.f32 %v404, %v407
      %v410 = vmul.f32 %v405, %v407
      %v411 = vmul.f32 %v406, %v407
      %v412 = vld [vmem:[%s383 + $0x4] sm:$0x1]
      %v413 = vld [vmem:[%s383 + $0xc] sm:$0x1]
      %v414 = vld [vmem:[%s383 + $0x14] sm:$0x1]
      %v415 = vld [vmem:[%s383 + $0x1c] sm:$0x1]
      %v416 = vunpack.c.l.bf16 %v412
      %v417 = vunpack.c.l.bf16 %v413
      %v418 = vunpack.c.l.bf16 %v414
      %v419 = vunpack.c.l.bf16 %v415
      %v420 = vperm.slane %v375, 2
      %v421 = vmul.f32 %v388, %v420
      %v422 = vmul.f32 %v416, %v420
      %v423 = vmul.f32 %v389, %v420
      %v424 = vmul.f32 %v417, %v420
      %v425 = vmul.f32 %v390, %v420
      %v426 = vmul.f32 %v418, %v420
      %v427 = vmul.f32 %v391, %v420
      %v428 = vmul.f32 %v419, %v420
      %s429 = smul.addr %s381, 4
      %s430 = scalar_lea.vmem %s361, %s429
      %v431 = vld [vmem:[%s430] sm:$0xf]
      %v432 = vld [vmem:[%s430 + $0x8] sm:$0xf]
      %v433 = vld [vmem:[%s430 + $0x10] sm:$0xf]
      %v434 = vld [vmem:[%s430 + $0x18] sm:$0xf]
      %v435 = vunpack.c.l.bf16 %v431
      %v436 = vunpack.c.l.bf16 %v432
      %v437 = vunpack.c.l.bf16 %v433
      %v438 = vunpack.c.l.bf16 %v434
      %v439 = vperm.slane %v375, 3
      %v440 = vmul.f32 %v435, %v439
      %v441 = vmul.f32 %v436, %v439
      %v442 = vmul.f32 %v437, %v439
      %v443 = vmul.f32 %v438, %v439
      %s444 = smul.addr %s381, 4
      %s445 = scalar_lea.vmem %s366, %s444
      %v446 = vld [vmem:[%s445] sm:$0xf]
      %v447 = vld [vmem:[%s445 + $0x8] sm:$0xf]
      %v448 = vld [vmem:[%s445 + $0x10] sm:$0xf]
      %v449 = vld [vmem:[%s445 + $0x18] sm:$0xf]
      %v450 = vunpack.c.l.bf16 %v446
      %v451 = vunpack.c.l.bf16 %v447
      %v452 = vunpack.c.l.bf16 %v448
      %v453 = vunpack.c.l.bf16 %v449
      %v454 = vperm.slane %v375, 4
      %v455 = vmul.f32 %v450, %v454
      %v456 = vmul.f32 %v451, %v454
      %v457 = vmul.f32 %v452, %v454
      %v458 = vmul.f32 %v453, %v454
      %v459 = vld [vmem:[%s430 + $0x4] sm:$0x1]
      %v460 = vld [vmem:[%s430 + $0xc] sm:$0x1]
      %v461 = vld [vmem:[%s430 + $0x14] sm:$0x1]
      %v462 = vld [vmem:[%s430 + $0x1c] sm:$0x1]
      %v463 = vunpack.c.l.bf16 %v459
      %v464 = vunpack.c.l.bf16 %v460
      %v465 = vunpack.c.l.bf16 %v461
      %v466 = vunpack.c.l.bf16 %v462
      %v467 = vperm.slane %v375, 5
      %v468 = vmul.f32 %v435, %v467
      %v469 = vmul.f32 %v463, %v467
      %v470 = vmul.f32 %v436, %v467
      %v471 = vmul.f32 %v464, %v467
      %v472 = vmul.f32 %v437, %v467
      %v473 = vmul.f32 %v465, %v467
      %v474 = vmul.f32 %v438, %v467
      %v475 = vmul.f32 %v466, %v467
      %s476 = sadd.s32 0, 1
      %s477 = smul.u32 %s476, 2
      %s478 = smul.addr %s477, 4
      %s479 = scalar_lea.vmem %s351, %s478
      %v480 = vld [vmem:[%s479] sm:$0xf]
      %v481 = vld [vmem:[%s479 + $0x8] sm:$0xf]
      %v482 = vld [vmem:[%s479 + $0x10] sm:$0xf]
      %v483 = vld [vmem:[%s479 + $0x18] sm:$0xf]
      %v484 = vunpack.c.l.bf16 %v480
      %v485 = vunpack.c.l.bf16 %v481
      %v486 = vunpack.c.l.bf16 %v482
      %v487 = vunpack.c.l.bf16 %v483
      %v488 = vperm.slane %v375, 6
      %v489 = vmul.f32 %v484, %v488
      %v490 = vmul.f32 %v485, %v488
      %v491 = vmul.f32 %v486, %v488
      %v492 = vmul.f32 %v487, %v488
      %s493 = smul.addr %s477, 4
      %s494 = scalar_lea.vmem %s356, %s493
      %v495 = vld [vmem:[%s494] sm:$0xf]
      %v496 = vld [vmem:[%s494 + $0x8] sm:$0xf]
      %v497 = vld [vmem:[%s494 + $0x10] sm:$0xf]
      %v498 = vld [vmem:[%s494 + $0x18] sm:$0xf]
      %v499 = vunpack.c.l.bf16 %v495
      %v500 = vunpack.c.l.bf16 %v496
      %v501 = vunpack.c.l.bf16 %v497
      %v502 = vunpack.c.l.bf16 %v498
      %v503 = vperm.slane %v375, 7
      %v504 = vmul.f32 %v499, %v503
      %v505 = vmul.f32 %v500, %v503
      %v506 = vmul.f32 %v501, %v503
      %v507 = vmul.f32 %v502, %v503
      %v508 = vld [vmem:[%s479 + $0x4] sm:$0x1]
      %v509 = vld [vmem:[%s479 + $0xc] sm:$0x1]
      %v510 = vld [vmem:[%s479 + $0x14] sm:$0x1]
      %v511 = vld [vmem:[%s479 + $0x1c] sm:$0x1]
      %v512 = vunpack.c.l.bf16 %v508
      %v513 = vunpack.c.l.bf16 %v509
      %v514 = vunpack.c.l.bf16 %v510
      %v515 = vunpack.c.l.bf16 %v511
      %v516 = vperm.slane %v376, 0
      %v517 = vmul.f32 %v484, %v516
      %v518 = vmul.f32 %v512, %v516
      %v519 = vmul.f32 %v485, %v516
      %v520 = vmul.f32 %v513, %v516
      %v521 = vmul.f32 %v486, %v516
      %v522 = vmul.f32 %v514, %v516
      %v523 = vmul.f32 %v487, %v516
      %v524 = vmul.f32 %v515, %v516
      %v525 = vadd.f32 %v393, %v408
      %v526 = vadd.f32 %v394, %v409
      %v527 = vadd.f32 %v395, %v410
      %v528 = vadd.f32 %v396, %v411
      %v533 = vrot.slane %v440, 7
      %v534 = vrot.slane %v441, 7
      %v535 = vrot.slane %v442, 7
      %v536 = vrot.slane %v443, 7
      %v541 = vadd.f32 %v421, %v533
      %v542 = vadd.f32 %v422, %v533
      %v543 = vadd.f32 %v423, %v534
      %v544 = vadd.f32 %v424, %v534
      %v545 = vadd.f32 %v425, %v535
      %v546 = vadd.f32 %v426, %v535
      %v547 = vadd.f32 %v427, %v536
      %v548 = vadd.f32 %v428, %v536
      %vm557 = vcmask 1046528
      %v558 = vrot.slane %v468, 1
      %v559 = vrot.slane %v469, 1
      %v560 = vsel %vm557, %v558, %v559
      %v561 = vrot.slane %v470, 1
      %v562 = vrot.slane %v471, 1
      %v563 = vsel %vm557, %v561, %v562
      %v564 = vrot.slane %v472, 1
      %v565 = vrot.slane %v473, 1
      %v566 = vsel %vm557, %v564, %v565
      %v567 = vrot.slane %v474, 1
      %v568 = vrot.slane %v475, 1
      %v569 = vsel %vm557, %v567, %v568
      %v574 = vadd.f32 %v455, %v560
      %v575 = vadd.f32 %v456, %v563
      %v576 = vadd.f32 %v457, %v566
      %v577 = vadd.f32 %v458, %v569
      %v578 = vadd.f32 %v489, %v504
      %v579 = vadd.f32 %v490, %v505
      %v580 = vadd.f32 %v491, %v506
      %v581 = vadd.f32 %v492, %v507
      %v590 = vrot.slane %v541, 1
      %v591 = vrot.slane %v542, 1
      %v592 = vsel %vm557, %v590, %v591
      %v593 = vrot.slane %v543, 1
      %v594 = vrot.slane %v544, 1
      %v595 = vsel %vm557, %v593, %v594
      %v596 = vrot.slane %v545, 1
      %v597 = vrot.slane %v546, 1
      %v598 = vsel %vm557, %v596, %v597
      %v599 = vrot.slane %v547, 1
      %v600 = vrot.slane %v548, 1
      %v601 = vsel %vm557, %v599, %v600
      %v606 = vadd.f32 %v525, %v592
      %v607 = vadd.f32 %v526, %v595
      %v608 = vadd.f32 %v527, %v598
      %v609 = vadd.f32 %v528, %v601
      %v610 = vadd.f32 %v574, %v578
      %v611 = vadd.f32 %v575, %v579
      %v612 = vadd.f32 %v576, %v580
      %v613 = vadd.f32 %v577, %v581
      %v614 = vadd.f32 %v606, %v610
      %v615 = vadd.f32 %v607, %v611
      %v616 = vadd.f32 %v608, %v612
      %v617 = vadd.f32 %v609, %v613
      %v626 = vrot.slane %v517, 1
      %v627 = vrot.slane %v518, 1
      %v628 = vsel %vm557, %v626, %v627
      %v629 = vrot.slane %v519, 1
      %v630 = vrot.slane %v520, 1
      %v631 = vsel %vm557, %v629, %v630
      %v632 = vrot.slane %v521, 1
      %v633 = vrot.slane %v522, 1
      %v634 = vsel %vm557, %v632, %v633
      %v635 = vrot.slane %v523, 1
      %v636 = vrot.slane %v524, 1
      %v637 = vsel %vm557, %v635, %v636
      %v642 = vadd.f32 %v614, %v628
      %v643 = vadd.f32 %v615, %v631
      %v644 = vadd.f32 %v616, %v634
      %v645 = vadd.f32 %v617, %v637
      %vm646 = vcmask 261120
      %v647 = vsel %vm646, %v642, 0.0
      %648 = vadd.xlane.f32.xlu0 %v647
      %v649 = vpop.xlane.xlu0 %648
      %v650 = vsel %vm646, %v643, 0.0
      %651 = vadd.xlane.f32.xlu0 %v650
      %v652 = vpop.xlane.xlu0 %651
      %v653 = vsel %vm646, %v644, 0.0
      %654 = vadd.xlane.f32.xlu0 %v653
      %v655 = vpop.xlane.xlu0 %654
      %v656 = vsel %vm646, %v645, 0.0
      %657 = vadd.xlane.f32.xlu0 %v656
      %v658 = vpop.xlane.xlu0 %657
      %v659 = vrcp.pop 32.0
      %v660 = vmul.f32 32.0, %v659
      %v661 = vsub.f32 1.0, %v660
      %v662 = vmul.f32 %v659, %v661
      %v663 = vadd.f32 %v659, %v662
      %vm664 = vweird.f32 %v659
      %v665 = vsel %vm664, %v659, %v663
      %v666 = vmul.f32 %v649, %v665
      %v667 = vmul.f32 %v652, %v665
      %v668 = vmul.f32 %v655, %v665
      %v669 = vmul.f32 %v658, %v665
      %v670 = vsub.f32 %v642, %v666
      %v671 = vsub.f32 %v643, %v667
      %v672 = vsub.f32 %v644, %v668
      %v673 = vsub.f32 %v645, %v669
      %v674 = vmul.f32 %v670, %v670
      %v675 = vmul.f32 %v671, %v671
      %v676 = vmul.f32 %v672, %v672
      %v677 = vmul.f32 %v673, %v673
      %v678 = vsel %vm646, %v674, 0.0
      %679 = vadd.xlane.f32.xlu0 %v678
      %v680 = vpop.xlane.xlu0 %679
      %v681 = vsel %vm646, %v675, 0.0
      %682 = vadd.xlane.f32.xlu0 %v681
      %v683 = vpop.xlane.xlu0 %682
      %v684 = vsel %vm646, %v676, 0.0
      %685 = vadd.xlane.f32.xlu0 %v684
      %v686 = vpop.xlane.xlu0 %685
      %v687 = vsel %vm646, %v677, 0.0
      %688 = vadd.xlane.f32.xlu0 %v687
      %v689 = vpop.xlane.xlu0 %688
      %v690 = vmul.f32 %v680, %v665
      %v691 = vmul.f32 %v683, %v665
      %v692 = vmul.f32 %v686, %v665
      %v693 = vmul.f32 %v689, %v665
      %v694 = vadd.f32 %v690, 1e-05
      %v695 = vadd.f32 %v691, 1e-05
      %v696 = vadd.f32 %v692, 1e-05
      %v697 = vadd.f32 %v693, 1e-05
      %v698 = vrsqrt.pop %v694
      %v699 = vmul.f32 %v698, %v694
      %v700 = vmul.f32 %v699, %v698
      %v701 = vmul.f32 0.5, %v700
      %v702 = vsub.f32 1.5, %v701
      %v703 = vmul.f32 %v698, %v702
      %vm704 = vweird.f32 %v694
      %vm705 = vweird.f32 %v698
      %vm706 = vmor %vm704, %vm705
      %v707 = vsel %vm706, %v698, %v703
      %v708 = vrsqrt.pop %v695
      %v709 = vmul.f32 %v708, %v695
      %v710 = vmul.f32 %v709, %v708
      %v711 = vmul.f32 0.5, %v710
      %v712 = vsub.f32 1.5, %v711
      %v713 = vmul.f32 %v708, %v712
      %vm714 = vweird.f32 %v695
      %vm715 = vweird.f32 %v708
      %vm716 = vmor %vm714, %vm715
      %v717 = vsel %vm716, %v708, %v713
      %v718 = vrsqrt.pop %v696
      %v719 = vmul.f32 %v718, %v696
      %v720 = vmul.f32 %v719, %v718
      %v721 = vmul.f32 0.5, %v720
      %v722 = vsub.f32 1.5, %v721
      %v723 = vmul.f32 %v718, %v722
      %vm724 = vweird.f32 %v696
      %vm725 = vweird.f32 %v718
      %vm726 = vmor %vm724, %vm725
      %v727 = vsel %vm726, %v718, %v723
      %v728 = vrsqrt.pop %v697
      %v729 = vmul.f32 %v728, %v697
      %v730 = vmul.f32 %v729, %v728
      %v731 = vmul.f32 0.5, %v730
      %v732 = vsub.f32 1.5, %v731
      %v733 = vmul.f32 %v728, %v732
      %vm734 = vweird.f32 %v697
      %vm735 = vweird.f32 %v728
      %vm736 = vmor %vm734, %vm735
      %v737 = vsel %vm736, %v728, %v733
      %v738 = vmul.f32 %v670, %v707
      %v739 = vmul.f32 %v671, %v717
      %v740 = vmul.f32 %v672, %v727
      %v741 = vmul.f32 %v673, %v737
      %v743 = vperm.slane %v377, 0
      %v745 = vmul.f32 %v738, %v743
      %v746 = vmul.f32 %v739, %v743
      %v747 = vmul.f32 %v740, %v743
      %v748 = vmul.f32 %v741, %v743
      %v750 = vperm.slane %v378, 0
      %v752 = vadd.f32 %v745, %v750
      %v753 = vadd.f32 %v746, %v750
      %v754 = vadd.f32 %v747, %v750
      %v755 = vadd.f32 %v748, %v750
      %v756 = vadd.f32 %v752, 3.0
      %v757 = vadd.f32 %v753, 3.0
      %v758 = vadd.f32 %v754, 3.0
      %v759 = vadd.f32 %v755, 3.0
      %v760 = vmax.f32 %v756, 0.0
      %v761 = vmax.f32 %v757, 0.0
      %v762 = vmax.f32 %v758, 0.0
      %v763 = vmax.f32 %v759, 0.0
      %v764 = vmin.f32 %v760, 6.0
      %v765 = vmin.f32 %v761, 6.0
      %v766 = vmin.f32 %v762, 6.0
      %v767 = vmin.f32 %v763, 6.0
      %v768 = vmul.f32 %v752, %v764
      %v769 = vmul.f32 %v753, %v765
      %v770 = vmul.f32 %v754, %v766
      %v771 = vmul.f32 %v755, %v767
      %v772 = vmul.f32 %v768, 0.16666667
      %v773 = vmul.f32 %v769, 0.16666667
      %v774 = vmul.f32 %v770, 0.16666667
      %v775 = vmul.f32 %v771, 0.16666667
      %v776 = vpack.c.bf16 %v772, %v772
      %v777 = vpack.c.bf16 %v773, %v773
      %v778 = vpack.c.bf16 %v774, %v774
      %v779 = vpack.c.bf16 %v775, %v775
      %vm780 = vcmask 257024
      %781 = vst.msk [vmem:[%s371] sm:$0xf] %vm780, %v776
      %782 = vst.msk [vmem:[%s371 + $0x4] sm:$0xf] %vm780, %v777
      %783 = vst.msk [vmem:[%s371 + $0x8] sm:$0xf] %vm780, %v778
      %784 = vst.msk [vmem:[%s371 + $0xc] sm:$0xf] %vm780, %v779
      %v785 = vld [vmem:[%s374] sm:$0x1]
      %v786 = vsel %vm646, %v772, 0.0
      %v787 = vsel %vm646, %v773, 0.0
      %v788 = vadd.f32 %v786, %v787
      %v789 = vsel %vm646, %v774, 0.0
      %v790 = vadd.f32 %v788, %v789
      %v791 = vsel %vm646, %v775, 0.0
      %v792 = vadd.f32 %v790, %v791
      %v793 = vsel %vm646, %v792, 0.0
      %v794 = vrot.slane %v793, 4
      %v795 = vadd.f32 %v793, %v794
      %v796 = vrot.slane %v795, 2
      %v797 = vadd.f32 %v795, %v796
      %v798 = vrot.slane %v797, 1
      %v799 = vadd.f32 %v797, %v798
      %v800 = vmul.f32 %v799, 0.015625
      %v801 = vadd.f32 %v785, %v800
      %802 = vst.msk [vmem:[%s374] sm:$0x1] %vm379, %v801
      %s803 = smul.u32 4, 2
      %s804 = smul.addr %s803, 4
      %s805 = scalar_lea.vmem %s351, %s804
      %v806 = vld [vmem:[%s805] sm:$0xf]
      %v807 = vld [vmem:[%s805 + $0x8] sm:$0xf]
      %v808 = vld [vmem:[%s805 + $0x10] sm:$0xf]
      %v809 = vld [vmem:[%s805 + $0x18] sm:$0xf]
      %v810 = vunpack.c.l.bf16 %v806
      %v811 = vunpack.c.l.bf16 %v807
      %v812 = vunpack.c.l.bf16 %v808
      %v813 = vunpack.c.l.bf16 %v809
      %v814 = vmul.f32 %v810, %v392
      %v815 = vmul.f32 %v811, %v392
      %v816 = vmul.f32 %v812, %v392
      %v817 = vmul.f32 %v813, %v392
      %s818 = smul.addr %s803, 4
      %s819 = scalar_lea.vmem %s356, %s818
      %v820 = vld [vmem:[%s819] sm:$0xf]
      %v821 = vld [vmem:[%s819 + $0x8] sm:$0xf]
      %v822 = vld [vmem:[%s819 + $0x10] sm:$0xf]
      %v823 = vld [vmem:[%s819 + $0x18] sm:$0xf]
      %v824 = vunpack.c.l.bf16 %v820
      %v825 = vunpack.c.l.bf16 %v821
      %v826 = vunpack.c.l.bf16 %v822
      %v827 = vunpack.c.l.bf16 %v823
      %v828 = vmul.f32 %v824, %v407
      %v829 = vmul.f32 %v825, %v407
      %v830 = vmul.f32 %v826, %v407
      %v831 = vmul.f32 %v827, %v407
      %v832 = vld [vmem:[%s805 + $0x4] sm:$0x1]
      %v833 = vld [vmem:[%s805 + $0xc] sm:$0x1]
      %v834 = vld [vmem:[%s805 + $0x14] sm:$0x1]
      %v835 = vld [vmem:[%s805 + $0x1c] sm:$0x1]
      %v836 = vunpack.c.l.bf16 %v832
      %v837 = vunpack.c.l.bf16 %v833
      %v838 = vunpack.c.l.bf16 %v834
      %v839 = vunpack.c.l.bf16 %v835
      %v840 = vmul.f32 %v810, %v420
      %v841 = vmul.f32 %v836, %v420
      %v842 = vmul.f32 %v811, %v420
      %v843 = vmul.f32 %v837, %v420
      %v844 = vmul.f32 %v812, %v420
      %v845 = vmul.f32 %v838, %v420
      %v846 = vmul.f32 %v813, %v420
      %v847 = vmul.f32 %v839, %v420
      %s848 = smul.addr %s803, 4
      %s849 = scalar_lea.vmem %s361, %s848
      %v850 = vld [vmem:[%s849] sm:$0xf]
      %v851 = vld [vmem:[%s849 + $0x8] sm:$0xf]
      %v852 = vld [vmem:[%s849 + $0x10] sm:$0xf]
      %v853 = vld [vmem:[%s849 + $0x18] sm:$0xf]
      %v854 = vunpack.c.l.bf16 %v850
      %v855 = vunpack.c.l.bf16 %v851
      %v856 = vunpack.c.l.bf16 %v852
      %v857 = vunpack.c.l.bf16 %v853
      %v858 = vmul.f32 %v854, %v439
      %v859 = vmul.f32 %v855, %v439
      %v860 = vmul.f32 %v856, %v439
      %v861 = vmul.f32 %v857, %v439
      %s862 = smul.addr %s803, 4
      %s863 = scalar_lea.vmem %s366, %s862
      %v864 = vld [vmem:[%s863] sm:$0xf]
      %v865 = vld [vmem:[%s863 + $0x8] sm:$0xf]
      %v866 = vld [vmem:[%s863 + $0x10] sm:$0xf]
      %v867 = vld [vmem:[%s863 + $0x18] sm:$0xf]
      %v868 = vunpack.c.l.bf16 %v864
      %v869 = vunpack.c.l.bf16 %v865
      %v870 = vunpack.c.l.bf16 %v866
      %v871 = vunpack.c.l.bf16 %v867
      %v872 = vmul.f32 %v868, %v454
      %v873 = vmul.f32 %v869, %v454
      %v874 = vmul.f32 %v870, %v454
      %v875 = vmul.f32 %v871, %v454
      %v876 = vld [vmem:[%s849 + $0x4] sm:$0x1]
      %v877 = vld [vmem:[%s849 + $0xc] sm:$0x1]
      %v878 = vld [vmem:[%s849 + $0x14] sm:$0x1]
      %v879 = vld [vmem:[%s849 + $0x1c] sm:$0x1]
      %v880 = vunpack.c.l.bf16 %v876
      %v881 = vunpack.c.l.bf16 %v877
      %v882 = vunpack.c.l.bf16 %v878
      %v883 = vunpack.c.l.bf16 %v879
      %v884 = vmul.f32 %v854, %v467
      %v885 = vmul.f32 %v880, %v467
      %v886 = vmul.f32 %v855, %v467
      %v887 = vmul.f32 %v881, %v467
      %v888 = vmul.f32 %v856, %v467
      %v889 = vmul.f32 %v882, %v467
      %v890 = vmul.f32 %v857, %v467
      %v891 = vmul.f32 %v883, %v467
      %s892 = sadd.s32 4, 1
      %s893 = smul.u32 %s892, 2
      %s894 = smul.addr %s893, 4
      %s895 = scalar_lea.vmem %s351, %s894
      %v896 = vld [vmem:[%s895] sm:$0xf]
      %v897 = vld [vmem:[%s895 + $0x8] sm:$0xf]
      %v898 = vld [vmem:[%s895 + $0x10] sm:$0xf]
      %v899 = vld [vmem:[%s895 + $0x18] sm:$0xf]
      %v900 = vunpack.c.l.bf16 %v896
      %v901 = vunpack.c.l.bf16 %v897
      %v902 = vunpack.c.l.bf16 %v898
      %v903 = vunpack.c.l.bf16 %v899
      %v904 = vmul.f32 %v900, %v488
      %v905 = vmul.f32 %v901, %v488
      %v906 = vmul.f32 %v902, %v488
      %v907 = vmul.f32 %v903, %v488
      %s908 = smul.addr %s893, 4
      %s909 = scalar_lea.vmem %s356, %s908
      %v910 = vld [vmem:[%s909] sm:$0xf]
      %v911 = vld [vmem:[%s909 + $0x8] sm:$0xf]
      %v912 = vld [vmem:[%s909 + $0x10] sm:$0xf]
      %v913 = vld [vmem:[%s909 + $0x18] sm:$0xf]
      %v914 = vunpack.c.l.bf16 %v910
      %v915 = vunpack.c.l.bf16 %v911
      %v916 = vunpack.c.l.bf16 %v912
      %v917 = vunpack.c.l.bf16 %v913
      %v918 = vmul.f32 %v914, %v503
      %v919 = vmul.f32 %v915, %v503
      %v920 = vmul.f32 %v916, %v503
      %v921 = vmul.f32 %v917, %v503
      %v922 = vld [vmem:[%s895 + $0x4] sm:$0x1]
      %v923 = vld [vmem:[%s895 + $0xc] sm:$0x1]
      %v924 = vld [vmem:[%s895 + $0x14] sm:$0x1]
      %v925 = vld [vmem:[%s895 + $0x1c] sm:$0x1]
      %v926 = vunpack.c.l.bf16 %v922
      %v927 = vunpack.c.l.bf16 %v923
      %v928 = vunpack.c.l.bf16 %v924
      %v929 = vunpack.c.l.bf16 %v925
      %v930 = vmul.f32 %v900, %v516
      %v931 = vmul.f32 %v926, %v516
      %v932 = vmul.f32 %v901, %v516
      %v933 = vmul.f32 %v927, %v516
      %v934 = vmul.f32 %v902, %v516
      %v935 = vmul.f32 %v928, %v516
      %v936 = vmul.f32 %v903, %v516
      %v937 = vmul.f32 %v929, %v516
      %v938 = vadd.f32 %v814, %v828
      %v939 = vadd.f32 %v815, %v829
      %v940 = vadd.f32 %v816, %v830
      %v941 = vadd.f32 %v817, %v831
      %v946 = vrot.slane %v858, 7
      %v947 = vrot.slane %v859, 7
      %v948 = vrot.slane %v860, 7
      %v949 = vrot.slane %v861, 7
      %v954 = vadd.f32 %v840, %v946
      %v955 = vadd.f32 %v841, %v946
      %v956 = vadd.f32 %v842, %v947
      %v957 = vadd.f32 %v843, %v947
      %v958 = vadd.f32 %v844, %v948
      %v959 = vadd.f32 %v845, %v948
      %v960 = vadd.f32 %v846, %v949
      %v961 = vadd.f32 %v847, %v949
      %v970 = vrot.slane %v884, 1
      %v971 = vrot.slane %v885, 1
      %v972 = vsel %vm557, %v970, %v971
      %v973 = vrot.slane %v886, 1
      %v974 = vrot.slane %v887, 1
      %v975 = vsel %vm557, %v973, %v974
      %v976 = vrot.slane %v888, 1
      %v977 = vrot.slane %v889, 1
      %v978 = vsel %vm557, %v976, %v977
      %v979 = vrot.slane %v890, 1
      %v980 = vrot.slane %v891, 1
      %v981 = vsel %vm557, %v979, %v980
      %v986 = vadd.f32 %v872, %v972
      %v987 = vadd.f32 %v873, %v975
      %v988 = vadd.f32 %v874, %v978
      %v989 = vadd.f32 %v875, %v981
      %v990 = vadd.f32 %v904, %v918
      %v991 = vadd.f32 %v905, %v919
      %v992 = vadd.f32 %v906, %v920
      %v993 = vadd.f32 %v907, %v921
      %v1002 = vrot.slane %v954, 1
      %v1003 = vrot.slane %v955, 1
      %v1004 = vsel %vm557, %v1002, %v1003
      %v1005 = vrot.slane %v956, 1
      %v1006 = vrot.slane %v957, 1
      %v1007 = vsel %vm557, %v1005, %v1006
      %v1008 = vrot.slane %v958, 1
      %v1009 = vrot.slane %v959, 1
      %v1010 = vsel %vm557, %v1008, %v1009
      %v1011 = vrot.slane %v960, 1
      %v1012 = vrot.slane %v961, 1
      %v1013 = vsel %vm557, %v1011, %v1012
      %v1018 = vadd.f32 %v938, %v1004
      %v1019 = vadd.f32 %v939, %v1007
      %v1020 = vadd.f32 %v940, %v1010
      %v1021 = vadd.f32 %v941, %v1013
      %v1022 = vadd.f32 %v986, %v990
      %v1023 = vadd.f32 %v987, %v991
      %v1024 = vadd.f32 %v988, %v992
      %v1025 = vadd.f32 %v989, %v993
      %v1026 = vadd.f32 %v1018, %v1022
      %v1027 = vadd.f32 %v1019, %v1023
      %v1028 = vadd.f32 %v1020, %v1024
      %v1029 = vadd.f32 %v1021, %v1025
      %v1038 = vrot.slane %v930, 1
      %v1039 = vrot.slane %v931, 1
      %v1040 = vsel %vm557, %v1038, %v1039
      %v1041 = vrot.slane %v932, 1
      %v1042 = vrot.slane %v933, 1
      %v1043 = vsel %vm557, %v1041, %v1042
      %v1044 = vrot.slane %v934, 1
      %v1045 = vrot.slane %v935, 1
      %v1046 = vsel %vm557, %v1044, %v1045
      %v1047 = vrot.slane %v936, 1
      %v1048 = vrot.slane %v937, 1
      %v1049 = vsel %vm557, %v1047, %v1048
      %v1054 = vadd.f32 %v1026, %v1040
      %v1055 = vadd.f32 %v1027, %v1043
      %v1056 = vadd.f32 %v1028, %v1046
      %v1057 = vadd.f32 %v1029, %v1049
      %v1058 = vsel %vm646, %v1054, 0.0
      %1059 = vadd.xlane.f32.xlu0 %v1058
      %v1060 = vpop.xlane.xlu0 %1059
      %v1061 = vsel %vm646, %v1055, 0.0
      %1062 = vadd.xlane.f32.xlu0 %v1061
      %v1063 = vpop.xlane.xlu0 %1062
      %v1064 = vsel %vm646, %v1056, 0.0
      %1065 = vadd.xlane.f32.xlu0 %v1064
      %v1066 = vpop.xlane.xlu0 %1065
      %v1067 = vsel %vm646, %v1057, 0.0
      %1068 = vadd.xlane.f32.xlu0 %v1067
      %v1069 = vpop.xlane.xlu0 %1068
      %v1070 = vmul.f32 %v1060, %v665
      %v1071 = vmul.f32 %v1063, %v665
      %v1072 = vmul.f32 %v1066, %v665
      %v1073 = vmul.f32 %v1069, %v665
      %v1074 = vsub.f32 %v1054, %v1070
      %v1075 = vsub.f32 %v1055, %v1071
      %v1076 = vsub.f32 %v1056, %v1072
      %v1077 = vsub.f32 %v1057, %v1073
      %v1078 = vmul.f32 %v1074, %v1074
      %v1079 = vmul.f32 %v1075, %v1075
      %v1080 = vmul.f32 %v1076, %v1076
      %v1081 = vmul.f32 %v1077, %v1077
      %v1082 = vsel %vm646, %v1078, 0.0
      %1083 = vadd.xlane.f32.xlu0 %v1082
      %v1084 = vpop.xlane.xlu0 %1083
      %v1085 = vsel %vm646, %v1079, 0.0
      %1086 = vadd.xlane.f32.xlu0 %v1085
      %v1087 = vpop.xlane.xlu0 %1086
      %v1088 = vsel %vm646, %v1080, 0.0
      %1089 = vadd.xlane.f32.xlu0 %v1088
      %v1090 = vpop.xlane.xlu0 %1089
      %v1091 = vsel %vm646, %v1081, 0.0
      %1092 = vadd.xlane.f32.xlu0 %v1091
      %v1093 = vpop.xlane.xlu0 %1092
      %v1094 = vmul.f32 %v1084, %v665
      %v1095 = vmul.f32 %v1087, %v665
      %v1096 = vmul.f32 %v1090, %v665
      %v1097 = vmul.f32 %v1093, %v665
      %v1098 = vadd.f32 %v1094, 1e-05
      %v1099 = vadd.f32 %v1095, 1e-05
      %v1100 = vadd.f32 %v1096, 1e-05
      %v1101 = vadd.f32 %v1097, 1e-05
      %v1102 = vrsqrt.pop %v1098
      %v1103 = vmul.f32 %v1102, %v1098
      %v1104 = vmul.f32 %v1103, %v1102
      %v1105 = vmul.f32 0.5, %v1104
      %v1106 = vsub.f32 1.5, %v1105
      %v1107 = vmul.f32 %v1102, %v1106
      %vm1108 = vweird.f32 %v1098
      %vm1109 = vweird.f32 %v1102
      %vm1110 = vmor %vm1108, %vm1109
      %v1111 = vsel %vm1110, %v1102, %v1107
      %v1112 = vrsqrt.pop %v1099
      %v1113 = vmul.f32 %v1112, %v1099
      %v1114 = vmul.f32 %v1113, %v1112
      %v1115 = vmul.f32 0.5, %v1114
      %v1116 = vsub.f32 1.5, %v1115
      %v1117 = vmul.f32 %v1112, %v1116
      %vm1118 = vweird.f32 %v1099
      %vm1119 = vweird.f32 %v1112
      %vm1120 = vmor %vm1118, %vm1119
      %v1121 = vsel %vm1120, %v1112, %v1117
      %v1122 = vrsqrt.pop %v1100
      %v1123 = vmul.f32 %v1122, %v1100
      %v1124 = vmul.f32 %v1123, %v1122
      %v1125 = vmul.f32 0.5, %v1124
      %v1126 = vsub.f32 1.5, %v1125
      %v1127 = vmul.f32 %v1122, %v1126
      %vm1128 = vweird.f32 %v1100
      %vm1129 = vweird.f32 %v1122
      %vm1130 = vmor %vm1128, %vm1129
      %v1131 = vsel %vm1130, %v1122, %v1127
      %v1132 = vrsqrt.pop %v1101
      %v1133 = vmul.f32 %v1132, %v1101
      %v1134 = vmul.f32 %v1133, %v1132
      %v1135 = vmul.f32 0.5, %v1134
      %v1136 = vsub.f32 1.5, %v1135
      %v1137 = vmul.f32 %v1132, %v1136
      %vm1138 = vweird.f32 %v1101
      %vm1139 = vweird.f32 %v1132
      %vm1140 = vmor %vm1138, %vm1139
      %v1141 = vsel %vm1140, %v1132, %v1137
      %v1142 = vmul.f32 %v1074, %v1111
      %v1143 = vmul.f32 %v1075, %v1121
      %v1144 = vmul.f32 %v1076, %v1131
      %v1145 = vmul.f32 %v1077, %v1141
      %v1146 = vmul.f32 %v1142, %v743
      %v1147 = vmul.f32 %v1143, %v743
      %v1148 = vmul.f32 %v1144, %v743
      %v1149 = vmul.f32 %v1145, %v743
      %v1150 = vadd.f32 %v1146, %v750
      %v1151 = vadd.f32 %v1147, %v750
      %v1152 = vadd.f32 %v1148, %v750
      %v1153 = vadd.f32 %v1149, %v750
      %v1154 = vadd.f32 %v1150, 3.0
      %v1155 = vadd.f32 %v1151, 3.0
      %v1156 = vadd.f32 %v1152, 3.0
      %v1157 = vadd.f32 %v1153, 3.0
      %v1158 = vmax.f32 %v1154, 0.0
      %v1159 = vmax.f32 %v1155, 0.0
      %v1160 = vmax.f32 %v1156, 0.0
      %v1161 = vmax.f32 %v1157, 0.0
      %v1162 = vmin.f32 %v1158, 6.0
      %v1163 = vmin.f32 %v1159, 6.0
      %v1164 = vmin.f32 %v1160, 6.0
      %v1165 = vmin.f32 %v1161, 6.0
      %v1166 = vmul.f32 %v1150, %v1162
      %v1167 = vmul.f32 %v1151, %v1163
      %v1168 = vmul.f32 %v1152, %v1164
      %v1169 = vmul.f32 %v1153, %v1165
      %v1170 = vmul.f32 %v1166, 0.16666667
      %v1171 = vmul.f32 %v1167, 0.16666667
      %v1172 = vmul.f32 %v1168, 0.16666667
      %v1173 = vmul.f32 %v1169, 0.16666667
      %v1174 = vpack.c.bf16 %v1170, %v1170
      %v1175 = vpack.c.bf16 %v1171, %v1171
      %v1176 = vpack.c.bf16 %v1172, %v1172
      %v1177 = vpack.c.bf16 %v1173, %v1173
      %s1178 = scalar_lea.vmem %s371, 16
      %1179 = vst.msk [vmem:[%s1178] sm:$0xf] %vm780, %v1174
      %1180 = vst.msk [vmem:[%s1178 + $0x4] sm:$0xf] %vm780, %v1175
      %1181 = vst.msk [vmem:[%s1178 + $0x8] sm:$0xf] %vm780, %v1176
      %1182 = vst.msk [vmem:[%s1178 + $0xc] sm:$0xf] %vm780, %v1177
      %v1183 = vld [vmem:[%s374] sm:$0x1]
      %v1184 = vsel %vm646, %v1170, 0.0
      %v1185 = vsel %vm646, %v1171, 0.0
      %v1186 = vadd.f32 %v1184, %v1185
      %v1187 = vsel %vm646, %v1172, 0.0
      %v1188 = vadd.f32 %v1186, %v1187
      %v1189 = vsel %vm646, %v1173, 0.0
      %v1190 = vadd.f32 %v1188, %v1189
      %v1191 = vsel %vm646, %v1190, 0.0
      %v1192 = vrot.slane %v1191, 4
      %v1193 = vadd.f32 %v1191, %v1192
      %v1194 = vrot.slane %v1193, 2
      %v1195 = vadd.f32 %v1193, %v1194
      %v1196 = vrot.slane %v1195, 1
      %v1197 = vadd.f32 %v1195, %v1196
      %v1198 = vmul.f32 %v1197, 0.015625
      %v1199 = vadd.f32 %v1183, %v1198
      %1200 = vst.msk [vmem:[%s374] sm:$0x1] %vm379, %v1199
      %p1201 = scmp.lt.s32.totalorder %s20, 1
      %s1202 = scalar_select %p1201, %s20, 1
      %s1203 = smul.addr %s1202, 8
      %s1204 = smul.addr %s1203, 4
      %s1205 = scalar_lea.vmem %s7, %s1204
      %p1206 = scmp.lt.s32.totalorder %s20, 1
      %s1207 = scalar_select %p1206, %s20, 1
      %s1208 = scalar_lea.vmem %s8, %s1207
      // Predicated region
      $region49: #{ldp_block_forward.11} parent=47 // pred_check
        %p1209 = pneg %p205
      $region50: #{ldp_block_forward.11} parent=47 // pred_check_branch
        %1211 = sbr.rel (%p1209) target = $region52
      $region51: #{ldp_block_forward.11} parent=47 // pred_region
        _
      $region52: #{ldp_block_forward.11} parent=47 // pred_fallthru
        _
      // Predicated region
      $region53: #{ldp_block_forward.11} parent=47 // pred_check
        %p1212 = pneg %p231
      $region54: #{ldp_block_forward.11} parent=47 // pred_check_branch
        %1214 = sbr.rel (%p1212) target = $region56
      $region55: #{ldp_block_forward.11} parent=47 // pred_region
        _
      $region56: #{ldp_block_forward.11} parent=47 // pred_fallthru
        _
    $region48: #{ldp_block_forward.11} parent=5 // pred_fallthru
      _
    %p1215 = scmp.le.s32.totalorder 2, %s15
    // Predicated region
    $region57: #{ldp_block_forward.11} parent=5 // pred_check
      %p1216 = pneg %p1215
    $region58: #{ldp_block_forward.11} parent=5 // pred_check_branch
      %1218 = sbr.rel (%p1216) target = $region60
    $region59: #{ldp_block_forward.11} parent=5 // pred_region
      %s1219 = ssub.s32 %s15, 2
      // Predicated region
      $region61: #{ldp_block_forward.11} parent=59 // pred_check
        %p1220 = pneg %p211
      $region62: #{ldp_block_forward.11} parent=59 // pred_check_branch
        %1222 = sbr.rel (%p1220) target = $region64
      $region63: #{ldp_block_forward.11} parent=59 // pred_region
        %p1223 = scmp.lt.s32.totalorder %s21, 1
        %s1224 = scalar_select %p1223, %s21, 1
        %s1225 = smul.addr %s1224, 8
        %s1226 = smul.addr %s1225, 4
        %s1227 = scalar_lea.vmem %s7, %s1226
      $region64: #{ldp_block_forward.11} parent=59 // pred_fallthru
        _
      // Predicated region
      $region65: #{ldp_block_forward.11} parent=59 // pred_check
        %p1228 = pneg %p237
      $region66: #{ldp_block_forward.11} parent=59 // pred_check_branch
        %1230 = sbr.rel (%p1228) target = $region68
      $region67: #{ldp_block_forward.11} parent=59 // pred_region
        %p1231 = scmp.lt.s32.totalorder %s21, 1
        %s1232 = scalar_select %p1231, %s21, 1
        %s1233 = scalar_lea.vmem %s8, %s1232
      $region68: #{ldp_block_forward.11} parent=59 // pred_fallthru
        _
    $region60: #{ldp_block_forward.11} parent=5 // pred_fallthru
      _
  $region6: #{ldp_block_forward.11} parent=0 // loop_footer
    %s19 = sadd.s32 1, %s15
  $region7: #{ldp_block_forward.11} parent=0 // loop_footer_branch
    %14 = sbr.rel target = $region3
  $region8: #{ldp_block_forward.11} parent=0 // loop_exit
    _

</llo_original>
